<compile_context>
chip_gen: v6e
topology: v6e:2x2x1
jax: 0.10.0
libtpu: 0.0.40
codegen_flags: <defaults>
</compile_context>

<pallas_src>
import numpy as np
import jax
import jax.numpy as jnp
from jax.experimental import pallas as pl
from jax.experimental.pallas import tpu as pltpu


HIDDEN = 32                                                     # eps-model hidden width
_TAPS = [(dy, dx) for dy in (-1, 0, 1) for dx in (-1, 0, 1)]    # 3x3 conv taps

_VMEM = pl.BlockSpec(memory_space=pltpu.MemorySpace.VMEM)
_SMEM = pl.BlockSpec(memory_space=pltpu.MemorySpace.SMEM)


def _round_up(x, m):
    return ((x + m - 1) // m) * m


def _geometry(H, W):
    """Row-padded, flattened spatial layout (no horizontal wrap masks needed)."""
    WS = W + 2                     # row stride: one zero halo column on each side
    LEAD = (-(WS + 1)) % 8         # leading pad so interior stores are 8-row aligned
    S0 = LEAD + WS + 1             # flattened index of image pixel (0, 0)
    M = H * WS                     # rows fed to the MXU (interior + halo columns)
    HWP = _round_up(S0 + WS + 1 + M, 8)   # covers the furthest 3x3 tap read
    return WS, LEAD, S0, M, HWP


# ------------------ time-embedding projection (runs once per jit) ------------------ #

def _temb_bias_kernel(sin_ref, wt_ref, bt_ref, b1_ref, o_ref):
    # o = b1 + SiLU(sin_table @ wt + bt), computed for every sampling step at once
    y = jnp.dot(sin_ref[...], wt_ref[...], preferred_element_type=jnp.float32)
    y = y + bt_ref[...]
    y = y * (1.0 / (1.0 + jnp.exp(-y)))                 # exact SiLU
    o_ref[...] = y + b1_ref[...]


def precompute_conv1_bias(sin_tab, wt, bt, b1):
    n = sin_tab.shape[0]
    return pl.pallas_call(
        _temb_bias_kernel,
        out_shape=jax.ShapeDtypeStruct((n, HIDDEN), jnp.float32),
        in_specs=[_VMEM, _VMEM, _VMEM, _VMEM],
        out_specs=_VMEM,
    )(sin_tab.astype(jnp.float32), wt.astype(jnp.float32),
      bt.reshape(1, -1).astype(jnp.float32), b1.reshape(1, -1).astype(jnp.float32))


# --------------------------- fused whole-loop kernel -------------------------------- #

def _make_step_kernel(*, H, W, C, with_noise):
    WS, _LEAD, S0, M, HWP = _geometry(H, W)
    starts = [S0 + dy * WS + dx for (dy, dx) in _TAPS]          # static slice starts

    def conv3x3(src_ref, w_ref):
        # 3x3 conv as 9 accumulated (M, cin) @ (cin, cout) MXU matmuls over
        # statically shifted slices of the row-padded source buffer.
        acc = None
        for k, st in enumerate(starts):
            part = jnp.dot(src_ref[pl.ds(st, M), :], w_ref[k],
                           preferred_element_type=jnp.float32)
            acc = part if acc is None else acc + part
        return acc

    def kernel(x_ref, coef_ref, bias1_ref, w1_ref, w2_ref, b2_ref, mask_ref, *rest):
        if with_noise:
            seed_ref, out_ref, x_state, h_pad = rest
        else:
            out_ref, x_state, h_pad = rest

        s = pl.program_id(1)                              # diffusion step index

        # One-time init per batch block: carried state <- padded input (zero halos
        # included), hidden-scratch halo rows <- 0.  No per-step full-buffer zeroing.
        @pl.when(s == 0)
        def _():
            x_state[...] = x_ref[...]
            h_pad[...] = jnp.zeros_like(h_pad)

        interior = mask_ref[...]                          # (M, 1): 1 on pixels, 0 on halo cols

        # ---- eps-model: conv1 (C -> HIDDEN) + per-step temb bias + exact SiLU ----
        h = conv3x3(x_state, w1_ref)
        h = h + bias1_ref[pl.ds(s, 1), :]                 # this step's temb bias row
        h = h * (1.0 / (1.0 + jnp.exp(-h)))
        h_pad[pl.ds(S0, M), :] = h * interior             # keep halo columns zero

        # ---- eps-model: conv2 (HIDDEN -> C) + bias -> eps prediction ----
        et = conv3x3(h_pad, w2_ref) + b2_ref[...]

        # ---- DDIM update; per-step scalars read from SMEM ----
        a_coef = coef_ref[s, 0]
        b_coef = coef_ref[s, 1]
        xt = x_state[pl.ds(S0, M), :]
        xn = a_coef * xt + b_coef * et
        if with_noise:
            pltpu.prng_seed(seed_ref[0] * 92821 + pl.program_id(0) * 7919 + s)
            xn = xn + coef_ref[s, 2] * pltpu.stateful_normal((M, C), jnp.float32)
        x_state[pl.ds(S0, M), :] = xn * interior          # keep halo columns zero

        # ---- final step: fused torch.clip and the only HBM writeback ----
        @pl.when(s == pl.num_programs(1) - 1)
        def _():
            out_ref[...] = jnp.clip(x_state[...], -1.0, 1.0)

    return kernel, HWP, M


def ddim_sample_fused(x_pad, coeffs, bias1_all, w1, w2, b2, mask, seed, *,
                      H, W, C, with_noise):
    B, HWP, _ = x_pad.shape
    n_steps = coeffs.shape[0]
    kernel, HWP_k, M = _make_step_kernel(H=H, W=W, C=C, with_noise=with_noise)
    assert HWP_k == HWP

    in_specs = [
        pl.BlockSpec((None, HWP, C), lambda b, s: (b, 0, 0)),      # initial state (read @ s=0)
        _SMEM,                                                     # per-step DDIM scalars
        pl.BlockSpec((n_steps, HIDDEN), lambda b, s: (0, 0)),      # temb bias table (resident)
        pl.BlockSpec(w1.shape, lambda b, s: (0, 0, 0)),            # conv1 weights (DMA'd once)
        pl.BlockSpec(w2.shape, lambda b, s: (0, 0, 0)),            # conv2 weights (DMA'd once)
        pl.BlockSpec((1, C), lambda b, s: (0, 0)),                 # conv2 bias
        pl.BlockSpec((M, 1), lambda b, s: (0, 0)),                 # interior mask (resident)
    ]
    args = [x_pad, coeffs, bias1_all, w1, w2, b2, mask]
    if with_noise:
        in_specs.append(_SMEM)                                     # PRNG seed
        args.append(seed)

    return pl.pallas_call(
        kernel,
        grid=(B, n_steps),
        in_specs=in_specs,
        out_specs=pl.BlockSpec((None, HWP, C), lambda b, s: (b, 0, 0)),
        out_shape=jax.ShapeDtypeStruct((B, HWP, C), jnp.float32),
        scratch_shapes=[pltpu.VMEM((HWP, C), jnp.float32),         # carried x_t (VMEM resident)
                        pltpu.VMEM((HWP, HIDDEN), jnp.float32)],   # hidden activation
        input_output_aliases={0: 0},
        compiler_params=pltpu.CompilerParams(
            dimension_semantics=("parallel", "arbitrary")),        # batch // on v7x, steps seq.
    )(*args)


# --------------------------- synthetic epsilon model ------------------------------- #

def init_eps_model_params(channels, hidden, key):
    k1, k2, k3, k4, k5, k6 = jax.random.split(key, 6)
    return {
        "wt": jax.random.normal(k1, (hidden, hidden), jnp.float32) * 0.05,
        "bt": jax.random.normal(k2, (hidden,), jnp.float32) * 0.01,
        "w1": jax.random.normal(k3, (9, channels, hidden), jnp.float32) * 0.05,
        "b1": jax.random.normal(k4, (hidden,), jnp.float32) * 0.01,
        "w2": jax.random.normal(k5, (9, hidden, channels), jnp.float32) * 0.05,
        "b2": jax.random.normal(k6, (channels,), jnp.float32) * 0.01,
    }


def sinusoid_table(t_vals, dim):
    half = dim // 2
    freqs = np.exp(-np.log(10000.0) * np.arange(half, dtype=np.float64) / half)
    args = np.asarray(t_vals, np.float64)[:, None] * freqs[None, :]
    return np.concatenate([np.sin(args), np.cos(args)], axis=-1).astype(np.float32)


# ------------------------------------ DDIM ------------------------------------------ #

class DDIM:
    def __init__(self, model_params, beta_1, beta_T, T, sample_type, skip_type,
                 eta, skipped_step):
        self.params = model_params
        self.T = T
        self.sample_type = sample_type
        self.skip_type = skip_type
        self.eta = float(eta)
        self.skipped_step = skipped_step
        # static schedule in float64, like the reference's double betas buffer
        betas = np.linspace(beta_1, beta_T, T, dtype=np.float64)
        self.alphas_cum = np.cumprod(np.concatenate([[1.0], 1.0 - betas]))

    def _make_seq(self):
        if self.skip_type == "uniform":
            skip = self.T // int(self.skipped_step)
            seq = list(range(1, self.T, skip))            # matches the reference module
        elif self.skip_type == "quard":
            seq = np.linspace(0, np.sqrt(self.T * 0.8), int(self.skipped_step)) ** 2
            seq = [int(s) for s in list(seq)]
        else:
            raise ValueError(self.skip_type)
        return seq

    def _schedule(self):
        seq = self._make_seq()
        seq_next = [-1] + list(seq[:-1])
        steps = list(zip(reversed(seq), reversed(seq_next)))
        coeffs = np.zeros((len(steps), 4), np.float32)
        for s, (i, j) in enumerate(steps):
            at = float(self.alphas_cum[i + 1])
            an = float(self.alphas_cum[j + 1])
            c1 = self.eta * float(np.sqrt((1.0 - at / an) * (1.0 - an) / (1.0 - at)))
            c2 = float(np.sqrt((1.0 - an) - c1 ** 2))
            # xt_next = a*xt + b*et + c1*noise   (algebraically == the reference update)
            coeffs[s, 0] = np.sqrt(an / at)
            coeffs[s, 1] = c2 - np.sqrt(an) * np.sqrt(1.0 - at) / np.sqrt(at)
            coeffs[s, 2] = c1
        t_vals = [float(i) for (i, _) in steps]
        return coeffs, t_vals

    def forward(self, noisy_image, seed=0):
        if self.sample_type != "generalized":
            # TODO(synk): ddpm_noisy branch (ddpm_steps) not reproduced here.
            raise NotImplementedError("only sample_type='generalized' implemented")

        B, C, H, W = noisy_image.shape
        WS, LEAD, _S0, M, HWP = _geometry(H, W)
        top = LEAD + WS

        coeffs_np, t_vals = self._schedule()
        with_noise = self.eta != 0.0

        p = self.params
        # time-embedding projection for the whole (static) schedule, computed once
        sin_tab = jnp.asarray(sinusoid_table(t_vals, HIDDEN))
        bias1_all = precompute_conv1_bias(sin_tab, p["wt"], p["bt"], p["b1"])

        # NCHW -> row-padded flattened NHWC state, built once at entry
        x_nhwc = jnp.transpose(noisy_image, (0, 2, 3, 1)).astype(jnp.float32)
        x_rows = jnp.pad(x_nhwc, ((0, 0), (0, 0), (1, 1), (0, 0)))        # (B,H,WS,C)
        x_flat = x_rows.reshape(B, H * WS, C)
        x_pad = jnp.pad(x_flat, ((0, 0), (top, HWP - top - H * WS), (0, 0)))

        # interior mask: 1 for real pixels, 0 for the per-row halo columns
        mask = jnp.asarray(((np.arange(M) % WS) < W).astype(np.float32).reshape(M, 1))

        out_pad = ddim_sample_fused(
            x_pad, jnp.asarray(coeffs_np), bias1_all,
            p["w1"].astype(jnp.float32), p["w2"].astype(jnp.float32),
            p["b2"].reshape(1, -1).astype(jnp.float32), mask,
            jnp.asarray([int(seed)], jnp.int32) if with_noise else None,
            H=H, W=W, C=C, with_noise=with_noise)

        # unpad and return to NCHW once at exit
        core = out_pad[:, top:top + H * WS, :].reshape(B, H, WS, C)[:, :, 1:1 + W, :]
        return jnp.transpose(core, (0, 3, 1, 2))

    def __call__(self, noisy_image, seed=0):
        return self.forward(noisy_image, seed)


# ------------------------------------ main ------------------------------------------ #

if __name__ == "__main__":
    B, C, H, W = 2, 4, 16, 16
    T = 100
    key = jax.random.PRNGKey(0)
    params = init_eps_model_params(C, HIDDEN, key)

    ddim = DDIM(params, beta_1=1e-4, beta_T=0.02, T=T,
                sample_type="generalized", skip_type="uniform",
                eta=0.0, skipped_step=10)

    noisy = jax.random.normal(jax.random.fold_in(key, 1), (B, C, H, W), jnp.float32)

    run = jax.jit(lambda x: ddim(x))
    out = jax.block_until_ready(run(noisy))

    assert out.shape == (B, C, H, W)
    assert bool(jnp.all(jnp.isfinite(out)))
    assert float(jnp.max(out)) <= 1.0 and float(jnp.min(out)) >= -1.0
    print("KERNEL_OK")
</pallas_src>

<mosaic_0001>
module attributes {stable_mosaic.version = 11 : i64} {
  func.func @_temb_bias_kernel(%arg0: memref<10x32xf32, #tpu.memory_space<vmem>>, %arg1: memref<32x32xf32, #tpu.memory_space<vmem>>, %arg2: memref<1x32xf32, #tpu.memory_space<vmem>>, %arg3: memref<1x32xf32, #tpu.memory_space<vmem>>, %arg4: memref<10x32xf32, #tpu.memory_space<vmem>>) attributes {dimension_semantics = [], scalar_prefetch = 0 : i64, scratch_operands = 0 : i64, tpu.core_type = #tpu.core_type<tc>} {
    %c0 = arith.constant 0 : index
    %c0_0 = arith.constant 0 : index
    %0 = vector.load %arg0[%c0, %c0_0] : memref<10x32xf32, #tpu.memory_space<vmem>>, vector<10x32xf32>
    %c0_1 = arith.constant 0 : index
    %c0_2 = arith.constant 0 : index
    %1 = vector.load %arg1[%c0_1, %c0_2] : memref<32x32xf32, #tpu.memory_space<vmem>>, vector<32x32xf32>
    %cst = arith.constant dense<0.000000e+00> : vector<10x32xf32>
    %2 = tpu.matmul %0, %1, %cst {dimension_numbers = #tpu.dot_dimension_numbers<[1], [0], [0], [1], [0, 0, 1, 1], [], []>} : vector<10x32xf32>, vector<32x32xf32>, vector<10x32xf32> -> vector<10x32xf32>
    %c0_3 = arith.constant 0 : index
    %c0_4 = arith.constant 0 : index
    %3 = vector.load %arg2[%c0_3, %c0_4] : memref<1x32xf32, #tpu.memory_space<vmem>>, vector<1x32xf32>
    %4 = vector.broadcast %3 : vector<1x32xf32> to vector<10x32xf32>
    %5 = arith.addf %2, %4 : vector<10x32xf32>
    %cst_5 = arith.constant 0.000000e+00 : f32
    %6 = vector.broadcast %cst_5 : f32 to vector<10x32xf32>
    %7 = arith.subf %6, %5 : vector<10x32xf32>
    %8 = math.exp %7 : vector<10x32xf32>
    %cst_6 = arith.constant 1.000000e+00 : f32
    %9 = vector.broadcast %cst_6 : f32 to vector<10x32xf32>
    %10 = arith.addf %9, %8 : vector<10x32xf32>
    %cst_7 = arith.constant 1.000000e+00 : f32
    %11 = vector.broadcast %cst_7 : f32 to vector<10x32xf32>
    %12 = arith.divf %11, %10 : vector<10x32xf32>
    %13 = arith.mulf %5, %12 : vector<10x32xf32>
    %c0_8 = arith.constant 0 : index
    %c0_9 = arith.constant 0 : index
    %14 = vector.load %arg3[%c0_8, %c0_9] : memref<1x32xf32, #tpu.memory_space<vmem>>, vector<1x32xf32>
    %15 = vector.broadcast %14 : vector<1x32xf32> to vector<10x32xf32>
    %16 = arith.addf %13, %15 : vector<10x32xf32>
    %c0_10 = arith.constant 0 : index
    %c0_11 = arith.constant 0 : index
    %17 = vector.load %arg4[%c0_10, %c0_11] : memref<10x32xf32, #tpu.memory_space<vmem>>, vector<10x32xf32>
    tpu.vector_store %arg4[%c0_10, %c0_11], %16 {strides = array<i32>} : memref<10x32xf32, #tpu.memory_space<vmem>>, vector<10x32xf32>,
    return
  }
}

module attributes {stable_mosaic.version = 11 : i64} {
  func.func @kernel(%arg0: i32, %arg1: i32, %arg2: memref<1x336x4xf32, #tpu.memory_space<vmem>>, %arg3: memref<10x4xf32, #tpu.memory_space<smem>>, %arg4: memref<10x32xf32, #tpu.memory_space<vmem>>, %arg5: memref<9x4x32xf32, #tpu.memory_space<vmem>>, %arg6: memref<9x32x4xf32, #tpu.memory_space<vmem>>, %arg7: memref<1x4xf32, #tpu.memory_space<vmem>>, %arg8: memref<288x1xf32, #tpu.memory_space<vmem>>, %arg9: memref<1x336x4xf32, #tpu.memory_space<vmem>>, %arg10: memref<336x4xf32, #tpu.memory_space<vmem>>, %arg11: memref<336x32xf32, #tpu.memory_space<vmem>>) attributes {dimension_semantics = [#tpu.dimension_semantics<parallel>, #tpu.dimension_semantics<arbitrary>], iteration_bounds = array<i64: 2, 10>, scalar_prefetch = 0 : i64, scratch_operands = 2 : i64, tpu.core_type = #tpu.core_type<tc>, window_params = [{transform_indices = @transform_0, window_bounds = array<i64: 1, 336, 4>}, {transform_indices = @transform_1, window_bounds = array<i64: 10, 4>}, {pipeline_mode = #tpu.pipeline_mode<synchronous>, transform_indices = @transform_2, window_bounds = array<i64: 10, 32>}, {pipeline_mode = #tpu.pipeline_mode<synchronous>, transform_indices = @transform_3, window_bounds = array<i64: 9, 4, 32>}, {pipeline_mode = #tpu.pipeline_mode<synchronous>, transform_indices = @transform_4, window_bounds = array<i64: 9, 32, 4>}, {pipeline_mode = #tpu.pipeline_mode<synchronous>, transform_indices = @transform_5, window_bounds = array<i64: 1, 4>}, {pipeline_mode = #tpu.pipeline_mode<synchronous>, transform_indices = @transform_6, window_bounds = array<i64: 288, 1>}, {transform_indices = @transform_7, window_bounds = array<i64: 1, 336, 4>}]} {
    %c0_i32 = arith.constant 0 : i32
    %0 = arith.cmpi eq, %arg1, %c0_i32 : i32
    %1 = arith.extui %0 : i1 to i32
    %c0_i32_0 = arith.constant 0 : i32
    %2 = arith.cmpi ne, %1, %c0_i32_0 : i32
    scf.if %2 {
      %c0_110 = arith.constant 0 : index
      %c0_111 = arith.constant 0 : index
      %c0_112 = arith.constant 0 : index
      %126 = vector.load %arg2[%c0_110, %c0_111, %c0_112] : memref<1x336x4xf32, #tpu.memory_space<vmem>>, vector<1x336x4xf32>
      %127 = vector.shape_cast %126 : vector<1x336x4xf32> to vector<336x4xf32>
      %c0_113 = arith.constant 0 : index
      %c0_114 = arith.constant 0 : index
      %128 = vector.load %arg10[%c0_113, %c0_114] : memref<336x4xf32, #tpu.memory_space<vmem>>, vector<336x4xf32>
      tpu.vector_store %arg10[%c0_113, %c0_114], %127 {strides = array<i32>} : memref<336x4xf32, #tpu.memory_space<vmem>>, vector<336x4xf32>,
      %cst_115 = arith.constant 0.000000e+00 : f32
      %129 = vector.broadcast %cst_115 : f32 to vector<336x32xf32>
      %c0_116 = arith.constant 0 : index
      %c0_117 = arith.constant 0 : index
      %130 = vector.load %arg11[%c0_116, %c0_117] : memref<336x32xf32, #tpu.memory_space<vmem>>, vector<336x32xf32>
      tpu.vector_store %arg11[%c0_116, %c0_117], %129 {strides = array<i32>} : memref<336x32xf32, #tpu.memory_space<vmem>>, vector<336x32xf32>,
    } else {
    }
    %c0 = arith.constant 0 : index
    %c0_1 = arith.constant 0 : index
    %3 = vector.load %arg8[%c0, %c0_1] : memref<288x1xf32, #tpu.memory_space<vmem>>, vector<288x1xf32>
    %c5 = arith.constant 5 : index
    %c0_2 = arith.constant 0 : index
    %4 = vector.load %arg10[%c5, %c0_2] : memref<336x4xf32, #tpu.memory_space<vmem>>, vector<288x4xf32>
    %c0_3 = arith.constant 0 : index
    %c0_4 = arith.constant 0 : index
    %c0_5 = arith.constant 0 : index
    %5 = vector.load %arg5[%c0_3, %c0_4, %c0_5] : memref<9x4x32xf32, #tpu.memory_space<vmem>>, vector<1x4x32xf32>
    %6 = vector.shape_cast %5 : vector<1x4x32xf32> to vector<4x32xf32>
    %cst = arith.constant dense<0.000000e+00> : vector<288x32xf32>
    %7 = tpu.matmul %4, %6, %cst {dimension_numbers = #tpu.dot_dimension_numbers<[1], [0], [0], [1], [0, 0, 1, 1], [], []>} : vector<288x4xf32>, vector<4x32xf32>, vector<288x32xf32> -> vector<288x32xf32>
    %c6 = arith.constant 6 : index
    %c0_6 = arith.constant 0 : index
    %8 = vector.load %arg10[%c6, %c0_6] : memref<336x4xf32, #tpu.memory_space<vmem>>, vector<288x4xf32>
    %c1 = arith.constant 1 : index
    %c0_7 = arith.constant 0 : index
    %c0_8 = arith.constant 0 : index
    %9 = vector.load %arg5[%c1, %c0_7, %c0_8] : memref<9x4x32xf32, #tpu.memory_space<vmem>>, vector<1x4x32xf32>
    %10 = vector.shape_cast %9 : vector<1x4x32xf32> to vector<4x32xf32>
    %cst_9 = arith.constant dense<0.000000e+00> : vector<288x32xf32>
    %11 = tpu.matmul %8, %10, %cst_9 {dimension_numbers = #tpu.dot_dimension_numbers<[1], [0], [0], [1], [0, 0, 1, 1], [], []>} : vector<288x4xf32>, vector<4x32xf32>, vector<288x32xf32> -> vector<288x32xf32>
    %12 = arith.addf %7, %11 : vector<288x32xf32>
    %c7 = arith.constant 7 : index
    %c0_10 = arith.constant 0 : index
    %13 = vector.load %arg10[%c7, %c0_10] : memref<336x4xf32, #tpu.memory_space<vmem>>, vector<288x4xf32>
    %c2 = arith.constant 2 : index
    %c0_11 = arith.constant 0 : index
    %c0_12 = arith.constant 0 : index
    %14 = vector.load %arg5[%c2, %c0_11, %c0_12] : memref<9x4x32xf32, #tpu.memory_space<vmem>>, vector<1x4x32xf32>
    %15 = vector.shape_cast %14 : vector<1x4x32xf32> to vector<4x32xf32>
    %cst_13 = arith.constant dense<0.000000e+00> : vector<288x32xf32>
    %16 = tpu.matmul %13, %15, %cst_13 {dimension_numbers = #tpu.dot_dimension_numbers<[1], [0], [0], [1], [0, 0, 1, 1], [], []>} : vector<288x4xf32>, vector<4x32xf32>, vector<288x32xf32> -> vector<288x32xf32>
    %17 = arith.addf %12, %16 : vector<288x32xf32>
    %c23 = arith.constant 23 : index
    %c0_14 = arith.constant 0 : index
    %18 = vector.load %arg10[%c23, %c0_14] : memref<336x4xf32, #tpu.memory_space<vmem>>, vector<288x4xf32>
    %c3 = arith.constant 3 : index
    %c0_15 = arith.constant 0 : index
    %c0_16 = arith.constant 0 : index
    %19 = vector.load %arg5[%c3, %c0_15, %c0_16] : memref<9x4x32xf32, #tpu.memory_space<vmem>>, vector<1x4x32xf32>
    %20 = vector.shape_cast %19 : vector<1x4x32xf32> to vector<4x32xf32>
    %cst_17 = arith.constant dense<0.000000e+00> : vector<288x32xf32>
    %21 = tpu.matmul %18, %20, %cst_17 {dimension_numbers = #tpu.dot_dimension_numbers<[1], [0], [0], [1], [0, 0, 1, 1], [], []>} : vector<288x4xf32>, vector<4x32xf32>, vector<288x32xf32> -> vector<288x32xf32>
    %22 = arith.addf %17, %21 : vector<288x32xf32>
    %c24 = arith.constant 24 : index
    %c0_18 = arith.constant 0 : index
    %23 = vector.load %arg10[%c24, %c0_18] : memref<336x4xf32, #tpu.memory_space<vmem>>, vector<288x4xf32>
    %c4 = arith.constant 4 : index
    %c0_19 = arith.constant 0 : index
    %c0_20 = arith.constant 0 : index
    %24 = vector.load %arg5[%c4, %c0_19, %c0_20] : memref<9x4x32xf32, #tpu.memory_space<vmem>>, vector<1x4x32xf32>
    %25 = vector.shape_cast %24 : vector<1x4x32xf32> to vector<4x32xf32>
    %cst_21 = arith.constant dense<0.000000e+00> : vector<288x32xf32>
    %26 = tpu.matmul %23, %25, %cst_21 {dimension_numbers = #tpu.dot_dimension_numbers<[1], [0], [0], [1], [0, 0, 1, 1], [], []>} : vector<288x4xf32>, vector<4x32xf32>, vector<288x32xf32> -> vector<288x32xf32>
    %27 = arith.addf %22, %26 : vector<288x32xf32>
    %c25 = arith.constant 25 : index
    %c0_22 = arith.constant 0 : index
    %28 = vector.load %arg10[%c25, %c0_22] : memref<336x4xf32, #tpu.memory_space<vmem>>, vector<288x4xf32>
    %c5_23 = arith.constant 5 : index
    %c0_24 = arith.constant 0 : index
    %c0_25 = arith.constant 0 : index
    %29 = vector.load %arg5[%c5_23, %c0_24, %c0_25] : memref<9x4x32xf32, #tpu.memory_space<vmem>>, vector<1x4x32xf32>
    %30 = vector.shape_cast %29 : vector<1x4x32xf32> to vector<4x32xf32>
    %cst_26 = arith.constant dense<0.000000e+00> : vector<288x32xf32>
    %31 = tpu.matmul %28, %30, %cst_26 {dimension_numbers = #tpu.dot_dimension_numbers<[1], [0], [0], [1], [0, 0, 1, 1], [], []>} : vector<288x4xf32>, vector<4x32xf32>, vector<288x32xf32> -> vector<288x32xf32>
    %32 = arith.addf %27, %31 : vector<288x32xf32>
    %c41 = arith.constant 41 : index
    %c0_27 = arith.constant 0 : index
    %33 = vector.load %arg10[%c41, %c0_27] : memref<336x4xf32, #tpu.memory_space<vmem>>, vector<288x4xf32>
    %c6_28 = arith.constant 6 : index
    %c0_29 = arith.constant 0 : index
    %c0_30 = arith.constant 0 : index
    %34 = vector.load %arg5[%c6_28, %c0_29, %c0_30] : memref<9x4x32xf32, #tpu.memory_space<vmem>>, vector<1x4x32xf32>
    %35 = vector.shape_cast %34 : vector<1x4x32xf32> to vector<4x32xf32>
    %cst_31 = arith.constant dense<0.000000e+00> : vector<288x32xf32>
    %36 = tpu.matmul %33, %35, %cst_31 {dimension_numbers = #tpu.dot_dimension_numbers<[1], [0], [0], [1], [0, 0, 1, 1], [], []>} : vector<288x4xf32>, vector<4x32xf32>, vector<288x32xf32> -> vector<288x32xf32>
    %37 = arith.addf %32, %36 : vector<288x32xf32>
    %c42 = arith.constant 42 : index
    %c0_32 = arith.constant 0 : index
    %38 = vector.load %arg10[%c42, %c0_32] : memref<336x4xf32, #tpu.memory_space<vmem>>, vector<288x4xf32>
    %c7_33 = arith.constant 7 : index
    %c0_34 = arith.constant 0 : index
    %c0_35 = arith.constant 0 : index
    %39 = vector.load %arg5[%c7_33, %c0_34, %c0_35] : memref<9x4x32xf32, #tpu.memory_space<vmem>>, vector<1x4x32xf32>
    %40 = vector.shape_cast %39 : vector<1x4x32xf32> to vector<4x32xf32>
    %cst_36 = arith.constant dense<0.000000e+00> : vector<288x32xf32>
    %41 = tpu.matmul %38, %40, %cst_36 {dimension_numbers = #tpu.dot_dimension_numbers<[1], [0], [0], [1], [0, 0, 1, 1], [], []>} : vector<288x4xf32>, vector<4x32xf32>, vector<288x32xf32> -> vector<288x32xf32>
    %42 = arith.addf %37, %41 : vector<288x32xf32>
    %c43 = arith.constant 43 : index
    %c0_37 = arith.constant 0 : index
    %43 = vector.load %arg10[%c43, %c0_37] : memref<336x4xf32, #tpu.memory_space<vmem>>, vector<288x4xf32>
    %c8 = arith.constant 8 : index
    %c0_38 = arith.constant 0 : index
    %c0_39 = arith.constant 0 : index
    %44 = vector.load %arg5[%c8, %c0_38, %c0_39] : memref<9x4x32xf32, #tpu.memory_space<vmem>>, vector<1x4x32xf32>
    %45 = vector.shape_cast %44 : vector<1x4x32xf32> to vector<4x32xf32>
    %cst_40 = arith.constant dense<0.000000e+00> : vector<288x32xf32>
    %46 = tpu.matmul %43, %45, %cst_40 {dimension_numbers = #tpu.dot_dimension_numbers<[1], [0], [0], [1], [0, 0, 1, 1], [], []>} : vector<288x4xf32>, vector<4x32xf32>, vector<288x32xf32> -> vector<288x32xf32>
    %47 = arith.addf %42, %46 : vector<288x32xf32>
    %48 = arith.index_cast %arg1 : i32 to index
    %c0_41 = arith.constant 0 : index
    %49 = vector.load %arg4[%48, %c0_41] : memref<10x32xf32, #tpu.memory_space<vmem>>, vector<1x32xf32>
    %50 = vector.broadcast %49 : vector<1x32xf32> to vector<288x32xf32>
    %51 = arith.addf %47, %50 : vector<288x32xf32>
    %cst_42 = arith.constant 0.000000e+00 : f32
    %52 = vector.broadcast %cst_42 : f32 to vector<288x32xf32>
    %53 = arith.subf %52, %51 : vector<288x32xf32>
    %54 = math.exp %53 : vector<288x32xf32>
    %cst_43 = arith.constant 1.000000e+00 : f32
    %55 = vector.broadcast %cst_43 : f32 to vector<288x32xf32>
    %56 = arith.addf %55, %54 : vector<288x32xf32>
    %cst_44 = arith.constant 1.000000e+00 : f32
    %57 = vector.broadcast %cst_44 : f32 to vector<288x32xf32>
    %58 = arith.divf %57, %56 : vector<288x32xf32>
    %59 = arith.mulf %51, %58 : vector<288x32xf32>
    %60 = vector.broadcast %3 : vector<288x1xf32> to vector<288x32xf32>
    %61 = arith.mulf %59, %60 : vector<288x32xf32>
    %c24_45 = arith.constant 24 : index
    %c0_46 = arith.constant 0 : index
    %62 = vector.load %arg11[%c24_45, %c0_46] : memref<336x32xf32, #tpu.memory_space<vmem>>, vector<288x32xf32>
    tpu.vector_store %arg11[%c24_45, %c0_46], %61 {strides = array<i32>} : memref<336x32xf32, #tpu.memory_space<vmem>>, vector<288x32xf32>,
    %c5_47 = arith.constant 5 : index
    %c0_48 = arith.constant 0 : index
    %63 = vector.load %arg11[%c5_47, %c0_48] : memref<336x32xf32, #tpu.memory_space<vmem>>, vector<288x32xf32>
    %c0_49 = arith.constant 0 : index
    %c0_50 = arith.constant 0 : index
    %c0_51 = arith.constant 0 : index
    %64 = vector.load %arg6[%c0_49, %c0_50, %c0_51] : memref<9x32x4xf32, #tpu.memory_space<vmem>>, vector<1x32x4xf32>
    %65 = vector.shape_cast %64 : vector<1x32x4xf32> to vector<32x4xf32>
    %cst_52 = arith.constant dense<0.000000e+00> : vector<288x4xf32>
    %66 = tpu.matmul %63, %65, %cst_52 {dimension_numbers = #tpu.dot_dimension_numbers<[1], [0], [0], [1], [0, 0, 1, 1], [], []>} : vector<288x32xf32>, vector<32x4xf32>, vector<288x4xf32> -> vector<288x4xf32>
    %c6_53 = arith.constant 6 : index
    %c0_54 = arith.constant 0 : index
    %67 = vector.load %arg11[%c6_53, %c0_54] : memref<336x32xf32, #tpu.memory_space<vmem>>, vector<288x32xf32>
    %c1_55 = arith.constant 1 : index
    %c0_56 = arith.constant 0 : index
    %c0_57 = arith.constant 0 : index
    %68 = vector.load %arg6[%c1_55, %c0_56, %c0_57] : memref<9x32x4xf32, #tpu.memory_space<vmem>>, vector<1x32x4xf32>
    %69 = vector.shape_cast %68 : vector<1x32x4xf32> to vector<32x4xf32>
    %cst_58 = arith.constant dense<0.000000e+00> : vector<288x4xf32>
    %70 = tpu.matmul %67, %69, %cst_58 {dimension_numbers = #tpu.dot_dimension_numbers<[1], [0], [0], [1], [0, 0, 1, 1], [], []>} : vector<288x32xf32>, vector<32x4xf32>, vector<288x4xf32> -> vector<288x4xf32>
    %71 = arith.addf %66, %70 : vector<288x4xf32>
    %c7_59 = arith.constant 7 : index
    %c0_60 = arith.constant 0 : index
    %72 = vector.load %arg11[%c7_59, %c0_60] : memref<336x32xf32, #tpu.memory_space<vmem>>, vector<288x32xf32>
    %c2_61 = arith.constant 2 : index
    %c0_62 = arith.constant 0 : index
    %c0_63 = arith.constant 0 : index
    %73 = vector.load %arg6[%c2_61, %c0_62, %c0_63] : memref<9x32x4xf32, #tpu.memory_space<vmem>>, vector<1x32x4xf32>
    %74 = vector.shape_cast %73 : vector<1x32x4xf32> to vector<32x4xf32>
    %cst_64 = arith.constant dense<0.000000e+00> : vector<288x4xf32>
    %75 = tpu.matmul %72, %74, %cst_64 {dimension_numbers = #tpu.dot_dimension_numbers<[1], [0], [0], [1], [0, 0, 1, 1], [], []>} : vector<288x32xf32>, vector<32x4xf32>, vector<288x4xf32> -> vector<288x4xf32>
    %76 = arith.addf %71, %75 : vector<288x4xf32>
    %c23_65 = arith.constant 23 : index
    %c0_66 = arith.constant 0 : index
    %77 = vector.load %arg11[%c23_65, %c0_66] : memref<336x32xf32, #tpu.memory_space<vmem>>, vector<288x32xf32>
    %c3_67 = arith.constant 3 : index
    %c0_68 = arith.constant 0 : index
    %c0_69 = arith.constant 0 : index
    %78 = vector.load %arg6[%c3_67, %c0_68, %c0_69] : memref<9x32x4xf32, #tpu.memory_space<vmem>>, vector<1x32x4xf32>
    %79 = vector.shape_cast %78 : vector<1x32x4xf32> to vector<32x4xf32>
    %cst_70 = arith.constant dense<0.000000e+00> : vector<288x4xf32>
    %80 = tpu.matmul %77, %79, %cst_70 {dimension_numbers = #tpu.dot_dimension_numbers<[1], [0], [0], [1], [0, 0, 1, 1], [], []>} : vector<288x32xf32>, vector<32x4xf32>, vector<288x4xf32> -> vector<288x4xf32>
    %81 = arith.addf %76, %80 : vector<288x4xf32>
    %c24_71 = arith.constant 24 : index
    %c0_72 = arith.constant 0 : index
    %82 = vector.load %arg11[%c24_71, %c0_72] : memref<336x32xf32, #tpu.memory_space<vmem>>, vector<288x32xf32>
    %c4_73 = arith.constant 4 : index
    %c0_74 = arith.constant 0 : index
    %c0_75 = arith.constant 0 : index
    %83 = vector.load %arg6[%c4_73, %c0_74, %c0_75] : memref<9x32x4xf32, #tpu.memory_space<vmem>>, vector<1x32x4xf32>
    %84 = vector.shape_cast %83 : vector<1x32x4xf32> to vector<32x4xf32>
    %cst_76 = arith.constant dense<0.000000e+00> : vector<288x4xf32>
    %85 = tpu.matmul %82, %84, %cst_76 {dimension_numbers = #tpu.dot_dimension_numbers<[1], [0], [0], [1], [0, 0, 1, 1], [], []>} : vector<288x32xf32>, vector<32x4xf32>, vector<288x4xf32> -> vector<288x4xf32>
    %86 = arith.addf %81, %85 : vector<288x4xf32>
    %c25_77 = arith.constant 25 : index
    %c0_78 = arith.constant 0 : index
    %87 = vector.load %arg11[%c25_77, %c0_78] : memref<336x32xf32, #tpu.memory_space<vmem>>, vector<288x32xf32>
    %c5_79 = arith.constant 5 : index
    %c0_80 = arith.constant 0 : index
    %c0_81 = arith.constant 0 : index
    %88 = vector.load %arg6[%c5_79, %c0_80, %c0_81] : memref<9x32x4xf32, #tpu.memory_space<vmem>>, vector<1x32x4xf32>
    %89 = vector.shape_cast %88 : vector<1x32x4xf32> to vector<32x4xf32>
    %cst_82 = arith.constant dense<0.000000e+00> : vector<288x4xf32>
    %90 = tpu.matmul %87, %89, %cst_82 {dimension_numbers = #tpu.dot_dimension_numbers<[1], [0], [0], [1], [0, 0, 1, 1], [], []>} : vector<288x32xf32>, vector<32x4xf32>, vector<288x4xf32> -> vector<288x4xf32>
    %91 = arith.addf %86, %90 : vector<288x4xf32>
    %c41_83 = arith.constant 41 : index
    %c0_84 = arith.constant 0 : index
    %92 = vector.load %arg11[%c41_83, %c0_84] : memref<336x32xf32, #tpu.memory_space<vmem>>, vector<288x32xf32>
    %c6_85 = arith.constant 6 : index
    %c0_86 = arith.constant 0 : index
    %c0_87 = arith.constant 0 : index
    %93 = vector.load %arg6[%c6_85, %c0_86, %c0_87] : memref<9x32x4xf32, #tpu.memory_space<vmem>>, vector<1x32x4xf32>
    %94 = vector.shape_cast %93 : vector<1x32x4xf32> to vector<32x4xf32>
    %cst_88 = arith.constant dense<0.000000e+00> : vector<288x4xf32>
    %95 = tpu.matmul %92, %94, %cst_88 {dimension_numbers = #tpu.dot_dimension_numbers<[1], [0], [0], [1], [0, 0, 1, 1], [], []>} : vector<288x32xf32>, vector<32x4xf32>, vector<288x4xf32> -> vector<288x4xf32>
    %96 = arith.addf %91, %95 : vector<288x4xf32>
    %c42_89 = arith.constant 42 : index
    %c0_90 = arith.constant 0 : index
    %97 = vector.load %arg11[%c42_89, %c0_90] : memref<336x32xf32, #tpu.memory_space<vmem>>, vector<288x32xf32>
    %c7_91 = arith.constant 7 : index
    %c0_92 = arith.constant 0 : index
    %c0_93 = arith.constant 0 : index
    %98 = vector.load %arg6[%c7_91, %c0_92, %c0_93] : memref<9x32x4xf32, #tpu.memory_space<vmem>>, vector<1x32x4xf32>
    %99 = vector.shape_cast %98 : vector<1x32x4xf32> to vector<32x4xf32>
    %cst_94 = arith.constant dense<0.000000e+00> : vector<288x4xf32>
    %100 = tpu.matmul %97, %99, %cst_94 {dimension_numbers = #tpu.dot_dimension_numbers<[1], [0], [0], [1], [0, 0, 1, 1], [], []>} : vector<288x32xf32>, vector<32x4xf32>, vector<288x4xf32> -> vector<288x4xf32>
    %101 = arith.addf %96, %100 : vector<288x4xf32>
    %c43_95 = arith.constant 43 : index
    %c0_96 = arith.constant 0 : index
    %102 = vector.load %arg11[%c43_95, %c0_96] : memref<336x32xf32, #tpu.memory_space<vmem>>, vector<288x32xf32>
    %c8_97 = arith.constant 8 : index
    %c0_98 = arith.constant 0 : index
    %c0_99 = arith.constant 0 : index
    %103 = vector.load %arg6[%c8_97, %c0_98, %c0_99] : memref<9x32x4xf32, #tpu.memory_space<vmem>>, vector<1x32x4xf32>
    %104 = vector.shape_cast %103 : vector<1x32x4xf32> to vector<32x4xf32>
    %cst_100 = arith.constant dense<0.000000e+00> : vector<288x4xf32>
    %105 = tpu.matmul %102, %104, %cst_100 {dimension_numbers = #tpu.dot_dimension_numbers<[1], [0], [0], [1], [0, 0, 1, 1], [], []>} : vector<288x32xf32>, vector<32x4xf32>, vector<288x4xf32> -> vector<288x4xf32>
    %106 = arith.addf %101, %105 : vector<288x4xf32>
    %c0_101 = arith.constant 0 : index
    %c0_102 = arith.constant 0 : index
    %107 = vector.load %arg7[%c0_101, %c0_102] : memref<1x4xf32, #tpu.memory_space<vmem>>, vector<1x4xf32>
    %108 = vector.broadcast %107 : vector<1x4xf32> to vector<288x4xf32>
    %109 = arith.addf %106, %108 : vector<288x4xf32>
    %110 = arith.index_cast %arg1 : i32 to index
    %c0_103 = arith.constant 0 : index
    %111 = memref.load %arg3[%110, %c0_103] : memref<10x4xf32, #tpu.memory_space<smem>>
    %112 = arith.index_cast %arg1 : i32 to index
    %c1_104 = arith.constant 1 : index
    %113 = memref.load %arg3[%112, %c1_104] : memref<10x4xf32, #tpu.memory_space<smem>>
    %c24_105 = arith.constant 24 : index
    %c0_106 = arith.constant 0 : index
    %114 = vector.load %arg10[%c24_105, %c0_106] : memref<336x4xf32, #tpu.memory_space<vmem>>, vector<288x4xf32>
    %115 = vector.broadcast %111 : f32 to vector<288x4xf32>
    %116 = arith.mulf %115, %114 : vector<288x4xf32>
    %117 = vector.broadcast %113 : f32 to vector<288x4xf32>
    %118 = arith.mulf %117, %109 : vector<288x4xf32>
    %119 = arith.addf %116, %118 : vector<288x4xf32>
    %120 = vector.broadcast %3 : vector<288x1xf32> to vector<288x4xf32>
    %121 = arith.mulf %119, %120 : vector<288x4xf32>
    %c24_107 = arith.constant 24 : index
    %c0_108 = arith.constant 0 : index
    %122 = vector.load %arg10[%c24_107, %c0_108] : memref<336x4xf32, #tpu.memory_space<vmem>>, vector<288x4xf32>
    tpu.vector_store %arg10[%c24_107, %c0_108], %121 {strides = array<i32>} : memref<336x4xf32, #tpu.memory_space<vmem>>, vector<288x4xf32>,
    %c9_i32 = arith.constant 9 : i32
    %123 = arith.cmpi eq, %arg1, %c9_i32 : i32
    %124 = arith.extui %123 : i1 to i32
    %c0_i32_109 = arith.constant 0 : i32
    %125 = arith.cmpi ne, %124, %c0_i32_109 : i32
    scf.if %125 {
      %c0_110 = arith.constant 0 : index
      %c0_111 = arith.constant 0 : index
      %126 = vector.load %arg10[%c0_110, %c0_111] : memref<336x4xf32, #tpu.memory_space<vmem>>, vector<336x4xf32>
      %cst_112 = arith.constant -1.000000e+00 : f32
      %cst_113 = arith.constant 1.000000e+00 : f32
      %127 = vector.broadcast %cst_112 : f32 to vector<336x4xf32>
      %128 = arith.maximumf %127, %126 : vector<336x4xf32>
      %129 = vector.broadcast %cst_113 : f32 to vector<336x4xf32>
      %130 = arith.minimumf %129, %128 : vector<336x4xf32>
      %c0_114 = arith.constant 0 : index
      %c0_115 = arith.constant 0 : index
      %c0_116 = arith.constant 0 : index
      %131 = vector.load %arg9[%c0_114, %c0_115, %c0_116] : memref<1x336x4xf32, #tpu.memory_space<vmem>>, vector<1x336x4xf32>
      %132 = vector.shape_cast %131 : vector<1x336x4xf32> to vector<336x4xf32>
      %133 = vector.shape_cast %130 : vector<336x4xf32> to vector<1x336x4xf32>
      tpu.vector_store %arg9[%c0_114, %c0_115, %c0_116], %133 {strides = array<i32>} : memref<1x336x4xf32, #tpu.memory_space<vmem>>, vector<1x336x4xf32>,
    } else {
    }
    return
  }
  func.func @transform_0(%arg0: i32, %arg1: i32) -> (i32, i32, i32) {
    %c0_i32 = arith.constant 0 : i32
    %c0_i32_0 = arith.constant 0 : i32
    %c0_i32_1 = arith.constant 0 : i32
    return %arg0, %c0_i32, %c0_i32_0 : i32, i32, i32
  }
  func.func @transform_1(%arg0: i32, %arg1: i32) -> (i32, i32) {
    %c0_i32 = arith.constant 0 : i32
    %c0_i32_0 = arith.constant 0 : i32
    %c0_i32_1 = arith.constant 0 : i32
    return %c0_i32, %c0_i32_0 : i32, i32
  }
  func.func @transform_2(%arg0: i32, %arg1: i32) -> (i32, i32) {
    %c0_i32 = arith.constant 0 : i32
    %c0_i32_0 = arith.constant 0 : i32
    %c0_i32_1 = arith.constant 0 : i32
    return %c0_i32, %c0_i32_0 : i32, i32
  }
  func.func @transform_3(%arg0: i32, %arg1: i32) -> (i32, i32, i32) {
    %c0_i32 = arith.constant 0 : i32
    %c0_i32_0 = arith.constant 0 : i32
    %c0_i32_1 = arith.constant 0 : i32
    %c0_i32_2 = arith.constant 0 : i32
    return %c0_i32, %c0_i32_0, %c0_i32_1 : i32, i32, i32
  }
  func.func @transform_4(%arg0: i32, %arg1: i32) -> (i32, i32, i32) {
    %c0_i32 = arith.constant 0 : i32
    %c0_i32_0 = arith.constant 0 : i32
    %c0_i32_1 = arith.constant 0 : i32
    %c0_i32_2 = arith.constant 0 : i32
    return %c0_i32, %c0_i32_0, %c0_i32_1 : i32, i32, i32
  }
  func.func @transform_5(%arg0: i32, %arg1: i32) -> (i32, i32) {
    %c0_i32 = arith.constant 0 : i32
    %c0_i32_0 = arith.constant 0 : i32
    %c0_i32_1 = arith.constant 0 : i32
    return %c0_i32, %c0_i32_0 : i32, i32
  }
  func.func @transform_6(%arg0: i32, %arg1: i32) -> (i32, i32) {
    %c0_i32 = arith.constant 0 : i32
    %c0_i32_0 = arith.constant 0 : i32
    %c0_i32_1 = arith.constant 0 : i32
    return %c0_i32, %c0_i32_0 : i32, i32
  }
  func.func @transform_7(%arg0: i32, %arg1: i32) -> (i32, i32, i32) {
    %c0_i32 = arith.constant 0 : i32
    %c0_i32_0 = arith.constant 0 : i32
    %c0_i32_1 = arith.constant 0 : i32
    return %arg0, %c0_i32, %c0_i32_0 : i32, i32, i32
  }
}

</mosaic_0001>

<llo_original>
// kernel: _lambda_.2
$region0: #{_lambda_.2}
  #allocation0 [shape = 'u32[]', space=smem, size = 0x4, offset = 0x4, fixed_abs, tag = 'smem constant byte address 0x4 - core index']
  #allocation1 [shape = 'u32[144,128]{1,0:T(1,128)}', space=vmem, size = 0x12000, scoped, tag = 'internal scratch']
  %s0 = inlined_call_operand.hbm [shape: f32[10,32], index: 0, kind: input, shape index: {}]
  %s1 = inlined_call_operand.hbm [shape: f32[32,32], index: 1, kind: input, shape index: {}]
  %s2 = inlined_call_operand.vmem [shape: f32[1,32], index: 2, kind: input, shape index: {}]
  %s3 = inlined_call_operand.vmem [shape: f32[1,32], index: 3, kind: input, shape index: {}]
  %s4 = inlined_call_operand.vmem [shape: f32[10,32], index: 4, kind: output, shape index: {}]
  %s5 = sld [smem:[#allocation0]]
  $region34: #{_lambda_.2} parent=0
    _
  %s7 = ssub.s32 1, %s5
  %s8 = scalar_select 0, %s7, %s5
  $region1: #{_lambda_.2} parent=0
    #allocation2 [shape = 'u8[8192]{0}', space=vmem, size = 0x2000, scoped, tag = 'input window, operand 0, single buffered']
    #allocation3 [shape = 's32[1]{0}', space=sflag, size = 0x4, scoped, tag = 'scoped memory for _lambda_.2']
    #allocation4 [shape = 'u8[16384]{0}', space=vmem, size = 0x4000, scoped, tag = 'input window, operand 1, single buffered']
    #allocation5 [shape = 's32[1]{0}', space=sflag, size = 0x4, scoped, tag = 'scoped memory for _lambda_.2']
    %9 = vsyncpa [#allocation3], 0
    %10 = vsyncpa [#allocation5], 0
    // Predicated region
    $region2: #{_lambda_.2} parent=1 // pred_check
      _
    $region3: #{_lambda_.2} parent=1 // pred_check_branch
      %12 = sbr.rel (0) target = $region5
    $region4: #{_lambda_.2} parent=1 // pred_region
      %s14 = ssub.s32 256, 256
      %15 = vsyncadd [#allocation3], %s14
      %s16 = sshll.u32 [#allocation2], 4
      %s17 = int_to_ptr.vmem [resolvable:$true] %s16
      %22 = dma.hbm_to_vmem [thread:$0]  %s0, 256, %s17, [#allocation3], 128, 128, 8
    $region5: #{_lambda_.2} parent=1 // pred_fallthru
      _
    // Predicated region
    $region6: #{_lambda_.2} parent=1 // pred_check
      _
    $region7: #{_lambda_.2} parent=1 // pred_check_branch
      %24 = sbr.rel (0) target = $region9
    $region8: #{_lambda_.2} parent=1 // pred_region
      %s26 = ssub.s32 512, 512
      %27 = vsyncadd [#allocation5], %s26
      %s28 = sshll.u32 [#allocation4], 4
      %s29 = int_to_ptr.vmem [resolvable:$true] %s28
      %34 = dma.hbm_to_vmem [thread:$0]  %s1, 512, %s29, [#allocation5], 128, 128, 8
    $region9: #{_lambda_.2} parent=1 // pred_fallthru
      _
    // Predicated region
    $region10: #{_lambda_.2} parent=1 // pred_check
      _
    $region11: #{_lambda_.2} parent=1 // pred_check_branch
      %36 = sbr.rel (0) target = $region13
    $region12: #{_lambda_.2} parent=1 // pred_region
      _
    $region13: #{_lambda_.2} parent=1 // pred_fallthru
      _
    // Predicated region
    $region14: #{_lambda_.2} parent=1 // pred_check
      _
    $region15: #{_lambda_.2} parent=1 // pred_check_branch
      %38 = sbr.rel (0) target = $region17
    $region16: #{_lambda_.2} parent=1 // pred_region
      _
    $region17: #{_lambda_.2} parent=1 // pred_fallthru
      _
    // Predicated region
    $region18: #{_lambda_.2} parent=1 // pred_check
      _
    $region19: #{_lambda_.2} parent=1 // pred_check_branch
      %40 = sbr.rel (0) target = $region21
    $region20: #{_lambda_.2} parent=1 // pred_region
      %41 = dma.done [#allocation3], 256
    $region21: #{_lambda_.2} parent=1 // pred_fallthru
      _
    // Predicated region
    $region22: #{_lambda_.2} parent=1 // pred_check
      _
    $region23: #{_lambda_.2} parent=1 // pred_check_branch
      %43 = sbr.rel (0) target = $region25
    $region24: #{_lambda_.2} parent=1 // pred_region
      %44 = dma.done [#allocation5], 512
    $region25: #{_lambda_.2} parent=1 // pred_fallthru
      _
    %v45 = vld [vmem:[#allocation2] sm:$0xff]
    %v46 = vld [vmem:[#allocation2 + $0x8] sm:$0x3]
    %v47 = vld [vmem:[#allocation4] sm:$0xff]
    %v48 = vld [vmem:[#allocation4 + $0x8] sm:$0xff]
    %v49 = vld [vmem:[#allocation4 + $0x10] sm:$0xff]
    %v50 = vld [vmem:[#allocation4 + $0x18] sm:$0xff]
    %v51 = vld [vmem:[%s2] sm:$0x1]
    %v53 = vlaneseq
    %v54 = vshrl.u32 %v53, 7
    %v55 = vsub.s32 0, %v54
    %v56 = vrot.slane %v51, %v55
    %vm58 = vcmask 261120
    %v60 = vsel %vm58, %v45, 0
    %v63 = vsel %vm58, %v46, 0
    %65 = vmatprep.subr.mxu0 0.0
    %66 = vmatpush1.msra.mxu0 0.0
    %67 = vmatprep.subr.mxu0 0.0
    %68 = vmatpush1.msra.mxu0 0.0
    %69 = vmatprep.subr.mxu0 0.0
    %70 = vmatpush1.msra.mxu0 0.0
    %71 = vmatprep.subr.mxu0 0.0
    %72 = vmatpush1.msra.mxu0 0.0
    %73 = vmatprep.subr.mxu0 0.0
    %74 = vmatpush1.msra.mxu0 0.0
    %75 = vmatprep.subr.mxu0 0.0
    %76 = vmatpush1.msra.mxu0 0.0
    %77 = vmatprep.subr.mxu0 0.0
    %78 = vmatpush1.msra.mxu0 0.0
    %79 = vmatprep.subr.mxu0 0.0
    %80 = vmatpush1.msra.mxu0 0.0
    %81 = vmatprep.subr.mxu0 0.0
    %82 = vmatpush1.msra.mxu0 0.0
    %83 = vmatprep.subr.mxu0 0.0
    %84 = vmatpush1.msra.mxu0 0.0
    %85 = vmatprep.subr.mxu0 0.0
    %86 = vmatpush1.msra.mxu0 0.0
    %87 = vmatprep.subr.mxu0 0.0
    %88 = vmatpush1.msra.mxu0 0.0
    %89 = vmatprep.subr.mxu0 0.0
    %90 = vmatpush1.msra.mxu0 %v50
    %91 = vmatprep.subr.mxu0 0.0
    %92 = vmatpush1.msra.mxu0 %v49
    %93 = vmatprep.subr.mxu0 0.0
    %94 = vmatpush1.msra.mxu0 %v48
    %95 = vmatprep.subr.mxu0 0.0
    %96 = vmatpush1.msra.mxu0 %v47
    %97 = vmatprep.subr.mxu0 0.0
    %98 = vmatpush2.msra.mxu0 0.0
    %99 = vmatprep.subr.mxu0 0.0
    %100 = vmatpush2.msra.mxu0 0.0
    %101 = vmatprep.subr.mxu0 0.0
    %102 = vmatpush2.msra.mxu0 0.0
    %103 = vmatprep.subr.mxu0 0.0
    %104 = vmatpush2.msra.mxu0 0.0
    %105 = vmatprep.subr.mxu0 0.0
    %106 = vmatpush2.msra.mxu0 0.0
    %107 = vmatprep.subr.mxu0 0.0
    %108 = vmatpush2.msra.mxu0 0.0
    %109 = vmatprep.subr.mxu0 0.0
    %110 = vmatpush2.msra.mxu0 0.0
    %111 = vmatprep.subr.mxu0 0.0
    %112 = vmatpush2.msra.mxu0 0.0
    %113 = vmatprep.subr.mxu0 0.0
    %114 = vmatpush2.msra.mxu0 0.0
    %115 = vmatprep.subr.mxu0 0.0
    %116 = vmatpush2.msra.mxu0 0.0
    %117 = vmatprep.subr.mxu0 0.0
    %118 = vmatpush2.msra.mxu0 0.0
    %119 = vmatprep.subr.mxu0 0.0
    %120 = vmatpush2.msra.mxu0 0.0
    %121 = vmatprep.subr.mxu0 0.0
    %122 = vmatpush2.msra.mxu0 0.0
    %123 = vmatprep.subr.mxu0 0.0
    %124 = vmatpush2.msra.mxu0 0.0
    %125 = vmatprep.subr.mxu0 0.0
    %126 = vmatpush2.msra.mxu0 0.0
    %127 = vmatprep.subr.mxu0 0.0
    %128 = vmatpush2.msra.mxu0 0.0
    %129 = vmatprep.mubr.f32.mxu0 0.0
    %130 = vmatmul.mubr.f32.gmra.mxu0 %v60
    %v131 = vpop.f32.mrf.mxu0
    %v132 = vadd.f32 %v56, %v131
    %v133 = vpop.f32.mrf.mxu0
    %134 = vmatprep.mubr.f32.mxu0 0.0
    %135 = vmatmul.mubr.f32.gmra.mxu0 %v63
    %v136 = vpop.f32.mrf.mxu0
    %v137 = vadd.f32 %v56, %v136
    %v138 = vpop.f32.mrf.mxu0
    %139 = vdwg.mxu0
    %v140 = vsub.f32 0.0, %v132
    %v141 = vsub.f32 0.0, %v137
    %v142 = vmul.f32 %v140, 1.442695
    %v143 = vpow.pop %v142
    %v144 = vmul.f32 %v141, 1.442695
    %v145 = vpow.pop %v144
    %v146 = vadd.f32 %v143, 1.0
    %v147 = vadd.f32 %v145, 1.0
    %v148 = vrcp.pop %v146
    %v149 = vmul.f32 1.0, %v148
    %v150 = vrcp.pop %v147
    %v151 = vmul.f32 1.0, %v150
    %v152 = vmul.f32 %v132, %v149
    %v153 = vmul.f32 %v137, %v151
    %v154 = vld [vmem:[%s3] sm:$0x1]
    %v156 = vlaneseq
    %v157 = vshrl.u32 %v156, 7
    %v158 = vsub.s32 0, %v157
    %v159 = vrot.slane %v154, %v158
    %v161 = vadd.f32 %v152, %v159
    %v162 = vadd.f32 %v153, %v159
    %163 = vst.msk [vmem:[%s4] sm:$0xff] %vm58, %v161
    %vm164 = vcmask 254976
    %165 = vst.msk [vmem:[%s4 + $0x8] sm:$0x3] %vm164, %v162
    // Predicated region
    $region26: #{_lambda_.2} parent=1 // pred_check
      _
    $region27: #{_lambda_.2} parent=1 // pred_check_branch
      %167 = sbr.rel (0) target = $region29
    $region28: #{_lambda_.2} parent=1 // pred_region
      _
    $region29: #{_lambda_.2} parent=1 // pred_fallthru
      _
    // Predicated region
    $region30: #{_lambda_.2} parent=1 // pred_check
      _
    $region31: #{_lambda_.2} parent=1 // pred_check_branch
      %169 = sbr.rel (0) target = $region33
    $region32: #{_lambda_.2} parent=1 // pred_region
      _
    $region33: #{_lambda_.2} parent=1 // pred_fallthru
      _
    %170 = vsyncpa [#allocation3], 1
    %171 = vsyncpa [#allocation5], 1

// kernel: _lambda_.3
$region0: #{_lambda_.3}
  #allocation0 [shape = 'u32[]', space=smem, size = 0x4, offset = 0x4, fixed_abs, tag = 'smem constant byte address 0x4 - core index']
  #allocation1 [shape = 'u32[144,128]{1,0:T(1,128)}', space=vmem, size = 0x12000, scoped, tag = 'internal scratch']
  #allocation2 [shape = 'f32[336,4]{1,0:T(8,128)}', space=vmem, size = 0x2a000, scoped, tag = 'scratch operand']
  #allocation3 [shape = 'f32[336,32]{1,0:T(8,128)}', space=vmem, size = 0x2a000, scoped, tag = 'scratch operand']
  %s0 = inlined_call_operand.vmem [shape: f32[2,336,4], index: 0, kind: input, shape index: {}, may-alias: {0,7}]
  %s1 = inlined_call_operand.vmem [shape: f32[10,4], index: 1, kind: input, shape index: {}]
  %s2 = inlined_call_operand.vmem [shape: f32[10,32], index: 2, kind: input, shape index: {}]
  %s3 = inlined_call_operand.vmem [shape: f32[9,4,32], index: 3, kind: input, shape index: {}]
  %s4 = inlined_call_operand.vmem [shape: f32[9,32,4], index: 4, kind: input, shape index: {}]
  %s5 = inlined_call_operand.vmem [shape: f32[1,4], index: 5, kind: input, shape index: {}]
  %s6 = inlined_call_operand.vmem [shape: f32[288,1], index: 6, kind: input, shape index: {}]
  %s7 = inlined_call_operand.vmem [shape: f32[2,336,4], index: 7, kind: output, shape index: {}, may-alias: {0,7}]
  %s8 = sld [smem:[#allocation0]]
  $region73: #{_lambda_.3} parent=0
    _
  %s10 = ssub.s32 1, %s8
  %s11 = scalar_select 0, %s10, %s8
  $region1: #{_lambda_.3} parent=0
    #allocation4 [shape = 'u8[8192]{0}', space=smem, size = 0x2000, scoped, tag = 'input window, operand 1, single buffered']
    #allocation5 [shape = 's32[2]{0}', space=sflag, size = 0x8, scoped, tag = 'scoped memory for _lambda_.3']
    %12 = vsyncpa [#allocation5], 0
    loop: start=0, step=1, limit=22
    $region2: #{_lambda_.3} parent=1 // loop_pre_header
      _
    $region3: #{_lambda_.3} parent=1 // loop_header
      %s14 = sphi 0, %s18
      %p15 = scmp.ge.s32.totalorder %s14, 22
      %s21 = sphi 0, %s33
      %s22 = sphi 0, %s29
      %s23 = sphi 0, %s21
      %s24 = sphi 0, %s22
      %s25 = sphi 0, %s23
      %s26 = sphi 0, %s24
      %s36 = sphi 0, %s38
      %s39 = sphi 0, %s36
      %s40 = sphi 0, %s39
      %s56 = sphi 0, %s40
      %s60 = sphi 0, %s60
      %s62 = sphi 0, %s60
      %s63 = sphi 0, %s62
      %s77 = sphi 0, %s63
      %s81 = sphi 0, %s81
      %s83 = sphi 0, %s81
      %s84 = sphi 0, %s83
      %s98 = sphi 0, %s84
      %s102 = sphi 0, %s102
      %s104 = sphi 0, %s102
      %s105 = sphi 0, %s104
      %s119 = sphi 0, %s105
      %s123 = sphi 0, %s123
      %s125 = sphi 0, %s123
      %s126 = sphi 0, %s125
      %s140 = sphi 0, %s126
      %s144 = sphi 0, %s144
      %s146 = sphi 0, %s144
      %s147 = sphi 0, %s146
      %s161 = sphi 0, %s147
      %s165 = sphi 0, %s165
      %s167 = sphi 0, %s165
      %s168 = sphi 0, %s167
      %s182 = sphi 0, %s168
      %s188 = sphi 0, %s190
      %s191 = sphi 0, %s188
      %s192 = sphi 0, %s191
      %s208 = sphi 0, %s192
    $region4: #{_lambda_.3} parent=1 // loop_header_branch
      %17 = sbr.rel (%p15) target = $region8
    $region5: #{_lambda_.3} parent=1 // loop_body
      %s19 = ssub.s32 %s14, 1
      %s20 = ssub.s32 %s14, 2
      %s27 = sadd.s32 1, %s22
      %p28 = scmp.ge.s32.totalorder %s27, 10
      %s29 = scalar_select %p28, 0, %s27
      %s30 = sadd.s32 1, %s21
      %s31 = scalar_select %p28, %s30, %s21
      %p32 = scmp.ge.s32.totalorder %s31, 2
      %s33 = scalar_select %p32, 0, %s31
      %s34 = ssub.s32 %s21, %s33
      %p35 = scmp.eq.s32.totalorder %s34, 0
      %s37 = sadd.s32 %s36, 1
      %s38 = scalar_select %p35, %s36, %s37
      %p41 = pneg %p35
      %p42 = scmp.eq.s32.totalorder %s14, 19
      %p43 = por %p41, %p42
      %p44 = scmp.ne.s32.totalorder %s36, %s39
      %p45 = scmp.eq.s32.totalorder %s14, 0
      %p46 = por %p44, %p45
      %p47 = scmp.ne.s32.totalorder %s36, %s39
      %p48 = scmp.eq.s32.totalorder %s19, 19
      %p49 = por %p47, %p48
      %p50 = scmp.ne.s32.totalorder %s39, %s40
      %p51 = scmp.eq.s32.totalorder %s19, 0
      %p52 = por %p50, %p51
      %p53 = scmp.ne.s32.totalorder %s39, %s40
      %p54 = scmp.eq.s32.totalorder %s20, 19
      %p55 = por %p53, %p54
      %p57 = scmp.ne.s32.totalorder %s40, %s56
      %p58 = scmp.eq.s32.totalorder %s20, 0
      %p59 = por %p57, %p58
      %s61 = sadd.s32 %s60, 1
      %p64 = scmp.eq.s32.totalorder %s14, 19
      %p65 = scmp.ne.s32.totalorder %s60, %s62
      %p66 = scmp.eq.s32.totalorder %s14, 0
      %p67 = por %p65, %p66
      %p68 = scmp.ne.s32.totalorder %s60, %s62
      %p69 = scmp.eq.s32.totalorder %s19, 19
      %p70 = por %p68, %p69
      %p71 = scmp.ne.s32.totalorder %s62, %s63
      %p72 = scmp.eq.s32.totalorder %s19, 0
      %p73 = por %p71, %p72
      %p74 = scmp.ne.s32.totalorder %s62, %s63
      %p75 = scmp.eq.s32.totalorder %s20, 19
      %p76 = por %p74, %p75
      %p78 = scmp.ne.s32.totalorder %s63, %s77
      %p79 = scmp.eq.s32.totalorder %s20, 0
      %p80 = por %p78, %p79
      %s82 = sadd.s32 %s81, 1
      %p85 = scmp.eq.s32.totalorder %s14, 19
      %p86 = scmp.ne.s32.totalorder %s81, %s83
      %p87 = scmp.eq.s32.totalorder %s14, 0
      %p88 = por %p86, %p87
      %p89 = scmp.ne.s32.totalorder %s81, %s83
      %p90 = scmp.eq.s32.totalorder %s19, 19
      %p91 = por %p89, %p90
      %p92 = scmp.ne.s32.totalorder %s83, %s84
      %p93 = scmp.eq.s32.totalorder %s19, 0
      %p94 = por %p92, %p93
      %p95 = scmp.ne.s32.totalorder %s83, %s84
      %p96 = scmp.eq.s32.totalorder %s20, 19
      %p97 = por %p95, %p96
      %p99 = scmp.ne.s32.totalorder %s84, %s98
      %p100 = scmp.eq.s32.totalorder %s20, 0
      %p101 = por %p99, %p100
      %s103 = sadd.s32 %s102, 1
      %p106 = scmp.eq.s32.totalorder %s14, 19
      %p107 = scmp.ne.s32.totalorder %s102, %s104
      %p108 = scmp.eq.s32.totalorder %s14, 0
      %p109 = por %p107, %p108
      %p110 = scmp.ne.s32.totalorder %s102, %s104
      %p111 = scmp.eq.s32.totalorder %s19, 19
      %p112 = por %p110, %p111
      %p113 = scmp.ne.s32.totalorder %s104, %s105
      %p114 = scmp.eq.s32.totalorder %s19, 0
      %p115 = por %p113, %p114
      %p116 = scmp.ne.s32.totalorder %s104, %s105
      %p117 = scmp.eq.s32.totalorder %s20, 19
      %p118 = por %p116, %p117
      %p120 = scmp.ne.s32.totalorder %s105, %s119
      %p121 = scmp.eq.s32.totalorder %s20, 0
      %p122 = por %p120, %p121
      %s124 = sadd.s32 %s123, 1
      %p127 = scmp.eq.s32.totalorder %s14, 19
      %p128 = scmp.ne.s32.totalorder %s123, %s125
      %p129 = scmp.eq.s32.totalorder %s14, 0
      %p130 = por %p128, %p129
      %p131 = scmp.ne.s32.totalorder %s123, %s125
      %p132 = scmp.eq.s32.totalorder %s19, 19
      %p133 = por %p131, %p132
      %p134 = scmp.ne.s32.totalorder %s125, %s126
      %p135 = scmp.eq.s32.totalorder %s19, 0
      %p136 = por %p134, %p135
      %p137 = scmp.ne.s32.totalorder %s125, %s126
      %p138 = scmp.eq.s32.totalorder %s20, 19
      %p139 = por %p137, %p138
      %p141 = scmp.ne.s32.totalorder %s126, %s140
      %p142 = scmp.eq.s32.totalorder %s20, 0
      %p143 = por %p141, %p142
      %s145 = sadd.s32 %s144, 1
      %p148 = scmp.eq.s32.totalorder %s14, 19
      %p149 = scmp.ne.s32.totalorder %s144, %s146
      %p150 = scmp.eq.s32.totalorder %s14, 0
      %p151 = por %p149, %p150
      %p152 = scmp.ne.s32.totalorder %s144, %s146
      %p153 = scmp.eq.s32.totalorder %s19, 19
      %p154 = por %p152, %p153
      %p155 = scmp.ne.s32.totalorder %s146, %s147
      %p156 = scmp.eq.s32.totalorder %s19, 0
      %p157 = por %p155, %p156
      %p158 = scmp.ne.s32.totalorder %s146, %s147
      %p159 = scmp.eq.s32.totalorder %s20, 19
      %p160 = por %p158, %p159
      %p162 = scmp.ne.s32.totalorder %s147, %s161
      %p163 = scmp.eq.s32.totalorder %s20, 0
      %p164 = por %p162, %p163
      %s166 = sadd.s32 %s165, 1
      %p169 = scmp.eq.s32.totalorder %s14, 19
      %p170 = scmp.ne.s32.totalorder %s165, %s167
      %p171 = scmp.eq.s32.totalorder %s14, 0
      %p172 = por %p170, %p171
      %p173 = scmp.ne.s32.totalorder %s165, %s167
      %p174 = scmp.eq.s32.totalorder %s19, 19
      %p175 = por %p173, %p174
      %p176 = scmp.ne.s32.totalorder %s167, %s168
      %p177 = scmp.eq.s32.totalorder %s19, 0
      %p178 = por %p176, %p177
      %p179 = scmp.ne.s32.totalorder %s167, %s168
      %p180 = scmp.eq.s32.totalorder %s20, 19
      %p181 = por %p179, %p180
      %p183 = scmp.ne.s32.totalorder %s168, %s182
      %p184 = scmp.eq.s32.totalorder %s20, 0
      %p185 = por %p183, %p184
      %s186 = ssub.s32 %s21, %s33
      %p187 = scmp.eq.s32.totalorder %s186, 0
      %s189 = sadd.s32 %s188, 1
      %s190 = scalar_select %p187, %s188, %s189
      %p193 = pneg %p187
      %p194 = scmp.eq.s32.totalorder %s14, 19
      %p195 = por %p193, %p194
      %p196 = scmp.ne.s32.totalorder %s188, %s191
      %p197 = scmp.eq.s32.totalorder %s14, 0
      %p198 = por %p196, %p197
      %p199 = scmp.ne.s32.totalorder %s188, %s191
      %p200 = scmp.eq.s32.totalorder %s19, 19
      %p201 = por %p199, %p200
      %p202 = scmp.ne.s32.totalorder %s191, %s192
      %p203 = scmp.eq.s32.totalorder %s19, 0
      %p204 = por %p202, %p203
      %p205 = scmp.ne.s32.totalorder %s191, %s192
      %p206 = scmp.eq.s32.totalorder %s20, 19
      %p207 = por %p205, %p206
      %p209 = scmp.ne.s32.totalorder %s192, %s208
      %p210 = scmp.eq.s32.totalorder %s20, 0
      %p211 = por %p209, %p210
      %p212 = scmp.le.s32.totalorder 1, %s14
      %p213 = scmp.lt.s32.totalorder %s14, 21
      %p214 = pnand %p212, %p213
      %p215 = pneg %p214
      // Predicated region
      $region9: #{_lambda_.3} parent=5 // pred_check
        _
      $region10: #{_lambda_.3} parent=5 // pred_check_branch
        %217 = sbr.rel (%p214) target = $region12
      $region11: #{_lambda_.3} parent=5 // pred_region
        %s218 = ssub.s32 %s14, 1
        // Predicated region
        $region13: #{_lambda_.3} parent=11 // pred_check
          %p219 = pneg %p73
        $region14: #{_lambda_.3} parent=11 // pred_check_branch
          %221 = sbr.rel (%p219) target = $region16
        $region15: #{_lambda_.3} parent=11 // pred_region
          %s223 = ssub.s32 256, 256
          %224 = vsyncadd [#allocation5], %s223
          %s225 = sshll.u32 %s1, 4
          %s226 = int_to_ptr.vmem [resolvable:$true] %s225
          %231 = dma.vmem_to_smem %s226, 256, [#allocation4], [#allocation5], 128, 128, 8
        $region16: #{_lambda_.3} parent=11 // pred_fallthru
          _
        // Predicated region
        $region17: #{_lambda_.3} parent=11 // pred_check
          %p232 = pneg %p94
        $region18: #{_lambda_.3} parent=11 // pred_check_branch
          %234 = sbr.rel (%p232) target = $region20
        $region19: #{_lambda_.3} parent=11 // pred_region
          _
        $region20: #{_lambda_.3} parent=11 // pred_fallthru
          _
        // Predicated region
        $region21: #{_lambda_.3} parent=11 // pred_check
          %p235 = pneg %p115
        $region22: #{_lambda_.3} parent=11 // pred_check_branch
          %237 = sbr.rel (%p235) target = $region24
        $region23: #{_lambda_.3} parent=11 // pred_region
          _
        $region24: #{_lambda_.3} parent=11 // pred_fallthru
          _
        // Predicated region
        $region25: #{_lambda_.3} parent=11 // pred_check
          %p238 = pneg %p136
        $region26: #{_lambda_.3} parent=11 // pred_check_branch
          %240 = sbr.rel (%p238) target = $region28
        $region27: #{_lambda_.3} parent=11 // pred_region
          _
        $region28: #{_lambda_.3} parent=11 // pred_fallthru
          _
        // Predicated region
        $region29: #{_lambda_.3} parent=11 // pred_check
          %p241 = pneg %p157
        $region30: #{_lambda_.3} parent=11 // pred_check_branch
          %243 = sbr.rel (%p241) target = $region32
        $region31: #{_lambda_.3} parent=11 // pred_region
          _
        $region32: #{_lambda_.3} parent=11 // pred_fallthru
          _
        // Predicated region
        $region33: #{_lambda_.3} parent=11 // pred_check
          %p244 = pneg %p178
        $region34: #{_lambda_.3} parent=11 // pred_check_branch
          %246 = sbr.rel (%p244) target = $region36
        $region35: #{_lambda_.3} parent=11 // pred_region
          _
        $region36: #{_lambda_.3} parent=11 // pred_fallthru
          _
      $region12: #{_lambda_.3} parent=5 // pred_fallthru
        _
      %p247 = scmp.lt.s32.totalorder %s14, 20
      // Predicated region
      $region37: #{_lambda_.3} parent=5 // pred_check
        %p248 = pneg %p247
      $region38: #{_lambda_.3} parent=5 // pred_check_branch
        %250 = sbr.rel (%p248) target = $region40
      $region39: #{_lambda_.3} parent=5 // pred_region
        // Predicated region
        $region41: #{_lambda_.3} parent=39 // pred_check
          %p251 = pneg %p46
        $region42: #{_lambda_.3} parent=39 // pred_check_branch
          %253 = sbr.rel (%p251) target = $region44
        $region43: #{_lambda_.3} parent=39 // pred_region
          %p254 = scmp.lt.s32.totalorder %s21, 1
          %s255 = scalar_select %p254, %s21, 1
          %s256 = smul.addr %s255, 42
          %s257 = smul.addr %s256, 8
          %s258 = scalar_lea.vmem %s0, %s257
        $region44: #{_lambda_.3} parent=39 // pred_fallthru
          _
      $region40: #{_lambda_.3} parent=5 // pred_fallthru
        _
      %p259 = scmp.le.s32.totalorder 1, %s14
      %p260 = scmp.lt.s32.totalorder %s14, 21
      %p261 = pnand %p259, %p260
      %p262 = pneg %p261
      // Predicated region
      $region45: #{_lambda_.3} parent=5 // pred_check
        _
      $region46: #{_lambda_.3} parent=5 // pred_check_branch
        %264 = sbr.rel (%p261) target = $region48
      $region47: #{_lambda_.3} parent=5 // pred_region
        %s265 = ssub.s32 %s14, 1
        // Predicated region
        $region49: #{_lambda_.3} parent=47 // pred_check
          %p266 = pneg %p73
        $region50: #{_lambda_.3} parent=47 // pred_check_branch
          %268 = sbr.rel (%p266) target = $region52
        $region51: #{_lambda_.3} parent=47 // pred_region
          %269 = dma.done [#allocation5], 256
        $region52: #{_lambda_.3} parent=47 // pred_fallthru
          _
        %270 = sfence
        %p271 = scmp.lt.s32.totalorder %s23, 1
        %s272 = scalar_select %p271, %s23, 1
        %s273 = smul.addr %s272, 42
        %s274 = smul.addr %s273, 8
        %s275 = scalar_lea.vmem %s0, %s274
        %p276 = pneg %p52
        %p277 = pneg %p49
        %p278 = pneg %p73
        %p279 = pneg %p70
        %p280 = pneg %p94
        %p281 = pneg %p91
        %p282 = pneg %p115
        %p283 = pneg %p112
        %p284 = pneg %p136
        %p285 = pneg %p133
        %p286 = pneg %p157
        %p287 = pneg %p154
        %p288 = pneg %p178
        %p289 = pneg %p175
        %p290 = pneg %p204
        %p291 = pneg %p201
        %p292 = scmp.lt.s32.totalorder %s23, 1
        %s293 = scalar_select %p292, %s23, 1
        %s294 = smul.addr %s293, 42
        %s295 = smul.addr %s294, 8
        %s296 = scalar_lea.vmem %s7, %s295
        %p297 = scmp.lt.s32.totalorder %s23, 1
        %s298 = scalar_select %p297, %s23, 1
        %s299 = smul.addr %s298, 42
        %s300 = smul.addr %s299, 8
        %s301 = scalar_lea.vmem %s0, %s300
        %p302 = scmp.lt.s32.totalorder %s23, 1
        %s303 = scalar_select %p302, %s23, 1
        %s304 = smul.addr %s303, 42
        %s305 = smul.addr %s304, 8
        %s306 = scalar_lea.vmem %s7, %s305
        %p307 = scmp.eq.s32.totalorder %s24, 0
        // Predicated region
        $region53: #{_lambda_.3} parent=47 // pred_check
          %p308 = pneg %p307
        $region54: #{_lambda_.3} parent=47 // pred_check_branch
          %310 = sbr.rel (%p308) target = $region56
        $region55: #{_lambda_.3} parent=47 // pred_region
          %v311 = vld [vmem:[%s301] sm:$0xff]
          %v312 = vld [vmem:[%s301 + $0x8] sm:$0xff]
          %v313 = vld [vmem:[%s301 + $0x10] sm:$0xff]
          %v314 = vld [vmem:[%s301 + $0x18] sm:$0xff]
          %v315 = vld [vmem:[%s301 + $0x20] sm:$0xff]
          %v316 = vld [vmem:[%s301 + $0x28] sm:$0xff]
          %v317 = vld [vmem:[%s301 + $0x30] sm:$0xff]
          %v318 = vld [vmem:[%s301 + $0x38] sm:$0xff]
          %v319 = vld [vmem:[%s301 + $0x40] sm:$0xff]
          %v320 = vld [vmem:[%s301 + $0x48] sm:$0xff]
          %v321 = vld [vmem:[%s301 + $0x50] sm:$0xff]
          %v322 = vld [vmem:[%s301 + $0x58] sm:$0xff]
          %v323 = vld [vmem:[%s301 + $0x60] sm:$0xff]
          %v324 = vld [vmem:[%s301 + $0x68] sm:$0xff]
          %v325 = vld [vmem:[%s301 + $0x70] sm:$0xff]
          %v326 = vld [vmem:[%s301 + $0x78] sm:$0xff]
          %v327 = vld [vmem:[%s301 + $0x80] sm:$0xff]
          %v328 = vld [vmem:[%s301 + $0x88] sm:$0xff]
          %v329 = vld [vmem:[%s301 + $0x90] sm:$0xff]
          %v330 = vld [vmem:[%s301 + $0x98] sm:$0xff]
          %v331 = vld [vmem:[%s301 + $0xa0] sm:$0xff]
          %v332 = vld [vmem:[%s301 + $0xa8] sm:$0xff]
          %v333 = vld [vmem:[%s301 + $0xb0] sm:$0xff]
          %v334 = vld [vmem:[%s301 + $0xb8] sm:$0xff]
          %v335 = vld [vmem:[%s301 + $0xc0] sm:$0xff]
          %v336 = vld [vmem:[%s301 + $0xc8] sm:$0xff]
          %v337 = vld [vmem:[%s301 + $0xd0] sm:$0xff]
          %v338 = vld [vmem:[%s301 + $0xd8] sm:$0xff]
          %v339 = vld [vmem:[%s301 + $0xe0] sm:$0xff]
          %v340 = vld [vmem:[%s301 + $0xe8] sm:$0xff]
          %v341 = vld [vmem:[%s301 + $0xf0] sm:$0xff]
          %v342 = vld [vmem:[%s301 + $0xf8] sm:$0xff]
          %v343 = vld [vmem:[%s301 + $0x100] sm:$0xff]
          %v344 = vld [vmem:[%s301 + $0x108] sm:$0xff]
          %v345 = vld [vmem:[%s301 + $0x110] sm:$0xff]
          %v346 = vld [vmem:[%s301 + $0x118] sm:$0xff]
          %v347 = vld [vmem:[%s301 + $0x120] sm:$0xff]
          %v348 = vld [vmem:[%s301 + $0x128] sm:$0xff]
          %v349 = vld [vmem:[%s301 + $0x130] sm:$0xff]
          %v350 = vld [vmem:[%s301 + $0x138] sm:$0xff]
          %v351 = vld [vmem:[%s301 + $0x140] sm:$0xff]
          %v352 = vld [vmem:[%s301 + $0x148] sm:$0xff]
          %vm353 = vcmask 31744
          %354 = vst.msk [vmem:[#allocation2] sm:$0xff] %vm353, %v311
          %355 = vst.msk [vmem:[#allocation2 + $0x8] sm:$0xff] %vm353, %v312
          %356 = vst.msk [vmem:[#allocation2 + $0x10] sm:$0xff] %vm353, %v313
          %357 = vst.msk [vmem:[#allocation2 + $0x18] sm:$0xff] %vm353, %v314
          %358 = vst.msk [vmem:[#allocation2 + $0x20] sm:$0xff] %vm353, %v315
          %359 = vst.msk [vmem:[#allocation2 + $0x28] sm:$0xff] %vm353, %v316
          %360 = vst.msk [vmem:[#allocation2 + $0x30] sm:$0xff] %vm353, %v317
          %361 = vst.msk [vmem:[#allocation2 + $0x38] sm:$0xff] %vm353, %v318
          %362 = vst.msk [vmem:[#allocation2 + $0x40] sm:$0xff] %vm353, %v319
          %363 = vst.msk [vmem:[#allocation2 + $0x48] sm:$0xff] %vm353, %v320
          %364 = vst.msk [vmem:[#allocation2 + $0x50] sm:$0xff] %vm353, %v321
          %365 = vst.msk [vmem:[#allocation2 + $0x58] sm:$0xff] %vm353, %v322
          %366 = vst.msk [vmem:[#allocation2 + $0x60] sm:$0xff] %vm353, %v323
          %367 = vst.msk [vmem:[#allocation2 + $0x68] sm:$0xff] %vm353, %v324
          %368 = vst.msk [vmem:[#allocation2 + $0x70] sm:$0xff] %vm353, %v325
          %369 = vst.msk [vmem:[#allocation2 + $0x78] sm:$0xff] %vm353, %v326
          %370 = vst.msk [vmem:[#allocation2 + $0x80] sm:$0xff] %vm353, %v327
          %371 = vst.msk [vmem:[#allocation2 + $0x88] sm:$0xff] %vm353, %v328
          %372 = vst.msk [vmem:[#allocation2 + $0x90] sm:$0xff] %vm353, %v329
          %373 = vst.msk [vmem:[#allocation2 + $0x98] sm:$0xff] %vm353, %v330
          %374 = vst.msk [vmem:[#allocation2 + $0xa0] sm:$0xff] %vm353, %v331
          %375 = vst.msk [vmem:[#allocation2 + $0xa8] sm:$0xff] %vm353, %v332
          %376 = vst.msk [vmem:[#allocation2 + $0xb0] sm:$0xff] %vm353, %v333
          %377 = vst.msk [vmem:[#allocation2 + $0xb8] sm:$0xff] %vm353, %v334
          %378 = vst.msk [vmem:[#allocation2 + $0xc0] sm:$0xff] %vm353, %v335
          %379 = vst.msk [vmem:[#allocation2 + $0xc8] sm:$0xff] %vm353, %v336
          %380 = vst.msk [vmem:[#allocation2 + $0xd0] sm:$0xff] %vm353, %v337
          %381 = vst.msk [vmem:[#allocation2 + $0xd8] sm:$0xff] %vm353, %v338
          %382 = vst.msk [vmem:[#allocation2 + $0xe0] sm:$0xff] %vm353, %v339
          %383 = vst.msk [vmem:[#allocation2 + $0xe8] sm:$0xff] %vm353, %v340
          %384 = vst.msk [vmem:[#allocation2 + $0xf0] sm:$0xff] %vm353, %v341
          %385 = vst.msk [vmem:[#allocation2 + $0xf8] sm:$0xff] %vm353, %v342
          %386 = vst.msk [vmem:[#allocation2 + $0x100] sm:$0xff] %vm353, %v343
          %387 = vst.msk [vmem:[#allocation2 + $0x108] sm:$0xff] %vm353, %v344
          %388 = vst.msk [vmem:[#allocation2 + $0x110] sm:$0xff] %vm353, %v345
          %389 = vst.msk [vmem:[#allocation2 + $0x118] sm:$0xff] %vm353, %v346
          %390 = vst.msk [vmem:[#allocation2 + $0x120] sm:$0xff] %vm353, %v347
          %391 = vst.msk [vmem:[#allocation2 + $0x128] sm:$0xff] %vm353, %v348
          %392 = vst.msk [vmem:[#allocation2 + $0x130] sm:$0xff] %vm353, %v349
          %393 = vst.msk [vmem:[#allocation2 + $0x138] sm:$0xff] %vm353, %v350
          %394 = vst.msk [vmem:[#allocation2 + $0x140] sm:$0xff] %vm353, %v351
          %395 = vst.msk [vmem:[#allocation2 + $0x148] sm:$0xff] %vm353, %v352
          %vm396 = vcmask 261120
          %397 = vst.msk [vmem:[#allocation3] sm:$0xff] %vm396, 0.0
          %398 = vst.msk [vmem:[#allocation3 + $0x8] sm:$0xff] %vm396, 0.0
          %399 = vst.msk [vmem:[#allocation3 + $0x10] sm:$0xff] %vm396, 0.0
          %400 = vst.msk [vmem:[#allocation3 + $0x18] sm:$0xff] %vm396, 0.0
          %401 = vst.msk [vmem:[#allocation3 + $0x20] sm:$0xff] %vm396, 0.0
          %402 = vst.msk [vmem:[#allocation3 + $0x28] sm:$0xff] %vm396, 0.0
          %403 = vst.msk [vmem:[#allocation3 + $0x30] sm:$0xff] %vm396, 0.0
          %404 = vst.msk [vmem:[#allocation3 + $0x38] sm:$0xff] %vm396, 0.0
          %405 = vst.msk [vmem:[#allocation3 + $0x40] sm:$0xff] %vm396, 0.0
          %406 = vst.msk [vmem:[#allocation3 + $0x48] sm:$0xff] %vm396, 0.0
          %407 = vst.msk [vmem:[#allocation3 + $0x50] sm:$0xff] %vm396, 0.0
          %408 = vst.msk [vmem:[#allocation3 + $0x58] sm:$0xff] %vm396, 0.0
          %409 = vst.msk [vmem:[#allocation3 + $0x60] sm:$0xff] %vm396, 0.0
          %410 = vst.msk [vmem:[#allocation3 + $0x68] sm:$0xff] %vm396, 0.0
          %411 = vst.msk [vmem:[#allocation3 + $0x70] sm:$0xff] %vm396, 0.0
          %412 = vst.msk [vmem:[#allocation3 + $0x78] sm:$0xff] %vm396, 0.0
          %413 = vst.msk [vmem:[#allocation3 + $0x80] sm:$0xff] %vm396, 0.0
          %414 = vst.msk [vmem:[#allocation3 + $0x88] sm:$0xff] %vm396, 0.0
          %415 = vst.msk [vmem:[#allocation3 + $0x90] sm:$0xff] %vm396, 0.0
          %416 = vst.msk [vmem:[#allocation3 + $0x98] sm:$0xff] %vm396, 0.0
          %417 = vst.msk [vmem:[#allocation3 + $0xa0] sm:$0xff] %vm396, 0.0
          %418 = vst.msk [vmem:[#allocation3 + $0xa8] sm:$0xff] %vm396, 0.0
          %419 = vst.msk [vmem:[#allocation3 + $0xb0] sm:$0xff] %vm396, 0.0
          %420 = vst.msk [vmem:[#allocation3 + $0xb8] sm:$0xff] %vm396, 0.0
          %421 = vst.msk [vmem:[#allocation3 + $0xc0] sm:$0xff] %vm396, 0.0
          %422 = vst.msk [vmem:[#allocation3 + $0xc8] sm:$0xff] %vm396, 0.0
          %423 = vst.msk [vmem:[#allocation3 + $0xd0] sm:$0xff] %vm396, 0.0
          %424 = vst.msk [vmem:[#allocation3 + $0xd8] sm:$0xff] %vm396, 0.0
          %425 = vst.msk [vmem:[#allocation3 + $0xe0] sm:$0xff] %vm396, 0.0
          %426 = vst.msk [vmem:[#allocation3 + $0xe8] sm:$0xff] %vm396, 0.0
          %427 = vst.msk [vmem:[#allocation3 + $0xf0] sm:$0xff] %vm396, 0.0
          %428 = vst.msk [vmem:[#allocation3 + $0xf8] sm:$0xff] %vm396, 0.0
          %429 = vst.msk [vmem:[#allocation3 + $0x100] sm:$0xff] %vm396, 0.0
          %430 = vst.msk [vmem:[#allocation3 + $0x108] sm:$0xff] %vm396, 0.0
          %431 = vst.msk [vmem:[#allocation3 + $0x110] sm:$0xff] %vm396, 0.0
          %432 = vst.msk [vmem:[#allocation3 + $0x118] sm:$0xff] %vm396, 0.0
          %433 = vst.msk [vmem:[#allocation3 + $0x120] sm:$0xff] %vm396, 0.0
          %434 = vst.msk [vmem:[#allocation3 + $0x128] sm:$0xff] %vm396, 0.0
          %435 = vst.msk [vmem:[#allocation3 + $0x130] sm:$0xff] %vm396, 0.0
          %436 = vst.msk [vmem:[#allocation3 + $0x138] sm:$0xff] %vm396, 0.0
          %437 = vst.msk [vmem:[#allocation3 + $0x140] sm:$0xff] %vm396, 0.0
          %438 = vst.msk [vmem:[#allocation3 + $0x148] sm:$0xff] %vm396, 0.0
        $region56: #{_lambda_.3} parent=47 // pred_fallthru
          _
        %v439 = vld [vmem:[%s6] sm:$0xff]
        %v440 = vld [vmem:[%s6 + $0x8] sm:$0xff]
        %v441 = vld [vmem:[%s6 + $0x10] sm:$0xff]
        %v442 = vld [vmem:[%s6 + $0x18] sm:$0xff]
        %v443 = vld [vmem:[%s6 + $0x20] sm:$0xff]
        %v444 = vld [vmem:[%s6 + $0x28] sm:$0xff]
        %v445 = vld [vmem:[%s6 + $0x30] sm:$0xff]
        %v446 = vld [vmem:[%s6 + $0x38] sm:$0xff]
        %v447 = vld [vmem:[%s6 + $0x40] sm:$0xff]
        %v448 = vld [vmem:[%s6 + $0x48] sm:$0xff]
        %v449 = vld [vmem:[%s6 + $0x50] sm:$0xff]
        %v450 = vld [vmem:[%s6 + $0x58] sm:$0xff]
        %v451 = vld [vmem:[%s6 + $0x60] sm:$0xff]
        %v452 = vld [vmem:[%s6 + $0x68] sm:$0xff]
        %v453 = vld [vmem:[%s6 + $0x70] sm:$0xff]
        %v454 = vld [vmem:[%s6 + $0x78] sm:$0xff]
        %v455 = vld [vmem:[%s6 + $0x80] sm:$0xff]
        %v456 = vld [vmem:[%s6 + $0x88] sm:$0xff]
        %v457 = vld [vmem:[%s6 + $0x90] sm:$0xff]
        %v458 = vld [vmem:[%s6 + $0x98] sm:$0xff]
        %v459 = vld [vmem:[%s6 + $0xa0] sm:$0xff]
        %v460 = vld [vmem:[%s6 + $0xa8] sm:$0xff]
        %v461 = vld [vmem:[%s6 + $0xb0] sm:$0xff]
        %v462 = vld [vmem:[%s6 + $0xb8] sm:$0xff]
        %v463 = vld [vmem:[%s6 + $0xc0] sm:$0xff]
        %v464 = vld [vmem:[%s6 + $0xc8] sm:$0xff]
        %v465 = vld [vmem:[%s6 + $0xd0] sm:$0xff]
        %v466 = vld [vmem:[%s6 + $0xd8] sm:$0xff]
        %v467 = vld [vmem:[%s6 + $0xe0] sm:$0xff]
        %v468 = vld [vmem:[%s6 + $0xe8] sm:$0xff]
        %v469 = vld [vmem:[%s6 + $0xf0] sm:$0xff]
        %v470 = vld [vmem:[%s6 + $0xf8] sm:$0xff]
        %v471 = vld [vmem:[%s6 + $0x100] sm:$0xff]
        %v472 = vld [vmem:[%s6 + $0x108] sm:$0xff]
        %v473 = vld [vmem:[%s6 + $0x110] sm:$0xff]
        %v474 = vld [vmem:[%s6 + $0x118] sm:$0xff]
        %v475 = vld [vmem:[#allocation2 + $0x5] sm:$0xff]
        %v476 = vld [vmem:[#allocation2 + $0xd] sm:$0xff]
        %v477 = vld [vmem:[#allocation2 + $0x15] sm:$0xff]
        %v478 = vld [vmem:[#allocation2 + $0x1d] sm:$0xff]
        %v479 = vld [vmem:[#allocation2 + $0x25] sm:$0xff]
        %v480 = vld [vmem:[#allocation2 + $0x2d] sm:$0xff]
        %v481 = vld [vmem:[#allocation2 + $0x35] sm:$0xff]
        %v482 = vld [vmem:[#allocation2 + $0x3d] sm:$0xff]
        %v483 = vld [vmem:[#allocation2 + $0x45] sm:$0xff]
        %v484 = vld [vmem:[#allocation2 + $0x4d] sm:$0xff]
        %v485 = vld [vmem:[#allocation2 + $0x55] sm:$0xff]
        %v486 = vld [vmem:[#allocation2 + $0x5d] sm:$0xff]
        %v487 = vld [vmem:[#allocation2 + $0x65] sm:$0xff]
        %v488 = vld [vmem:[#allocation2 + $0x6d] sm:$0xff]
        %v489 = vld [vmem:[#allocation2 + $0x75] sm:$0xff]
        %v490 = vld [vmem:[#allocation2 + $0x7d] sm:$0xff]
        %v491 = vld [vmem:[#allocation2 + $0x85] sm:$0xff]
        %v492 = vld [vmem:[#allocation2 + $0x8d] sm:$0xff]
        %v493 = vld [vmem:[#allocation2 + $0x95] sm:$0xff]
        %v494 = vld [vmem:[#allocation2 + $0x9d] sm:$0xff]
        %v495 = vld [vmem:[#allocation2 + $0xa5] sm:$0xff]
        %v496 = vld [vmem:[#allocation2 + $0xad] sm:$0xff]
        %v497 = vld [vmem:[#allocation2 + $0xb5] sm:$0xff]
        %v498 = vld [vmem:[#allocation2 + $0xbd] sm:$0xff]
        %v499 = vld [vmem:[#allocation2 + $0xc5] sm:$0xff]
        %v500 = vld [vmem:[#allocation2 + $0xcd] sm:$0xff]
        %v501 = vld [vmem:[#allocation2 + $0xd5] sm:$0xff]
        %v502 = vld [vmem:[#allocation2 + $0xdd] sm:$0xff]
        %v503 = vld [vmem:[#allocation2 + $0xe5] sm:$0xff]
        %v504 = vld [vmem:[#allocation2 + $0xed] sm:$0xff]
        %v505 = vld [vmem:[#allocation2 + $0xf5] sm:$0xff]
        %v506 = vld [vmem:[#allocation2 + $0xfd] sm:$0xff]
        %v507 = vld [vmem:[#allocation2 + $0x105] sm:$0xff]
        %v508 = vld [vmem:[#allocation2 + $0x10d] sm:$0xff]
        %v509 = vld [vmem:[#allocation2 + $0x115] sm:$0xff]
        %v510 = vld [vmem:[#allocation2 + $0x11d] sm:$0xff]
        %v511 = vld [vmem:[%s3] sm:$0xf]
        %v512 = vld [vmem:[#allocation2 + $0x6] sm:$0xff]
        %v513 = vld [vmem:[#allocation2 + $0xe] sm:$0xff]
        %v514 = vld [vmem:[#allocation2 + $0x16] sm:$0xff]
        %v515 = vld [vmem:[#allocation2 + $0x1e] sm:$0xff]
        %v516 = vld [vmem:[#allocation2 + $0x26] sm:$0xff]
        %v517 = vld [vmem:[#allocation2 + $0x2e] sm:$0xff]
        %v518 = vld [vmem:[#allocation2 + $0x36] sm:$0xff]
        %v519 = vld [vmem:[#allocation2 + $0x3e] sm:$0xff]
        %v520 = vld [vmem:[#allocation2 + $0x46] sm:$0xff]
        %v521 = vld [vmem:[#allocation2 + $0x4e] sm:$0xff]
        %v522 = vld [vmem:[#allocation2 + $0x56] sm:$0xff]
        %v523 = vld [vmem:[#allocation2 + $0x5e] sm:$0xff]
        %v524 = vld [vmem:[#allocation2 + $0x66] sm:$0xff]
        %v525 = vld [vmem:[#allocation2 + $0x6e] sm:$0xff]
        %v526 = vld [vmem:[#allocation2 + $0x76] sm:$0xff]
        %v527 = vld [vmem:[#allocation2 + $0x7e] sm:$0xff]
        %v528 = vld [vmem:[#allocation2 + $0x86] sm:$0xff]
        %v529 = vld [vmem:[#allocation2 + $0x8e] sm:$0xff]
        %v530 = vld [vmem:[#allocation2 + $0x96] sm:$0xff]
        %v531 = vld [vmem:[#allocation2 + $0x9e] sm:$0xff]
        %v532 = vld [vmem:[#allocation2 + $0xa6] sm:$0xff]
        %v533 = vld [vmem:[#allocation2 + $0xae] sm:$0xff]
        %v534 = vld [vmem:[#allocation2 + $0xb6] sm:$0xff]
        %v535 = vld [vmem:[#allocation2 + $0xbe] sm:$0xff]
        %v536 = vld [vmem:[#allocation2 + $0xc6] sm:$0xff]
        %v537 = vld [vmem:[#allocation2 + $0xce] sm:$0xff]
        %v538 = vld [vmem:[#allocation2 + $0xd6] sm:$0xff]
        %v539 = vld [vmem:[#allocation2 + $0xde] sm:$0xff]
        %v540 = vld [vmem:[#allocation2 + $0xe6] sm:$0xff]
        %v541 = vld [vmem:[#allocation2 + $0xee] sm:$0xff]
        %v542 = vld [vmem:[#allocation2 + $0xf6] sm:$0xff]
        %v543 = vld [vmem:[#allocation2 + $0xfe] sm:$0xff]
        %v544 = vld [vmem:[#allocation2 + $0x106] sm:$0xff]
        %v545 = vld [vmem:[#allocation2 + $0x10e] sm:$0xff]
        %v546 = vld [vmem:[#allocation2 + $0x116] sm:$0xff]
        %v547 = vld [vmem:[#allocation2 + $0x11e] sm:$0xff]
        %s548 = scalar_lea.vmem %s3, 4
        %v549 = vld [vmem:[%s548] sm:$0xf]
        %vm550 = vcmask 31744
        %v552 = vsel %vm550, %v512, 0
        %v555 = vsel %vm550, %v513, 0
        %v558 = vsel %vm550, %v514, 0
        %v561 = vsel %vm550, %v515, 0
        %v564 = vsel %vm550, %v516, 0
        %v567 = vsel %vm550, %v517, 0
        %v570 = vsel %vm550, %v518, 0
        %v573 = vsel %vm550, %v519, 0
        %v576 = vsel %vm550, %v520, 0
        %v579 = vsel %vm550, %v521, 0
        %v582 = vsel %vm550, %v522, 0
        %v585 = vsel %vm550, %v523, 0
        %v588 = vsel %vm550, %v524, 0
        %v591 = vsel %vm550, %v525, 0
        %v594 = vsel %vm550, %v526, 0
        %v597 = vsel %vm550, %v527, 0
        %v600 = vsel %vm550, %v528, 0
        %v603 = vsel %vm550, %v529, 0
        %v606 = vsel %vm550, %v530, 0
        %v609 = vsel %vm550, %v531, 0
        %v612 = vsel %vm550, %v532, 0
        %v615 = vsel %vm550, %v533, 0
        %v618 = vsel %vm550, %v534, 0
        %v621 = vsel %vm550, %v535, 0
        %v624 = vsel %vm550, %v536, 0
        %v627 = vsel %vm550, %v537, 0
        %v630 = vsel %vm550, %v538, 0
        %v633 = vsel %vm550, %v539, 0
        %v636 = vsel %vm550, %v540, 0
        %v639 = vsel %vm550, %v541, 0
        %v642 = vsel %vm550, %v542, 0
        %v645 = vsel %vm550, %v543, 0
        %v648 = vsel %vm550, %v544, 0
        %v651 = vsel %vm550, %v545, 0
        %v654 = vsel %vm550, %v546, 0
        %v657 = vsel %vm550, %v547, 0
        %vm659 = vcmask 1043456
        %v661 = vsel %vm659, %v549, 0
        %663 = vmatprep.subr.mxu0 0.0
        %664 = vmatpush1.msra.mxu0 0.0
        %665 = vmatprep.subr.mxu0 0.0
        %666 = vmatpush1.msra.mxu0 0.0
        %667 = vmatprep.subr.mxu0 0.0
        %668 = vmatpush1.msra.mxu0 0.0
        %669 = vmatprep.subr.mxu0 0.0
        %670 = vmatpush1.msra.mxu0 0.0
        %671 = vmatprep.subr.mxu0 0.0
        %672 = vmatpush1.msra.mxu0 0.0
        %673 = vmatprep.subr.mxu0 0.0
        %674 = vmatpush1.msra.mxu0 0.0
        %675 = vmatprep.subr.mxu0 0.0
        %676 = vmatpush1.msra.mxu0 0.0
        %677 = vmatprep.subr.mxu0 0.0
        %678 = vmatpush1.msra.mxu0 0.0
        %679 = vmatprep.subr.mxu0 0.0
        %680 = vmatpush1.msra.mxu0 0.0
        %681 = vmatprep.subr.mxu0 0.0
        %682 = vmatpush1.msra.mxu0 0.0
        %683 = vmatprep.subr.mxu0 0.0
        %684 = vmatpush1.msra.mxu0 0.0
        %685 = vmatprep.subr.mxu0 0.0
        %686 = vmatpush1.msra.mxu0 0.0
        %687 = vmatprep.subr.mxu0 0.0
        %688 = vmatpush1.msra.mxu0 0.0
        %689 = vmatprep.subr.mxu0 0.0
        %690 = vmatpush1.msra.mxu0 0.0
        %691 = vmatprep.subr.mxu0 0.0
        %692 = vmatpush1.msra.mxu0 0.0
        %693 = vmatprep.subr.mxu0 0.0
        %694 = vmatpush1.msra.mxu0 %v661
        %695 = vmatprep.subr.mxu0 0.0
        %696 = vmatpush2.msra.mxu0 0.0
        %697 = vmatprep.subr.mxu0 0.0
        %698 = vmatpush2.msra.mxu0 0.0
        %699 = vmatprep.subr.mxu0 0.0
        %700 = vmatpush2.msra.mxu0 0.0
        %701 = vmatprep.subr.mxu0 0.0
        %702 = vmatpush2.msra.mxu0 0.0
        %703 = vmatprep.subr.mxu0 0.0
        %704 = vmatpush2.msra.mxu0 0.0
        %705 = vmatprep.subr.mxu0 0.0
        %706 = vmatpush2.msra.mxu0 0.0
        %707 = vmatprep.subr.mxu0 0.0
        %708 = vmatpush2.msra.mxu0 0.0
        %709 = vmatprep.subr.mxu0 0.0
        %710 = vmatpush2.msra.mxu0 0.0
        %711 = vmatprep.subr.mxu0 0.0
        %712 = vmatpush2.msra.mxu0 0.0
        %713 = vmatprep.subr.mxu0 0.0
        %714 = vmatpush2.msra.mxu0 0.0
        %715 = vmatprep.subr.mxu0 0.0
        %716 = vmatpush2.msra.mxu0 0.0
        %717 = vmatprep.subr.mxu0 0.0
        %718 = vmatpush2.msra.mxu0 0.0
        %719 = vmatprep.subr.mxu0 0.0
        %720 = vmatpush2.msra.mxu0 0.0
        %721 = vmatprep.subr.mxu0 0.0
        %722 = vmatpush2.msra.mxu0 0.0
        %723 = vmatprep.subr.mxu0 0.0
        %724 = vmatpush2.msra.mxu0 0.0
        %725 = vmatprep.subr.mxu0 0.0
        %726 = vmatpush2.msra.mxu0 0.0
        %727 = vmatprep.mubr.f32.mxu0 0.0
        %728 = vmatmul.mubr.f32.gmra.mxu0 %v552
        %v729 = vpop.f32.mrf.mxu0
        %v730 = vadd.f32 0.0, %v729
        %v731 = vpop.f32.mrf.mxu0
        %732 = vmatprep.mubr.f32.mxu0 0.0
        %733 = vmatmul.mubr.f32.gmra.mxu0 %v555
        %v734 = vpop.f32.mrf.mxu0
        %v735 = vadd.f32 0.0, %v734
        %v736 = vpop.f32.mrf.mxu0
        %737 = vmatprep.mubr.f32.mxu0 0.0
        %738 = vmatmul.mubr.f32.gmra.mxu0 %v558
        %v739 = vpop.f32.mrf.mxu0
        %v740 = vadd.f32 0.0, %v739
        %v741 = vpop.f32.mrf.mxu0
        %742 = vmatprep.mubr.f32.mxu0 0.0
        %743 = vmatmul.mubr.f32.gmra.mxu0 %v561
        %v744 = vpop.f32.mrf.mxu0
        %v745 = vadd.f32 0.0, %v744
        %v746 = vpop.f32.mrf.mxu0
        %747 = vmatprep.mubr.f32.mxu0 0.0
        %748 = vmatmul.mubr.f32.gmra.mxu0 %v564
        %v749 = vpop.f32.mrf.mxu0
        %v750 = vadd.f32 0.0, %v749
        %v751 = vpop.f32.mrf.mxu0
        %752 = vmatprep.mubr.f32.mxu0 0.0
        %753 = vmatmul.mubr.f32.gmra.mxu0 %v567
        %v754 = vpop.f32.mrf.mxu0
        %v755 = vadd.f32 0.0, %v754
        %v756 = vpop.f32.mrf.mxu0
        %757 = vmatprep.mubr.f32.mxu0 0.0
        %758 = vmatmul.mubr.f32.gmra.mxu0 %v570
        %v759 = vpop.f32.mrf.mxu0
        %v760 = vadd.f32 0.0, %v759
        %v761 = vpop.f32.mrf.mxu0
        %762 = vmatprep.mubr.f32.mxu0 0.0
        %763 = vmatmul.mubr.f32.gmra.mxu0 %v573
        %v764 = vpop.f32.mrf.mxu0
        %v765 = vadd.f32 0.0, %v764
        %v766 = vpop.f32.mrf.mxu0
        %767 = vmatprep.mubr.f32.mxu0 0.0
        %768 = vmatmul.mubr.f32.gmra.mxu0 %v576
        %v769 = vpop.f32.mrf.mxu0
        %v770 = vadd.f32 0.0, %v769
        %v771 = vpop.f32.mrf.mxu0
        %772 = vmatprep.mubr.f32.mxu0 0.0
        %773 = vmatmul.mubr.f32.gmra.mxu0 %v579
        %v774 = vpop.f32.mrf.mxu0
        %v775 = vadd.f32 0.0, %v774
        %v776 = vpop.f32.mrf.mxu0
        %777 = vmatprep.mubr.f32.mxu0 0.0
        %778 = vmatmul.mubr.f32.gmra.mxu0 %v582
        %v779 = vpop.f32.mrf.mxu0
        %v780 = vadd.f32 0.0, %v779
        %v781 = vpop.f32.mrf.mxu0
        %782 = vmatprep.mubr.f32.mxu0 0.0
        %783 = vmatmul.mubr.f32.gmra.mxu0 %v585
        %v784 = vpop.f32.mrf.mxu0
        %v785 = vadd.f32 0.0, %v784
        %v786 = vpop.f32.mrf.mxu0
        %787 = vmatprep.mubr.f32.mxu0 0.0
        %788 = vmatmul.mubr.f32.gmra.mxu0 %v588
        %v789 = vpop.f32.mrf.mxu0
        %v790 = vadd.f32 0.0, %v789
        %v791 = vpop.f32.mrf.mxu0
        %792 = vmatprep.mubr.f32.mxu0 0.0
        %793 = vmatmul.mubr.f32.gmra.mxu0 %v591
        %v794 = vpop.f32.mrf.mxu0
        %v795 = vadd.f32 0.0, %v794
        %v796 = vpop.f32.mrf.mxu0
        %797 = vmatprep.mubr.f32.mxu0 0.0
        %798 = vmatmul.mubr.f32.gmra.mxu0 %v594
        %v799 = vpop.f32.mrf.mxu0
        %v800 = vadd.f32 0.0, %v799
        %v801 = vpop.f32.mrf.mxu0
        %802 = vmatprep.mubr.f32.mxu0 0.0
        %803 = vmatmul.mubr.f32.gmra.mxu0 %v597
        %v804 = vpop.f32.mrf.mxu0
        %v805 = vadd.f32 0.0, %v804
        %v806 = vpop.f32.mrf.mxu0
        %807 = vmatprep.mubr.f32.mxu0 0.0
        %808 = vmatmul.mubr.f32.gmra.mxu0 %v600
        %v809 = vpop.f32.mrf.mxu0
        %v810 = vadd.f32 0.0, %v809
        %v811 = vpop.f32.mrf.mxu0
        %812 = vmatprep.mubr.f32.mxu0 0.0
        %813 = vmatmul.mubr.f32.gmra.mxu0 %v603
        %v814 = vpop.f32.mrf.mxu0
        %v815 = vadd.f32 0.0, %v814
        %v816 = vpop.f32.mrf.mxu0
        %817 = vmatprep.mubr.f32.mxu0 0.0
        %818 = vmatmul.mubr.f32.gmra.mxu0 %v606
        %v819 = vpop.f32.mrf.mxu0
        %v820 = vadd.f32 0.0, %v819
        %v821 = vpop.f32.mrf.mxu0
        %822 = vmatprep.mubr.f32.mxu0 0.0
        %823 = vmatmul.mubr.f32.gmra.mxu0 %v609
        %v824 = vpop.f32.mrf.mxu0
        %v825 = vadd.f32 0.0, %v824
        %v826 = vpop.f32.mrf.mxu0
        %827 = vmatprep.mubr.f32.mxu0 0.0
        %828 = vmatmul.mubr.f32.gmra.mxu0 %v612
        %v829 = vpop.f32.mrf.mxu0
        %v830 = vadd.f32 0.0, %v829
        %v831 = vpop.f32.mrf.mxu0
        %832 = vmatprep.mubr.f32.mxu0 0.0
        %833 = vmatmul.mubr.f32.gmra.mxu0 %v615
        %v834 = vpop.f32.mrf.mxu0
        %v835 = vadd.f32 0.0, %v834
        %v836 = vpop.f32.mrf.mxu0
        %837 = vmatprep.mubr.f32.mxu0 0.0
        %838 = vmatmul.mubr.f32.gmra.mxu0 %v618
        %v839 = vpop.f32.mrf.mxu0
        %v840 = vadd.f32 0.0, %v839
        %v841 = vpop.f32.mrf.mxu0
        %842 = vmatprep.mubr.f32.mxu0 0.0
        %843 = vmatmul.mubr.f32.gmra.mxu0 %v621
        %v844 = vpop.f32.mrf.mxu0
        %v845 = vadd.f32 0.0, %v844
        %v846 = vpop.f32.mrf.mxu0
        %847 = vmatprep.mubr.f32.mxu0 0.0
        %848 = vmatmul.mubr.f32.gmra.mxu0 %v624
        %v849 = vpop.f32.mrf.mxu0
        %v850 = vadd.f32 0.0, %v849
        %v851 = vpop.f32.mrf.mxu0
        %852 = vmatprep.mubr.f32.mxu0 0.0
        %853 = vmatmul.mubr.f32.gmra.mxu0 %v627
        %v854 = vpop.f32.mrf.mxu0
        %v855 = vadd.f32 0.0, %v854
        %v856 = vpop.f32.mrf.mxu0
        %857 = vmatprep.mubr.f32.mxu0 0.0
        %858 = vmatmul.mubr.f32.gmra.mxu0 %v630
        %v859 = vpop.f32.mrf.mxu0
        %v860 = vadd.f32 0.0, %v859
        %v861 = vpop.f32.mrf.mxu0
        %862 = vmatprep.mubr.f32.mxu0 0.0
        %863 = vmatmul.mubr.f32.gmra.mxu0 %v633
        %v864 = vpop.f32.mrf.mxu0
        %v865 = vadd.f32 0.0, %v864
        %v866 = vpop.f32.mrf.mxu0
        %867 = vmatprep.mubr.f32.mxu0 0.0
        %868 = vmatmul.mubr.f32.gmra.mxu0 %v636
        %v869 = vpop.f32.mrf.mxu0
        %v870 = vadd.f32 0.0, %v869
        %v871 = vpop.f32.mrf.mxu0
        %872 = vmatprep.mubr.f32.mxu0 0.0
        %873 = vmatmul.mubr.f32.gmra.mxu0 %v639
        %v874 = vpop.f32.mrf.mxu0
        %v875 = vadd.f32 0.0, %v874
        %v876 = vpop.f32.mrf.mxu0
        %877 = vmatprep.mubr.f32.mxu0 0.0
        %878 = vmatmul.mubr.f32.gmra.mxu0 %v642
        %v879 = vpop.f32.mrf.mxu0
        %v880 = vadd.f32 0.0, %v879
        %v881 = vpop.f32.mrf.mxu0
        %882 = vmatprep.mubr.f32.mxu0 0.0
        %883 = vmatmul.mubr.f32.gmra.mxu0 %v645
        %v884 = vpop.f32.mrf.mxu0
        %v885 = vadd.f32 0.0, %v884
        %v886 = vpop.f32.mrf.mxu0
        %887 = vmatprep.mubr.f32.mxu0 0.0
        %888 = vmatmul.mubr.f32.gmra.mxu0 %v648
        %v889 = vpop.f32.mrf.mxu0
        %v890 = vadd.f32 0.0, %v889
        %v891 = vpop.f32.mrf.mxu0
        %892 = vmatprep.mubr.f32.mxu0 0.0
        %893 = vmatmul.mubr.f32.gmra.mxu0 %v651
        %v894 = vpop.f32.mrf.mxu0
        %v895 = vadd.f32 0.0, %v894
        %v896 = vpop.f32.mrf.mxu0
        %897 = vmatprep.mubr.f32.mxu0 0.0
        %898 = vmatmul.mubr.f32.gmra.mxu0 %v654
        %v899 = vpop.f32.mrf.mxu0
        %v900 = vadd.f32 0.0, %v899
        %v901 = vpop.f32.mrf.mxu0
        %902 = vmatprep.mubr.f32.mxu0 0.0
        %903 = vmatmul.mubr.f32.gmra.mxu0 %v657
        %v904 = vpop.f32.mrf.mxu0
        %v905 = vadd.f32 0.0, %v904
        %v906 = vpop.f32.mrf.mxu0
        %907 = vdwg.mxu0
        %v909 = vsel %vm550, %v475, 0
        %v912 = vsel %vm550, %v476, 0
        %v915 = vsel %vm550, %v477, 0
        %v918 = vsel %vm550, %v478, 0
        %v921 = vsel %vm550, %v479, 0
        %v924 = vsel %vm550, %v480, 0
        %v927 = vsel %vm550, %v481, 0
        %v930 = vsel %vm550, %v482, 0
        %v933 = vsel %vm550, %v483, 0
        %v936 = vsel %vm550, %v484, 0
        %v939 = vsel %vm550, %v485, 0
        %v942 = vsel %vm550, %v486, 0
        %v945 = vsel %vm550, %v487, 0
        %v948 = vsel %vm550, %v488, 0
        %v951 = vsel %vm550, %v489, 0
        %v954 = vsel %vm550, %v490, 0
        %v957 = vsel %vm550, %v491, 0
        %v960 = vsel %vm550, %v492, 0
        %v963 = vsel %vm550, %v493, 0
        %v966 = vsel %vm550, %v494, 0
        %v969 = vsel %vm550, %v495, 0
        %v972 = vsel %vm550, %v496, 0
        %v975 = vsel %vm550, %v497, 0
        %v978 = vsel %vm550, %v498, 0
        %v981 = vsel %vm550, %v499, 0
        %v984 = vsel %vm550, %v500, 0
        %v987 = vsel %vm550, %v501, 0
        %v990 = vsel %vm550, %v502, 0
        %v993 = vsel %vm550, %v503, 0
        %v996 = vsel %vm550, %v504, 0
        %v999 = vsel %vm550, %v505, 0
        %v1002 = vsel %vm550, %v506, 0
        %v1005 = vsel %vm550, %v507, 0
        %v1008 = vsel %vm550, %v508, 0
        %v1011 = vsel %vm550, %v509, 0
        %v1014 = vsel %vm550, %v510, 0
        %v1017 = vsel %vm659, %v511, 0
        %1019 = vmatprep.subr.mxu0 0.0
        %1020 = vmatpush1.msra.mxu0 0.0
        %1021 = vmatprep.subr.mxu0 0.0
        %1022 = vmatpush1.msra.mxu0 0.0
        %1023 = vmatprep.subr.mxu0 0.0
        %1024 = vmatpush1.msra.mxu0 0.0
        %1025 = vmatprep.subr.mxu0 0.0
        %1026 = vmatpush1.msra.mxu0 0.0
        %1027 = vmatprep.subr.mxu0 0.0
        %1028 = vmatpush1.msra.mxu0 0.0
        %1029 = vmatprep.subr.mxu0 0.0
        %1030 = vmatpush1.msra.mxu0 0.0
        %1031 = vmatprep.subr.mxu0 0.0
        %1032 = vmatpush1.msra.mxu0 0.0
        %1033 = vmatprep.subr.mxu0 0.0
        %1034 = vmatpush1.msra.mxu0 0.0
        %1035 = vmatprep.subr.mxu0 0.0
        %1036 = vmatpush1.msra.mxu0 0.0
        %1037 = vmatprep.subr.mxu0 0.0
        %1038 = vmatpush1.msra.mxu0 0.0
        %1039 = vmatprep.subr.mxu0 0.0
        %1040 = vmatpush1.msra.mxu0 0.0
        %1041 = vmatprep.subr.mxu0 0.0
        %1042 = vmatpush1.msra.mxu0 0.0
        %1043 = vmatprep.subr.mxu0 0.0
        %1044 = vmatpush1.msra.mxu0 0.0
        %1045 = vmatprep.subr.mxu0 0.0
        %1046 = vmatpush1.msra.mxu0 0.0
        %1047 = vmatprep.subr.mxu0 0.0
        %1048 = vmatpush1.msra.mxu0 0.0
        %1049 = vmatprep.subr.mxu0 0.0
        %1050 = vmatpush1.msra.mxu0 %v1017
        %1051 = vmatprep.subr.mxu0 0.0
        %1052 = vmatpush2.msra.mxu0 0.0
        %1053 = vmatprep.subr.mxu0 0.0
        %1054 = vmatpush2.msra.mxu0 0.0
        %1055 = vmatprep.subr.mxu0 0.0
        %1056 = vmatpush2.msra.mxu0 0.0
        %1057 = vmatprep.subr.mxu0 0.0
        %1058 = vmatpush2.msra.mxu0 0.0
        %1059 = vmatprep.subr.mxu0 0.0
        %1060 = vmatpush2.msra.mxu0 0.0
        %1061 = vmatprep.subr.mxu0 0.0
        %1062 = vmatpush2.msra.mxu0 0.0
        %1063 = vmatprep.subr.mxu0 0.0
        %1064 = vmatpush2.msra.mxu0 0.0
        %1065 = vmatprep.subr.mxu0 0.0
        %1066 = vmatpush2.msra.mxu0 0.0
        %1067 = vmatprep.subr.mxu0 0.0
        %1068 = vmatpush2.msra.mxu0 0.0
        %1069 = vmatprep.subr.mxu0 0.0
        %1070 = vmatpush2.msra.mxu0 0.0
        %1071 = vmatprep.subr.mxu0 0.0
        %1072 = vmatpush2.msra.mxu0 0.0
        %1073 = vmatprep.subr.mxu0 0.0
        %1074 = vmatpush2.msra.mxu0 0.0
        %1075 = vmatprep.subr.mxu0 0.0
        %1076 = vmatpush2.msra.mxu0 0.0
        %1077 = vmatprep.subr.mxu0 0.0
        %1078 = vmatpush2.msra.mxu0 0.0
        %1079 = vmatprep.subr.mxu0 0.0
        %1080 = vmatpush2.msra.mxu0 0.0
        %1081 = vmatprep.subr.mxu0 0.0
        %1082 = vmatpush2.msra.mxu0 0.0
        %1083 = vmatprep.mubr.f32.mxu0 0.0
        %1084 = vmatmul.mubr.f32.gmra.mxu0 %v909
        %v1085 = vpop.f32.mrf.mxu0
        %v1086 = vadd.f32 %v730, %v1085
        %v1087 = vpop.f32.mrf.mxu0
        %1088 = vmatprep.mubr.f32.mxu0 0.0
        %1089 = vmatmul.mubr.f32.gmra.mxu0 %v912
        %v1090 = vpop.f32.mrf.mxu0
        %v1091 = vadd.f32 %v735, %v1090
        %v1092 = vpop.f32.mrf.mxu0
        %1093 = vmatprep.mubr.f32.mxu0 0.0
        %1094 = vmatmul.mubr.f32.gmra.mxu0 %v915
        %v1095 = vpop.f32.mrf.mxu0
        %v1096 = vadd.f32 %v740, %v1095
        %v1097 = vpop.f32.mrf.mxu0
        %1098 = vmatprep.mubr.f32.mxu0 0.0
        %1099 = vmatmul.mubr.f32.gmra.mxu0 %v918
        %v1100 = vpop.f32.mrf.mxu0
        %v1101 = vadd.f32 %v745, %v1100
        %v1102 = vpop.f32.mrf.mxu0
        %1103 = vmatprep.mubr.f32.mxu0 0.0
        %1104 = vmatmul.mubr.f32.gmra.mxu0 %v921
        %v1105 = vpop.f32.mrf.mxu0
        %v1106 = vadd.f32 %v750, %v1105
        %v1107 = vpop.f32.mrf.mxu0
        %1108 = vmatprep.mubr.f32.mxu0 0.0
        %1109 = vmatmul.mubr.f32.gmra.mxu0 %v924
        %v1110 = vpop.f32.mrf.mxu0
        %v1111 = vadd.f32 %v755, %v1110
        %v1112 = vpop.f32.mrf.mxu0
        %1113 = vmatprep.mubr.f32.mxu0 0.0
        %1114 = vmatmul.mubr.f32.gmra.mxu0 %v927
        %v1115 = vpop.f32.mrf.mxu0
        %v1116 = vadd.f32 %v760, %v1115
        %v1117 = vpop.f32.mrf.mxu0
        %1118 = vmatprep.mubr.f32.mxu0 0.0
        %1119 = vmatmul.mubr.f32.gmra.mxu0 %v930
        %v1120 = vpop.f32.mrf.mxu0
        %v1121 = vadd.f32 %v765, %v1120
        %v1122 = vpop.f32.mrf.mxu0
        %1123 = vmatprep.mubr.f32.mxu0 0.0
        %1124 = vmatmul.mubr.f32.gmra.mxu0 %v933
        %v1125 = vpop.f32.mrf.mxu0
        %v1126 = vadd.f32 %v770, %v1125
        %v1127 = vpop.f32.mrf.mxu0
        %1128 = vmatprep.mubr.f32.mxu0 0.0
        %1129 = vmatmul.mubr.f32.gmra.mxu0 %v936
        %v1130 = vpop.f32.mrf.mxu0
        %v1131 = vadd.f32 %v775, %v1130
        %v1132 = vpop.f32.mrf.mxu0
        %1133 = vmatprep.mubr.f32.mxu0 0.0
        %1134 = vmatmul.mubr.f32.gmra.mxu0 %v939
        %v1135 = vpop.f32.mrf.mxu0
        %v1136 = vadd.f32 %v780, %v1135
        %v1137 = vpop.f32.mrf.mxu0
        %1138 = vmatprep.mubr.f32.mxu0 0.0
        %1139 = vmatmul.mubr.f32.gmra.mxu0 %v942
        %v1140 = vpop.f32.mrf.mxu0
        %v1141 = vadd.f32 %v785, %v1140
        %v1142 = vpop.f32.mrf.mxu0
        %1143 = vmatprep.mubr.f32.mxu0 0.0
        %1144 = vmatmul.mubr.f32.gmra.mxu0 %v945
        %v1145 = vpop.f32.mrf.mxu0
        %v1146 = vadd.f32 %v790, %v1145
        %v1147 = vpop.f32.mrf.mxu0
        %1148 = vmatprep.mubr.f32.mxu0 0.0
        %1149 = vmatmul.mubr.f32.gmra.mxu0 %v948
        %v1150 = vpop.f32.mrf.mxu0
        %v1151 = vadd.f32 %v795, %v1150
        %v1152 = vpop.f32.mrf.mxu0
        %1153 = vmatprep.mubr.f32.mxu0 0.0
        %1154 = vmatmul.mubr.f32.gmra.mxu0 %v951
        %v1155 = vpop.f32.mrf.mxu0
        %v1156 = vadd.f32 %v800, %v1155
        %v1157 = vpop.f32.mrf.mxu0
        %1158 = vmatprep.mubr.f32.mxu0 0.0
        %1159 = vmatmul.mubr.f32.gmra.mxu0 %v954
        %v1160 = vpop.f32.mrf.mxu0
        %v1161 = vadd.f32 %v805, %v1160
        %v1162 = vpop.f32.mrf.mxu0
        %1163 = vmatprep.mubr.f32.mxu0 0.0
        %1164 = vmatmul.mubr.f32.gmra.mxu0 %v957
        %v1165 = vpop.f32.mrf.mxu0
        %v1166 = vadd.f32 %v810, %v1165
        %v1167 = vpop.f32.mrf.mxu0
        %1168 = vmatprep.mubr.f32.mxu0 0.0
        %1169 = vmatmul.mubr.f32.gmra.mxu0 %v960
        %v1170 = vpop.f32.mrf.mxu0
        %v1171 = vadd.f32 %v815, %v1170
        %v1172 = vpop.f32.mrf.mxu0
        %1173 = vmatprep.mubr.f32.mxu0 0.0
        %1174 = vmatmul.mubr.f32.gmra.mxu0 %v963
        %v1175 = vpop.f32.mrf.mxu0
        %v1176 = vadd.f32 %v820, %v1175
        %v1177 = vpop.f32.mrf.mxu0
        %1178 = vmatprep.mubr.f32.mxu0 0.0
        %1179 = vmatmul.mubr.f32.gmra.mxu0 %v966
        %v1180 = vpop.f32.mrf.mxu0
        %v1181 = vadd.f32 %v825, %v1180
        %v1182 = vpop.f32.mrf.mxu0
        %1183 = vmatprep.mubr.f32.mxu0 0.0
        %1184 = vmatmul.mubr.f32.gmra.mxu0 %v969
        %v1185 = vpop.f32.mrf.mxu0
        %v1186 = vadd.f32 %v830, %v1185
        %v1187 = vpop.f32.mrf.mxu0
        %1188 = vmatprep.mubr.f32.mxu0 0.0
        %1189 = vmatmul.mubr.f32.gmra.mxu0 %v972
        %v1190 = vpop.f32.mrf.mxu0
        %v1191 = vadd.f32 %v835, %v1190
        %v1192 = vpop.f32.mrf.mxu0
        %1193 = vmatprep.mubr.f32.mxu0 0.0
        %1194 = vmatmul.mubr.f32.gmra.mxu0 %v975
        %v1195 = vpop.f32.mrf.mxu0
        %v1196 = vadd.f32 %v840, %v1195
        %v1197 = vpop.f32.mrf.mxu0
        %1198 = vmatprep.mubr.f32.mxu0 0.0
        %1199 = vmatmul.mubr.f32.gmra.mxu0 %v978
        %v1200 = vpop.f32.mrf.mxu0
        %v1201 = vadd.f32 %v845, %v1200
        %v1202 = vpop.f32.mrf.mxu0
        %1203 = vmatprep.mubr.f32.mxu0 0.0
        %1204 = vmatmul.mubr.f32.gmra.mxu0 %v981
        %v1205 = vpop.f32.mrf.mxu0
        %v1206 = vadd.f32 %v850, %v1205
        %v1207 = vpop.f32.mrf.mxu0
        %1208 = vmatprep.mubr.f32.mxu0 0.0
        %1209 = vmatmul.mubr.f32.gmra.mxu0 %v984
        %v1210 = vpop.f32.mrf.mxu0
        %v1211 = vadd.f32 %v855, %v1210
        %v1212 = vpop.f32.mrf.mxu0
        %1213 = vmatprep.mubr.f32.mxu0 0.0
        %1214 = vmatmul.mubr.f32.gmra.mxu0 %v987
        %v1215 = vpop.f32.mrf.mxu0
        %v1216 = vadd.f32 %v860, %v1215
        %v1217 = vpop.f32.mrf.mxu0
        %1218 = vmatprep.mubr.f32.mxu0 0.0
        %1219 = vmatmul.mubr.f32.gmra.mxu0 %v990
        %v1220 = vpop.f32.mrf.mxu0
        %v1221 = vadd.f32 %v865, %v1220
        %v1222 = vpop.f32.mrf.mxu0
        %1223 = vmatprep.mubr.f32.mxu0 0.0
        %1224 = vmatmul.mubr.f32.gmra.mxu0 %v993
        %v1225 = vpop.f32.mrf.mxu0
        %v1226 = vadd.f32 %v870, %v1225
        %v1227 = vpop.f32.mrf.mxu0
        %1228 = vmatprep.mubr.f32.mxu0 0.0
        %1229 = vmatmul.mubr.f32.gmra.mxu0 %v996
        %v1230 = vpop.f32.mrf.mxu0
        %v1231 = vadd.f32 %v875, %v1230
        %v1232 = vpop.f32.mrf.mxu0
        %1233 = vmatprep.mubr.f32.mxu0 0.0
        %1234 = vmatmul.mubr.f32.gmra.mxu0 %v999
        %v1235 = vpop.f32.mrf.mxu0
        %v1236 = vadd.f32 %v880, %v1235
        %v1237 = vpop.f32.mrf.mxu0
        %1238 = vmatprep.mubr.f32.mxu0 0.0
        %1239 = vmatmul.mubr.f32.gmra.mxu0 %v1002
        %v1240 = vpop.f32.mrf.mxu0
        %v1241 = vadd.f32 %v885, %v1240
        %v1242 = vpop.f32.mrf.mxu0
        %1243 = vmatprep.mubr.f32.mxu0 0.0
        %1244 = vmatmul.mubr.f32.gmra.mxu0 %v1005
        %v1245 = vpop.f32.mrf.mxu0
        %v1246 = vadd.f32 %v890, %v1245
        %v1247 = vpop.f32.mrf.mxu0
        %1248 = vmatprep.mubr.f32.mxu0 0.0
        %1249 = vmatmul.mubr.f32.gmra.mxu0 %v1008
        %v1250 = vpop.f32.mrf.mxu0
        %v1251 = vadd.f32 %v895, %v1250
        %v1252 = vpop.f32.mrf.mxu0
        %1253 = vmatprep.mubr.f32.mxu0 0.0
        %1254 = vmatmul.mubr.f32.gmra.mxu0 %v1011
        %v1255 = vpop.f32.mrf.mxu0
        %v1256 = vadd.f32 %v900, %v1255
        %v1257 = vpop.f32.mrf.mxu0
        %1258 = vmatprep.mubr.f32.mxu0 0.0
        %1259 = vmatmul.mubr.f32.gmra.mxu0 %v1014
        %v1260 = vpop.f32.mrf.mxu0
        %v1261 = vadd.f32 %v905, %v1260
        %v1262 = vpop.f32.mrf.mxu0
        %1263 = vdwg.mxu0
        %v1264 = vld [vmem:[#allocation2 + $0x7] sm:$0xff]
        %v1265 = vld [vmem:[#allocation2 + $0xf] sm:$0xff]
        %v1266 = vld [vmem:[#allocation2 + $0x17] sm:$0xff]
        %v1267 = vld [vmem:[#allocation2 + $0x1f] sm:$0xff]
        %v1268 = vld [vmem:[#allocation2 + $0x27] sm:$0xff]
        %v1269 = vld [vmem:[#allocation2 + $0x2f] sm:$0xff]
        %v1270 = vld [vmem:[#allocation2 + $0x37] sm:$0xff]
        %v1271 = vld [vmem:[#allocation2 + $0x3f] sm:$0xff]
        %v1272 = vld [vmem:[#allocation2 + $0x47] sm:$0xff]
        %v1273 = vld [vmem:[#allocation2 + $0x4f] sm:$0xff]
        %v1274 = vld [vmem:[#allocation2 + $0x57] sm:$0xff]
        %v1275 = vld [vmem:[#allocation2 + $0x5f] sm:$0xff]
        %v1276 = vld [vmem:[#allocation2 + $0x67] sm:$0xff]
        %v1277 = vld [vmem:[#allocation2 + $0x6f] sm:$0xff]
        %v1278 = vld [vmem:[#allocation2 + $0x77] sm:$0xff]
        %v1279 = vld [vmem:[#allocation2 + $0x7f] sm:$0xff]
        %v1280 = vld [vmem:[#allocation2 + $0x87] sm:$0xff]
        %v1281 = vld [vmem:[#allocation2 + $0x8f] sm:$0xff]
        %v1282 = vld [vmem:[#allocation2 + $0x97] sm:$0xff]
        %v1283 = vld [vmem:[#allocation2 + $0x9f] sm:$0xff]
        %v1284 = vld [vmem:[#allocation2 + $0xa7] sm:$0xff]
        %v1285 = vld [vmem:[#allocation2 + $0xaf] sm:$0xff]
        %v1286 = vld [vmem:[#allocation2 + $0xb7] sm:$0xff]
        %v1287 = vld [vmem:[#allocation2 + $0xbf] sm:$0xff]
        %v1288 = vld [vmem:[#allocation2 + $0xc7] sm:$0xff]
        %v1289 = vld [vmem:[#allocation2 + $0xcf] sm:$0xff]
        %v1290 = vld [vmem:[#allocation2 + $0xd7] sm:$0xff]
        %v1291 = vld [vmem:[#allocation2 + $0xdf] sm:$0xff]
        %v1292 = vld [vmem:[#allocation2 + $0xe7] sm:$0xff]
        %v1293 = vld [vmem:[#allocation2 + $0xef] sm:$0xff]
        %v1294 = vld [vmem:[#allocation2 + $0xf7] sm:$0xff]
        %v1295 = vld [vmem:[#allocation2 + $0xff] sm:$0xff]
        %v1296 = vld [vmem:[#allocation2 + $0x107] sm:$0xff]
        %v1297 = vld [vmem:[#allocation2 + $0x10f] sm:$0xff]
        %v1298 = vld [vmem:[#allocation2 + $0x117] sm:$0xff]
        %v1299 = vld [vmem:[#allocation2 + $0x11f] sm:$0xff]
        %s1300 = scalar_lea.vmem %s3, 8
        %v1301 = vld [vmem:[%s1300] sm:$0xf]
        %v1303 = vsel %vm550, %v1264, 0
        %v1306 = vsel %vm550, %v1265, 0
        %v1309 = vsel %vm550, %v1266, 0
        %v1312 = vsel %vm550, %v1267, 0
        %v1315 = vsel %vm550, %v1268, 0
        %v1318 = vsel %vm550, %v1269, 0
        %v1321 = vsel %vm550, %v1270, 0
        %v1324 = vsel %vm550, %v1271, 0
        %v1327 = vsel %vm550, %v1272, 0
        %v1330 = vsel %vm550, %v1273, 0
        %v1333 = vsel %vm550, %v1274, 0
        %v1336 = vsel %vm550, %v1275, 0
        %v1339 = vsel %vm550, %v1276, 0
        %v1342 = vsel %vm550, %v1277, 0
        %v1345 = vsel %vm550, %v1278, 0
        %v1348 = vsel %vm550, %v1279, 0
        %v1351 = vsel %vm550, %v1280, 0
        %v1354 = vsel %vm550, %v1281, 0
        %v1357 = vsel %vm550, %v1282, 0
        %v1360 = vsel %vm550, %v1283, 0
        %v1363 = vsel %vm550, %v1284, 0
        %v1366 = vsel %vm550, %v1285, 0
        %v1369 = vsel %vm550, %v1286, 0
        %v1372 = vsel %vm550, %v1287, 0
        %v1375 = vsel %vm550, %v1288, 0
        %v1378 = vsel %vm550, %v1289, 0
        %v1381 = vsel %vm550, %v1290, 0
        %v1384 = vsel %vm550, %v1291, 0
        %v1387 = vsel %vm550, %v1292, 0
        %v1390 = vsel %vm550, %v1293, 0
        %v1393 = vsel %vm550, %v1294, 0
        %v1396 = vsel %vm550, %v1295, 0
        %v1399 = vsel %vm550, %v1296, 0
        %v1402 = vsel %vm550, %v1297, 0
        %v1405 = vsel %vm550, %v1298, 0
        %v1408 = vsel %vm550, %v1299, 0
        %v1411 = vsel %vm659, %v1301, 0
        %1413 = vmatprep.subr.mxu0 0.0
        %1414 = vmatpush1.msra.mxu0 0.0
        %1415 = vmatprep.subr.mxu0 0.0
        %1416 = vmatpush1.msra.mxu0 0.0
        %1417 = vmatprep.subr.mxu0 0.0
        %1418 = vmatpush1.msra.mxu0 0.0
        %1419 = vmatprep.subr.mxu0 0.0
        %1420 = vmatpush1.msra.mxu0 0.0
        %1421 = vmatprep.subr.mxu0 0.0
        %1422 = vmatpush1.msra.mxu0 0.0
        %1423 = vmatprep.subr.mxu0 0.0
        %1424 = vmatpush1.msra.mxu0 0.0
        %1425 = vmatprep.subr.mxu0 0.0
        %1426 = vmatpush1.msra.mxu0 0.0
        %1427 = vmatprep.subr.mxu0 0.0
        %1428 = vmatpush1.msra.mxu0 0.0
        %1429 = vmatprep.subr.mxu0 0.0
        %1430 = vmatpush1.msra.mxu0 0.0
        %1431 = vmatprep.subr.mxu0 0.0
        %1432 = vmatpush1.msra.mxu0 0.0
        %1433 = vmatprep.subr.mxu0 0.0
        %1434 = vmatpush1.msra.mxu0 0.0
        %1435 = vmatprep.subr.mxu0 0.0
        %1436 = vmatpush1.msra.mxu0 0.0
        %1437 = vmatprep.subr.mxu0 0.0
        %1438 = vmatpush1.msra.mxu0 0.0
        %1439 = vmatprep.subr.mxu0 0.0
        %1440 = vmatpush1.msra.mxu0 0.0
        %1441 = vmatprep.subr.mxu0 0.0
        %1442 = vmatpush1.msra.mxu0 0.0
        %1443 = vmatprep.subr.mxu0 0.0
        %1444 = vmatpush1.msra.mxu0 %v1411
        %1445 = vmatprep.subr.mxu0 0.0
        %1446 = vmatpush2.msra.mxu0 0.0
        %1447 = vmatprep.subr.mxu0 0.0
        %1448 = vmatpush2.msra.mxu0 0.0
        %1449 = vmatprep.subr.mxu0 0.0
        %1450 = vmatpush2.msra.mxu0 0.0
        %1451 = vmatprep.subr.mxu0 0.0
        %1452 = vmatpush2.msra.mxu0 0.0
        %1453 = vmatprep.subr.mxu0 0.0
        %1454 = vmatpush2.msra.mxu0 0.0
        %1455 = vmatprep.subr.mxu0 0.0
        %1456 = vmatpush2.msra.mxu0 0.0
        %1457 = vmatprep.subr.mxu0 0.0
        %1458 = vmatpush2.msra.mxu0 0.0
        %1459 = vmatprep.subr.mxu0 0.0
        %1460 = vmatpush2.msra.mxu0 0.0
        %1461 = vmatprep.subr.mxu0 0.0
        %1462 = vmatpush2.msra.mxu0 0.0
        %1463 = vmatprep.subr.mxu0 0.0
        %1464 = vmatpush2.msra.mxu0 0.0
        %1465 = vmatprep.subr.mxu0 0.0
        %1466 = vmatpush2.msra.mxu0 0.0
        %1467 = vmatprep.subr.mxu0 0.0
        %1468 = vmatpush2.msra.mxu0 0.0
        %1469 = vmatprep.subr.mxu0 0.0
        %1470 = vmatpush2.msra.mxu0 0.0
        %1471 = vmatprep.subr.mxu0 0.0
        %1472 = vmatpush2.msra.mxu0 0.0
        %1473 = vmatprep.subr.mxu0 0.0
        %1474 = vmatpush2.msra.mxu0 0.0
        %1475 = vmatprep.subr.mxu0 0.0
        %1476 = vmatpush2.msra.mxu0 0.0
        %1477 = vmatprep.mubr.f32.mxu0 0.0
        %1478 = vmatmul.mubr.f32.gmra.mxu0 %v1303
        %v1479 = vpop.f32.mrf.mxu0
        %v1480 = vadd.f32 0.0, %v1479
        %v1481 = vpop.f32.mrf.mxu0
        %1482 = vmatprep.mubr.f32.mxu0 0.0
        %1483 = vmatmul.mubr.f32.gmra.mxu0 %v1306
        %v1484 = vpop.f32.mrf.mxu0
        %v1485 = vadd.f32 0.0, %v1484
        %v1486 = vpop.f32.mrf.mxu0
        %1487 = vmatprep.mubr.f32.mxu0 0.0
        %1488 = vmatmul.mubr.f32.gmra.mxu0 %v1309
        %v1489 = vpop.f32.mrf.mxu0
        %v1490 = vadd.f32 0.0, %v1489
        %v1491 = vpop.f32.mrf.mxu0
        %1492 = vmatprep.mubr.f32.mxu0 0.0
        %1493 = vmatmul.mubr.f32.gmra.mxu0 %v1312
        %v1494 = vpop.f32.mrf.mxu0
        %v1495 = vadd.f32 0.0, %v1494
        %v1496 = vpop.f32.mrf.mxu0
        %1497 = vmatprep.mubr.f32.mxu0 0.0
        %1498 = vmatmul.mubr.f32.gmra.mxu0 %v1315
        %v1499 = vpop.f32.mrf.mxu0
        %v1500 = vadd.f32 0.0, %v1499
        %v1501 = vpop.f32.mrf.mxu0
        %1502 = vmatprep.mubr.f32.mxu0 0.0
        %1503 = vmatmul.mubr.f32.gmra.mxu0 %v1318
        %v1504 = vpop.f32.mrf.mxu0
        %v1505 = vadd.f32 0.0, %v1504
        %v1506 = vpop.f32.mrf.mxu0
        %1507 = vmatprep.mubr.f32.mxu0 0.0
        %1508 = vmatmul.mubr.f32.gmra.mxu0 %v1321
        %v1509 = vpop.f32.mrf.mxu0
        %v1510 = vadd.f32 0.0, %v1509
        %v1511 = vpop.f32.mrf.mxu0
        %1512 = vmatprep.mubr.f32.mxu0 0.0
        %1513 = vmatmul.mubr.f32.gmra.mxu0 %v1324
        %v1514 = vpop.f32.mrf.mxu0
        %v1515 = vadd.f32 0.0, %v1514
        %v1516 = vpop.f32.mrf.mxu0
        %1517 = vmatprep.mubr.f32.mxu0 0.0
        %1518 = vmatmul.mubr.f32.gmra.mxu0 %v1327
        %v1519 = vpop.f32.mrf.mxu0
        %v1520 = vadd.f32 0.0, %v1519
        %v1521 = vpop.f32.mrf.mxu0
        %1522 = vmatprep.mubr.f32.mxu0 0.0
        %1523 = vmatmul.mubr.f32.gmra.mxu0 %v1330
        %v1524 = vpop.f32.mrf.mxu0
        %v1525 = vadd.f32 0.0, %v1524
        %v1526 = vpop.f32.mrf.mxu0
        %1527 = vmatprep.mubr.f32.mxu0 0.0
        %1528 = vmatmul.mubr.f32.gmra.mxu0 %v1333
        %v1529 = vpop.f32.mrf.mxu0
        %v1530 = vadd.f32 0.0, %v1529
        %v1531 = vpop.f32.mrf.mxu0
        %1532 = vmatprep.mubr.f32.mxu0 0.0
        %1533 = vmatmul.mubr.f32.gmra.mxu0 %v1336
        %v1534 = vpop.f32.mrf.mxu0
        %v1535 = vadd.f32 0.0, %v1534
        %v1536 = vpop.f32.mrf.mxu0
        %1537 = vmatprep.mubr.f32.mxu0 0.0
        %1538 = vmatmul.mubr.f32.gmra.mxu0 %v1339
        %v1539 = vpop.f32.mrf.mxu0
        %v1540 = vadd.f32 0.0, %v1539
        %v1541 = vpop.f32.mrf.mxu0
        %1542 = vmatprep.mubr.f32.mxu0 0.0
        %1543 = vmatmul.mubr.f32.gmra.mxu0 %v1342
        %v1544 = vpop.f32.mrf.mxu0
        %v1545 = vadd.f32 0.0, %v1544
        %v1546 = vpop.f32.mrf.mxu0
        %1547 = vmatprep.mubr.f32.mxu0 0.0
        %1548 = vmatmul.mubr.f32.gmra.mxu0 %v1345
        %v1549 = vpop.f32.mrf.mxu0
        %v1550 = vadd.f32 0.0, %v1549
        %v1551 = vpop.f32.mrf.mxu0
        %1552 = vmatprep.mubr.f32.mxu0 0.0
        %1553 = vmatmul.mubr.f32.gmra.mxu0 %v1348
        %v1554 = vpop.f32.mrf.mxu0
        %v1555 = vadd.f32 0.0, %v1554
        %v1556 = vpop.f32.mrf.mxu0
        %1557 = vmatprep.mubr.f32.mxu0 0.0
        %1558 = vmatmul.mubr.f32.gmra.mxu0 %v1351
        %v1559 = vpop.f32.mrf.mxu0
        %v1560 = vadd.f32 0.0, %v1559
        %v1561 = vpop.f32.mrf.mxu0
        %1562 = vmatprep.mubr.f32.mxu0 0.0
        %1563 = vmatmul.mubr.f32.gmra.mxu0 %v1354
        %v1564 = vpop.f32.mrf.mxu0
        %v1565 = vadd.f32 0.0, %v1564
        %v1566 = vpop.f32.mrf.mxu0
        %1567 = vmatprep.mubr.f32.mxu0 0.0
        %1568 = vmatmul.mubr.f32.gmra.mxu0 %v1357
        %v1569 = vpop.f32.mrf.mxu0
        %v1570 = vadd.f32 0.0, %v1569
        %v1571 = vpop.f32.mrf.mxu0
        %1572 = vmatprep.mubr.f32.mxu0 0.0
        %1573 = vmatmul.mubr.f32.gmra.mxu0 %v1360
        %v1574 = vpop.f32.mrf.mxu0
        %v1575 = vadd.f32 0.0, %v1574
        %v1576 = vpop.f32.mrf.mxu0
        %1577 = vmatprep.mubr.f32.mxu0 0.0
        %1578 = vmatmul.mubr.f32.gmra.mxu0 %v1363
        %v1579 = vpop.f32.mrf.mxu0
        %v1580 = vadd.f32 0.0, %v1579
        %v1581 = vpop.f32.mrf.mxu0
        %1582 = vmatprep.mubr.f32.mxu0 0.0
        %1583 = vmatmul.mubr.f32.gmra.mxu0 %v1366
        %v1584 = vpop.f32.mrf.mxu0
        %v1585 = vadd.f32 0.0, %v1584
        %v1586 = vpop.f32.mrf.mxu0
        %1587 = vmatprep.mubr.f32.mxu0 0.0
        %1588 = vmatmul.mubr.f32.gmra.mxu0 %v1369
        %v1589 = vpop.f32.mrf.mxu0
        %v1590 = vadd.f32 0.0, %v1589
        %v1591 = vpop.f32.mrf.mxu0
        %1592 = vmatprep.mubr.f32.mxu0 0.0
        %1593 = vmatmul.mubr.f32.gmra.mxu0 %v1372
        %v1594 = vpop.f32.mrf.mxu0
        %v1595 = vadd.f32 0.0, %v1594
        %v1596 = vpop.f32.mrf.mxu0
        %1597 = vmatprep.mubr.f32.mxu0 0.0
        %1598 = vmatmul.mubr.f32.gmra.mxu0 %v1375
        %v1599 = vpop.f32.mrf.mxu0
        %v1600 = vadd.f32 0.0, %v1599
        %v1601 = vpop.f32.mrf.mxu0
        %1602 = vmatprep.mubr.f32.mxu0 0.0
        %1603 = vmatmul.mubr.f32.gmra.mxu0 %v1378
        %v1604 = vpop.f32.mrf.mxu0
        %v1605 = vadd.f32 0.0, %v1604
        %v1606 = vpop.f32.mrf.mxu0
        %1607 = vmatprep.mubr.f32.mxu0 0.0
        %1608 = vmatmul.mubr.f32.gmra.mxu0 %v1381
        %v1609 = vpop.f32.mrf.mxu0
        %v1610 = vadd.f32 0.0, %v1609
        %v1611 = vpop.f32.mrf.mxu0
        %1612 = vmatprep.mubr.f32.mxu0 0.0
        %1613 = vmatmul.mubr.f32.gmra.mxu0 %v1384
        %v1614 = vpop.f32.mrf.mxu0
        %v1615 = vadd.f32 0.0, %v1614
        %v1616 = vpop.f32.mrf.mxu0
        %1617 = vmatprep.mubr.f32.mxu0 0.0
        %1618 = vmatmul.mubr.f32.gmra.mxu0 %v1387
        %v1619 = vpop.f32.mrf.mxu0
        %v1620 = vadd.f32 0.0, %v1619
        %v1621 = vpop.f32.mrf.mxu0
        %1622 = vmatprep.mubr.f32.mxu0 0.0
        %1623 = vmatmul.mubr.f32.gmra.mxu0 %v1390
        %v1624 = vpop.f32.mrf.mxu0
        %v1625 = vadd.f32 0.0, %v1624
        %v1626 = vpop.f32.mrf.mxu0
        %1627 = vmatprep.mubr.f32.mxu0 0.0
        %1628 = vmatmul.mubr.f32.gmra.mxu0 %v1393
        %v1629 = vpop.f32.mrf.mxu0
        %v1630 = vadd.f32 0.0, %v1629
        %v1631 = vpop.f32.mrf.mxu0
        %1632 = vmatprep.mubr.f32.mxu0 0.0
        %1633 = vmatmul.mubr.f32.gmra.mxu0 %v1396
        %v1634 = vpop.f32.mrf.mxu0
        %v1635 = vadd.f32 0.0, %v1634
        %v1636 = vpop.f32.mrf.mxu0
        %1637 = vmatprep.mubr.f32.mxu0 0.0
        %1638 = vmatmul.mubr.f32.gmra.mxu0 %v1399
        %v1639 = vpop.f32.mrf.mxu0
        %v1640 = vadd.f32 0.0, %v1639
        %v1641 = vpop.f32.mrf.mxu0
        %1642 = vmatprep.mubr.f32.mxu0 0.0
        %1643 = vmatmul.mubr.f32.gmra.mxu0 %v1402
        %v1644 = vpop.f32.mrf.mxu0
        %v1645 = vadd.f32 0.0, %v1644
        %v1646 = vpop.f32.mrf.mxu0
        %1647 = vmatprep.mubr.f32.mxu0 0.0
        %1648 = vmatmul.mubr.f32.gmra.mxu0 %v1405
        %v1649 = vpop.f32.mrf.mxu0
        %v1650 = vadd.f32 0.0, %v1649
        %v1651 = vpop.f32.mrf.mxu0
        %1652 = vmatprep.mubr.f32.mxu0 0.0
        %1653 = vmatmul.mubr.f32.gmra.mxu0 %v1408
        %v1654 = vpop.f32.mrf.mxu0
        %v1655 = vadd.f32 0.0, %v1654
        %v1656 = vpop.f32.mrf.mxu0
        %1657 = vdwg.mxu0
        %v1658 = vadd.f32 %v1086, %v1480
        %v1659 = vadd.f32 %v1091, %v1485
        %v1660 = vadd.f32 %v1096, %v1490
        %v1661 = vadd.f32 %v1101, %v1495
        %v1662 = vadd.f32 %v1106, %v1500
        %v1663 = vadd.f32 %v1111, %v1505
        %v1664 = vadd.f32 %v1116, %v1510
        %v1665 = vadd.f32 %v1121, %v1515
        %v1666 = vadd.f32 %v1126, %v1520
        %v1667 = vadd.f32 %v1131, %v1525
        %v1668 = vadd.f32 %v1136, %v1530
        %v1669 = vadd.f32 %v1141, %v1535
        %v1670 = vadd.f32 %v1146, %v1540
        %v1671 = vadd.f32 %v1151, %v1545
        %v1672 = vadd.f32 %v1156, %v1550
        %v1673 = vadd.f32 %v1161, %v1555
        %v1674 = vadd.f32 %v1166, %v1560
        %v1675 = vadd.f32 %v1171, %v1565
        %v1676 = vadd.f32 %v1176, %v1570
        %v1677 = vadd.f32 %v1181, %v1575
        %v1678 = vadd.f32 %v1186, %v1580
        %v1679 = vadd.f32 %v1191, %v1585
        %v1680 = vadd.f32 %v1196, %v1590
        %v1681 = vadd.f32 %v1201, %v1595
        %v1682 = vadd.f32 %v1206, %v1600
        %v1683 = vadd.f32 %v1211, %v1605
        %v1684 = vadd.f32 %v1216, %v1610
        %v1685 = vadd.f32 %v1221, %v1615
        %v1686 = vadd.f32 %v1226, %v1620
        %v1687 = vadd.f32 %v1231, %v1625
        %v1688 = vadd.f32 %v1236, %v1630
        %v1689 = vadd.f32 %v1241, %v1635
        %v1690 = vadd.f32 %v1246, %v1640
        %v1691 = vadd.f32 %v1251, %v1645
        %v1692 = vadd.f32 %v1256, %v1650
        %v1693 = vadd.f32 %v1261, %v1655
        %v1694 = vld [vmem:[#allocation2 + $0x17] sm:$0xff]
        %v1695 = vld [vmem:[#allocation2 + $0x1f] sm:$0xff]
        %v1696 = vld [vmem:[#allocation2 + $0x27] sm:$0xff]
        %v1697 = vld [vmem:[#allocation2 + $0x2f] sm:$0xff]
        %v1698 = vld [vmem:[#allocation2 + $0x37] sm:$0xff]
        %v1699 = vld [vmem:[#allocation2 + $0x3f] sm:$0xff]
        %v1700 = vld [vmem:[#allocation2 + $0x47] sm:$0xff]
        %v1701 = vld [vmem:[#allocation2 + $0x4f] sm:$0xff]
        %v1702 = vld [vmem:[#allocation2 + $0x57] sm:$0xff]
        %v1703 = vld [vmem:[#allocation2 + $0x5f] sm:$0xff]
        %v1704 = vld [vmem:[#allocation2 + $0x67] sm:$0xff]
        %v1705 = vld [vmem:[#allocation2 + $0x6f] sm:$0xff]
        %v1706 = vld [vmem:[#allocation2 + $0x77] sm:$0xff]
        %v1707 = vld [vmem:[#allocation2 + $0x7f] sm:$0xff]
        %v1708 = vld [vmem:[#allocation2 + $0x87] sm:$0xff]
        %v1709 = vld [vmem:[#allocation2 + $0x8f] sm:$0xff]
        %v1710 = vld [vmem:[#allocation2 + $0x97] sm:$0xff]
        %v1711 = vld [vmem:[#allocation2 + $0x9f] sm:$0xff]
        %v1712 = vld [vmem:[#allocation2 + $0xa7] sm:$0xff]
        %v1713 = vld [vmem:[#allocation2 + $0xaf] sm:$0xff]
        %v1714 = vld [vmem:[#allocation2 + $0xb7] sm:$0xff]
        %v1715 = vld [vmem:[#allocation2 + $0xbf] sm:$0xff]
        %v1716 = vld [vmem:[#allocation2 + $0xc7] sm:$0xff]
        %v1717 = vld [vmem:[#allocation2 + $0xcf] sm:$0xff]
        %v1718 = vld [vmem:[#allocation2 + $0xd7] sm:$0xff]
        %v1719 = vld [vmem:[#allocation2 + $0xdf] sm:$0xff]
        %v1720 = vld [vmem:[#allocation2 + $0xe7] sm:$0xff]
        %v1721 = vld [vmem:[#allocation2 + $0xef] sm:$0xff]
        %v1722 = vld [vmem:[#allocation2 + $0xf7] sm:$0xff]
        %v1723 = vld [vmem:[#allocation2 + $0xff] sm:$0xff]
        %v1724 = vld [vmem:[#allocation2 + $0x107] sm:$0xff]
        %v1725 = vld [vmem:[#allocation2 + $0x10f] sm:$0xff]
        %v1726 = vld [vmem:[#allocation2 + $0x117] sm:$0xff]
        %v1727 = vld [vmem:[#allocation2 + $0x11f] sm:$0xff]
        %v1728 = vld [vmem:[#allocation2 + $0x127] sm:$0xff]
        %v1729 = vld [vmem:[#allocation2 + $0x12f] sm:$0xff]
        %s1730 = scalar_lea.vmem %s3, 12
        %v1731 = vld [vmem:[%s1730] sm:$0xf]
        %v1733 = vsel %vm550, %v1694, 0
        %v1736 = vsel %vm550, %v1695, 0
        %v1739 = vsel %vm550, %v1696, 0
        %v1742 = vsel %vm550, %v1697, 0
        %v1745 = vsel %vm550, %v1698, 0
        %v1748 = vsel %vm550, %v1699, 0
        %v1751 = vsel %vm550, %v1700, 0
        %v1754 = vsel %vm550, %v1701, 0
        %v1757 = vsel %vm550, %v1702, 0
        %v1760 = vsel %vm550, %v1703, 0
        %v1763 = vsel %vm550, %v1704, 0
        %v1766 = vsel %vm550, %v1705, 0
        %v1769 = vsel %vm550, %v1706, 0
        %v1772 = vsel %vm550, %v1707, 0
        %v1775 = vsel %vm550, %v1708, 0
        %v1778 = vsel %vm550, %v1709, 0
        %v1781 = vsel %vm550, %v1710, 0
        %v1784 = vsel %vm550, %v1711, 0
        %v1787 = vsel %vm550, %v1712, 0
        %v1790 = vsel %vm550, %v1713, 0
        %v1793 = vsel %vm550, %v1714, 0
        %v1796 = vsel %vm550, %v1715, 0
        %v1799 = vsel %vm550, %v1716, 0
        %v1802 = vsel %vm550, %v1717, 0
        %v1805 = vsel %vm550, %v1718, 0
        %v1808 = vsel %vm550, %v1719, 0
        %v1811 = vsel %vm550, %v1720, 0
        %v1814 = vsel %vm550, %v1721, 0
        %v1817 = vsel %vm550, %v1722, 0
        %v1820 = vsel %vm550, %v1723, 0
        %v1823 = vsel %vm550, %v1724, 0
        %v1826 = vsel %vm550, %v1725, 0
        %v1829 = vsel %vm550, %v1726, 0
        %v1832 = vsel %vm550, %v1727, 0
        %v1835 = vsel %vm550, %v1728, 0
        %v1838 = vsel %vm550, %v1729, 0
        %v1841 = vsel %vm659, %v1731, 0
        %1843 = vmatprep.subr.mxu0 0.0
        %1844 = vmatpush1.msra.mxu0 0.0
        %1845 = vmatprep.subr.mxu0 0.0
        %1846 = vmatpush1.msra.mxu0 0.0
        %1847 = vmatprep.subr.mxu0 0.0
        %1848 = vmatpush1.msra.mxu0 0.0
        %1849 = vmatprep.subr.mxu0 0.0
        %1850 = vmatpush1.msra.mxu0 0.0
        %1851 = vmatprep.subr.mxu0 0.0
        %1852 = vmatpush1.msra.mxu0 0.0
        %1853 = vmatprep.subr.mxu0 0.0
        %1854 = vmatpush1.msra.mxu0 0.0
        %1855 = vmatprep.subr.mxu0 0.0
        %1856 = vmatpush1.msra.mxu0 0.0
        %1857 = vmatprep.subr.mxu0 0.0
        %1858 = vmatpush1.msra.mxu0 0.0
        %1859 = vmatprep.subr.mxu0 0.0
        %1860 = vmatpush1.msra.mxu0 0.0
        %1861 = vmatprep.subr.mxu0 0.0
        %1862 = vmatpush1.msra.mxu0 0.0
        %1863 = vmatprep.subr.mxu0 0.0
        %1864 = vmatpush1.msra.mxu0 0.0
        %1865 = vmatprep.subr.mxu0 0.0
        %1866 = vmatpush1.msra.mxu0 0.0
        %1867 = vmatprep.subr.mxu0 0.0
        %1868 = vmatpush1.msra.mxu0 0.0
        %1869 = vmatprep.subr.mxu0 0.0
        %1870 = vmatpush1.msra.mxu0 0.0
        %1871 = vmatprep.subr.mxu0 0.0
        %1872 = vmatpush1.msra.mxu0 0.0
        %1873 = vmatprep.subr.mxu0 0.0
        %1874 = vmatpush1.msra.mxu0 %v1841
        %1875 = vmatprep.subr.mxu0 0.0
        %1876 = vmatpush2.msra.mxu0 0.0
        %1877 = vmatprep.subr.mxu0 0.0
        %1878 = vmatpush2.msra.mxu0 0.0
        %1879 = vmatprep.subr.mxu0 0.0
        %1880 = vmatpush2.msra.mxu0 0.0
        %1881 = vmatprep.subr.mxu0 0.0
        %1882 = vmatpush2.msra.mxu0 0.0
        %1883 = vmatprep.subr.mxu0 0.0
        %1884 = vmatpush2.msra.mxu0 0.0
        %1885 = vmatprep.subr.mxu0 0.0
        %1886 = vmatpush2.msra.mxu0 0.0
        %1887 = vmatprep.subr.mxu0 0.0
        %1888 = vmatpush2.msra.mxu0 0.0
        %1889 = vmatprep.subr.mxu0 0.0
        %1890 = vmatpush2.msra.mxu0 0.0
        %1891 = vmatprep.subr.mxu0 0.0
        %1892 = vmatpush2.msra.mxu0 0.0
        %1893 = vmatprep.subr.mxu0 0.0
        %1894 = vmatpush2.msra.mxu0 0.0
        %1895 = vmatprep.subr.mxu0 0.0
        %1896 = vmatpush2.msra.mxu0 0.0
        %1897 = vmatprep.subr.mxu0 0.0
        %1898 = vmatpush2.msra.mxu0 0.0
        %1899 = vmatprep.subr.mxu0 0.0
        %1900 = vmatpush2.msra.mxu0 0.0
        %1901 = vmatprep.subr.mxu0 0.0
        %1902 = vmatpush2.msra.mxu0 0.0
        %1903 = vmatprep.subr.mxu0 0.0
        %1904 = vmatpush2.msra.mxu0 0.0
        %1905 = vmatprep.subr.mxu0 0.0
        %1906 = vmatpush2.msra.mxu0 0.0
        %1907 = vmatprep.mubr.f32.mxu0 0.0
        %1908 = vmatmul.mubr.f32.gmra.mxu0 %v1733
        %v1909 = vpop.f32.mrf.mxu0
        %v1910 = vadd.f32 0.0, %v1909
        %v1911 = vpop.f32.mrf.mxu0
        %1912 = vmatprep.mubr.f32.mxu0 0.0
        %1913 = vmatmul.mubr.f32.gmra.mxu0 %v1736
        %v1914 = vpop.f32.mrf.mxu0
        %v1915 = vadd.f32 0.0, %v1914
        %v1916 = vpop.f32.mrf.mxu0
        %1917 = vmatprep.mubr.f32.mxu0 0.0
        %1918 = vmatmul.mubr.f32.gmra.mxu0 %v1739
        %v1919 = vpop.f32.mrf.mxu0
        %v1920 = vadd.f32 0.0, %v1919
        %v1921 = vpop.f32.mrf.mxu0
        %1922 = vmatprep.mubr.f32.mxu0 0.0
        %1923 = vmatmul.mubr.f32.gmra.mxu0 %v1742
        %v1924 = vpop.f32.mrf.mxu0
        %v1925 = vadd.f32 0.0, %v1924
        %v1926 = vpop.f32.mrf.mxu0
        %1927 = vmatprep.mubr.f32.mxu0 0.0
        %1928 = vmatmul.mubr.f32.gmra.mxu0 %v1745
        %v1929 = vpop.f32.mrf.mxu0
        %v1930 = vadd.f32 0.0, %v1929
        %v1931 = vpop.f32.mrf.mxu0
        %1932 = vmatprep.mubr.f32.mxu0 0.0
        %1933 = vmatmul.mubr.f32.gmra.mxu0 %v1748
        %v1934 = vpop.f32.mrf.mxu0
        %v1935 = vadd.f32 0.0, %v1934
        %v1936 = vpop.f32.mrf.mxu0
        %1937 = vmatprep.mubr.f32.mxu0 0.0
        %1938 = vmatmul.mubr.f32.gmra.mxu0 %v1751
        %v1939 = vpop.f32.mrf.mxu0
        %v1940 = vadd.f32 0.0, %v1939
        %v1941 = vpop.f32.mrf.mxu0
        %1942 = vmatprep.mubr.f32.mxu0 0.0
        %1943 = vmatmul.mubr.f32.gmra.mxu0 %v1754
        %v1944 = vpop.f32.mrf.mxu0
        %v1945 = vadd.f32 0.0, %v1944
        %v1946 = vpop.f32.mrf.mxu0
        %1947 = vmatprep.mubr.f32.mxu0 0.0
        %1948 = vmatmul.mubr.f32.gmra.mxu0 %v1757
        %v1949 = vpop.f32.mrf.mxu0
        %v1950 = vadd.f32 0.0, %v1949
        %v1951 = vpop.f32.mrf.mxu0
        %1952 = vmatprep.mubr.f32.mxu0 0.0
        %1953 = vmatmul.mubr.f32.gmra.mxu0 %v1760
        %v1954 = vpop.f32.mrf.mxu0
        %v1955 = vadd.f32 0.0, %v1954
        %v1956 = vpop.f32.mrf.mxu0
        %1957 = vmatprep.mubr.f32.mxu0 0.0
        %1958 = vmatmul.mubr.f32.gmra.mxu0 %v1763
        %v1959 = vpop.f32.mrf.mxu0
        %v1960 = vadd.f32 0.0, %v1959
        %v1961 = vpop.f32.mrf.mxu0
        %1962 = vmatprep.mubr.f32.mxu0 0.0
        %1963 = vmatmul.mubr.f32.gmra.mxu0 %v1766
        %v1964 = vpop.f32.mrf.mxu0
        %v1965 = vadd.f32 0.0, %v1964
        %v1966 = vpop.f32.mrf.mxu0
        %1967 = vmatprep.mubr.f32.mxu0 0.0
        %1968 = vmatmul.mubr.f32.gmra.mxu0 %v1769
        %v1969 = vpop.f32.mrf.mxu0
        %v1970 = vadd.f32 0.0, %v1969
        %v1971 = vpop.f32.mrf.mxu0
        %1972 = vmatprep.mubr.f32.mxu0 0.0
        %1973 = vmatmul.mubr.f32.gmra.mxu0 %v1772
        %v1974 = vpop.f32.mrf.mxu0
        %v1975 = vadd.f32 0.0, %v1974
        %v1976 = vpop.f32.mrf.mxu0
        %1977 = vmatprep.mubr.f32.mxu0 0.0
        %1978 = vmatmul.mubr.f32.gmra.mxu0 %v1775
        %v1979 = vpop.f32.mrf.mxu0
        %v1980 = vadd.f32 0.0, %v1979
        %v1981 = vpop.f32.mrf.mxu0
        %1982 = vmatprep.mubr.f32.mxu0 0.0
        %1983 = vmatmul.mubr.f32.gmra.mxu0 %v1778
        %v1984 = vpop.f32.mrf.mxu0
        %v1985 = vadd.f32 0.0, %v1984
        %v1986 = vpop.f32.mrf.mxu0
        %1987 = vmatprep.mubr.f32.mxu0 0.0
        %1988 = vmatmul.mubr.f32.gmra.mxu0 %v1781
        %v1989 = vpop.f32.mrf.mxu0
        %v1990 = vadd.f32 0.0, %v1989
        %v1991 = vpop.f32.mrf.mxu0
        %1992 = vmatprep.mubr.f32.mxu0 0.0
        %1993 = vmatmul.mubr.f32.gmra.mxu0 %v1784
        %v1994 = vpop.f32.mrf.mxu0
        %v1995 = vadd.f32 0.0, %v1994
        %v1996 = vpop.f32.mrf.mxu0
        %1997 = vmatprep.mubr.f32.mxu0 0.0
        %1998 = vmatmul.mubr.f32.gmra.mxu0 %v1787
        %v1999 = vpop.f32.mrf.mxu0
        %v2000 = vadd.f32 0.0, %v1999
        %v2001 = vpop.f32.mrf.mxu0
        %2002 = vmatprep.mubr.f32.mxu0 0.0
        %2003 = vmatmul.mubr.f32.gmra.mxu0 %v1790
        %v2004 = vpop.f32.mrf.mxu0
        %v2005 = vadd.f32 0.0, %v2004
        %v2006 = vpop.f32.mrf.mxu0
        %2007 = vmatprep.mubr.f32.mxu0 0.0
        %2008 = vmatmul.mubr.f32.gmra.mxu0 %v1793
        %v2009 = vpop.f32.mrf.mxu0
        %v2010 = vadd.f32 0.0, %v2009
        %v2011 = vpop.f32.mrf.mxu0
        %2012 = vmatprep.mubr.f32.mxu0 0.0
        %2013 = vmatmul.mubr.f32.gmra.mxu0 %v1796
        %v2014 = vpop.f32.mrf.mxu0
        %v2015 = vadd.f32 0.0, %v2014
        %v2016 = vpop.f32.mrf.mxu0
        %2017 = vmatprep.mubr.f32.mxu0 0.0
        %2018 = vmatmul.mubr.f32.gmra.mxu0 %v1799
        %v2019 = vpop.f32.mrf.mxu0
        %v2020 = vadd.f32 0.0, %v2019
        %v2021 = vpop.f32.mrf.mxu0
        %2022 = vmatprep.mubr.f32.mxu0 0.0
        %2023 = vmatmul.mubr.f32.gmra.mxu0 %v1802
        %v2024 = vpop.f32.mrf.mxu0
        %v2025 = vadd.f32 0.0, %v2024
        %v2026 = vpop.f32.mrf.mxu0
        %2027 = vmatprep.mubr.f32.mxu0 0.0
        %2028 = vmatmul.mubr.f32.gmra.mxu0 %v1805
        %v2029 = vpop.f32.mrf.mxu0
        %v2030 = vadd.f32 0.0, %v2029
        %v2031 = vpop.f32.mrf.mxu0
        %2032 = vmatprep.mubr.f32.mxu0 0.0
        %2033 = vmatmul.mubr.f32.gmra.mxu0 %v1808
        %v2034 = vpop.f32.mrf.mxu0
        %v2035 = vadd.f32 0.0, %v2034
        %v2036 = vpop.f32.mrf.mxu0
        %2037 = vmatprep.mubr.f32.mxu0 0.0
        %2038 = vmatmul.mubr.f32.gmra.mxu0 %v1811
        %v2039 = vpop.f32.mrf.mxu0
        %v2040 = vadd.f32 0.0, %v2039
        %v2041 = vpop.f32.mrf.mxu0
        %2042 = vmatprep.mubr.f32.mxu0 0.0
        %2043 = vmatmul.mubr.f32.gmra.mxu0 %v1814
        %v2044 = vpop.f32.mrf.mxu0
        %v2045 = vadd.f32 0.0, %v2044
        %v2046 = vpop.f32.mrf.mxu0
        %2047 = vmatprep.mubr.f32.mxu0 0.0
        %2048 = vmatmul.mubr.f32.gmra.mxu0 %v1817
        %v2049 = vpop.f32.mrf.mxu0
        %v2050 = vadd.f32 0.0, %v2049
        %v2051 = vpop.f32.mrf.mxu0
        %2052 = vmatprep.mubr.f32.mxu0 0.0
        %2053 = vmatmul.mubr.f32.gmra.mxu0 %v1820
        %v2054 = vpop.f32.mrf.mxu0
        %v2055 = vadd.f32 0.0, %v2054
        %v2056 = vpop.f32.mrf.mxu0
        %2057 = vmatprep.mubr.f32.mxu0 0.0
        %2058 = vmatmul.mubr.f32.gmra.mxu0 %v1823
        %v2059 = vpop.f32.mrf.mxu0
        %v2060 = vadd.f32 0.0, %v2059
        %v2061 = vpop.f32.mrf.mxu0
        %2062 = vmatprep.mubr.f32.mxu0 0.0
        %2063 = vmatmul.mubr.f32.gmra.mxu0 %v1826
        %v2064 = vpop.f32.mrf.mxu0
        %v2065 = vadd.f32 0.0, %v2064
        %v2066 = vpop.f32.mrf.mxu0
        %2067 = vmatprep.mubr.f32.mxu0 0.0
        %2068 = vmatmul.mubr.f32.gmra.mxu0 %v1829
        %v2069 = vpop.f32.mrf.mxu0
        %v2070 = vadd.f32 0.0, %v2069
        %v2071 = vpop.f32.mrf.mxu0
        %2072 = vmatprep.mubr.f32.mxu0 0.0
        %2073 = vmatmul.mubr.f32.gmra.mxu0 %v1832
        %v2074 = vpop.f32.mrf.mxu0
        %v2075 = vadd.f32 0.0, %v2074
        %v2076 = vpop.f32.mrf.mxu0
        %2077 = vmatprep.mubr.f32.mxu0 0.0
        %2078 = vmatmul.mubr.f32.gmra.mxu0 %v1835
        %v2079 = vpop.f32.mrf.mxu0
        %v2080 = vadd.f32 0.0, %v2079
        %v2081 = vpop.f32.mrf.mxu0
        %2082 = vmatprep.mubr.f32.mxu0 0.0
        %2083 = vmatmul.mubr.f32.gmra.mxu0 %v1838
        %v2084 = vpop.f32.mrf.mxu0
        %v2085 = vadd.f32 0.0, %v2084
        %v2086 = vpop.f32.mrf.mxu0
        %2087 = vdwg.mxu0
        %v2088 = vadd.f32 %v1658, %v1910
        %v2089 = vadd.f32 %v1659, %v1915
        %v2090 = vadd.f32 %v1660, %v1920
        %v2091 = vadd.f32 %v1661, %v1925
        %v2092 = vadd.f32 %v1662, %v1930
        %v2093 = vadd.f32 %v1663, %v1935
        %v2094 = vadd.f32 %v1664, %v1940
        %v2095 = vadd.f32 %v1665, %v1945
        %v2096 = vadd.f32 %v1666, %v1950
        %v2097 = vadd.f32 %v1667, %v1955
        %v2098 = vadd.f32 %v1668, %v1960
        %v2099 = vadd.f32 %v1669, %v1965
        %v2100 = vadd.f32 %v1670, %v1970
        %v2101 = vadd.f32 %v1671, %v1975
        %v2102 = vadd.f32 %v1672, %v1980
        %v2103 = vadd.f32 %v1673, %v1985
        %v2104 = vadd.f32 %v1674, %v1990
        %v2105 = vadd.f32 %v1675, %v1995
        %v2106 = vadd.f32 %v1676, %v2000
        %v2107 = vadd.f32 %v1677, %v2005
        %v2108 = vadd.f32 %v1678, %v2010
        %v2109 = vadd.f32 %v1679, %v2015
        %v2110 = vadd.f32 %v1680, %v2020
        %v2111 = vadd.f32 %v1681, %v2025
        %v2112 = vadd.f32 %v1682, %v2030
        %v2113 = vadd.f32 %v1683, %v2035
        %v2114 = vadd.f32 %v1684, %v2040
        %v2115 = vadd.f32 %v1685, %v2045
        %v2116 = vadd.f32 %v1686, %v2050
        %v2117 = vadd.f32 %v1687, %v2055
        %v2118 = vadd.f32 %v1688, %v2060
        %v2119 = vadd.f32 %v1689, %v2065
        %v2120 = vadd.f32 %v1690, %v2070
        %v2121 = vadd.f32 %v1691, %v2075
        %v2122 = vadd.f32 %v1692, %v2080
        %v2123 = vadd.f32 %v1693, %v2085
        %v2124 = vld [vmem:[#allocation2 + $0x18] sm:$0xff]
        %v2125 = vld [vmem:[#allocation2 + $0x20] sm:$0xff]
        %v2126 = vld [vmem:[#allocation2 + $0x28] sm:$0xff]
        %v2127 = vld [vmem:[#allocation2 + $0x30] sm:$0xff]
        %v2128 = vld [vmem:[#allocation2 + $0x38] sm:$0xff]
        %v2129 = vld [vmem:[#allocation2 + $0x40] sm:$0xff]
        %v2130 = vld [vmem:[#allocation2 + $0x48] sm:$0xff]
        %v2131 = vld [vmem:[#allocation2 + $0x50] sm:$0xff]
        %v2132 = vld [vmem:[#allocation2 + $0x58] sm:$0xff]
        %v2133 = vld [vmem:[#allocation2 + $0x60] sm:$0xff]
        %v2134 = vld [vmem:[#allocation2 + $0x68] sm:$0xff]
        %v2135 = vld [vmem:[#allocation2 + $0x70] sm:$0xff]
        %v2136 = vld [vmem:[#allocation2 + $0x78] sm:$0xff]
        %v2137 = vld [vmem:[#allocation2 + $0x80] sm:$0xff]
        %v2138 = vld [vmem:[#allocation2 + $0x88] sm:$0xff]
        %v2139 = vld [vmem:[#allocation2 + $0x90] sm:$0xff]
        %v2140 = vld [vmem:[#allocation2 + $0x98] sm:$0xff]
        %v2141 = vld [vmem:[#allocation2 + $0xa0] sm:$0xff]
        %v2142 = vld [vmem:[#allocation2 + $0xa8] sm:$0xff]
        %v2143 = vld [vmem:[#allocation2 + $0xb0] sm:$0xff]
        %v2144 = vld [vmem:[#allocation2 + $0xb8] sm:$0xff]
        %v2145 = vld [vmem:[#allocation2 + $0xc0] sm:$0xff]
        %v2146 = vld [vmem:[#allocation2 + $0xc8] sm:$0xff]
        %v2147 = vld [vmem:[#allocation2 + $0xd0] sm:$0xff]
        %v2148 = vld [vmem:[#allocation2 + $0xd8] sm:$0xff]
        %v2149 = vld [vmem:[#allocation2 + $0xe0] sm:$0xff]
        %v2150 = vld [vmem:[#allocation2 + $0xe8] sm:$0xff]
        %v2151 = vld [vmem:[#allocation2 + $0xf0] sm:$0xff]
        %v2152 = vld [vmem:[#allocation2 + $0xf8] sm:$0xff]
        %v2153 = vld [vmem:[#allocation2 + $0x100] sm:$0xff]
        %v2154 = vld [vmem:[#allocation2 + $0x108] sm:$0xff]
        %v2155 = vld [vmem:[#allocation2 + $0x110] sm:$0xff]
        %v2156 = vld [vmem:[#allocation2 + $0x118] sm:$0xff]
        %v2157 = vld [vmem:[#allocation2 + $0x120] sm:$0xff]
        %v2158 = vld [vmem:[#allocation2 + $0x128] sm:$0xff]
        %v2159 = vld [vmem:[#allocation2 + $0x130] sm:$0xff]
        %s2160 = scalar_lea.vmem %s3, 16
        %v2161 = vld [vmem:[%s2160] sm:$0xf]
        %v2163 = vsel %vm550, %v2124, 0
        %v2166 = vsel %vm550, %v2125, 0
        %v2169 = vsel %vm550, %v2126, 0
        %v2172 = vsel %vm550, %v2127, 0
        %v2175 = vsel %vm550, %v2128, 0
        %v2178 = vsel %vm550, %v2129, 0
        %v2181 = vsel %vm550, %v2130, 0
        %v2184 = vsel %vm550, %v2131, 0
        %v2187 = vsel %vm550, %v2132, 0
        %v2190 = vsel %vm550, %v2133, 0
        %v2193 = vsel %vm550, %v2134, 0
        %v2196 = vsel %vm550, %v2135, 0
        %v2199 = vsel %vm550, %v2136, 0
        %v2202 = vsel %vm550, %v2137, 0
        %v2205 = vsel %vm550, %v2138, 0
        %v2208 = vsel %vm550, %v2139, 0
        %v2211 = vsel %vm550, %v2140, 0
        %v2214 = vsel %vm550, %v2141, 0
        %v2217 = vsel %vm550, %v2142, 0
        %v2220 = vsel %vm550, %v2143, 0
        %v2223 = vsel %vm550, %v2144, 0
        %v2226 = vsel %vm550, %v2145, 0
        %v2229 = vsel %vm550, %v2146, 0
        %v2232 = vsel %vm550, %v2147, 0
        %v2235 = vsel %vm550, %v2148, 0
        %v2238 = vsel %vm550, %v2149, 0
        %v2241 = vsel %vm550, %v2150, 0
        %v2244 = vsel %vm550, %v2151, 0
        %v2247 = vsel %vm550, %v2152, 0
        %v2250 = vsel %vm550, %v2153, 0
        %v2253 = vsel %vm550, %v2154, 0
        %v2256 = vsel %vm550, %v2155, 0
        %v2259 = vsel %vm550, %v2156, 0
        %v2262 = vsel %vm550, %v2157, 0
        %v2265 = vsel %vm550, %v2158, 0
        %v2268 = vsel %vm550, %v2159, 0
        %v2271 = vsel %vm659, %v2161, 0
        %2273 = vmatprep.subr.mxu0 0.0
        %2274 = vmatpush1.msra.mxu0 0.0
        %2275 = vmatprep.subr.mxu0 0.0
        %2276 = vmatpush1.msra.mxu0 0.0
        %2277 = vmatprep.subr.mxu0 0.0
        %2278 = vmatpush1.msra.mxu0 0.0
        %2279 = vmatprep.subr.mxu0 0.0
        %2280 = vmatpush1.msra.mxu0 0.0
        %2281 = vmatprep.subr.mxu0 0.0
        %2282 = vmatpush1.msra.mxu0 0.0
        %2283 = vmatprep.subr.mxu0 0.0
        %2284 = vmatpush1.msra.mxu0 0.0
        %2285 = vmatprep.subr.mxu0 0.0
        %2286 = vmatpush1.msra.mxu0 0.0
        %2287 = vmatprep.subr.mxu0 0.0
        %2288 = vmatpush1.msra.mxu0 0.0
        %2289 = vmatprep.subr.mxu0 0.0
        %2290 = vmatpush1.msra.mxu0 0.0
        %2291 = vmatprep.subr.mxu0 0.0
        %2292 = vmatpush1.msra.mxu0 0.0
        %2293 = vmatprep.subr.mxu0 0.0
        %2294 = vmatpush1.msra.mxu0 0.0
        %2295 = vmatprep.subr.mxu0 0.0
        %2296 = vmatpush1.msra.mxu0 0.0
        %2297 = vmatprep.subr.mxu0 0.0
        %2298 = vmatpush1.msra.mxu0 0.0
        %2299 = vmatprep.subr.mxu0 0.0
        %2300 = vmatpush1.msra.mxu0 0.0
        %2301 = vmatprep.subr.mxu0 0.0
        %2302 = vmatpush1.msra.mxu0 0.0
        %2303 = vmatprep.subr.mxu0 0.0
        %2304 = vmatpush1.msra.mxu0 %v2271
        %2305 = vmatprep.subr.mxu0 0.0
        %2306 = vmatpush2.msra.mxu0 0.0
        %2307 = vmatprep.subr.mxu0 0.0
        %2308 = vmatpush2.msra.mxu0 0.0
        %2309 = vmatprep.subr.mxu0 0.0
        %2310 = vmatpush2.msra.mxu0 0.0
        %2311 = vmatprep.subr.mxu0 0.0
        %2312 = vmatpush2.msra.mxu0 0.0
        %2313 = vmatprep.subr.mxu0 0.0
        %2314 = vmatpush2.msra.mxu0 0.0
        %2315 = vmatprep.subr.mxu0 0.0
        %2316 = vmatpush2.msra.mxu0 0.0
        %2317 = vmatprep.subr.mxu0 0.0
        %2318 = vmatpush2.msra.mxu0 0.0
        %2319 = vmatprep.subr.mxu0 0.0
        %2320 = vmatpush2.msra.mxu0 0.0
        %2321 = vmatprep.subr.mxu0 0.0
        %2322 = vmatpush2.msra.mxu0 0.0
        %2323 = vmatprep.subr.mxu0 0.0
        %2324 = vmatpush2.msra.mxu0 0.0
        %2325 = vmatprep.subr.mxu0 0.0
        %2326 = vmatpush2.msra.mxu0 0.0
        %2327 = vmatprep.subr.mxu0 0.0
        %2328 = vmatpush2.msra.mxu0 0.0
        %2329 = vmatprep.subr.mxu0 0.0
        %2330 = vmatpush2.msra.mxu0 0.0
        %2331 = vmatprep.subr.mxu0 0.0
        %2332 = vmatpush2.msra.mxu0 0.0
        %2333 = vmatprep.subr.mxu0 0.0
        %2334 = vmatpush2.msra.mxu0 0.0
        %2335 = vmatprep.subr.mxu0 0.0
        %2336 = vmatpush2.msra.mxu0 0.0
        %2337 = vmatprep.mubr.f32.mxu0 0.0
        %2338 = vmatmul.mubr.f32.gmra.mxu0 %v2163
        %v2339 = vpop.f32.mrf.mxu0
        %v2340 = vadd.f32 0.0, %v2339
        %v2341 = vpop.f32.mrf.mxu0
        %2342 = vmatprep.mubr.f32.mxu0 0.0
        %2343 = vmatmul.mubr.f32.gmra.mxu0 %v2166
        %v2344 = vpop.f32.mrf.mxu0
        %v2345 = vadd.f32 0.0, %v2344
        %v2346 = vpop.f32.mrf.mxu0
        %2347 = vmatprep.mubr.f32.mxu0 0.0
        %2348 = vmatmul.mubr.f32.gmra.mxu0 %v2169
        %v2349 = vpop.f32.mrf.mxu0
        %v2350 = vadd.f32 0.0, %v2349
        %v2351 = vpop.f32.mrf.mxu0
        %2352 = vmatprep.mubr.f32.mxu0 0.0
        %2353 = vmatmul.mubr.f32.gmra.mxu0 %v2172
        %v2354 = vpop.f32.mrf.mxu0
        %v2355 = vadd.f32 0.0, %v2354
        %v2356 = vpop.f32.mrf.mxu0
        %2357 = vmatprep.mubr.f32.mxu0 0.0
        %2358 = vmatmul.mubr.f32.gmra.mxu0 %v2175
        %v2359 = vpop.f32.mrf.mxu0
        %v2360 = vadd.f32 0.0, %v2359
        %v2361 = vpop.f32.mrf.mxu0
        %2362 = vmatprep.mubr.f32.mxu0 0.0
        %2363 = vmatmul.mubr.f32.gmra.mxu0 %v2178
        %v2364 = vpop.f32.mrf.mxu0
        %v2365 = vadd.f32 0.0, %v2364
        %v2366 = vpop.f32.mrf.mxu0
        %2367 = vmatprep.mubr.f32.mxu0 0.0
        %2368 = vmatmul.mubr.f32.gmra.mxu0 %v2181
        %v2369 = vpop.f32.mrf.mxu0
        %v2370 = vadd.f32 0.0, %v2369
        %v2371 = vpop.f32.mrf.mxu0
        %2372 = vmatprep.mubr.f32.mxu0 0.0
        %2373 = vmatmul.mubr.f32.gmra.mxu0 %v2184
        %v2374 = vpop.f32.mrf.mxu0
        %v2375 = vadd.f32 0.0, %v2374
        %v2376 = vpop.f32.mrf.mxu0
        %2377 = vmatprep.mubr.f32.mxu0 0.0
        %2378 = vmatmul.mubr.f32.gmra.mxu0 %v2187
        %v2379 = vpop.f32.mrf.mxu0
        %v2380 = vadd.f32 0.0, %v2379
        %v2381 = vpop.f32.mrf.mxu0
        %2382 = vmatprep.mubr.f32.mxu0 0.0
        %2383 = vmatmul.mubr.f32.gmra.mxu0 %v2190
        %v2384 = vpop.f32.mrf.mxu0
        %v2385 = vadd.f32 0.0, %v2384
        %v2386 = vpop.f32.mrf.mxu0
        %2387 = vmatprep.mubr.f32.mxu0 0.0
        %2388 = vmatmul.mubr.f32.gmra.mxu0 %v2193
        %v2389 = vpop.f32.mrf.mxu0
        %v2390 = vadd.f32 0.0, %v2389
        %v2391 = vpop.f32.mrf.mxu0
        %2392 = vmatprep.mubr.f32.mxu0 0.0
        %2393 = vmatmul.mubr.f32.gmra.mxu0 %v2196
        %v2394 = vpop.f32.mrf.mxu0
        %v2395 = vadd.f32 0.0, %v2394
        %v2396 = vpop.f32.mrf.mxu0
        %2397 = vmatprep.mubr.f32.mxu0 0.0
        %2398 = vmatmul.mubr.f32.gmra.mxu0 %v2199
        %v2399 = vpop.f32.mrf.mxu0
        %v2400 = vadd.f32 0.0, %v2399
        %v2401 = vpop.f32.mrf.mxu0
        %2402 = vmatprep.mubr.f32.mxu0 0.0
        %2403 = vmatmul.mubr.f32.gmra.mxu0 %v2202
        %v2404 = vpop.f32.mrf.mxu0
        %v2405 = vadd.f32 0.0, %v2404
        %v2406 = vpop.f32.mrf.mxu0
        %2407 = vmatprep.mubr.f32.mxu0 0.0
        %2408 = vmatmul.mubr.f32.gmra.mxu0 %v2205
        %v2409 = vpop.f32.mrf.mxu0
        %v2410 = vadd.f32 0.0, %v2409
        %v2411 = vpop.f32.mrf.mxu0
        %2412 = vmatprep.mubr.f32.mxu0 0.0
        %2413 = vmatmul.mubr.f32.gmra.mxu0 %v2208
        %v2414 = vpop.f32.mrf.mxu0
        %v2415 = vadd.f32 0.0, %v2414
        %v2416 = vpop.f32.mrf.mxu0
        %2417 = vmatprep.mubr.f32.mxu0 0.0
        %2418 = vmatmul.mubr.f32.gmra.mxu0 %v2211
        %v2419 = vpop.f32.mrf.mxu0
        %v2420 = vadd.f32 0.0, %v2419
        %v2421 = vpop.f32.mrf.mxu0
        %2422 = vmatprep.mubr.f32.mxu0 0.0
        %2423 = vmatmul.mubr.f32.gmra.mxu0 %v2214
        %v2424 = vpop.f32.mrf.mxu0
        %v2425 = vadd.f32 0.0, %v2424
        %v2426 = vpop.f32.mrf.mxu0
        %2427 = vmatprep.mubr.f32.mxu0 0.0
        %2428 = vmatmul.mubr.f32.gmra.mxu0 %v2217
        %v2429 = vpop.f32.mrf.mxu0
        %v2430 = vadd.f32 0.0, %v2429
        %v2431 = vpop.f32.mrf.mxu0
        %2432 = vmatprep.mubr.f32.mxu0 0.0
        %2433 = vmatmul.mubr.f32.gmra.mxu0 %v2220
        %v2434 = vpop.f32.mrf.mxu0
        %v2435 = vadd.f32 0.0, %v2434
        %v2436 = vpop.f32.mrf.mxu0
        %2437 = vmatprep.mubr.f32.mxu0 0.0
        %2438 = vmatmul.mubr.f32.gmra.mxu0 %v2223
        %v2439 = vpop.f32.mrf.mxu0
        %v2440 = vadd.f32 0.0, %v2439
        %v2441 = vpop.f32.mrf.mxu0
        %2442 = vmatprep.mubr.f32.mxu0 0.0
        %2443 = vmatmul.mubr.f32.gmra.mxu0 %v2226
        %v2444 = vpop.f32.mrf.mxu0
        %v2445 = vadd.f32 0.0, %v2444
        %v2446 = vpop.f32.mrf.mxu0
        %2447 = vmatprep.mubr.f32.mxu0 0.0
        %2448 = vmatmul.mubr.f32.gmra.mxu0 %v2229
        %v2449 = vpop.f32.mrf.mxu0
        %v2450 = vadd.f32 0.0, %v2449
        %v2451 = vpop.f32.mrf.mxu0
        %2452 = vmatprep.mubr.f32.mxu0 0.0
        %2453 = vmatmul.mubr.f32.gmra.mxu0 %v2232
        %v2454 = vpop.f32.mrf.mxu0
        %v2455 = vadd.f32 0.0, %v2454
        %v2456 = vpop.f32.mrf.mxu0
        %2457 = vmatprep.mubr.f32.mxu0 0.0
        %2458 = vmatmul.mubr.f32.gmra.mxu0 %v2235
        %v2459 = vpop.f32.mrf.mxu0
        %v2460 = vadd.f32 0.0, %v2459
        %v2461 = vpop.f32.mrf.mxu0
        %2462 = vmatprep.mubr.f32.mxu0 0.0
        %2463 = vmatmul.mubr.f32.gmra.mxu0 %v2238
        %v2464 = vpop.f32.mrf.mxu0
        %v2465 = vadd.f32 0.0, %v2464
        %v2466 = vpop.f32.mrf.mxu0
        %2467 = vmatprep.mubr.f32.mxu0 0.0
        %2468 = vmatmul.mubr.f32.gmra.mxu0 %v2241
        %v2469 = vpop.f32.mrf.mxu0
        %v2470 = vadd.f32 0.0, %v2469
        %v2471 = vpop.f32.mrf.mxu0
        %2472 = vmatprep.mubr.f32.mxu0 0.0
        %2473 = vmatmul.mubr.f32.gmra.mxu0 %v2244
        %v2474 = vpop.f32.mrf.mxu0
        %v2475 = vadd.f32 0.0, %v2474
        %v2476 = vpop.f32.mrf.mxu0
        %2477 = vmatprep.mubr.f32.mxu0 0.0
        %2478 = vmatmul.mubr.f32.gmra.mxu0 %v2247
        %v2479 = vpop.f32.mrf.mxu0
        %v2480 = vadd.f32 0.0, %v2479
        %v2481 = vpop.f32.mrf.mxu0
        %2482 = vmatprep.mubr.f32.mxu0 0.0
        %2483 = vmatmul.mubr.f32.gmra.mxu0 %v2250
        %v2484 = vpop.f32.mrf.mxu0
        %v2485 = vadd.f32 0.0, %v2484
        %v2486 = vpop.f32.mrf.mxu0
        %2487 = vmatprep.mubr.f32.mxu0 0.0
        %2488 = vmatmul.mubr.f32.gmra.mxu0 %v2253
        %v2489 = vpop.f32.mrf.mxu0
        %v2490 = vadd.f32 0.0, %v2489
        %v2491 = vpop.f32.mrf.mxu0
        %2492 = vmatprep.mubr.f32.mxu0 0.0
        %2493 = vmatmul.mubr.f32.gmra.mxu0 %v2256
        %v2494 = vpop.f32.mrf.mxu0
        %v2495 = vadd.f32 0.0, %v2494
        %v2496 = vpop.f32.mrf.mxu0
        %2497 = vmatprep.mubr.f32.mxu0 0.0
        %2498 = vmatmul.mubr.f32.gmra.mxu0 %v2259
        %v2499 = vpop.f32.mrf.mxu0
        %v2500 = vadd.f32 0.0, %v2499
        %v2501 = vpop.f32.mrf.mxu0
        %2502 = vmatprep.mubr.f32.mxu0 0.0
        %2503 = vmatmul.mubr.f32.gmra.mxu0 %v2262
        %v2504 = vpop.f32.mrf.mxu0
        %v2505 = vadd.f32 0.0, %v2504
        %v2506 = vpop.f32.mrf.mxu0
        %2507 = vmatprep.mubr.f32.mxu0 0.0
        %2508 = vmatmul.mubr.f32.gmra.mxu0 %v2265
        %v2509 = vpop.f32.mrf.mxu0
        %v2510 = vadd.f32 0.0, %v2509
        %v2511 = vpop.f32.mrf.mxu0
        %2512 = vmatprep.mubr.f32.mxu0 0.0
        %2513 = vmatmul.mubr.f32.gmra.mxu0 %v2268
        %v2514 = vpop.f32.mrf.mxu0
        %v2515 = vadd.f32 0.0, %v2514
        %v2516 = vpop.f32.mrf.mxu0
        %2517 = vdwg.mxu0
        %v2518 = vadd.f32 %v2088, %v2340
        %v2519 = vadd.f32 %v2089, %v2345
        %v2520 = vadd.f32 %v2090, %v2350
        %v2521 = vadd.f32 %v2091, %v2355
        %v2522 = vadd.f32 %v2092, %v2360
        %v2523 = vadd.f32 %v2093, %v2365
        %v2524 = vadd.f32 %v2094, %v2370
        %v2525 = vadd.f32 %v2095, %v2375
        %v2526 = vadd.f32 %v2096, %v2380
        %v2527 = vadd.f32 %v2097, %v2385
        %v2528 = vadd.f32 %v2098, %v2390
        %v2529 = vadd.f32 %v2099, %v2395
        %v2530 = vadd.f32 %v2100, %v2400
        %v2531 = vadd.f32 %v2101, %v2405
        %v2532 = vadd.f32 %v2102, %v2410
        %v2533 = vadd.f32 %v2103, %v2415
        %v2534 = vadd.f32 %v2104, %v2420
        %v2535 = vadd.f32 %v2105, %v2425
        %v2536 = vadd.f32 %v2106, %v2430
        %v2537 = vadd.f32 %v2107, %v2435
        %v2538 = vadd.f32 %v2108, %v2440
        %v2539 = vadd.f32 %v2109, %v2445
        %v2540 = vadd.f32 %v2110, %v2450
        %v2541 = vadd.f32 %v2111, %v2455
        %v2542 = vadd.f32 %v2112, %v2460
        %v2543 = vadd.f32 %v2113, %v2465
        %v2544 = vadd.f32 %v2114, %v2470
        %v2545 = vadd.f32 %v2115, %v2475
        %v2546 = vadd.f32 %v2116, %v2480
        %v2547 = vadd.f32 %v2117, %v2485
        %v2548 = vadd.f32 %v2118, %v2490
        %v2549 = vadd.f32 %v2119, %v2495
        %v2550 = vadd.f32 %v2120, %v2500
        %v2551 = vadd.f32 %v2121, %v2505
        %v2552 = vadd.f32 %v2122, %v2510
        %v2553 = vadd.f32 %v2123, %v2515
        %v2554 = vld [vmem:[#allocation2 + $0x19] sm:$0xff]
        %v2555 = vld [vmem:[#allocation2 + $0x21] sm:$0xff]
        %v2556 = vld [vmem:[#allocation2 + $0x29] sm:$0xff]
        %v2557 = vld [vmem:[#allocation2 + $0x31] sm:$0xff]
        %v2558 = vld [vmem:[#allocation2 + $0x39] sm:$0xff]
        %v2559 = vld [vmem:[#allocation2 + $0x41] sm:$0xff]
        %v2560 = vld [vmem:[#allocation2 + $0x49] sm:$0xff]
        %v2561 = vld [vmem:[#allocation2 + $0x51] sm:$0xff]
        %v2562 = vld [vmem:[#allocation2 + $0x59] sm:$0xff]
        %v2563 = vld [vmem:[#allocation2 + $0x61] sm:$0xff]
        %v2564 = vld [vmem:[#allocation2 + $0x69] sm:$0xff]
        %v2565 = vld [vmem:[#allocation2 + $0x71] sm:$0xff]
        %v2566 = vld [vmem:[#allocation2 + $0x79] sm:$0xff]
        %v2567 = vld [vmem:[#allocation2 + $0x81] sm:$0xff]
        %v2568 = vld [vmem:[#allocation2 + $0x89] sm:$0xff]
        %v2569 = vld [vmem:[#allocation2 + $0x91] sm:$0xff]
        %v2570 = vld [vmem:[#allocation2 + $0x99] sm:$0xff]
        %v2571 = vld [vmem:[#allocation2 + $0xa1] sm:$0xff]
        %v2572 = vld [vmem:[#allocation2 + $0xa9] sm:$0xff]
        %v2573 = vld [vmem:[#allocation2 + $0xb1] sm:$0xff]
        %v2574 = vld [vmem:[#allocation2 + $0xb9] sm:$0xff]
        %v2575 = vld [vmem:[#allocation2 + $0xc1] sm:$0xff]
        %v2576 = vld [vmem:[#allocation2 + $0xc9] sm:$0xff]
        %v2577 = vld [vmem:[#allocation2 + $0xd1] sm:$0xff]
        %v2578 = vld [vmem:[#allocation2 + $0xd9] sm:$0xff]
        %v2579 = vld [vmem:[#allocation2 + $0xe1] sm:$0xff]
        %v2580 = vld [vmem:[#allocation2 + $0xe9] sm:$0xff]
        %v2581 = vld [vmem:[#allocation2 + $0xf1] sm:$0xff]
        %v2582 = vld [vmem:[#allocation2 + $0xf9] sm:$0xff]
        %v2583 = vld [vmem:[#allocation2 + $0x101] sm:$0xff]
        %v2584 = vld [vmem:[#allocation2 + $0x109] sm:$0xff]
        %v2585 = vld [vmem:[#allocation2 + $0x111] sm:$0xff]
        %v2586 = vld [vmem:[#allocation2 + $0x119] sm:$0xff]
        %v2587 = vld [vmem:[#allocation2 + $0x121] sm:$0xff]
        %v2588 = vld [vmem:[#allocation2 + $0x129] sm:$0xff]
        %v2589 = vld [vmem:[#allocation2 + $0x131] sm:$0xff]
        %s2590 = scalar_lea.vmem %s3, 20
        %v2591 = vld [vmem:[%s2590] sm:$0xf]
        %v2593 = vsel %vm550, %v2554, 0
        %v2596 = vsel %vm550, %v2555, 0
        %v2599 = vsel %vm550, %v2556, 0
        %v2602 = vsel %vm550, %v2557, 0
        %v2605 = vsel %vm550, %v2558, 0
        %v2608 = vsel %vm550, %v2559, 0
        %v2611 = vsel %vm550, %v2560, 0
        %v2614 = vsel %vm550, %v2561, 0
        %v2617 = vsel %vm550, %v2562, 0
        %v2620 = vsel %vm550, %v2563, 0
        %v2623 = vsel %vm550, %v2564, 0
        %v2626 = vsel %vm550, %v2565, 0
        %v2629 = vsel %vm550, %v2566, 0
        %v2632 = vsel %vm550, %v2567, 0
        %v2635 = vsel %vm550, %v2568, 0
        %v2638 = vsel %vm550, %v2569, 0
        %v2641 = vsel %vm550, %v2570, 0
        %v2644 = vsel %vm550, %v2571, 0
        %v2647 = vsel %vm550, %v2572, 0
        %v2650 = vsel %vm550, %v2573, 0
        %v2653 = vsel %vm550, %v2574, 0
        %v2656 = vsel %vm550, %v2575, 0
        %v2659 = vsel %vm550, %v2576, 0
        %v2662 = vsel %vm550, %v2577, 0
        %v2665 = vsel %vm550, %v2578, 0
        %v2668 = vsel %vm550, %v2579, 0
        %v2671 = vsel %vm550, %v2580, 0
        %v2674 = vsel %vm550, %v2581, 0
        %v2677 = vsel %vm550, %v2582, 0
        %v2680 = vsel %vm550, %v2583, 0
        %v2683 = vsel %vm550, %v2584, 0
        %v2686 = vsel %vm550, %v2585, 0
        %v2689 = vsel %vm550, %v2586, 0
        %v2692 = vsel %vm550, %v2587, 0
        %v2695 = vsel %vm550, %v2588, 0
        %v2698 = vsel %vm550, %v2589, 0
        %v2701 = vsel %vm659, %v2591, 0
        %2703 = vmatprep.subr.mxu0 0.0
        %2704 = vmatpush1.msra.mxu0 0.0
        %2705 = vmatprep.subr.mxu0 0.0
        %2706 = vmatpush1.msra.mxu0 0.0
        %2707 = vmatprep.subr.mxu0 0.0
        %2708 = vmatpush1.msra.mxu0 0.0
        %2709 = vmatprep.subr.mxu0 0.0
        %2710 = vmatpush1.msra.mxu0 0.0
        %2711 = vmatprep.subr.mxu0 0.0
        %2712 = vmatpush1.msra.mxu0 0.0
        %2713 = vmatprep.subr.mxu0 0.0
        %2714 = vmatpush1.msra.mxu0 0.0
        %2715 = vmatprep.subr.mxu0 0.0
        %2716 = vmatpush1.msra.mxu0 0.0
        %2717 = vmatprep.subr.mxu0 0.0
        %2718 = vmatpush1.msra.mxu0 0.0
        %2719 = vmatprep.subr.mxu0 0.0
        %2720 = vmatpush1.msra.mxu0 0.0
        %2721 = vmatprep.subr.mxu0 0.0
        %2722 = vmatpush1.msra.mxu0 0.0
        %2723 = vmatprep.subr.mxu0 0.0
        %2724 = vmatpush1.msra.mxu0 0.0
        %2725 = vmatprep.subr.mxu0 0.0
        %2726 = vmatpush1.msra.mxu0 0.0
        %2727 = vmatprep.subr.mxu0 0.0
        %2728 = vmatpush1.msra.mxu0 0.0
        %2729 = vmatprep.subr.mxu0 0.0
        %2730 = vmatpush1.msra.mxu0 0.0
        %2731 = vmatprep.subr.mxu0 0.0
        %2732 = vmatpush1.msra.mxu0 0.0
        %2733 = vmatprep.subr.mxu0 0.0
        %2734 = vmatpush1.msra.mxu0 %v2701
        %2735 = vmatprep.subr.mxu0 0.0
        %2736 = vmatpush2.msra.mxu0 0.0
        %2737 = vmatprep.subr.mxu0 0.0
        %2738 = vmatpush2.msra.mxu0 0.0
        %2739 = vmatprep.subr.mxu0 0.0
        %2740 = vmatpush2.msra.mxu0 0.0
        %2741 = vmatprep.subr.mxu0 0.0
        %2742 = vmatpush2.msra.mxu0 0.0
        %2743 = vmatprep.subr.mxu0 0.0
        %2744 = vmatpush2.msra.mxu0 0.0
        %2745 = vmatprep.subr.mxu0 0.0
        %2746 = vmatpush2.msra.mxu0 0.0
        %2747 = vmatprep.subr.mxu0 0.0
        %2748 = vmatpush2.msra.mxu0 0.0
        %2749 = vmatprep.subr.mxu0 0.0
        %2750 = vmatpush2.msra.mxu0 0.0
        %2751 = vmatprep.subr.mxu0 0.0
        %2752 = vmatpush2.msra.mxu0 0.0
        %2753 = vmatprep.subr.mxu0 0.0
        %2754 = vmatpush2.msra.mxu0 0.0
        %2755 = vmatprep.subr.mxu0 0.0
        %2756 = vmatpush2.msra.mxu0 0.0
        %2757 = vmatprep.subr.mxu0 0.0
        %2758 = vmatpush2.msra.mxu0 0.0
        %2759 = vmatprep.subr.mxu0 0.0
        %2760 = vmatpush2.msra.mxu0 0.0
        %2761 = vmatprep.subr.mxu0 0.0
        %2762 = vmatpush2.msra.mxu0 0.0
        %2763 = vmatprep.subr.mxu0 0.0
        %2764 = vmatpush2.msra.mxu0 0.0
        %2765 = vmatprep.subr.mxu0 0.0
        %2766 = vmatpush2.msra.mxu0 0.0
        %2767 = vmatprep.mubr.f32.mxu0 0.0
        %2768 = vmatmul.mubr.f32.gmra.mxu0 %v2593
        %v2769 = vpop.f32.mrf.mxu0
        %v2770 = vadd.f32 0.0, %v2769
        %v2771 = vpop.f32.mrf.mxu0
        %2772 = vmatprep.mubr.f32.mxu0 0.0
        %2773 = vmatmul.mubr.f32.gmra.mxu0 %v2596
        %v2774 = vpop.f32.mrf.mxu0
        %v2775 = vadd.f32 0.0, %v2774
        %v2776 = vpop.f32.mrf.mxu0
        %2777 = vmatprep.mubr.f32.mxu0 0.0
        %2778 = vmatmul.mubr.f32.gmra.mxu0 %v2599
        %v2779 = vpop.f32.mrf.mxu0
        %v2780 = vadd.f32 0.0, %v2779
        %v2781 = vpop.f32.mrf.mxu0
        %2782 = vmatprep.mubr.f32.mxu0 0.0
        %2783 = vmatmul.mubr.f32.gmra.mxu0 %v2602
        %v2784 = vpop.f32.mrf.mxu0
        %v2785 = vadd.f32 0.0, %v2784
        %v2786 = vpop.f32.mrf.mxu0
        %2787 = vmatprep.mubr.f32.mxu0 0.0
        %2788 = vmatmul.mubr.f32.gmra.mxu0 %v2605
        %v2789 = vpop.f32.mrf.mxu0
        %v2790 = vadd.f32 0.0, %v2789
        %v2791 = vpop.f32.mrf.mxu0
        %2792 = vmatprep.mubr.f32.mxu0 0.0
        %2793 = vmatmul.mubr.f32.gmra.mxu0 %v2608
        %v2794 = vpop.f32.mrf.mxu0
        %v2795 = vadd.f32 0.0, %v2794
        %v2796 = vpop.f32.mrf.mxu0
        %2797 = vmatprep.mubr.f32.mxu0 0.0
        %2798 = vmatmul.mubr.f32.gmra.mxu0 %v2611
        %v2799 = vpop.f32.mrf.mxu0
        %v2800 = vadd.f32 0.0, %v2799
        %v2801 = vpop.f32.mrf.mxu0
        %2802 = vmatprep.mubr.f32.mxu0 0.0
        %2803 = vmatmul.mubr.f32.gmra.mxu0 %v2614
        %v2804 = vpop.f32.mrf.mxu0
        %v2805 = vadd.f32 0.0, %v2804
        %v2806 = vpop.f32.mrf.mxu0
        %2807 = vmatprep.mubr.f32.mxu0 0.0
        %2808 = vmatmul.mubr.f32.gmra.mxu0 %v2617
        %v2809 = vpop.f32.mrf.mxu0
        %v2810 = vadd.f32 0.0, %v2809
        %v2811 = vpop.f32.mrf.mxu0
        %2812 = vmatprep.mubr.f32.mxu0 0.0
        %2813 = vmatmul.mubr.f32.gmra.mxu0 %v2620
        %v2814 = vpop.f32.mrf.mxu0
        %v2815 = vadd.f32 0.0, %v2814
        %v2816 = vpop.f32.mrf.mxu0
        %2817 = vmatprep.mubr.f32.mxu0 0.0
        %2818 = vmatmul.mubr.f32.gmra.mxu0 %v2623
        %v2819 = vpop.f32.mrf.mxu0
        %v2820 = vadd.f32 0.0, %v2819
        %v2821 = vpop.f32.mrf.mxu0
        %2822 = vmatprep.mubr.f32.mxu0 0.0
        %2823 = vmatmul.mubr.f32.gmra.mxu0 %v2626
        %v2824 = vpop.f32.mrf.mxu0
        %v2825 = vadd.f32 0.0, %v2824
        %v2826 = vpop.f32.mrf.mxu0
        %2827 = vmatprep.mubr.f32.mxu0 0.0
        %2828 = vmatmul.mubr.f32.gmra.mxu0 %v2629
        %v2829 = vpop.f32.mrf.mxu0
        %v2830 = vadd.f32 0.0, %v2829
        %v2831 = vpop.f32.mrf.mxu0
        %2832 = vmatprep.mubr.f32.mxu0 0.0
        %2833 = vmatmul.mubr.f32.gmra.mxu0 %v2632
        %v2834 = vpop.f32.mrf.mxu0
        %v2835 = vadd.f32 0.0, %v2834
        %v2836 = vpop.f32.mrf.mxu0
        %2837 = vmatprep.mubr.f32.mxu0 0.0
        %2838 = vmatmul.mubr.f32.gmra.mxu0 %v2635
        %v2839 = vpop.f32.mrf.mxu0
        %v2840 = vadd.f32 0.0, %v2839
        %v2841 = vpop.f32.mrf.mxu0
        %2842 = vmatprep.mubr.f32.mxu0 0.0
        %2843 = vmatmul.mubr.f32.gmra.mxu0 %v2638
        %v2844 = vpop.f32.mrf.mxu0
        %v2845 = vadd.f32 0.0, %v2844
        %v2846 = vpop.f32.mrf.mxu0
        %2847 = vmatprep.mubr.f32.mxu0 0.0
        %2848 = vmatmul.mubr.f32.gmra.mxu0 %v2641
        %v2849 = vpop.f32.mrf.mxu0
        %v2850 = vadd.f32 0.0, %v2849
        %v2851 = vpop.f32.mrf.mxu0
        %2852 = vmatprep.mubr.f32.mxu0 0.0
        %2853 = vmatmul.mubr.f32.gmra.mxu0 %v2644
        %v2854 = vpop.f32.mrf.mxu0
        %v2855 = vadd.f32 0.0, %v2854
        %v2856 = vpop.f32.mrf.mxu0
        %2857 = vmatprep.mubr.f32.mxu0 0.0
        %2858 = vmatmul.mubr.f32.gmra.mxu0 %v2647
        %v2859 = vpop.f32.mrf.mxu0
        %v2860 = vadd.f32 0.0, %v2859
        %v2861 = vpop.f32.mrf.mxu0
        %2862 = vmatprep.mubr.f32.mxu0 0.0
        %2863 = vmatmul.mubr.f32.gmra.mxu0 %v2650
        %v2864 = vpop.f32.mrf.mxu0
        %v2865 = vadd.f32 0.0, %v2864
        %v2866 = vpop.f32.mrf.mxu0
        %2867 = vmatprep.mubr.f32.mxu0 0.0
        %2868 = vmatmul.mubr.f32.gmra.mxu0 %v2653
        %v2869 = vpop.f32.mrf.mxu0
        %v2870 = vadd.f32 0.0, %v2869
        %v2871 = vpop.f32.mrf.mxu0
        %2872 = vmatprep.mubr.f32.mxu0 0.0
        %2873 = vmatmul.mubr.f32.gmra.mxu0 %v2656
        %v2874 = vpop.f32.mrf.mxu0
        %v2875 = vadd.f32 0.0, %v2874
        %v2876 = vpop.f32.mrf.mxu0
        %2877 = vmatprep.mubr.f32.mxu0 0.0
        %2878 = vmatmul.mubr.f32.gmra.mxu0 %v2659
        %v2879 = vpop.f32.mrf.mxu0
        %v2880 = vadd.f32 0.0, %v2879
        %v2881 = vpop.f32.mrf.mxu0
        %2882 = vmatprep.mubr.f32.mxu0 0.0
        %2883 = vmatmul.mubr.f32.gmra.mxu0 %v2662
        %v2884 = vpop.f32.mrf.mxu0
        %v2885 = vadd.f32 0.0, %v2884
        %v2886 = vpop.f32.mrf.mxu0
        %2887 = vmatprep.mubr.f32.mxu0 0.0
        %2888 = vmatmul.mubr.f32.gmra.mxu0 %v2665
        %v2889 = vpop.f32.mrf.mxu0
        %v2890 = vadd.f32 0.0, %v2889
        %v2891 = vpop.f32.mrf.mxu0
        %2892 = vmatprep.mubr.f32.mxu0 0.0
        %2893 = vmatmul.mubr.f32.gmra.mxu0 %v2668
        %v2894 = vpop.f32.mrf.mxu0
        %v2895 = vadd.f32 0.0, %v2894
        %v2896 = vpop.f32.mrf.mxu0
        %2897 = vmatprep.mubr.f32.mxu0 0.0
        %2898 = vmatmul.mubr.f32.gmra.mxu0 %v2671
        %v2899 = vpop.f32.mrf.mxu0
        %v2900 = vadd.f32 0.0, %v2899
        %v2901 = vpop.f32.mrf.mxu0
        %2902 = vmatprep.mubr.f32.mxu0 0.0
        %2903 = vmatmul.mubr.f32.gmra.mxu0 %v2674
        %v2904 = vpop.f32.mrf.mxu0
        %v2905 = vadd.f32 0.0, %v2904
        %v2906 = vpop.f32.mrf.mxu0
        %2907 = vmatprep.mubr.f32.mxu0 0.0
        %2908 = vmatmul.mubr.f32.gmra.mxu0 %v2677
        %v2909 = vpop.f32.mrf.mxu0
        %v2910 = vadd.f32 0.0, %v2909
        %v2911 = vpop.f32.mrf.mxu0
        %2912 = vmatprep.mubr.f32.mxu0 0.0
        %2913 = vmatmul.mubr.f32.gmra.mxu0 %v2680
        %v2914 = vpop.f32.mrf.mxu0
        %v2915 = vadd.f32 0.0, %v2914
        %v2916 = vpop.f32.mrf.mxu0
        %2917 = vmatprep.mubr.f32.mxu0 0.0
        %2918 = vmatmul.mubr.f32.gmra.mxu0 %v2683
        %v2919 = vpop.f32.mrf.mxu0
        %v2920 = vadd.f32 0.0, %v2919
        %v2921 = vpop.f32.mrf.mxu0
        %2922 = vmatprep.mubr.f32.mxu0 0.0
        %2923 = vmatmul.mubr.f32.gmra.mxu0 %v2686
        %v2924 = vpop.f32.mrf.mxu0
        %v2925 = vadd.f32 0.0, %v2924
        %v2926 = vpop.f32.mrf.mxu0
        %2927 = vmatprep.mubr.f32.mxu0 0.0
        %2928 = vmatmul.mubr.f32.gmra.mxu0 %v2689
        %v2929 = vpop.f32.mrf.mxu0
        %v2930 = vadd.f32 0.0, %v2929
        %v2931 = vpop.f32.mrf.mxu0
        %2932 = vmatprep.mubr.f32.mxu0 0.0
        %2933 = vmatmul.mubr.f32.gmra.mxu0 %v2692
        %v2934 = vpop.f32.mrf.mxu0
        %v2935 = vadd.f32 0.0, %v2934
        %v2936 = vpop.f32.mrf.mxu0
        %2937 = vmatprep.mubr.f32.mxu0 0.0
        %2938 = vmatmul.mubr.f32.gmra.mxu0 %v2695
        %v2939 = vpop.f32.mrf.mxu0
        %v2940 = vadd.f32 0.0, %v2939
        %v2941 = vpop.f32.mrf.mxu0
        %2942 = vmatprep.mubr.f32.mxu0 0.0
        %2943 = vmatmul.mubr.f32.gmra.mxu0 %v2698
        %v2944 = vpop.f32.mrf.mxu0
        %v2945 = vadd.f32 0.0, %v2944
        %v2946 = vpop.f32.mrf.mxu0
        %2947 = vdwg.mxu0
        %v2948 = vadd.f32 %v2518, %v2770
        %v2949 = vadd.f32 %v2519, %v2775
        %v2950 = vadd.f32 %v2520, %v2780
        %v2951 = vadd.f32 %v2521, %v2785
        %v2952 = vadd.f32 %v2522, %v2790
        %v2953 = vadd.f32 %v2523, %v2795
        %v2954 = vadd.f32 %v2524, %v2800
        %v2955 = vadd.f32 %v2525, %v2805
        %v2956 = vadd.f32 %v2526, %v2810
        %v2957 = vadd.f32 %v2527, %v2815
        %v2958 = vadd.f32 %v2528, %v2820
        %v2959 = vadd.f32 %v2529, %v2825
        %v2960 = vadd.f32 %v2530, %v2830
        %v2961 = vadd.f32 %v2531, %v2835
        %v2962 = vadd.f32 %v2532, %v2840
        %v2963 = vadd.f32 %v2533, %v2845
        %v2964 = vadd.f32 %v2534, %v2850
        %v2965 = vadd.f32 %v2535, %v2855
        %v2966 = vadd.f32 %v2536, %v2860
        %v2967 = vadd.f32 %v2537, %v2865
        %v2968 = vadd.f32 %v2538, %v2870
        %v2969 = vadd.f32 %v2539, %v2875
        %v2970 = vadd.f32 %v2540, %v2880
        %v2971 = vadd.f32 %v2541, %v2885
        %v2972 = vadd.f32 %v2542, %v2890
        %v2973 = vadd.f32 %v2543, %v2895
        %v2974 = vadd.f32 %v2544, %v2900
        %v2975 = vadd.f32 %v2545, %v2905
        %v2976 = vadd.f32 %v2546, %v2910
        %v2977 = vadd.f32 %v2547, %v2915
        %v2978 = vadd.f32 %v2548, %v2920
        %v2979 = vadd.f32 %v2549, %v2925
        %v2980 = vadd.f32 %v2550, %v2930
        %v2981 = vadd.f32 %v2551, %v2935
        %v2982 = vadd.f32 %v2552, %v2940
        %v2983 = vadd.f32 %v2553, %v2945
        %v2984 = vld [vmem:[#allocation2 + $0x29] sm:$0xff]
        %v2985 = vld [vmem:[#allocation2 + $0x31] sm:$0xff]
        %v2986 = vld [vmem:[#allocation2 + $0x39] sm:$0xff]
        %v2987 = vld [vmem:[#allocation2 + $0x41] sm:$0xff]
        %v2988 = vld [vmem:[#allocation2 + $0x49] sm:$0xff]
        %v2989 = vld [vmem:[#allocation2 + $0x51] sm:$0xff]
        %v2990 = vld [vmem:[#allocation2 + $0x59] sm:$0xff]
        %v2991 = vld [vmem:[#allocation2 + $0x61] sm:$0xff]
        %v2992 = vld [vmem:[#allocation2 + $0x69] sm:$0xff]
        %v2993 = vld [vmem:[#allocation2 + $0x71] sm:$0xff]
        %v2994 = vld [vmem:[#allocation2 + $0x79] sm:$0xff]
        %v2995 = vld [vmem:[#allocation2 + $0x81] sm:$0xff]
        %v2996 = vld [vmem:[#allocation2 + $0x89] sm:$0xff]
        %v2997 = vld [vmem:[#allocation2 + $0x91] sm:$0xff]
        %v2998 = vld [vmem:[#allocation2 + $0x99] sm:$0xff]
        %v2999 = vld [vmem:[#allocation2 + $0xa1] sm:$0xff]
        %v3000 = vld [vmem:[#allocation2 + $0xa9] sm:$0xff]
        %v3001 = vld [vmem:[#allocation2 + $0xb1] sm:$0xff]
        %v3002 = vld [vmem:[#allocation2 + $0xb9] sm:$0xff]
        %v3003 = vld [vmem:[#allocation2 + $0xc1] sm:$0xff]
        %v3004 = vld [vmem:[#allocation2 + $0xc9] sm:$0xff]
        %v3005 = vld [vmem:[#allocation2 + $0xd1] sm:$0xff]
        %v3006 = vld [vmem:[#allocation2 + $0xd9] sm:$0xff]
        %v3007 = vld [vmem:[#allocation2 + $0xe1] sm:$0xff]
        %v3008 = vld [vmem:[#allocation2 + $0xe9] sm:$0xff]
        %v3009 = vld [vmem:[#allocation2 + $0xf1] sm:$0xff]
        %v3010 = vld [vmem:[#allocation2 + $0xf9] sm:$0xff]
        %v3011 = vld [vmem:[#allocation2 + $0x101] sm:$0xff]
        %v3012 = vld [vmem:[#allocation2 + $0x109] sm:$0xff]
        %v3013 = vld [vmem:[#allocation2 + $0x111] sm:$0xff]
        %v3014 = vld [vmem:[#allocation2 + $0x119] sm:$0xff]
        %v3015 = vld [vmem:[#allocation2 + $0x121] sm:$0xff]
        %v3016 = vld [vmem:[#allocation2 + $0x129] sm:$0xff]
        %v3017 = vld [vmem:[#allocation2 + $0x131] sm:$0xff]
        %v3018 = vld [vmem:[#allocation2 + $0x139] sm:$0xff]
        %v3019 = vld [vmem:[#allocation2 + $0x141] sm:$0xff]
        %s3020 = scalar_lea.vmem %s3, 24
        %v3021 = vld [vmem:[%s3020] sm:$0xf]
        %v3023 = vsel %vm550, %v2984, 0
        %v3026 = vsel %vm550, %v2985, 0
        %v3029 = vsel %vm550, %v2986, 0
        %v3032 = vsel %vm550, %v2987, 0
        %v3035 = vsel %vm550, %v2988, 0
        %v3038 = vsel %vm550, %v2989, 0
        %v3041 = vsel %vm550, %v2990, 0
        %v3044 = vsel %vm550, %v2991, 0
        %v3047 = vsel %vm550, %v2992, 0
        %v3050 = vsel %vm550, %v2993, 0
        %v3053 = vsel %vm550, %v2994, 0
        %v3056 = vsel %vm550, %v2995, 0
        %v3059 = vsel %vm550, %v2996, 0
        %v3062 = vsel %vm550, %v2997, 0
        %v3065 = vsel %vm550, %v2998, 0
        %v3068 = vsel %vm550, %v2999, 0
        %v3071 = vsel %vm550, %v3000, 0
        %v3074 = vsel %vm550, %v3001, 0
        %v3077 = vsel %vm550, %v3002, 0
        %v3080 = vsel %vm550, %v3003, 0
        %v3083 = vsel %vm550, %v3004, 0
        %v3086 = vsel %vm550, %v3005, 0
        %v3089 = vsel %vm550, %v3006, 0
        %v3092 = vsel %vm550, %v3007, 0
        %v3095 = vsel %vm550, %v3008, 0
        %v3098 = vsel %vm550, %v3009, 0
        %v3101 = vsel %vm550, %v3010, 0
        %v3104 = vsel %vm550, %v3011, 0
        %v3107 = vsel %vm550, %v3012, 0
        %v3110 = vsel %vm550, %v3013, 0
        %v3113 = vsel %vm550, %v3014, 0
        %v3116 = vsel %vm550, %v3015, 0
        %v3119 = vsel %vm550, %v3016, 0
        %v3122 = vsel %vm550, %v3017, 0
        %v3125 = vsel %vm550, %v3018, 0
        %v3128 = vsel %vm550, %v3019, 0
        %v3131 = vsel %vm659, %v3021, 0
        %3133 = vmatprep.subr.mxu0 0.0
        %3134 = vmatpush1.msra.mxu0 0.0
        %3135 = vmatprep.subr.mxu0 0.0
        %3136 = vmatpush1.msra.mxu0 0.0
        %3137 = vmatprep.subr.mxu0 0.0
        %3138 = vmatpush1.msra.mxu0 0.0
        %3139 = vmatprep.subr.mxu0 0.0
        %3140 = vmatpush1.msra.mxu0 0.0
        %3141 = vmatprep.subr.mxu0 0.0
        %3142 = vmatpush1.msra.mxu0 0.0
        %3143 = vmatprep.subr.mxu0 0.0
        %3144 = vmatpush1.msra.mxu0 0.0
        %3145 = vmatprep.subr.mxu0 0.0
        %3146 = vmatpush1.msra.mxu0 0.0
        %3147 = vmatprep.subr.mxu0 0.0
        %3148 = vmatpush1.msra.mxu0 0.0
        %3149 = vmatprep.subr.mxu0 0.0
        %3150 = vmatpush1.msra.mxu0 0.0
        %3151 = vmatprep.subr.mxu0 0.0
        %3152 = vmatpush1.msra.mxu0 0.0
        %3153 = vmatprep.subr.mxu0 0.0
        %3154 = vmatpush1.msra.mxu0 0.0
        %3155 = vmatprep.subr.mxu0 0.0
        %3156 = vmatpush1.msra.mxu0 0.0
        %3157 = vmatprep.subr.mxu0 0.0
        %3158 = vmatpush1.msra.mxu0 0.0
        %3159 = vmatprep.subr.mxu0 0.0
        %3160 = vmatpush1.msra.mxu0 0.0
        %3161 = vmatprep.subr.mxu0 0.0
        %3162 = vmatpush1.msra.mxu0 0.0
        %3163 = vmatprep.subr.mxu0 0.0
        %3164 = vmatpush1.msra.mxu0 %v3131
        %3165 = vmatprep.subr.mxu0 0.0
        %3166 = vmatpush2.msra.mxu0 0.0
        %3167 = vmatprep.subr.mxu0 0.0
        %3168 = vmatpush2.msra.mxu0 0.0
        %3169 = vmatprep.subr.mxu0 0.0
        %3170 = vmatpush2.msra.mxu0 0.0
        %3171 = vmatprep.subr.mxu0 0.0
        %3172 = vmatpush2.msra.mxu0 0.0
        %3173 = vmatprep.subr.mxu0 0.0
        %3174 = vmatpush2.msra.mxu0 0.0
        %3175 = vmatprep.subr.mxu0 0.0
        %3176 = vmatpush2.msra.mxu0 0.0
        %3177 = vmatprep.subr.mxu0 0.0
        %3178 = vmatpush2.msra.mxu0 0.0
        %3179 = vmatprep.subr.mxu0 0.0
        %3180 = vmatpush2.msra.mxu0 0.0
        %3181 = vmatprep.subr.mxu0 0.0
        %3182 = vmatpush2.msra.mxu0 0.0
        %3183 = vmatprep.subr.mxu0 0.0
        %3184 = vmatpush2.msra.mxu0 0.0
        %3185 = vmatprep.subr.mxu0 0.0
        %3186 = vmatpush2.msra.mxu0 0.0
        %3187 = vmatprep.subr.mxu0 0.0
        %3188 = vmatpush2.msra.mxu0 0.0
        %3189 = vmatprep.subr.mxu0 0.0
        %3190 = vmatpush2.msra.mxu0 0.0
        %3191 = vmatprep.subr.mxu0 0.0
        %3192 = vmatpush2.msra.mxu0 0.0
        %3193 = vmatprep.subr.mxu0 0.0
        %3194 = vmatpush2.msra.mxu0 0.0
        %3195 = vmatprep.subr.mxu0 0.0
        %3196 = vmatpush2.msra.mxu0 0.0
        %3197 = vmatprep.mubr.f32.mxu0 0.0
        %3198 = vmatmul.mubr.f32.gmra.mxu0 %v3023
        %v3199 = vpop.f32.mrf.mxu0
        %v3200 = vadd.f32 0.0, %v3199
        %v3201 = vpop.f32.mrf.mxu0
        %3202 = vmatprep.mubr.f32.mxu0 0.0
        %3203 = vmatmul.mubr.f32.gmra.mxu0 %v3026
        %v3204 = vpop.f32.mrf.mxu0
        %v3205 = vadd.f32 0.0, %v3204
        %v3206 = vpop.f32.mrf.mxu0
        %3207 = vmatprep.mubr.f32.mxu0 0.0
        %3208 = vmatmul.mubr.f32.gmra.mxu0 %v3029
        %v3209 = vpop.f32.mrf.mxu0
        %v3210 = vadd.f32 0.0, %v3209
        %v3211 = vpop.f32.mrf.mxu0
        %3212 = vmatprep.mubr.f32.mxu0 0.0
        %3213 = vmatmul.mubr.f32.gmra.mxu0 %v3032
        %v3214 = vpop.f32.mrf.mxu0
        %v3215 = vadd.f32 0.0, %v3214
        %v3216 = vpop.f32.mrf.mxu0
        %3217 = vmatprep.mubr.f32.mxu0 0.0
        %3218 = vmatmul.mubr.f32.gmra.mxu0 %v3035
        %v3219 = vpop.f32.mrf.mxu0
        %v3220 = vadd.f32 0.0, %v3219
        %v3221 = vpop.f32.mrf.mxu0
        %3222 = vmatprep.mubr.f32.mxu0 0.0
        %3223 = vmatmul.mubr.f32.gmra.mxu0 %v3038
        %v3224 = vpop.f32.mrf.mxu0
        %v3225 = vadd.f32 0.0, %v3224
        %v3226 = vpop.f32.mrf.mxu0
        %3227 = vmatprep.mubr.f32.mxu0 0.0
        %3228 = vmatmul.mubr.f32.gmra.mxu0 %v3041
        %v3229 = vpop.f32.mrf.mxu0
        %v3230 = vadd.f32 0.0, %v3229
        %v3231 = vpop.f32.mrf.mxu0
        %3232 = vmatprep.mubr.f32.mxu0 0.0
        %3233 = vmatmul.mubr.f32.gmra.mxu0 %v3044
        %v3234 = vpop.f32.mrf.mxu0
        %v3235 = vadd.f32 0.0, %v3234
        %v3236 = vpop.f32.mrf.mxu0
        %3237 = vmatprep.mubr.f32.mxu0 0.0
        %3238 = vmatmul.mubr.f32.gmra.mxu0 %v3047
        %v3239 = vpop.f32.mrf.mxu0
        %v3240 = vadd.f32 0.0, %v3239
        %v3241 = vpop.f32.mrf.mxu0
        %3242 = vmatprep.mubr.f32.mxu0 0.0
        %3243 = vmatmul.mubr.f32.gmra.mxu0 %v3050
        %v3244 = vpop.f32.mrf.mxu0
        %v3245 = vadd.f32 0.0, %v3244
        %v3246 = vpop.f32.mrf.mxu0
        %3247 = vmatprep.mubr.f32.mxu0 0.0
        %3248 = vmatmul.mubr.f32.gmra.mxu0 %v3053
        %v3249 = vpop.f32.mrf.mxu0
        %v3250 = vadd.f32 0.0, %v3249
        %v3251 = vpop.f32.mrf.mxu0
        %3252 = vmatprep.mubr.f32.mxu0 0.0
        %3253 = vmatmul.mubr.f32.gmra.mxu0 %v3056
        %v3254 = vpop.f32.mrf.mxu0
        %v3255 = vadd.f32 0.0, %v3254
        %v3256 = vpop.f32.mrf.mxu0
        %3257 = vmatprep.mubr.f32.mxu0 0.0
        %3258 = vmatmul.mubr.f32.gmra.mxu0 %v3059
        %v3259 = vpop.f32.mrf.mxu0
        %v3260 = vadd.f32 0.0, %v3259
        %v3261 = vpop.f32.mrf.mxu0
        %3262 = vmatprep.mubr.f32.mxu0 0.0
        %3263 = vmatmul.mubr.f32.gmra.mxu0 %v3062
        %v3264 = vpop.f32.mrf.mxu0
        %v3265 = vadd.f32 0.0, %v3264
        %v3266 = vpop.f32.mrf.mxu0
        %3267 = vmatprep.mubr.f32.mxu0 0.0
        %3268 = vmatmul.mubr.f32.gmra.mxu0 %v3065
        %v3269 = vpop.f32.mrf.mxu0
        %v3270 = vadd.f32 0.0, %v3269
        %v3271 = vpop.f32.mrf.mxu0
        %3272 = vmatprep.mubr.f32.mxu0 0.0
        %3273 = vmatmul.mubr.f32.gmra.mxu0 %v3068
        %v3274 = vpop.f32.mrf.mxu0
        %v3275 = vadd.f32 0.0, %v3274
        %v3276 = vpop.f32.mrf.mxu0
        %3277 = vmatprep.mubr.f32.mxu0 0.0
        %3278 = vmatmul.mubr.f32.gmra.mxu0 %v3071
        %v3279 = vpop.f32.mrf.mxu0
        %v3280 = vadd.f32 0.0, %v3279
        %v3281 = vpop.f32.mrf.mxu0
        %3282 = vmatprep.mubr.f32.mxu0 0.0
        %3283 = vmatmul.mubr.f32.gmra.mxu0 %v3074
        %v3284 = vpop.f32.mrf.mxu0
        %v3285 = vadd.f32 0.0, %v3284
        %v3286 = vpop.f32.mrf.mxu0
        %3287 = vmatprep.mubr.f32.mxu0 0.0
        %3288 = vmatmul.mubr.f32.gmra.mxu0 %v3077
        %v3289 = vpop.f32.mrf.mxu0
        %v3290 = vadd.f32 0.0, %v3289
        %v3291 = vpop.f32.mrf.mxu0
        %3292 = vmatprep.mubr.f32.mxu0 0.0
        %3293 = vmatmul.mubr.f32.gmra.mxu0 %v3080
        %v3294 = vpop.f32.mrf.mxu0
        %v3295 = vadd.f32 0.0, %v3294
        %v3296 = vpop.f32.mrf.mxu0
        %3297 = vmatprep.mubr.f32.mxu0 0.0
        %3298 = vmatmul.mubr.f32.gmra.mxu0 %v3083
        %v3299 = vpop.f32.mrf.mxu0
        %v3300 = vadd.f32 0.0, %v3299
        %v3301 = vpop.f32.mrf.mxu0
        %3302 = vmatprep.mubr.f32.mxu0 0.0
        %3303 = vmatmul.mubr.f32.gmra.mxu0 %v3086
        %v3304 = vpop.f32.mrf.mxu0
        %v3305 = vadd.f32 0.0, %v3304
        %v3306 = vpop.f32.mrf.mxu0
        %3307 = vmatprep.mubr.f32.mxu0 0.0
        %3308 = vmatmul.mubr.f32.gmra.mxu0 %v3089
        %v3309 = vpop.f32.mrf.mxu0
        %v3310 = vadd.f32 0.0, %v3309
        %v3311 = vpop.f32.mrf.mxu0
        %3312 = vmatprep.mubr.f32.mxu0 0.0
        %3313 = vmatmul.mubr.f32.gmra.mxu0 %v3092
        %v3314 = vpop.f32.mrf.mxu0
        %v3315 = vadd.f32 0.0, %v3314
        %v3316 = vpop.f32.mrf.mxu0
        %3317 = vmatprep.mubr.f32.mxu0 0.0
        %3318 = vmatmul.mubr.f32.gmra.mxu0 %v3095
        %v3319 = vpop.f32.mrf.mxu0
        %v3320 = vadd.f32 0.0, %v3319
        %v3321 = vpop.f32.mrf.mxu0
        %3322 = vmatprep.mubr.f32.mxu0 0.0
        %3323 = vmatmul.mubr.f32.gmra.mxu0 %v3098
        %v3324 = vpop.f32.mrf.mxu0
        %v3325 = vadd.f32 0.0, %v3324
        %v3326 = vpop.f32.mrf.mxu0
        %3327 = vmatprep.mubr.f32.mxu0 0.0
        %3328 = vmatmul.mubr.f32.gmra.mxu0 %v3101
        %v3329 = vpop.f32.mrf.mxu0
        %v3330 = vadd.f32 0.0, %v3329
        %v3331 = vpop.f32.mrf.mxu0
        %3332 = vmatprep.mubr.f32.mxu0 0.0
        %3333 = vmatmul.mubr.f32.gmra.mxu0 %v3104
        %v3334 = vpop.f32.mrf.mxu0
        %v3335 = vadd.f32 0.0, %v3334
        %v3336 = vpop.f32.mrf.mxu0
        %3337 = vmatprep.mubr.f32.mxu0 0.0
        %3338 = vmatmul.mubr.f32.gmra.mxu0 %v3107
        %v3339 = vpop.f32.mrf.mxu0
        %v3340 = vadd.f32 0.0, %v3339
        %v3341 = vpop.f32.mrf.mxu0
        %3342 = vmatprep.mubr.f32.mxu0 0.0
        %3343 = vmatmul.mubr.f32.gmra.mxu0 %v3110
        %v3344 = vpop.f32.mrf.mxu0
        %v3345 = vadd.f32 0.0, %v3344
        %v3346 = vpop.f32.mrf.mxu0
        %3347 = vmatprep.mubr.f32.mxu0 0.0
        %3348 = vmatmul.mubr.f32.gmra.mxu0 %v3113
        %v3349 = vpop.f32.mrf.mxu0
        %v3350 = vadd.f32 0.0, %v3349
        %v3351 = vpop.f32.mrf.mxu0
        %3352 = vmatprep.mubr.f32.mxu0 0.0
        %3353 = vmatmul.mubr.f32.gmra.mxu0 %v3116
        %v3354 = vpop.f32.mrf.mxu0
        %v3355 = vadd.f32 0.0, %v3354
        %v3356 = vpop.f32.mrf.mxu0
        %3357 = vmatprep.mubr.f32.mxu0 0.0
        %3358 = vmatmul.mubr.f32.gmra.mxu0 %v3119
        %v3359 = vpop.f32.mrf.mxu0
        %v3360 = vadd.f32 0.0, %v3359
        %v3361 = vpop.f32.mrf.mxu0
        %3362 = vmatprep.mubr.f32.mxu0 0.0
        %3363 = vmatmul.mubr.f32.gmra.mxu0 %v3122
        %v3364 = vpop.f32.mrf.mxu0
        %v3365 = vadd.f32 0.0, %v3364
        %v3366 = vpop.f32.mrf.mxu0
        %3367 = vmatprep.mubr.f32.mxu0 0.0
        %3368 = vmatmul.mubr.f32.gmra.mxu0 %v3125
        %v3369 = vpop.f32.mrf.mxu0
        %v3370 = vadd.f32 0.0, %v3369
        %v3371 = vpop.f32.mrf.mxu0
        %3372 = vmatprep.mubr.f32.mxu0 0.0
        %3373 = vmatmul.mubr.f32.gmra.mxu0 %v3128
        %v3374 = vpop.f32.mrf.mxu0
        %v3375 = vadd.f32 0.0, %v3374
        %v3376 = vpop.f32.mrf.mxu0
        %3377 = vdwg.mxu0
        %v3378 = vadd.f32 %v2948, %v3200
        %v3379 = vadd.f32 %v2949, %v3205
        %v3380 = vadd.f32 %v2950, %v3210
        %v3381 = vadd.f32 %v2951, %v3215
        %v3382 = vadd.f32 %v2952, %v3220
        %v3383 = vadd.f32 %v2953, %v3225
        %v3384 = vadd.f32 %v2954, %v3230
        %v3385 = vadd.f32 %v2955, %v3235
        %v3386 = vadd.f32 %v2956, %v3240
        %v3387 = vadd.f32 %v2957, %v3245
        %v3388 = vadd.f32 %v2958, %v3250
        %v3389 = vadd.f32 %v2959, %v3255
        %v3390 = vadd.f32 %v2960, %v3260
        %v3391 = vadd.f32 %v2961, %v3265
        %v3392 = vadd.f32 %v2962, %v3270
        %v3393 = vadd.f32 %v2963, %v3275
        %v3394 = vadd.f32 %v2964, %v3280
        %v3395 = vadd.f32 %v2965, %v3285
        %v3396 = vadd.f32 %v2966, %v3290
        %v3397 = vadd.f32 %v2967, %v3295
        %v3398 = vadd.f32 %v2968, %v3300
        %v3399 = vadd.f32 %v2969, %v3305
        %v3400 = vadd.f32 %v2970, %v3310
        %v3401 = vadd.f32 %v2971, %v3315
        %v3402 = vadd.f32 %v2972, %v3320
        %v3403 = vadd.f32 %v2973, %v3325
        %v3404 = vadd.f32 %v2974, %v3330
        %v3405 = vadd.f32 %v2975, %v3335
        %v3406 = vadd.f32 %v2976, %v3340
        %v3407 = vadd.f32 %v2977, %v3345
        %v3408 = vadd.f32 %v2978, %v3350
        %v3409 = vadd.f32 %v2979, %v3355
        %v3410 = vadd.f32 %v2980, %v3360
        %v3411 = vadd.f32 %v2981, %v3365
        %v3412 = vadd.f32 %v2982, %v3370
        %v3413 = vadd.f32 %v2983, %v3375
        %v3414 = vld [vmem:[#allocation2 + $0x2a] sm:$0xff]
        %v3415 = vld [vmem:[#allocation2 + $0x32] sm:$0xff]
        %v3416 = vld [vmem:[#allocation2 + $0x3a] sm:$0xff]
        %v3417 = vld [vmem:[#allocation2 + $0x42] sm:$0xff]
        %v3418 = vld [vmem:[#allocation2 + $0x4a] sm:$0xff]
        %v3419 = vld [vmem:[#allocation2 + $0x52] sm:$0xff]
        %v3420 = vld [vmem:[#allocation2 + $0x5a] sm:$0xff]
        %v3421 = vld [vmem:[#allocation2 + $0x62] sm:$0xff]
        %v3422 = vld [vmem:[#allocation2 + $0x6a] sm:$0xff]
        %v3423 = vld [vmem:[#allocation2 + $0x72] sm:$0xff]
        %v3424 = vld [vmem:[#allocation2 + $0x7a] sm:$0xff]
        %v3425 = vld [vmem:[#allocation2 + $0x82] sm:$0xff]
        %v3426 = vld [vmem:[#allocation2 + $0x8a] sm:$0xff]
        %v3427 = vld [vmem:[#allocation2 + $0x92] sm:$0xff]
        %v3428 = vld [vmem:[#allocation2 + $0x9a] sm:$0xff]
        %v3429 = vld [vmem:[#allocation2 + $0xa2] sm:$0xff]
        %v3430 = vld [vmem:[#allocation2 + $0xaa] sm:$0xff]
        %v3431 = vld [vmem:[#allocation2 + $0xb2] sm:$0xff]
        %v3432 = vld [vmem:[#allocation2 + $0xba] sm:$0xff]
        %v3433 = vld [vmem:[#allocation2 + $0xc2] sm:$0xff]
        %v3434 = vld [vmem:[#allocation2 + $0xca] sm:$0xff]
        %v3435 = vld [vmem:[#allocation2 + $0xd2] sm:$0xff]
        %v3436 = vld [vmem:[#allocation2 + $0xda] sm:$0xff]
        %v3437 = vld [vmem:[#allocation2 + $0xe2] sm:$0xff]
        %v3438 = vld [vmem:[#allocation2 + $0xea] sm:$0xff]
        %v3439 = vld [vmem:[#allocation2 + $0xf2] sm:$0xff]
        %v3440 = vld [vmem:[#allocation2 + $0xfa] sm:$0xff]
        %v3441 = vld [vmem:[#allocation2 + $0x102] sm:$0xff]
        %v3442 = vld [vmem:[#allocation2 + $0x10a] sm:$0xff]
        %v3443 = vld [vmem:[#allocation2 + $0x112] sm:$0xff]
        %v3444 = vld [vmem:[#allocation2 + $0x11a] sm:$0xff]
        %v3445 = vld [vmem:[#allocation2 + $0x122] sm:$0xff]
        %v3446 = vld [vmem:[#allocation2 + $0x12a] sm:$0xff]
        %v3447 = vld [vmem:[#allocation2 + $0x132] sm:$0xff]
        %v3448 = vld [vmem:[#allocation2 + $0x13a] sm:$0xff]
        %v3449 = vld [vmem:[#allocation2 + $0x142] sm:$0xff]
        %s3450 = scalar_lea.vmem %s3, 28
        %v3451 = vld [vmem:[%s3450] sm:$0xf]
        %v3453 = vsel %vm550, %v3414, 0
        %v3456 = vsel %vm550, %v3415, 0
        %v3459 = vsel %vm550, %v3416, 0
        %v3462 = vsel %vm550, %v3417, 0
        %v3465 = vsel %vm550, %v3418, 0
        %v3468 = vsel %vm550, %v3419, 0
        %v3471 = vsel %vm550, %v3420, 0
        %v3474 = vsel %vm550, %v3421, 0
        %v3477 = vsel %vm550, %v3422, 0
        %v3480 = vsel %vm550, %v3423, 0
        %v3483 = vsel %vm550, %v3424, 0
        %v3486 = vsel %vm550, %v3425, 0
        %v3489 = vsel %vm550, %v3426, 0
        %v3492 = vsel %vm550, %v3427, 0
        %v3495 = vsel %vm550, %v3428, 0
        %v3498 = vsel %vm550, %v3429, 0
        %v3501 = vsel %vm550, %v3430, 0
        %v3504 = vsel %vm550, %v3431, 0
        %v3507 = vsel %vm550, %v3432, 0
        %v3510 = vsel %vm550, %v3433, 0
        %v3513 = vsel %vm550, %v3434, 0
        %v3516 = vsel %vm550, %v3435, 0
        %v3519 = vsel %vm550, %v3436, 0
        %v3522 = vsel %vm550, %v3437, 0
        %v3525 = vsel %vm550, %v3438, 0
        %v3528 = vsel %vm550, %v3439, 0
        %v3531 = vsel %vm550, %v3440, 0
        %v3534 = vsel %vm550, %v3441, 0
        %v3537 = vsel %vm550, %v3442, 0
        %v3540 = vsel %vm550, %v3443, 0
        %v3543 = vsel %vm550, %v3444, 0
        %v3546 = vsel %vm550, %v3445, 0
        %v3549 = vsel %vm550, %v3446, 0
        %v3552 = vsel %vm550, %v3447, 0
        %v3555 = vsel %vm550, %v3448, 0
        %v3558 = vsel %vm550, %v3449, 0
        %v3561 = vsel %vm659, %v3451, 0
        %3563 = vmatprep.subr.mxu0 0.0
        %3564 = vmatpush1.msra.mxu0 0.0
        %3565 = vmatprep.subr.mxu0 0.0
        %3566 = vmatpush1.msra.mxu0 0.0
        %3567 = vmatprep.subr.mxu0 0.0
        %3568 = vmatpush1.msra.mxu0 0.0
        %3569 = vmatprep.subr.mxu0 0.0
        %3570 = vmatpush1.msra.mxu0 0.0
        %3571 = vmatprep.subr.mxu0 0.0
        %3572 = vmatpush1.msra.mxu0 0.0
        %3573 = vmatprep.subr.mxu0 0.0
        %3574 = vmatpush1.msra.mxu0 0.0
        %3575 = vmatprep.subr.mxu0 0.0
        %3576 = vmatpush1.msra.mxu0 0.0
        %3577 = vmatprep.subr.mxu0 0.0
        %3578 = vmatpush1.msra.mxu0 0.0
        %3579 = vmatprep.subr.mxu0 0.0
        %3580 = vmatpush1.msra.mxu0 0.0
        %3581 = vmatprep.subr.mxu0 0.0
        %3582 = vmatpush1.msra.mxu0 0.0
        %3583 = vmatprep.subr.mxu0 0.0
        %3584 = vmatpush1.msra.mxu0 0.0
        %3585 = vmatprep.subr.mxu0 0.0
        %3586 = vmatpush1.msra.mxu0 0.0
        %3587 = vmatprep.subr.mxu0 0.0
        %3588 = vmatpush1.msra.mxu0 0.0
        %3589 = vmatprep.subr.mxu0 0.0
        %3590 = vmatpush1.msra.mxu0 0.0
        %3591 = vmatprep.subr.mxu0 0.0
        %3592 = vmatpush1.msra.mxu0 0.0
        %3593 = vmatprep.subr.mxu0 0.0
        %3594 = vmatpush1.msra.mxu0 %v3561
        %3595 = vmatprep.subr.mxu0 0.0
        %3596 = vmatpush2.msra.mxu0 0.0
        %3597 = vmatprep.subr.mxu0 0.0
        %3598 = vmatpush2.msra.mxu0 0.0
        %3599 = vmatprep.subr.mxu0 0.0
        %3600 = vmatpush2.msra.mxu0 0.0
        %3601 = vmatprep.subr.mxu0 0.0
        %3602 = vmatpush2.msra.mxu0 0.0
        %3603 = vmatprep.subr.mxu0 0.0
        %3604 = vmatpush2.msra.mxu0 0.0
        %3605 = vmatprep.subr.mxu0 0.0
        %3606 = vmatpush2.msra.mxu0 0.0
        %3607 = vmatprep.subr.mxu0 0.0
        %3608 = vmatpush2.msra.mxu0 0.0
        %3609 = vmatprep.subr.mxu0 0.0
        %3610 = vmatpush2.msra.mxu0 0.0
        %3611 = vmatprep.subr.mxu0 0.0
        %3612 = vmatpush2.msra.mxu0 0.0
        %3613 = vmatprep.subr.mxu0 0.0
        %3614 = vmatpush2.msra.mxu0 0.0
        %3615 = vmatprep.subr.mxu0 0.0
        %3616 = vmatpush2.msra.mxu0 0.0
        %3617 = vmatprep.subr.mxu0 0.0
        %3618 = vmatpush2.msra.mxu0 0.0
        %3619 = vmatprep.subr.mxu0 0.0
        %3620 = vmatpush2.msra.mxu0 0.0
        %3621 = vmatprep.subr.mxu0 0.0
        %3622 = vmatpush2.msra.mxu0 0.0
        %3623 = vmatprep.subr.mxu0 0.0
        %3624 = vmatpush2.msra.mxu0 0.0
        %3625 = vmatprep.subr.mxu0 0.0
        %3626 = vmatpush2.msra.mxu0 0.0
        %3627 = vmatprep.mubr.f32.mxu0 0.0
        %3628 = vmatmul.mubr.f32.gmra.mxu0 %v3453
        %v3629 = vpop.f32.mrf.mxu0
        %v3630 = vadd.f32 0.0, %v3629
        %v3631 = vpop.f32.mrf.mxu0
        %3632 = vmatprep.mubr.f32.mxu0 0.0
        %3633 = vmatmul.mubr.f32.gmra.mxu0 %v3456
        %v3634 = vpop.f32.mrf.mxu0
        %v3635 = vadd.f32 0.0, %v3634
        %v3636 = vpop.f32.mrf.mxu0
        %3637 = vmatprep.mubr.f32.mxu0 0.0
        %3638 = vmatmul.mubr.f32.gmra.mxu0 %v3459
        %v3639 = vpop.f32.mrf.mxu0
        %v3640 = vadd.f32 0.0, %v3639
        %v3641 = vpop.f32.mrf.mxu0
        %3642 = vmatprep.mubr.f32.mxu0 0.0
        %3643 = vmatmul.mubr.f32.gmra.mxu0 %v3462
        %v3644 = vpop.f32.mrf.mxu0
        %v3645 = vadd.f32 0.0, %v3644
        %v3646 = vpop.f32.mrf.mxu0
        %3647 = vmatprep.mubr.f32.mxu0 0.0
        %3648 = vmatmul.mubr.f32.gmra.mxu0 %v3465
        %v3649 = vpop.f32.mrf.mxu0
        %v3650 = vadd.f32 0.0, %v3649
        %v3651 = vpop.f32.mrf.mxu0
        %3652 = vmatprep.mubr.f32.mxu0 0.0
        %3653 = vmatmul.mubr.f32.gmra.mxu0 %v3468
        %v3654 = vpop.f32.mrf.mxu0
        %v3655 = vadd.f32 0.0, %v3654
        %v3656 = vpop.f32.mrf.mxu0
        %3657 = vmatprep.mubr.f32.mxu0 0.0
        %3658 = vmatmul.mubr.f32.gmra.mxu0 %v3471
        %v3659 = vpop.f32.mrf.mxu0
        %v3660 = vadd.f32 0.0, %v3659
        %v3661 = vpop.f32.mrf.mxu0
        %3662 = vmatprep.mubr.f32.mxu0 0.0
        %3663 = vmatmul.mubr.f32.gmra.mxu0 %v3474
        %v3664 = vpop.f32.mrf.mxu0
        %v3665 = vadd.f32 0.0, %v3664
        %v3666 = vpop.f32.mrf.mxu0
        %3667 = vmatprep.mubr.f32.mxu0 0.0
        %3668 = vmatmul.mubr.f32.gmra.mxu0 %v3477
        %v3669 = vpop.f32.mrf.mxu0
        %v3670 = vadd.f32 0.0, %v3669
        %v3671 = vpop.f32.mrf.mxu0
        %3672 = vmatprep.mubr.f32.mxu0 0.0
        %3673 = vmatmul.mubr.f32.gmra.mxu0 %v3480
        %v3674 = vpop.f32.mrf.mxu0
        %v3675 = vadd.f32 0.0, %v3674
        %v3676 = vpop.f32.mrf.mxu0
        %3677 = vmatprep.mubr.f32.mxu0 0.0
        %3678 = vmatmul.mubr.f32.gmra.mxu0 %v3483
        %v3679 = vpop.f32.mrf.mxu0
        %v3680 = vadd.f32 0.0, %v3679
        %v3681 = vpop.f32.mrf.mxu0
        %3682 = vmatprep.mubr.f32.mxu0 0.0
        %3683 = vmatmul.mubr.f32.gmra.mxu0 %v3486
        %v3684 = vpop.f32.mrf.mxu0
        %v3685 = vadd.f32 0.0, %v3684
        %v3686 = vpop.f32.mrf.mxu0
        %3687 = vmatprep.mubr.f32.mxu0 0.0
        %3688 = vmatmul.mubr.f32.gmra.mxu0 %v3489
        %v3689 = vpop.f32.mrf.mxu0
        %v3690 = vadd.f32 0.0, %v3689
        %v3691 = vpop.f32.mrf.mxu0
        %3692 = vmatprep.mubr.f32.mxu0 0.0
        %3693 = vmatmul.mubr.f32.gmra.mxu0 %v3492
        %v3694 = vpop.f32.mrf.mxu0
        %v3695 = vadd.f32 0.0, %v3694
        %v3696 = vpop.f32.mrf.mxu0
        %3697 = vmatprep.mubr.f32.mxu0 0.0
        %3698 = vmatmul.mubr.f32.gmra.mxu0 %v3495
        %v3699 = vpop.f32.mrf.mxu0
        %v3700 = vadd.f32 0.0, %v3699
        %v3701 = vpop.f32.mrf.mxu0
        %3702 = vmatprep.mubr.f32.mxu0 0.0
        %3703 = vmatmul.mubr.f32.gmra.mxu0 %v3498
        %v3704 = vpop.f32.mrf.mxu0
        %v3705 = vadd.f32 0.0, %v3704
        %v3706 = vpop.f32.mrf.mxu0
        %3707 = vmatprep.mubr.f32.mxu0 0.0
        %3708 = vmatmul.mubr.f32.gmra.mxu0 %v3501
        %v3709 = vpop.f32.mrf.mxu0
        %v3710 = vadd.f32 0.0, %v3709
        %v3711 = vpop.f32.mrf.mxu0
        %3712 = vmatprep.mubr.f32.mxu0 0.0
        %3713 = vmatmul.mubr.f32.gmra.mxu0 %v3504
        %v3714 = vpop.f32.mrf.mxu0
        %v3715 = vadd.f32 0.0, %v3714
        %v3716 = vpop.f32.mrf.mxu0
        %3717 = vmatprep.mubr.f32.mxu0 0.0
        %3718 = vmatmul.mubr.f32.gmra.mxu0 %v3507
        %v3719 = vpop.f32.mrf.mxu0
        %v3720 = vadd.f32 0.0, %v3719
        %v3721 = vpop.f32.mrf.mxu0
        %3722 = vmatprep.mubr.f32.mxu0 0.0
        %3723 = vmatmul.mubr.f32.gmra.mxu0 %v3510
        %v3724 = vpop.f32.mrf.mxu0
        %v3725 = vadd.f32 0.0, %v3724
        %v3726 = vpop.f32.mrf.mxu0
        %3727 = vmatprep.mubr.f32.mxu0 0.0
        %3728 = vmatmul.mubr.f32.gmra.mxu0 %v3513
        %v3729 = vpop.f32.mrf.mxu0
        %v3730 = vadd.f32 0.0, %v3729
        %v3731 = vpop.f32.mrf.mxu0
        %3732 = vmatprep.mubr.f32.mxu0 0.0
        %3733 = vmatmul.mubr.f32.gmra.mxu0 %v3516
        %v3734 = vpop.f32.mrf.mxu0
        %v3735 = vadd.f32 0.0, %v3734
        %v3736 = vpop.f32.mrf.mxu0
        %3737 = vmatprep.mubr.f32.mxu0 0.0
        %3738 = vmatmul.mubr.f32.gmra.mxu0 %v3519
        %v3739 = vpop.f32.mrf.mxu0
        %v3740 = vadd.f32 0.0, %v3739
        %v3741 = vpop.f32.mrf.mxu0
        %3742 = vmatprep.mubr.f32.mxu0 0.0
        %3743 = vmatmul.mubr.f32.gmra.mxu0 %v3522
        %v3744 = vpop.f32.mrf.mxu0
        %v3745 = vadd.f32 0.0, %v3744
        %v3746 = vpop.f32.mrf.mxu0
        %3747 = vmatprep.mubr.f32.mxu0 0.0
        %3748 = vmatmul.mubr.f32.gmra.mxu0 %v3525
        %v3749 = vpop.f32.mrf.mxu0
        %v3750 = vadd.f32 0.0, %v3749
        %v3751 = vpop.f32.mrf.mxu0
        %3752 = vmatprep.mubr.f32.mxu0 0.0
        %3753 = vmatmul.mubr.f32.gmra.mxu0 %v3528
        %v3754 = vpop.f32.mrf.mxu0
        %v3755 = vadd.f32 0.0, %v3754
        %v3756 = vpop.f32.mrf.mxu0
        %3757 = vmatprep.mubr.f32.mxu0 0.0
        %3758 = vmatmul.mubr.f32.gmra.mxu0 %v3531
        %v3759 = vpop.f32.mrf.mxu0
        %v3760 = vadd.f32 0.0, %v3759
        %v3761 = vpop.f32.mrf.mxu0
        %3762 = vmatprep.mubr.f32.mxu0 0.0
        %3763 = vmatmul.mubr.f32.gmra.mxu0 %v3534
        %v3764 = vpop.f32.mrf.mxu0
        %v3765 = vadd.f32 0.0, %v3764
        %v3766 = vpop.f32.mrf.mxu0
        %3767 = vmatprep.mubr.f32.mxu0 0.0
        %3768 = vmatmul.mubr.f32.gmra.mxu0 %v3537
        %v3769 = vpop.f32.mrf.mxu0
        %v3770 = vadd.f32 0.0, %v3769
        %v3771 = vpop.f32.mrf.mxu0
        %3772 = vmatprep.mubr.f32.mxu0 0.0
        %3773 = vmatmul.mubr.f32.gmra.mxu0 %v3540
        %v3774 = vpop.f32.mrf.mxu0
        %v3775 = vadd.f32 0.0, %v3774
        %v3776 = vpop.f32.mrf.mxu0
        %3777 = vmatprep.mubr.f32.mxu0 0.0
        %3778 = vmatmul.mubr.f32.gmra.mxu0 %v3543
        %v3779 = vpop.f32.mrf.mxu0
        %v3780 = vadd.f32 0.0, %v3779
        %v3781 = vpop.f32.mrf.mxu0
        %3782 = vmatprep.mubr.f32.mxu0 0.0
        %3783 = vmatmul.mubr.f32.gmra.mxu0 %v3546
        %v3784 = vpop.f32.mrf.mxu0
        %v3785 = vadd.f32 0.0, %v3784
        %v3786 = vpop.f32.mrf.mxu0
        %3787 = vmatprep.mubr.f32.mxu0 0.0
        %3788 = vmatmul.mubr.f32.gmra.mxu0 %v3549
        %v3789 = vpop.f32.mrf.mxu0
        %v3790 = vadd.f32 0.0, %v3789
        %v3791 = vpop.f32.mrf.mxu0
        %3792 = vmatprep.mubr.f32.mxu0 0.0
        %3793 = vmatmul.mubr.f32.gmra.mxu0 %v3552
        %v3794 = vpop.f32.mrf.mxu0
        %v3795 = vadd.f32 0.0, %v3794
        %v3796 = vpop.f32.mrf.mxu0
        %3797 = vmatprep.mubr.f32.mxu0 0.0
        %3798 = vmatmul.mubr.f32.gmra.mxu0 %v3555
        %v3799 = vpop.f32.mrf.mxu0
        %v3800 = vadd.f32 0.0, %v3799
        %v3801 = vpop.f32.mrf.mxu0
        %3802 = vmatprep.mubr.f32.mxu0 0.0
        %3803 = vmatmul.mubr.f32.gmra.mxu0 %v3558
        %v3804 = vpop.f32.mrf.mxu0
        %v3805 = vadd.f32 0.0, %v3804
        %v3806 = vpop.f32.mrf.mxu0
        %3807 = vdwg.mxu0
        %v3808 = vadd.f32 %v3378, %v3630
        %v3809 = vadd.f32 %v3379, %v3635
        %v3810 = vadd.f32 %v3380, %v3640
        %v3811 = vadd.f32 %v3381, %v3645
        %v3812 = vadd.f32 %v3382, %v3650
        %v3813 = vadd.f32 %v3383, %v3655
        %v3814 = vadd.f32 %v3384, %v3660
        %v3815 = vadd.f32 %v3385, %v3665
        %v3816 = vadd.f32 %v3386, %v3670
        %v3817 = vadd.f32 %v3387, %v3675
        %v3818 = vadd.f32 %v3388, %v3680
        %v3819 = vadd.f32 %v3389, %v3685
        %v3820 = vadd.f32 %v3390, %v3690
        %v3821 = vadd.f32 %v3391, %v3695
        %v3822 = vadd.f32 %v3392, %v3700
        %v3823 = vadd.f32 %v3393, %v3705
        %v3824 = vadd.f32 %v3394, %v3710
        %v3825 = vadd.f32 %v3395, %v3715
        %v3826 = vadd.f32 %v3396, %v3720
        %v3827 = vadd.f32 %v3397, %v3725
        %v3828 = vadd.f32 %v3398, %v3730
        %v3829 = vadd.f32 %v3399, %v3735
        %v3830 = vadd.f32 %v3400, %v3740
        %v3831 = vadd.f32 %v3401, %v3745
        %v3832 = vadd.f32 %v3402, %v3750
        %v3833 = vadd.f32 %v3403, %v3755
        %v3834 = vadd.f32 %v3404, %v3760
        %v3835 = vadd.f32 %v3405, %v3765
        %v3836 = vadd.f32 %v3406, %v3770
        %v3837 = vadd.f32 %v3407, %v3775
        %v3838 = vadd.f32 %v3408, %v3780
        %v3839 = vadd.f32 %v3409, %v3785
        %v3840 = vadd.f32 %v3410, %v3790
        %v3841 = vadd.f32 %v3411, %v3795
        %v3842 = vadd.f32 %v3412, %v3800
        %v3843 = vadd.f32 %v3413, %v3805
        %v3844 = vld [vmem:[#allocation2 + $0x2b] sm:$0xff]
        %v3845 = vld [vmem:[#allocation2 + $0x33] sm:$0xff]
        %v3846 = vld [vmem:[#allocation2 + $0x3b] sm:$0xff]
        %v3847 = vld [vmem:[#allocation2 + $0x43] sm:$0xff]
        %v3848 = vld [vmem:[#allocation2 + $0x4b] sm:$0xff]
        %v3849 = vld [vmem:[#allocation2 + $0x53] sm:$0xff]
        %v3850 = vld [vmem:[#allocation2 + $0x5b] sm:$0xff]
        %v3851 = vld [vmem:[#allocation2 + $0x63] sm:$0xff]
        %v3852 = vld [vmem:[#allocation2 + $0x6b] sm:$0xff]
        %v3853 = vld [vmem:[#allocation2 + $0x73] sm:$0xff]
        %v3854 = vld [vmem:[#allocation2 + $0x7b] sm:$0xff]
        %v3855 = vld [vmem:[#allocation2 + $0x83] sm:$0xff]
        %v3856 = vld [vmem:[#allocation2 + $0x8b] sm:$0xff]
        %v3857 = vld [vmem:[#allocation2 + $0x93] sm:$0xff]
        %v3858 = vld [vmem:[#allocation2 + $0x9b] sm:$0xff]
        %v3859 = vld [vmem:[#allocation2 + $0xa3] sm:$0xff]
        %v3860 = vld [vmem:[#allocation2 + $0xab] sm:$0xff]
        %v3861 = vld [vmem:[#allocation2 + $0xb3] sm:$0xff]
        %v3862 = vld [vmem:[#allocation2 + $0xbb] sm:$0xff]
        %v3863 = vld [vmem:[#allocation2 + $0xc3] sm:$0xff]
        %v3864 = vld [vmem:[#allocation2 + $0xcb] sm:$0xff]
        %v3865 = vld [vmem:[#allocation2 + $0xd3] sm:$0xff]
        %v3866 = vld [vmem:[#allocation2 + $0xdb] sm:$0xff]
        %v3867 = vld [vmem:[#allocation2 + $0xe3] sm:$0xff]
        %v3868 = vld [vmem:[#allocation2 + $0xeb] sm:$0xff]
        %v3869 = vld [vmem:[#allocation2 + $0xf3] sm:$0xff]
        %v3870 = vld [vmem:[#allocation2 + $0xfb] sm:$0xff]
        %v3871 = vld [vmem:[#allocation2 + $0x103] sm:$0xff]
        %v3872 = vld [vmem:[#allocation2 + $0x10b] sm:$0xff]
        %v3873 = vld [vmem:[#allocation2 + $0x113] sm:$0xff]
        %v3874 = vld [vmem:[#allocation2 + $0x11b] sm:$0xff]
        %v3875 = vld [vmem:[#allocation2 + $0x123] sm:$0xff]
        %v3876 = vld [vmem:[#allocation2 + $0x12b] sm:$0xff]
        %v3877 = vld [vmem:[#allocation2 + $0x133] sm:$0xff]
        %v3878 = vld [vmem:[#allocation2 + $0x13b] sm:$0xff]
        %v3879 = vld [vmem:[#allocation2 + $0x143] sm:$0xff]
        %s3880 = scalar_lea.vmem %s3, 32
        %v3881 = vld [vmem:[%s3880] sm:$0xf]
        %v3883 = vsel %vm550, %v3844, 0
        %v3886 = vsel %vm550, %v3845, 0
        %v3889 = vsel %vm550, %v3846, 0
        %v3892 = vsel %vm550, %v3847, 0
        %v3895 = vsel %vm550, %v3848, 0
        %v3898 = vsel %vm550, %v3849, 0
        %v3901 = vsel %vm550, %v3850, 0
        %v3904 = vsel %vm550, %v3851, 0
        %v3907 = vsel %vm550, %v3852, 0
        %v3910 = vsel %vm550, %v3853, 0
        %v3913 = vsel %vm550, %v3854, 0
        %v3916 = vsel %vm550, %v3855, 0
        %v3919 = vsel %vm550, %v3856, 0
        %v3922 = vsel %vm550, %v3857, 0
        %v3925 = vsel %vm550, %v3858, 0
        %v3928 = vsel %vm550, %v3859, 0
        %v3931 = vsel %vm550, %v3860, 0
        %v3934 = vsel %vm550, %v3861, 0
        %v3937 = vsel %vm550, %v3862, 0
        %v3940 = vsel %vm550, %v3863, 0
        %v3943 = vsel %vm550, %v3864, 0
        %v3946 = vsel %vm550, %v3865, 0
        %v3949 = vsel %vm550, %v3866, 0
        %v3952 = vsel %vm550, %v3867, 0
        %v3955 = vsel %vm550, %v3868, 0
        %v3958 = vsel %vm550, %v3869, 0
        %v3961 = vsel %vm550, %v3870, 0
        %v3964 = vsel %vm550, %v3871, 0
        %v3967 = vsel %vm550, %v3872, 0
        %v3970 = vsel %vm550, %v3873, 0
        %v3973 = vsel %vm550, %v3874, 0
        %v3976 = vsel %vm550, %v3875, 0
        %v3979 = vsel %vm550, %v3876, 0
        %v3982 = vsel %vm550, %v3877, 0
        %v3985 = vsel %vm550, %v3878, 0
        %v3988 = vsel %vm550, %v3879, 0
        %v3991 = vsel %vm659, %v3881, 0
        %3993 = vmatprep.subr.mxu0 0.0
        %3994 = vmatpush1.msra.mxu0 0.0
        %3995 = vmatprep.subr.mxu0 0.0
        %3996 = vmatpush1.msra.mxu0 0.0
        %3997 = vmatprep.subr.mxu0 0.0
        %3998 = vmatpush1.msra.mxu0 0.0
        %3999 = vmatprep.subr.mxu0 0.0
        %4000 = vmatpush1.msra.mxu0 0.0
        %4001 = vmatprep.subr.mxu0 0.0
        %4002 = vmatpush1.msra.mxu0 0.0
        %4003 = vmatprep.subr.mxu0 0.0
        %4004 = vmatpush1.msra.mxu0 0.0
        %4005 = vmatprep.subr.mxu0 0.0
        %4006 = vmatpush1.msra.mxu0 0.0
        %4007 = vmatprep.subr.mxu0 0.0
        %4008 = vmatpush1.msra.mxu0 0.0
        %4009 = vmatprep.subr.mxu0 0.0
        %4010 = vmatpush1.msra.mxu0 0.0
        %4011 = vmatprep.subr.mxu0 0.0
        %4012 = vmatpush1.msra.mxu0 0.0
        %4013 = vmatprep.subr.mxu0 0.0
        %4014 = vmatpush1.msra.mxu0 0.0
        %4015 = vmatprep.subr.mxu0 0.0
        %4016 = vmatpush1.msra.mxu0 0.0
        %4017 = vmatprep.subr.mxu0 0.0
        %4018 = vmatpush1.msra.mxu0 0.0
        %4019 = vmatprep.subr.mxu0 0.0
        %4020 = vmatpush1.msra.mxu0 0.0
        %4021 = vmatprep.subr.mxu0 0.0
        %4022 = vmatpush1.msra.mxu0 0.0
        %4023 = vmatprep.subr.mxu0 0.0
        %4024 = vmatpush1.msra.mxu0 %v3991
        %4025 = vmatprep.subr.mxu0 0.0
        %4026 = vmatpush2.msra.mxu0 0.0
        %4027 = vmatprep.subr.mxu0 0.0
        %4028 = vmatpush2.msra.mxu0 0.0
        %4029 = vmatprep.subr.mxu0 0.0
        %4030 = vmatpush2.msra.mxu0 0.0
        %4031 = vmatprep.subr.mxu0 0.0
        %4032 = vmatpush2.msra.mxu0 0.0
        %4033 = vmatprep.subr.mxu0 0.0
        %4034 = vmatpush2.msra.mxu0 0.0
        %4035 = vmatprep.subr.mxu0 0.0
        %4036 = vmatpush2.msra.mxu0 0.0
        %4037 = vmatprep.subr.mxu0 0.0
        %4038 = vmatpush2.msra.mxu0 0.0
        %4039 = vmatprep.subr.mxu0 0.0
        %4040 = vmatpush2.msra.mxu0 0.0
        %4041 = vmatprep.subr.mxu0 0.0
        %4042 = vmatpush2.msra.mxu0 0.0
        %4043 = vmatprep.subr.mxu0 0.0
        %4044 = vmatpush2.msra.mxu0 0.0
        %4045 = vmatprep.subr.mxu0 0.0
        %4046 = vmatpush2.msra.mxu0 0.0
        %4047 = vmatprep.subr.mxu0 0.0
        %4048 = vmatpush2.msra.mxu0 0.0
        %4049 = vmatprep.subr.mxu0 0.0
        %4050 = vmatpush2.msra.mxu0 0.0
        %4051 = vmatprep.subr.mxu0 0.0
        %4052 = vmatpush2.msra.mxu0 0.0
        %4053 = vmatprep.subr.mxu0 0.0
        %4054 = vmatpush2.msra.mxu0 0.0
        %4055 = vmatprep.subr.mxu0 0.0
        %4056 = vmatpush2.msra.mxu0 0.0
        %4057 = vmatprep.mubr.f32.mxu0 0.0
        %4058 = vmatmul.mubr.f32.gmra.mxu0 %v3883
        %v4059 = vpop.f32.mrf.mxu0
        %v4060 = vadd.f32 0.0, %v4059
        %v4061 = vpop.f32.mrf.mxu0
        %4062 = vmatprep.mubr.f32.mxu0 0.0
        %4063 = vmatmul.mubr.f32.gmra.mxu0 %v3886
        %v4064 = vpop.f32.mrf.mxu0
        %v4065 = vadd.f32 0.0, %v4064
        %v4066 = vpop.f32.mrf.mxu0
        %4067 = vmatprep.mubr.f32.mxu0 0.0
        %4068 = vmatmul.mubr.f32.gmra.mxu0 %v3889
        %v4069 = vpop.f32.mrf.mxu0
        %v4070 = vadd.f32 0.0, %v4069
        %v4071 = vpop.f32.mrf.mxu0
        %4072 = vmatprep.mubr.f32.mxu0 0.0
        %4073 = vmatmul.mubr.f32.gmra.mxu0 %v3892
        %v4074 = vpop.f32.mrf.mxu0
        %v4075 = vadd.f32 0.0, %v4074
        %v4076 = vpop.f32.mrf.mxu0
        %4077 = vmatprep.mubr.f32.mxu0 0.0
        %4078 = vmatmul.mubr.f32.gmra.mxu0 %v3895
        %v4079 = vpop.f32.mrf.mxu0
        %v4080 = vadd.f32 0.0, %v4079
        %v4081 = vpop.f32.mrf.mxu0
        %4082 = vmatprep.mubr.f32.mxu0 0.0
        %4083 = vmatmul.mubr.f32.gmra.mxu0 %v3898
        %v4084 = vpop.f32.mrf.mxu0
        %v4085 = vadd.f32 0.0, %v4084
        %v4086 = vpop.f32.mrf.mxu0
        %4087 = vmatprep.mubr.f32.mxu0 0.0
        %4088 = vmatmul.mubr.f32.gmra.mxu0 %v3901
        %v4089 = vpop.f32.mrf.mxu0
        %v4090 = vadd.f32 0.0, %v4089
        %v4091 = vpop.f32.mrf.mxu0
        %4092 = vmatprep.mubr.f32.mxu0 0.0
        %4093 = vmatmul.mubr.f32.gmra.mxu0 %v3904
        %v4094 = vpop.f32.mrf.mxu0
        %v4095 = vadd.f32 0.0, %v4094
        %v4096 = vpop.f32.mrf.mxu0
        %4097 = vmatprep.mubr.f32.mxu0 0.0
        %4098 = vmatmul.mubr.f32.gmra.mxu0 %v3907
        %v4099 = vpop.f32.mrf.mxu0
        %v4100 = vadd.f32 0.0, %v4099
        %v4101 = vpop.f32.mrf.mxu0
        %4102 = vmatprep.mubr.f32.mxu0 0.0
        %4103 = vmatmul.mubr.f32.gmra.mxu0 %v3910
        %v4104 = vpop.f32.mrf.mxu0
        %v4105 = vadd.f32 0.0, %v4104
        %v4106 = vpop.f32.mrf.mxu0
        %4107 = vmatprep.mubr.f32.mxu0 0.0
        %4108 = vmatmul.mubr.f32.gmra.mxu0 %v3913
        %v4109 = vpop.f32.mrf.mxu0
        %v4110 = vadd.f32 0.0, %v4109
        %v4111 = vpop.f32.mrf.mxu0
        %4112 = vmatprep.mubr.f32.mxu0 0.0
        %4113 = vmatmul.mubr.f32.gmra.mxu0 %v3916
        %v4114 = vpop.f32.mrf.mxu0
        %v4115 = vadd.f32 0.0, %v4114
        %v4116 = vpop.f32.mrf.mxu0
        %4117 = vmatprep.mubr.f32.mxu0 0.0
        %4118 = vmatmul.mubr.f32.gmra.mxu0 %v3919
        %v4119 = vpop.f32.mrf.mxu0
        %v4120 = vadd.f32 0.0, %v4119
        %v4121 = vpop.f32.mrf.mxu0
        %4122 = vmatprep.mubr.f32.mxu0 0.0
        %4123 = vmatmul.mubr.f32.gmra.mxu0 %v3922
        %v4124 = vpop.f32.mrf.mxu0
        %v4125 = vadd.f32 0.0, %v4124
        %v4126 = vpop.f32.mrf.mxu0
        %4127 = vmatprep.mubr.f32.mxu0 0.0
        %4128 = vmatmul.mubr.f32.gmra.mxu0 %v3925
        %v4129 = vpop.f32.mrf.mxu0
        %v4130 = vadd.f32 0.0, %v4129
        %v4131 = vpop.f32.mrf.mxu0
        %4132 = vmatprep.mubr.f32.mxu0 0.0
        %4133 = vmatmul.mubr.f32.gmra.mxu0 %v3928
        %v4134 = vpop.f32.mrf.mxu0
        %v4135 = vadd.f32 0.0, %v4134
        %v4136 = vpop.f32.mrf.mxu0
        %4137 = vmatprep.mubr.f32.mxu0 0.0
        %4138 = vmatmul.mubr.f32.gmra.mxu0 %v3931
        %v4139 = vpop.f32.mrf.mxu0
        %v4140 = vadd.f32 0.0, %v4139
        %v4141 = vpop.f32.mrf.mxu0
        %4142 = vmatprep.mubr.f32.mxu0 0.0
        %4143 = vmatmul.mubr.f32.gmra.mxu0 %v3934
        %v4144 = vpop.f32.mrf.mxu0
        %v4145 = vadd.f32 0.0, %v4144
        %v4146 = vpop.f32.mrf.mxu0
        %4147 = vmatprep.mubr.f32.mxu0 0.0
        %4148 = vmatmul.mubr.f32.gmra.mxu0 %v3937
        %v4149 = vpop.f32.mrf.mxu0
        %v4150 = vadd.f32 0.0, %v4149
        %v4151 = vpop.f32.mrf.mxu0
        %4152 = vmatprep.mubr.f32.mxu0 0.0
        %4153 = vmatmul.mubr.f32.gmra.mxu0 %v3940
        %v4154 = vpop.f32.mrf.mxu0
        %v4155 = vadd.f32 0.0, %v4154
        %v4156 = vpop.f32.mrf.mxu0
        %4157 = vmatprep.mubr.f32.mxu0 0.0
        %4158 = vmatmul.mubr.f32.gmra.mxu0 %v3943
        %v4159 = vpop.f32.mrf.mxu0
        %v4160 = vadd.f32 0.0, %v4159
        %v4161 = vpop.f32.mrf.mxu0
        %4162 = vmatprep.mubr.f32.mxu0 0.0
        %4163 = vmatmul.mubr.f32.gmra.mxu0 %v3946
        %v4164 = vpop.f32.mrf.mxu0
        %v4165 = vadd.f32 0.0, %v4164
        %v4166 = vpop.f32.mrf.mxu0
        %4167 = vmatprep.mubr.f32.mxu0 0.0
        %4168 = vmatmul.mubr.f32.gmra.mxu0 %v3949
        %v4169 = vpop.f32.mrf.mxu0
        %v4170 = vadd.f32 0.0, %v4169
        %v4171 = vpop.f32.mrf.mxu0
        %4172 = vmatprep.mubr.f32.mxu0 0.0
        %4173 = vmatmul.mubr.f32.gmra.mxu0 %v3952
        %v4174 = vpop.f32.mrf.mxu0
        %v4175 = vadd.f32 0.0, %v4174
        %v4176 = vpop.f32.mrf.mxu0
        %4177 = vmatprep.mubr.f32.mxu0 0.0
        %4178 = vmatmul.mubr.f32.gmra.mxu0 %v3955
        %v4179 = vpop.f32.mrf.mxu0
        %v4180 = vadd.f32 0.0, %v4179
        %v4181 = vpop.f32.mrf.mxu0
        %4182 = vmatprep.mubr.f32.mxu0 0.0
        %4183 = vmatmul.mubr.f32.gmra.mxu0 %v3958
        %v4184 = vpop.f32.mrf.mxu0
        %v4185 = vadd.f32 0.0, %v4184
        %v4186 = vpop.f32.mrf.mxu0
        %4187 = vmatprep.mubr.f32.mxu0 0.0
        %4188 = vmatmul.mubr.f32.gmra.mxu0 %v3961
        %v4189 = vpop.f32.mrf.mxu0
        %v4190 = vadd.f32 0.0, %v4189
        %v4191 = vpop.f32.mrf.mxu0
        %4192 = vmatprep.mubr.f32.mxu0 0.0
        %4193 = vmatmul.mubr.f32.gmra.mxu0 %v3964
        %v4194 = vpop.f32.mrf.mxu0
        %v4195 = vadd.f32 0.0, %v4194
        %v4196 = vpop.f32.mrf.mxu0
        %4197 = vmatprep.mubr.f32.mxu0 0.0
        %4198 = vmatmul.mubr.f32.gmra.mxu0 %v3967
        %v4199 = vpop.f32.mrf.mxu0
        %v4200 = vadd.f32 0.0, %v4199
        %v4201 = vpop.f32.mrf.mxu0
        %4202 = vmatprep.mubr.f32.mxu0 0.0
        %4203 = vmatmul.mubr.f32.gmra.mxu0 %v3970
        %v4204 = vpop.f32.mrf.mxu0
        %v4205 = vadd.f32 0.0, %v4204
        %v4206 = vpop.f32.mrf.mxu0
        %4207 = vmatprep.mubr.f32.mxu0 0.0
        %4208 = vmatmul.mubr.f32.gmra.mxu0 %v3973
        %v4209 = vpop.f32.mrf.mxu0
        %v4210 = vadd.f32 0.0, %v4209
        %v4211 = vpop.f32.mrf.mxu0
        %4212 = vmatprep.mubr.f32.mxu0 0.0
        %4213 = vmatmul.mubr.f32.gmra.mxu0 %v3976
        %v4214 = vpop.f32.mrf.mxu0
        %v4215 = vadd.f32 0.0, %v4214
        %v4216 = vpop.f32.mrf.mxu0
        %4217 = vmatprep.mubr.f32.mxu0 0.0
        %4218 = vmatmul.mubr.f32.gmra.mxu0 %v3979
        %v4219 = vpop.f32.mrf.mxu0
        %v4220 = vadd.f32 0.0, %v4219
        %v4221 = vpop.f32.mrf.mxu0
        %4222 = vmatprep.mubr.f32.mxu0 0.0
        %4223 = vmatmul.mubr.f32.gmra.mxu0 %v3982
        %v4224 = vpop.f32.mrf.mxu0
        %v4225 = vadd.f32 0.0, %v4224
        %v4226 = vpop.f32.mrf.mxu0
        %4227 = vmatprep.mubr.f32.mxu0 0.0
        %4228 = vmatmul.mubr.f32.gmra.mxu0 %v3985
        %v4229 = vpop.f32.mrf.mxu0
        %v4230 = vadd.f32 0.0, %v4229
        %v4231 = vpop.f32.mrf.mxu0
        %4232 = vmatprep.mubr.f32.mxu0 0.0
        %4233 = vmatmul.mubr.f32.gmra.mxu0 %v3988
        %v4234 = vpop.f32.mrf.mxu0
        %v4235 = vadd.f32 0.0, %v4234
        %v4236 = vpop.f32.mrf.mxu0
        %4237 = vdwg.mxu0
        %v4238 = vadd.f32 %v3808, %v4060
        %v4239 = vadd.f32 %v3809, %v4065
        %v4240 = vadd.f32 %v3810, %v4070
        %v4241 = vadd.f32 %v3811, %v4075
        %v4242 = vadd.f32 %v3812, %v4080
        %v4243 = vadd.f32 %v3813, %v4085
        %v4244 = vadd.f32 %v3814, %v4090
        %v4245 = vadd.f32 %v3815, %v4095
        %v4246 = vadd.f32 %v3816, %v4100
        %v4247 = vadd.f32 %v3817, %v4105
        %v4248 = vadd.f32 %v3818, %v4110
        %v4249 = vadd.f32 %v3819, %v4115
        %v4250 = vadd.f32 %v3820, %v4120
        %v4251 = vadd.f32 %v3821, %v4125
        %v4252 = vadd.f32 %v3822, %v4130
        %v4253 = vadd.f32 %v3823, %v4135
        %v4254 = vadd.f32 %v3824, %v4140
        %v4255 = vadd.f32 %v3825, %v4145
        %v4256 = vadd.f32 %v3826, %v4150
        %v4257 = vadd.f32 %v3827, %v4155
        %v4258 = vadd.f32 %v3828, %v4160
        %v4259 = vadd.f32 %v3829, %v4165
        %v4260 = vadd.f32 %v3830, %v4170
        %v4261 = vadd.f32 %v3831, %v4175
        %v4262 = vadd.f32 %v3832, %v4180
        %v4263 = vadd.f32 %v3833, %v4185
        %v4264 = vadd.f32 %v3834, %v4190
        %v4265 = vadd.f32 %v3835, %v4195
        %v4266 = vadd.f32 %v3836, %v4200
        %v4267 = vadd.f32 %v3837, %v4205
        %v4268 = vadd.f32 %v3838, %v4210
        %v4269 = vadd.f32 %v3839, %v4215
        %v4270 = vadd.f32 %v3840, %v4220
        %v4271 = vadd.f32 %v3841, %v4225
        %v4272 = vadd.f32 %v3842, %v4230
        %v4273 = vadd.f32 %v3843, %v4235
        %s4274 = scalar_lea.vmem %s2, %s24
        %v4275 = vld [vmem:[%s4274] sm:$0x1]
        %v4276 = vlaneseq
        %v4277 = vshrl.u32 %v4276, 7
        %v4278 = vsub.s32 0, %v4277
        %v4279 = vrot.slane %v4275, %v4278
        %v4280 = vadd.f32 %v4238, %v4279
        %v4281 = vadd.f32 %v4239, %v4279
        %v4282 = vadd.f32 %v4240, %v4279
        %v4283 = vadd.f32 %v4241, %v4279
        %v4284 = vadd.f32 %v4242, %v4279
        %v4285 = vadd.f32 %v4243, %v4279
        %v4286 = vadd.f32 %v4244, %v4279
        %v4287 = vadd.f32 %v4245, %v4279
        %v4288 = vadd.f32 %v4246, %v4279
        %v4289 = vadd.f32 %v4247, %v4279
        %v4290 = vadd.f32 %v4248, %v4279
        %v4291 = vadd.f32 %v4249, %v4279
        %v4292 = vadd.f32 %v4250, %v4279
        %v4293 = vadd.f32 %v4251, %v4279
        %v4294 = vadd.f32 %v4252, %v4279
        %v4295 = vadd.f32 %v4253, %v4279
        %v4296 = vadd.f32 %v4254, %v4279
        %v4297 = vadd.f32 %v4255, %v4279
        %v4298 = vadd.f32 %v4256, %v4279
        %v4299 = vadd.f32 %v4257, %v4279
        %v4300 = vadd.f32 %v4258, %v4279
        %v4301 = vadd.f32 %v4259, %v4279
        %v4302 = vadd.f32 %v4260, %v4279
        %v4303 = vadd.f32 %v4261, %v4279
        %v4304 = vadd.f32 %v4262, %v4279
        %v4305 = vadd.f32 %v4263, %v4279
        %v4306 = vadd.f32 %v4264, %v4279
        %v4307 = vadd.f32 %v4265, %v4279
        %v4308 = vadd.f32 %v4266, %v4279
        %v4309 = vadd.f32 %v4267, %v4279
        %v4310 = vadd.f32 %v4268, %v4279
        %v4311 = vadd.f32 %v4269, %v4279
        %v4312 = vadd.f32 %v4270, %v4279
        %v4313 = vadd.f32 %v4271, %v4279
        %v4314 = vadd.f32 %v4272, %v4279
        %v4315 = vadd.f32 %v4273, %v4279
        %v4316 = vsub.f32 0.0, %v4280
        %v4317 = vsub.f32 0.0, %v4281
        %v4318 = vsub.f32 0.0, %v4282
        %v4319 = vsub.f32 0.0, %v4283
        %v4320 = vsub.f32 0.0, %v4284
        %v4321 = vsub.f32 0.0, %v4285
        %v4322 = vsub.f32 0.0, %v4286
        %v4323 = vsub.f32 0.0, %v4287
        %v4324 = vsub.f32 0.0, %v4288
        %v4325 = vsub.f32 0.0, %v4289
        %v4326 = vsub.f32 0.0, %v4290
        %v4327 = vsub.f32 0.0, %v4291
        %v4328 = vsub.f32 0.0, %v4292
        %v4329 = vsub.f32 0.0, %v4293
        %v4330 = vsub.f32 0.0, %v4294
        %v4331 = vsub.f32 0.0, %v4295
        %v4332 = vsub.f32 0.0, %v4296
        %v4333 = vsub.f32 0.0, %v4297
        %v4334 = vsub.f32 0.0, %v4298
        %v4335 = vsub.f32 0.0, %v4299
        %v4336 = vsub.f32 0.0, %v4300
        %v4337 = vsub.f32 0.0, %v4301
        %v4338 = vsub.f32 0.0, %v4302
        %v4339 = vsub.f32 0.0, %v4303
        %v4340 = vsub.f32 0.0, %v4304
        %v4341 = vsub.f32 0.0, %v4305
        %v4342 = vsub.f32 0.0, %v4306
        %v4343 = vsub.f32 0.0, %v4307
        %v4344 = vsub.f32 0.0, %v4308
        %v4345 = vsub.f32 0.0, %v4309
        %v4346 = vsub.f32 0.0, %v4310
        %v4347 = vsub.f32 0.0, %v4311
        %v4348 = vsub.f32 0.0, %v4312
        %v4349 = vsub.f32 0.0, %v4313
        %v4350 = vsub.f32 0.0, %v4314
        %v4351 = vsub.f32 0.0, %v4315
        %v4352 = vmul.f32 %v4316, 1.442695
        %v4353 = vpow.pop %v4352
        %v4354 = vmul.f32 %v4317, 1.442695
        %v4355 = vpow.pop %v4354
        %v4356 = vmul.f32 %v4318, 1.442695
        %v4357 = vpow.pop %v4356
        %v4358 = vmul.f32 %v4319, 1.442695
        %v4359 = vpow.pop %v4358
        %v4360 = vmul.f32 %v4320, 1.442695
        %v4361 = vpow.pop %v4360
        %v4362 = vmul.f32 %v4321, 1.442695
        %v4363 = vpow.pop %v4362
        %v4364 = vmul.f32 %v4322, 1.442695
        %v4365 = vpow.pop %v4364
        %v4366 = vmul.f32 %v4323, 1.442695
        %v4367 = vpow.pop %v4366
        %v4368 = vmul.f32 %v4324, 1.442695
        %v4369 = vpow.pop %v4368
        %v4370 = vmul.f32 %v4325, 1.442695
        %v4371 = vpow.pop %v4370
        %v4372 = vmul.f32 %v4326, 1.442695
        %v4373 = vpow.pop %v4372
        %v4374 = vmul.f32 %v4327, 1.442695
        %v4375 = vpow.pop %v4374
        %v4376 = vmul.f32 %v4328, 1.442695
        %v4377 = vpow.pop %v4376
        %v4378 = vmul.f32 %v4329, 1.442695
        %v4379 = vpow.pop %v4378
        %v4380 = vmul.f32 %v4330, 1.442695
        %v4381 = vpow.pop %v4380
        %v4382 = vmul.f32 %v4331, 1.442695
        %v4383 = vpow.pop %v4382
        %v4384 = vmul.f32 %v4332, 1.442695
        %v4385 = vpow.pop %v4384
        %v4386 = vmul.f32 %v4333, 1.442695
        %v4387 = vpow.pop %v4386
        %v4388 = vmul.f32 %v4334, 1.442695
        %v4389 = vpow.pop %v4388
        %v4390 = vmul.f32 %v4335, 1.442695
        %v4391 = vpow.pop %v4390
        %v4392 = vmul.f32 %v4336, 1.442695
        %v4393 = vpow.pop %v4392
        %v4394 = vmul.f32 %v4337, 1.442695
        %v4395 = vpow.pop %v4394
        %v4396 = vmul.f32 %v4338, 1.442695
        %v4397 = vpow.pop %v4396
        %v4398 = vmul.f32 %v4339, 1.442695
        %v4399 = vpow.pop %v4398
        %v4400 = vmul.f32 %v4340, 1.442695
        %v4401 = vpow.pop %v4400
        %v4402 = vmul.f32 %v4341, 1.442695
        %v4403 = vpow.pop %v4402
        %v4404 = vmul.f32 %v4342, 1.442695
        %v4405 = vpow.pop %v4404
        %v4406 = vmul.f32 %v4343, 1.442695
        %v4407 = vpow.pop %v4406
        %v4408 = vmul.f32 %v4344, 1.442695
        %v4409 = vpow.pop %v4408
        %v4410 = vmul.f32 %v4345, 1.442695
        %v4411 = vpow.pop %v4410
        %v4412 = vmul.f32 %v4346, 1.442695
        %v4413 = vpow.pop %v4412
        %v4414 = vmul.f32 %v4347, 1.442695
        %v4415 = vpow.pop %v4414
        %v4416 = vmul.f32 %v4348, 1.442695
        %v4417 = vpow.pop %v4416
        %v4418 = vmul.f32 %v4349, 1.442695
        %v4419 = vpow.pop %v4418
        %v4420 = vmul.f32 %v4350, 1.442695
        %v4421 = vpow.pop %v4420
        %v4422 = vmul.f32 %v4351, 1.442695
        %v4423 = vpow.pop %v4422
        %v4424 = vadd.f32 %v4353, 1.0
        %v4425 = vadd.f32 %v4355, 1.0
        %v4426 = vadd.f32 %v4357, 1.0
        %v4427 = vadd.f32 %v4359, 1.0
        %v4428 = vadd.f32 %v4361, 1.0
        %v4429 = vadd.f32 %v4363, 1.0
        %v4430 = vadd.f32 %v4365, 1.0
        %v4431 = vadd.f32 %v4367, 1.0
        %v4432 = vadd.f32 %v4369, 1.0
        %v4433 = vadd.f32 %v4371, 1.0
        %v4434 = vadd.f32 %v4373, 1.0
        %v4435 = vadd.f32 %v4375, 1.0
        %v4436 = vadd.f32 %v4377, 1.0
        %v4437 = vadd.f32 %v4379, 1.0
        %v4438 = vadd.f32 %v4381, 1.0
        %v4439 = vadd.f32 %v4383, 1.0
        %v4440 = vadd.f32 %v4385, 1.0
        %v4441 = vadd.f32 %v4387, 1.0
        %v4442 = vadd.f32 %v4389, 1.0
        %v4443 = vadd.f32 %v4391, 1.0
        %v4444 = vadd.f32 %v4393, 1.0
        %v4445 = vadd.f32 %v4395, 1.0
        %v4446 = vadd.f32 %v4397, 1.0
        %v4447 = vadd.f32 %v4399, 1.0
        %v4448 = vadd.f32 %v4401, 1.0
        %v4449 = vadd.f32 %v4403, 1.0
        %v4450 = vadd.f32 %v4405, 1.0
        %v4451 = vadd.f32 %v4407, 1.0
        %v4452 = vadd.f32 %v4409, 1.0
        %v4453 = vadd.f32 %v4411, 1.0
        %v4454 = vadd.f32 %v4413, 1.0
        %v4455 = vadd.f32 %v4415, 1.0
        %v4456 = vadd.f32 %v4417, 1.0
        %v4457 = vadd.f32 %v4419, 1.0
        %v4458 = vadd.f32 %v4421, 1.0
        %v4459 = vadd.f32 %v4423, 1.0
        %v4460 = vrcp.pop %v4424
        %v4461 = vmul.f32 1.0, %v4460
        %v4462 = vrcp.pop %v4425
        %v4463 = vmul.f32 1.0, %v4462
        %v4464 = vrcp.pop %v4426
        %v4465 = vmul.f32 1.0, %v4464
        %v4466 = vrcp.pop %v4427
        %v4467 = vmul.f32 1.0, %v4466
        %v4468 = vrcp.pop %v4428
        %v4469 = vmul.f32 1.0, %v4468
        %v4470 = vrcp.pop %v4429
        %v4471 = vmul.f32 1.0, %v4470
        %v4472 = vrcp.pop %v4430
        %v4473 = vmul.f32 1.0, %v4472
        %v4474 = vrcp.pop %v4431
        %v4475 = vmul.f32 1.0, %v4474
        %v4476 = vrcp.pop %v4432
        %v4477 = vmul.f32 1.0, %v4476
        %v4478 = vrcp.pop %v4433
        %v4479 = vmul.f32 1.0, %v4478
        %v4480 = vrcp.pop %v4434
        %v4481 = vmul.f32 1.0, %v4480
        %v4482 = vrcp.pop %v4435
        %v4483 = vmul.f32 1.0, %v4482
        %v4484 = vrcp.pop %v4436
        %v4485 = vmul.f32 1.0, %v4484
        %v4486 = vrcp.pop %v4437
        %v4487 = vmul.f32 1.0, %v4486
        %v4488 = vrcp.pop %v4438
        %v4489 = vmul.f32 1.0, %v4488
        %v4490 = vrcp.pop %v4439
        %v4491 = vmul.f32 1.0, %v4490
        %v4492 = vrcp.pop %v4440
        %v4493 = vmul.f32 1.0, %v4492
        %v4494 = vrcp.pop %v4441
        %v4495 = vmul.f32 1.0, %v4494
        %v4496 = vrcp.pop %v4442
        %v4497 = vmul.f32 1.0, %v4496
        %v4498 = vrcp.pop %v4443
        %v4499 = vmul.f32 1.0, %v4498
        %v4500 = vrcp.pop %v4444
        %v4501 = vmul.f32 1.0, %v4500
        %v4502 = vrcp.pop %v4445
        %v4503 = vmul.f32 1.0, %v4502
        %v4504 = vrcp.pop %v4446
        %v4505 = vmul.f32 1.0, %v4504
        %v4506 = vrcp.pop %v4447
        %v4507 = vmul.f32 1.0, %v4506
        %v4508 = vrcp.pop %v4448
        %v4509 = vmul.f32 1.0, %v4508
        %v4510 = vrcp.pop %v4449
        %v4511 = vmul.f32 1.0, %v4510
        %v4512 = vrcp.pop %v4450
        %v4513 = vmul.f32 1.0, %v4512
        %v4514 = vrcp.pop %v4451
        %v4515 = vmul.f32 1.0, %v4514
        %v4516 = vrcp.pop %v4452
        %v4517 = vmul.f32 1.0, %v4516
        %v4518 = vrcp.pop %v4453
        %v4519 = vmul.f32 1.0, %v4518
        %v4520 = vrcp.pop %v4454
        %v4521 = vmul.f32 1.0, %v4520
        %v4522 = vrcp.pop %v4455
        %v4523 = vmul.f32 1.0, %v4522
        %v4524 = vrcp.pop %v4456
        %v4525 = vmul.f32 1.0, %v4524
        %v4526 = vrcp.pop %v4457
        %v4527 = vmul.f32 1.0, %v4526
        %v4528 = vrcp.pop %v4458
        %v4529 = vmul.f32 1.0, %v4528
        %v4530 = vrcp.pop %v4459
        %v4531 = vmul.f32 1.0, %v4530
        %v4532 = vmul.f32 %v4280, %v4461
        %v4533 = vmul.f32 %v4281, %v4463
        %v4534 = vmul.f32 %v4282, %v4465
        %v4535 = vmul.f32 %v4283, %v4467
        %v4536 = vmul.f32 %v4284, %v4469
        %v4537 = vmul.f32 %v4285, %v4471
        %v4538 = vmul.f32 %v4286, %v4473
        %v4539 = vmul.f32 %v4287, %v4475
        %v4540 = vmul.f32 %v4288, %v4477
        %v4541 = vmul.f32 %v4289, %v4479
        %v4542 = vmul.f32 %v4290, %v4481
        %v4543 = vmul.f32 %v4291, %v4483
        %v4544 = vmul.f32 %v4292, %v4485
        %v4545 = vmul.f32 %v4293, %v4487
        %v4546 = vmul.f32 %v4294, %v4489
        %v4547 = vmul.f32 %v4295, %v4491
        %v4548 = vmul.f32 %v4296, %v4493
        %v4549 = vmul.f32 %v4297, %v4495
        %v4550 = vmul.f32 %v4298, %v4497
        %v4551 = vmul.f32 %v4299, %v4499
        %v4552 = vmul.f32 %v4300, %v4501
        %v4553 = vmul.f32 %v4301, %v4503
        %v4554 = vmul.f32 %v4302, %v4505
        %v4555 = vmul.f32 %v4303, %v4507
        %v4556 = vmul.f32 %v4304, %v4509
        %v4557 = vmul.f32 %v4305, %v4511
        %v4558 = vmul.f32 %v4306, %v4513
        %v4559 = vmul.f32 %v4307, %v4515
        %v4560 = vmul.f32 %v4308, %v4517
        %v4561 = vmul.f32 %v4309, %v4519
        %v4562 = vmul.f32 %v4310, %v4521
        %v4563 = vmul.f32 %v4311, %v4523
        %v4564 = vmul.f32 %v4312, %v4525
        %v4565 = vmul.f32 %v4313, %v4527
        %v4566 = vmul.f32 %v4314, %v4529
        %v4567 = vmul.f32 %v4315, %v4531
        %4569 = vset.pattern.permute.xlu0 0
        %4570 = vperm.xlu0 %4569, %v439
        %v4571 = vpop.permute.xlu0 %4570
        %4574 = vset.pattern.permute.xlu0 0
        %4575 = vperm.xlu0 %4574, %v440
        %v4576 = vpop.permute.xlu0 %4575
        %4579 = vset.pattern.permute.xlu0 0
        %4580 = vperm.xlu0 %4579, %v441
        %v4581 = vpop.permute.xlu0 %4580
        %4584 = vset.pattern.permute.xlu0 0
        %4585 = vperm.xlu0 %4584, %v442
        %v4586 = vpop.permute.xlu0 %4585
        %4589 = vset.pattern.permute.xlu0 0
        %4590 = vperm.xlu0 %4589, %v443
        %v4591 = vpop.permute.xlu0 %4590
        %4594 = vset.pattern.permute.xlu0 0
        %4595 = vperm.xlu0 %4594, %v444
        %v4596 = vpop.permute.xlu0 %4595
        %4599 = vset.pattern.permute.xlu0 0
        %4600 = vperm.xlu0 %4599, %v445
        %v4601 = vpop.permute.xlu0 %4600
        %4604 = vset.pattern.permute.xlu0 0
        %4605 = vperm.xlu0 %4604, %v446
        %v4606 = vpop.permute.xlu0 %4605
        %4609 = vset.pattern.permute.xlu0 0
        %4610 = vperm.xlu0 %4609, %v447
        %v4611 = vpop.permute.xlu0 %4610
        %4614 = vset.pattern.permute.xlu0 0
        %4615 = vperm.xlu0 %4614, %v448
        %v4616 = vpop.permute.xlu0 %4615
        %4619 = vset.pattern.permute.xlu0 0
        %4620 = vperm.xlu0 %4619, %v449
        %v4621 = vpop.permute.xlu0 %4620
        %4624 = vset.pattern.permute.xlu0 0
        %4625 = vperm.xlu0 %4624, %v450
        %v4626 = vpop.permute.xlu0 %4625
        %4629 = vset.pattern.permute.xlu0 0
        %4630 = vperm.xlu0 %4629, %v451
        %v4631 = vpop.permute.xlu0 %4630
        %4634 = vset.pattern.permute.xlu0 0
        %4635 = vperm.xlu0 %4634, %v452
        %v4636 = vpop.permute.xlu0 %4635
        %4639 = vset.pattern.permute.xlu0 0
        %4640 = vperm.xlu0 %4639, %v453
        %v4641 = vpop.permute.xlu0 %4640
        %4644 = vset.pattern.permute.xlu0 0
        %4645 = vperm.xlu0 %4644, %v454
        %v4646 = vpop.permute.xlu0 %4645
        %4649 = vset.pattern.permute.xlu0 0
        %4650 = vperm.xlu0 %4649, %v455
        %v4651 = vpop.permute.xlu0 %4650
        %4654 = vset.pattern.permute.xlu0 0
        %4655 = vperm.xlu0 %4654, %v456
        %v4656 = vpop.permute.xlu0 %4655
        %4659 = vset.pattern.permute.xlu0 0
        %4660 = vperm.xlu0 %4659, %v457
        %v4661 = vpop.permute.xlu0 %4660
        %4664 = vset.pattern.permute.xlu0 0
        %4665 = vperm.xlu0 %4664, %v458
        %v4666 = vpop.permute.xlu0 %4665
        %4669 = vset.pattern.permute.xlu0 0
        %4670 = vperm.xlu0 %4669, %v459
        %v4671 = vpop.permute.xlu0 %4670
        %4674 = vset.pattern.permute.xlu0 0
        %4675 = vperm.xlu0 %4674, %v460
        %v4676 = vpop.permute.xlu0 %4675
        %4679 = vset.pattern.permute.xlu0 0
        %4680 = vperm.xlu0 %4679, %v461
        %v4681 = vpop.permute.xlu0 %4680
        %4684 = vset.pattern.permute.xlu0 0
        %4685 = vperm.xlu0 %4684, %v462
        %v4686 = vpop.permute.xlu0 %4685
        %4689 = vset.pattern.permute.xlu0 0
        %4690 = vperm.xlu0 %4689, %v463
        %v4691 = vpop.permute.xlu0 %4690
        %4694 = vset.pattern.permute.xlu0 0
        %4695 = vperm.xlu0 %4694, %v464
        %v4696 = vpop.permute.xlu0 %4695
        %4699 = vset.pattern.permute.xlu0 0
        %4700 = vperm.xlu0 %4699, %v465
        %v4701 = vpop.permute.xlu0 %4700
        %4704 = vset.pattern.permute.xlu0 0
        %4705 = vperm.xlu0 %4704, %v466
        %v4706 = vpop.permute.xlu0 %4705
        %4709 = vset.pattern.permute.xlu0 0
        %4710 = vperm.xlu0 %4709, %v467
        %v4711 = vpop.permute.xlu0 %4710
        %4714 = vset.pattern.permute.xlu0 0
        %4715 = vperm.xlu0 %4714, %v468
        %v4716 = vpop.permute.xlu0 %4715
        %4719 = vset.pattern.permute.xlu0 0
        %4720 = vperm.xlu0 %4719, %v469
        %v4721 = vpop.permute.xlu0 %4720
        %4724 = vset.pattern.permute.xlu0 0
        %4725 = vperm.xlu0 %4724, %v470
        %v4726 = vpop.permute.xlu0 %4725
        %4729 = vset.pattern.permute.xlu0 0
        %4730 = vperm.xlu0 %4729, %v471
        %v4731 = vpop.permute.xlu0 %4730
        %4734 = vset.pattern.permute.xlu0 0
        %4735 = vperm.xlu0 %4734, %v472
        %v4736 = vpop.permute.xlu0 %4735
        %4739 = vset.pattern.permute.xlu0 0
        %4740 = vperm.xlu0 %4739, %v473
        %v4741 = vpop.permute.xlu0 %4740
        %4744 = vset.pattern.permute.xlu0 0
        %4745 = vperm.xlu0 %4744, %v474
        %v4746 = vpop.permute.xlu0 %4745
        %v4748 = vmul.f32 %v4532, %v4571
        %v4749 = vmul.f32 %v4533, %v4576
        %v4750 = vmul.f32 %v4534, %v4581
        %v4751 = vmul.f32 %v4535, %v4586
        %v4752 = vmul.f32 %v4536, %v4591
        %v4753 = vmul.f32 %v4537, %v4596
        %v4754 = vmul.f32 %v4538, %v4601
        %v4755 = vmul.f32 %v4539, %v4606
        %v4756 = vmul.f32 %v4540, %v4611
        %v4757 = vmul.f32 %v4541, %v4616
        %v4758 = vmul.f32 %v4542, %v4621
        %v4759 = vmul.f32 %v4543, %v4626
        %v4760 = vmul.f32 %v4544, %v4631
        %v4761 = vmul.f32 %v4545, %v4636
        %v4762 = vmul.f32 %v4546, %v4641
        %v4763 = vmul.f32 %v4547, %v4646
        %v4764 = vmul.f32 %v4548, %v4651
        %v4765 = vmul.f32 %v4549, %v4656
        %v4766 = vmul.f32 %v4550, %v4661
        %v4767 = vmul.f32 %v4551, %v4666
        %v4768 = vmul.f32 %v4552, %v4671
        %v4769 = vmul.f32 %v4553, %v4676
        %v4770 = vmul.f32 %v4554, %v4681
        %v4771 = vmul.f32 %v4555, %v4686
        %v4772 = vmul.f32 %v4556, %v4691
        %v4773 = vmul.f32 %v4557, %v4696
        %v4774 = vmul.f32 %v4558, %v4701
        %v4775 = vmul.f32 %v4559, %v4706
        %v4776 = vmul.f32 %v4560, %v4711
        %v4777 = vmul.f32 %v4561, %v4716
        %v4778 = vmul.f32 %v4562, %v4721
        %v4779 = vmul.f32 %v4563, %v4726
        %v4780 = vmul.f32 %v4564, %v4731
        %v4781 = vmul.f32 %v4565, %v4736
        %v4782 = vmul.f32 %v4566, %v4741
        %v4783 = vmul.f32 %v4567, %v4746
        %vm4784 = vcmask 261120
        %4785 = vst.msk [vmem:[#allocation3 + $0x18] sm:$0xff] %vm4784, %v4748
        %4786 = vst.msk [vmem:[#allocation3 + $0x20] sm:$0xff] %vm4784, %v4749
        %4787 = vst.msk [vmem:[#allocation3 + $0x28] sm:$0xff] %vm4784, %v4750
        %4788 = vst.msk [vmem:[#allocation3 + $0x30] sm:$0xff] %vm4784, %v4751
        %4789 = vst.msk [vmem:[#allocation3 + $0x38] sm:$0xff] %vm4784, %v4752
        %4790 = vst.msk [vmem:[#allocation3 + $0x40] sm:$0xff] %vm4784, %v4753
        %4791 = vst.msk [vmem:[#allocation3 + $0x48] sm:$0xff] %vm4784, %v4754
        %4792 = vst.msk [vmem:[#allocation3 + $0x50] sm:$0xff] %vm4784, %v4755
        %4793 = vst.msk [vmem:[#allocation3 + $0x58] sm:$0xff] %vm4784, %v4756
        %4794 = vst.msk [vmem:[#allocation3 + $0x60] sm:$0xff] %vm4784, %v4757
        %4795 = vst.msk [vmem:[#allocation3 + $0x68] sm:$0xff] %vm4784, %v4758
        %4796 = vst.msk [vmem:[#allocation3 + $0x70] sm:$0xff] %vm4784, %v4759
        %4797 = vst.msk [vmem:[#allocation3 + $0x78] sm:$0xff] %vm4784, %v4760
        %4798 = vst.msk [vmem:[#allocation3 + $0x80] sm:$0xff] %vm4784, %v4761
        %4799 = vst.msk [vmem:[#allocation3 + $0x88] sm:$0xff] %vm4784, %v4762
        %4800 = vst.msk [vmem:[#allocation3 + $0x90] sm:$0xff] %vm4784, %v4763
        %4801 = vst.msk [vmem:[#allocation3 + $0x98] sm:$0xff] %vm4784, %v4764
        %4802 = vst.msk [vmem:[#allocation3 + $0xa0] sm:$0xff] %vm4784, %v4765
        %4803 = vst.msk [vmem:[#allocation3 + $0xa8] sm:$0xff] %vm4784, %v4766
        %4804 = vst.msk [vmem:[#allocation3 + $0xb0] sm:$0xff] %vm4784, %v4767
        %4805 = vst.msk [vmem:[#allocation3 + $0xb8] sm:$0xff] %vm4784, %v4768
        %4806 = vst.msk [vmem:[#allocation3 + $0xc0] sm:$0xff] %vm4784, %v4769
        %4807 = vst.msk [vmem:[#allocation3 + $0xc8] sm:$0xff] %vm4784, %v4770
        %4808 = vst.msk [vmem:[#allocation3 + $0xd0] sm:$0xff] %vm4784, %v4771
        %4809 = vst.msk [vmem:[#allocation3 + $0xd8] sm:$0xff] %vm4784, %v4772
        %4810 = vst.msk [vmem:[#allocation3 + $0xe0] sm:$0xff] %vm4784, %v4773
        %4811 = vst.msk [vmem:[#allocation3 + $0xe8] sm:$0xff] %vm4784, %v4774
        %4812 = vst.msk [vmem:[#allocation3 + $0xf0] sm:$0xff] %vm4784, %v4775
        %4813 = vst.msk [vmem:[#allocation3 + $0xf8] sm:$0xff] %vm4784, %v4776
        %4814 = vst.msk [vmem:[#allocation3 + $0x100] sm:$0xff] %vm4784, %v4777
        %4815 = vst.msk [vmem:[#allocation3 + $0x108] sm:$0xff] %vm4784, %v4778
        %4816 = vst.msk [vmem:[#allocation3 + $0x110] sm:$0xff] %vm4784, %v4779
        %4817 = vst.msk [vmem:[#allocation3 + $0x118] sm:$0xff] %vm4784, %v4780
        %4818 = vst.msk [vmem:[#allocation3 + $0x120] sm:$0xff] %vm4784, %v4781
        %4819 = vst.msk [vmem:[#allocation3 + $0x128] sm:$0xff] %vm4784, %v4782
        %4820 = vst.msk [vmem:[#allocation3 + $0x130] sm:$0xff] %vm4784, %v4783
        %v4821 = vld [vmem:[#allocation3 + $0x5] sm:$0xff]
        %v4822 = vld [vmem:[#allocation3 + $0xd] sm:$0xff]
        %v4823 = vld [vmem:[#allocation3 + $0x15] sm:$0xff]
        %v4824 = vld [vmem:[#allocation3 + $0x1d] sm:$0xff]
        %v4825 = vld [vmem:[#allocation3 + $0x25] sm:$0xff]
        %v4826 = vld [vmem:[#allocation3 + $0x2d] sm:$0xff]
        %v4827 = vld [vmem:[#allocation3 + $0x35] sm:$0xff]
        %v4828 = vld [vmem:[#allocation3 + $0x3d] sm:$0xff]
        %v4829 = vld [vmem:[#allocation3 + $0x45] sm:$0xff]
        %v4830 = vld [vmem:[#allocation3 + $0x4d] sm:$0xff]
        %v4831 = vld [vmem:[#allocation3 + $0x55] sm:$0xff]
        %v4832 = vld [vmem:[#allocation3 + $0x5d] sm:$0xff]
        %v4833 = vld [vmem:[#allocation3 + $0x65] sm:$0xff]
        %v4834 = vld [vmem:[#allocation3 + $0x6d] sm:$0xff]
        %v4835 = vld [vmem:[#allocation3 + $0x75] sm:$0xff]
        %v4836 = vld [vmem:[#allocation3 + $0x7d] sm:$0xff]
        %v4837 = vld [vmem:[#allocation3 + $0x85] sm:$0xff]
        %v4838 = vld [vmem:[#allocation3 + $0x8d] sm:$0xff]
        %v4839 = vld [vmem:[#allocation3 + $0x95] sm:$0xff]
        %v4840 = vld [vmem:[#allocation3 + $0x9d] sm:$0xff]
        %v4841 = vld [vmem:[#allocation3 + $0xa5] sm:$0xff]
        %v4842 = vld [vmem:[#allocation3 + $0xad] sm:$0xff]
        %v4843 = vld [vmem:[#allocation3 + $0xb5] sm:$0xff]
        %v4844 = vld [vmem:[#allocation3 + $0xbd] sm:$0xff]
        %v4845 = vld [vmem:[#allocation3 + $0xc5] sm:$0xff]
        %v4846 = vld [vmem:[#allocation3 + $0xcd] sm:$0xff]
        %v4847 = vld [vmem:[#allocation3 + $0xd5] sm:$0xff]
        %v4848 = vld [vmem:[#allocation3 + $0xdd] sm:$0xff]
        %v4849 = vld [vmem:[#allocation3 + $0xe5] sm:$0xff]
        %v4850 = vld [vmem:[#allocation3 + $0xed] sm:$0xff]
        %v4851 = vld [vmem:[#allocation3 + $0xf5] sm:$0xff]
        %v4852 = vld [vmem:[#allocation3 + $0xfd] sm:$0xff]
        %v4853 = vld [vmem:[#allocation3 + $0x105] sm:$0xff]
        %v4854 = vld [vmem:[#allocation3 + $0x10d] sm:$0xff]
        %v4855 = vld [vmem:[#allocation3 + $0x115] sm:$0xff]
        %v4856 = vld [vmem:[#allocation3 + $0x11d] sm:$0xff]
        %v4857 = vld [vmem:[%s4] sm:$0xff]
        %v4858 = vld [vmem:[%s4 + $0x8] sm:$0xff]
        %v4859 = vld [vmem:[%s4 + $0x10] sm:$0xff]
        %v4860 = vld [vmem:[%s4 + $0x18] sm:$0xff]
        %v4861 = vld [vmem:[#allocation3 + $0x6] sm:$0xff]
        %v4862 = vld [vmem:[#allocation3 + $0xe] sm:$0xff]
        %v4863 = vld [vmem:[#allocation3 + $0x16] sm:$0xff]
        %v4864 = vld [vmem:[#allocation3 + $0x1e] sm:$0xff]
        %v4865 = vld [vmem:[#allocation3 + $0x26] sm:$0xff]
        %v4866 = vld [vmem:[#allocation3 + $0x2e] sm:$0xff]
        %v4867 = vld [vmem:[#allocation3 + $0x36] sm:$0xff]
        %v4868 = vld [vmem:[#allocation3 + $0x3e] sm:$0xff]
        %v4869 = vld [vmem:[#allocation3 + $0x46] sm:$0xff]
        %v4870 = vld [vmem:[#allocation3 + $0x4e] sm:$0xff]
        %v4871 = vld [vmem:[#allocation3 + $0x56] sm:$0xff]
        %v4872 = vld [vmem:[#allocation3 + $0x5e] sm:$0xff]
        %v4873 = vld [vmem:[#allocation3 + $0x66] sm:$0xff]
        %v4874 = vld [vmem:[#allocation3 + $0x6e] sm:$0xff]
        %v4875 = vld [vmem:[#allocation3 + $0x76] sm:$0xff]
        %v4876 = vld [vmem:[#allocation3 + $0x7e] sm:$0xff]
        %v4877 = vld [vmem:[#allocation3 + $0x86] sm:$0xff]
        %v4878 = vld [vmem:[#allocation3 + $0x8e] sm:$0xff]
        %v4879 = vld [vmem:[#allocation3 + $0x96] sm:$0xff]
        %v4880 = vld [vmem:[#allocation3 + $0x9e] sm:$0xff]
        %v4881 = vld [vmem:[#allocation3 + $0xa6] sm:$0xff]
        %v4882 = vld [vmem:[#allocation3 + $0xae] sm:$0xff]
        %v4883 = vld [vmem:[#allocation3 + $0xb6] sm:$0xff]
        %v4884 = vld [vmem:[#allocation3 + $0xbe] sm:$0xff]
        %v4885 = vld [vmem:[#allocation3 + $0xc6] sm:$0xff]
        %v4886 = vld [vmem:[#allocation3 + $0xce] sm:$0xff]
        %v4887 = vld [vmem:[#allocation3 + $0xd6] sm:$0xff]
        %v4888 = vld [vmem:[#allocation3 + $0xde] sm:$0xff]
        %v4889 = vld [vmem:[#allocation3 + $0xe6] sm:$0xff]
        %v4890 = vld [vmem:[#allocation3 + $0xee] sm:$0xff]
        %v4891 = vld [vmem:[#allocation3 + $0xf6] sm:$0xff]
        %v4892 = vld [vmem:[#allocation3 + $0xfe] sm:$0xff]
        %v4893 = vld [vmem:[#allocation3 + $0x106] sm:$0xff]
        %v4894 = vld [vmem:[#allocation3 + $0x10e] sm:$0xff]
        %v4895 = vld [vmem:[#allocation3 + $0x116] sm:$0xff]
        %v4896 = vld [vmem:[#allocation3 + $0x11e] sm:$0xff]
        %s4897 = scalar_lea.vmem %s4, 32
        %v4898 = vld [vmem:[%s4897] sm:$0xff]
        %v4899 = vld [vmem:[%s4897 + $0x8] sm:$0xff]
        %v4900 = vld [vmem:[%s4897 + $0x10] sm:$0xff]
        %v4901 = vld [vmem:[%s4897 + $0x18] sm:$0xff]
        %v4903 = vsel %vm4784, %v4861, 0
        %v4906 = vsel %vm4784, %v4862, 0
        %v4909 = vsel %vm4784, %v4863, 0
        %v4912 = vsel %vm4784, %v4864, 0
        %v4915 = vsel %vm4784, %v4865, 0
        %v4918 = vsel %vm4784, %v4866, 0
        %v4921 = vsel %vm4784, %v4867, 0
        %v4924 = vsel %vm4784, %v4868, 0
        %v4927 = vsel %vm4784, %v4869, 0
        %v4930 = vsel %vm4784, %v4870, 0
        %v4933 = vsel %vm4784, %v4871, 0
        %v4936 = vsel %vm4784, %v4872, 0
        %v4939 = vsel %vm4784, %v4873, 0
        %v4942 = vsel %vm4784, %v4874, 0
        %v4945 = vsel %vm4784, %v4875, 0
        %v4948 = vsel %vm4784, %v4876, 0
        %v4951 = vsel %vm4784, %v4877, 0
        %v4954 = vsel %vm4784, %v4878, 0
        %v4957 = vsel %vm4784, %v4879, 0
        %v4960 = vsel %vm4784, %v4880, 0
        %v4963 = vsel %vm4784, %v4881, 0
        %v4966 = vsel %vm4784, %v4882, 0
        %v4969 = vsel %vm4784, %v4883, 0
        %v4972 = vsel %vm4784, %v4884, 0
        %v4975 = vsel %vm4784, %v4885, 0
        %v4978 = vsel %vm4784, %v4886, 0
        %v4981 = vsel %vm4784, %v4887, 0
        %v4984 = vsel %vm4784, %v4888, 0
        %v4987 = vsel %vm4784, %v4889, 0
        %v4990 = vsel %vm4784, %v4890, 0
        %v4993 = vsel %vm4784, %v4891, 0
        %v4996 = vsel %vm4784, %v4892, 0
        %v4999 = vsel %vm4784, %v4893, 0
        %v5002 = vsel %vm4784, %v4894, 0
        %v5005 = vsel %vm4784, %v4895, 0
        %v5008 = vsel %vm4784, %v4896, 0
        %5010 = vmatprep.subr.mxu0 0.0
        %5011 = vmatpush1.msra.mxu0 0.0
        %5012 = vmatprep.subr.mxu0 0.0
        %5013 = vmatpush1.msra.mxu0 0.0
        %5014 = vmatprep.subr.mxu0 0.0
        %5015 = vmatpush1.msra.mxu0 0.0
        %5016 = vmatprep.subr.mxu0 0.0
        %5017 = vmatpush1.msra.mxu0 0.0
        %5018 = vmatprep.subr.mxu0 0.0
        %5019 = vmatpush1.msra.mxu0 0.0
        %5020 = vmatprep.subr.mxu0 0.0
        %5021 = vmatpush1.msra.mxu0 0.0
        %5022 = vmatprep.subr.mxu0 0.0
        %5023 = vmatpush1.msra.mxu0 0.0
        %5024 = vmatprep.subr.mxu0 0.0
        %5025 = vmatpush1.msra.mxu0 0.0
        %5026 = vmatprep.subr.mxu0 0.0
        %5027 = vmatpush1.msra.mxu0 0.0
        %5028 = vmatprep.subr.mxu0 0.0
        %5029 = vmatpush1.msra.mxu0 0.0
        %5030 = vmatprep.subr.mxu0 0.0
        %5031 = vmatpush1.msra.mxu0 0.0
        %5032 = vmatprep.subr.mxu0 0.0
        %5033 = vmatpush1.msra.mxu0 0.0
        %5034 = vmatprep.subr.mxu0 0.0
        %5035 = vmatpush1.msra.mxu0 %v4901
        %5036 = vmatprep.subr.mxu0 0.0
        %5037 = vmatpush1.msra.mxu0 %v4900
        %5038 = vmatprep.subr.mxu0 0.0
        %5039 = vmatpush1.msra.mxu0 %v4899
        %5040 = vmatprep.subr.mxu0 0.0
        %5041 = vmatpush1.msra.mxu0 %v4898
        %5042 = vmatprep.subr.mxu0 0.0
        %5043 = vmatpush2.msra.mxu0 0.0
        %5044 = vmatprep.subr.mxu0 0.0
        %5045 = vmatpush2.msra.mxu0 0.0
        %5046 = vmatprep.subr.mxu0 0.0
        %5047 = vmatpush2.msra.mxu0 0.0
        %5048 = vmatprep.subr.mxu0 0.0
        %5049 = vmatpush2.msra.mxu0 0.0
        %5050 = vmatprep.subr.mxu0 0.0
        %5051 = vmatpush2.msra.mxu0 0.0
        %5052 = vmatprep.subr.mxu0 0.0
        %5053 = vmatpush2.msra.mxu0 0.0
        %5054 = vmatprep.subr.mxu0 0.0
        %5055 = vmatpush2.msra.mxu0 0.0
        %5056 = vmatprep.subr.mxu0 0.0
        %5057 = vmatpush2.msra.mxu0 0.0
        %5058 = vmatprep.subr.mxu0 0.0
        %5059 = vmatpush2.msra.mxu0 0.0
        %5060 = vmatprep.subr.mxu0 0.0
        %5061 = vmatpush2.msra.mxu0 0.0
        %5062 = vmatprep.subr.mxu0 0.0
        %5063 = vmatpush2.msra.mxu0 0.0
        %5064 = vmatprep.subr.mxu0 0.0
        %5065 = vmatpush2.msra.mxu0 0.0
        %5066 = vmatprep.subr.mxu0 0.0
        %5067 = vmatpush2.msra.mxu0 0.0
        %5068 = vmatprep.subr.mxu0 0.0
        %5069 = vmatpush2.msra.mxu0 0.0
        %5070 = vmatprep.subr.mxu0 0.0
        %5071 = vmatpush2.msra.mxu0 0.0
        %5072 = vmatprep.subr.mxu0 0.0
        %5073 = vmatpush2.msra.mxu0 0.0
        %5074 = vmatprep.mubr.f32.mxu0 0.0
        %5075 = vmatmul.mubr.f32.gmra.mxu0 %v4903
        %v5076 = vpop.f32.mrf.mxu0
        %v5077 = vadd.f32 0.0, %v5076
        %v5078 = vpop.f32.mrf.mxu0
        %5079 = vmatprep.mubr.f32.mxu0 0.0
        %5080 = vmatmul.mubr.f32.gmra.mxu0 %v4906
        %v5081 = vpop.f32.mrf.mxu0
        %v5082 = vadd.f32 0.0, %v5081
        %v5083 = vpop.f32.mrf.mxu0
        %5084 = vmatprep.mubr.f32.mxu0 0.0
        %5085 = vmatmul.mubr.f32.gmra.mxu0 %v4909
        %v5086 = vpop.f32.mrf.mxu0
        %v5087 = vadd.f32 0.0, %v5086
        %v5088 = vpop.f32.mrf.mxu0
        %5089 = vmatprep.mubr.f32.mxu0 0.0
        %5090 = vmatmul.mubr.f32.gmra.mxu0 %v4912
        %v5091 = vpop.f32.mrf.mxu0
        %v5092 = vadd.f32 0.0, %v5091
        %v5093 = vpop.f32.mrf.mxu0
        %5094 = vmatprep.mubr.f32.mxu0 0.0
        %5095 = vmatmul.mubr.f32.gmra.mxu0 %v4915
        %v5096 = vpop.f32.mrf.mxu0
        %v5097 = vadd.f32 0.0, %v5096
        %v5098 = vpop.f32.mrf.mxu0
        %5099 = vmatprep.mubr.f32.mxu0 0.0
        %5100 = vmatmul.mubr.f32.gmra.mxu0 %v4918
        %v5101 = vpop.f32.mrf.mxu0
        %v5102 = vadd.f32 0.0, %v5101
        %v5103 = vpop.f32.mrf.mxu0
        %5104 = vmatprep.mubr.f32.mxu0 0.0
        %5105 = vmatmul.mubr.f32.gmra.mxu0 %v4921
        %v5106 = vpop.f32.mrf.mxu0
        %v5107 = vadd.f32 0.0, %v5106
        %v5108 = vpop.f32.mrf.mxu0
        %5109 = vmatprep.mubr.f32.mxu0 0.0
        %5110 = vmatmul.mubr.f32.gmra.mxu0 %v4924
        %v5111 = vpop.f32.mrf.mxu0
        %v5112 = vadd.f32 0.0, %v5111
        %v5113 = vpop.f32.mrf.mxu0
        %5114 = vmatprep.mubr.f32.mxu0 0.0
        %5115 = vmatmul.mubr.f32.gmra.mxu0 %v4927
        %v5116 = vpop.f32.mrf.mxu0
        %v5117 = vadd.f32 0.0, %v5116
        %v5118 = vpop.f32.mrf.mxu0
        %5119 = vmatprep.mubr.f32.mxu0 0.0
        %5120 = vmatmul.mubr.f32.gmra.mxu0 %v4930
        %v5121 = vpop.f32.mrf.mxu0
        %v5122 = vadd.f32 0.0, %v5121
        %v5123 = vpop.f32.mrf.mxu0
        %5124 = vmatprep.mubr.f32.mxu0 0.0
        %5125 = vmatmul.mubr.f32.gmra.mxu0 %v4933
        %v5126 = vpop.f32.mrf.mxu0
        %v5127 = vadd.f32 0.0, %v5126
        %v5128 = vpop.f32.mrf.mxu0
        %5129 = vmatprep.mubr.f32.mxu0 0.0
        %5130 = vmatmul.mubr.f32.gmra.mxu0 %v4936
        %v5131 = vpop.f32.mrf.mxu0
        %v5132 = vadd.f32 0.0, %v5131
        %v5133 = vpop.f32.mrf.mxu0
        %5134 = vmatprep.mubr.f32.mxu0 0.0
        %5135 = vmatmul.mubr.f32.gmra.mxu0 %v4939
        %v5136 = vpop.f32.mrf.mxu0
        %v5137 = vadd.f32 0.0, %v5136
        %v5138 = vpop.f32.mrf.mxu0
        %5139 = vmatprep.mubr.f32.mxu0 0.0
        %5140 = vmatmul.mubr.f32.gmra.mxu0 %v4942
        %v5141 = vpop.f32.mrf.mxu0
        %v5142 = vadd.f32 0.0, %v5141
        %v5143 = vpop.f32.mrf.mxu0
        %5144 = vmatprep.mubr.f32.mxu0 0.0
        %5145 = vmatmul.mubr.f32.gmra.mxu0 %v4945
        %v5146 = vpop.f32.mrf.mxu0
        %v5147 = vadd.f32 0.0, %v5146
        %v5148 = vpop.f32.mrf.mxu0
        %5149 = vmatprep.mubr.f32.mxu0 0.0
        %5150 = vmatmul.mubr.f32.gmra.mxu0 %v4948
        %v5151 = vpop.f32.mrf.mxu0
        %v5152 = vadd.f32 0.0, %v5151
        %v5153 = vpop.f32.mrf.mxu0
        %5154 = vmatprep.mubr.f32.mxu0 0.0
        %5155 = vmatmul.mubr.f32.gmra.mxu0 %v4951
        %v5156 = vpop.f32.mrf.mxu0
        %v5157 = vadd.f32 0.0, %v5156
        %v5158 = vpop.f32.mrf.mxu0
        %5159 = vmatprep.mubr.f32.mxu0 0.0
        %5160 = vmatmul.mubr.f32.gmra.mxu0 %v4954
        %v5161 = vpop.f32.mrf.mxu0
        %v5162 = vadd.f32 0.0, %v5161
        %v5163 = vpop.f32.mrf.mxu0
        %5164 = vmatprep.mubr.f32.mxu0 0.0
        %5165 = vmatmul.mubr.f32.gmra.mxu0 %v4957
        %v5166 = vpop.f32.mrf.mxu0
        %v5167 = vadd.f32 0.0, %v5166
        %v5168 = vpop.f32.mrf.mxu0
        %5169 = vmatprep.mubr.f32.mxu0 0.0
        %5170 = vmatmul.mubr.f32.gmra.mxu0 %v4960
        %v5171 = vpop.f32.mrf.mxu0
        %v5172 = vadd.f32 0.0, %v5171
        %v5173 = vpop.f32.mrf.mxu0
        %5174 = vmatprep.mubr.f32.mxu0 0.0
        %5175 = vmatmul.mubr.f32.gmra.mxu0 %v4963
        %v5176 = vpop.f32.mrf.mxu0
        %v5177 = vadd.f32 0.0, %v5176
        %v5178 = vpop.f32.mrf.mxu0
        %5179 = vmatprep.mubr.f32.mxu0 0.0
        %5180 = vmatmul.mubr.f32.gmra.mxu0 %v4966
        %v5181 = vpop.f32.mrf.mxu0
        %v5182 = vadd.f32 0.0, %v5181
        %v5183 = vpop.f32.mrf.mxu0
        %5184 = vmatprep.mubr.f32.mxu0 0.0
        %5185 = vmatmul.mubr.f32.gmra.mxu0 %v4969
        %v5186 = vpop.f32.mrf.mxu0
        %v5187 = vadd.f32 0.0, %v5186
        %v5188 = vpop.f32.mrf.mxu0
        %5189 = vmatprep.mubr.f32.mxu0 0.0
        %5190 = vmatmul.mubr.f32.gmra.mxu0 %v4972
        %v5191 = vpop.f32.mrf.mxu0
        %v5192 = vadd.f32 0.0, %v5191
        %v5193 = vpop.f32.mrf.mxu0
        %5194 = vmatprep.mubr.f32.mxu0 0.0
        %5195 = vmatmul.mubr.f32.gmra.mxu0 %v4975
        %v5196 = vpop.f32.mrf.mxu0
        %v5197 = vadd.f32 0.0, %v5196
        %v5198 = vpop.f32.mrf.mxu0
        %5199 = vmatprep.mubr.f32.mxu0 0.0
        %5200 = vmatmul.mubr.f32.gmra.mxu0 %v4978
        %v5201 = vpop.f32.mrf.mxu0
        %v5202 = vadd.f32 0.0, %v5201
        %v5203 = vpop.f32.mrf.mxu0
        %5204 = vmatprep.mubr.f32.mxu0 0.0
        %5205 = vmatmul.mubr.f32.gmra.mxu0 %v4981
        %v5206 = vpop.f32.mrf.mxu0
        %v5207 = vadd.f32 0.0, %v5206
        %v5208 = vpop.f32.mrf.mxu0
        %5209 = vmatprep.mubr.f32.mxu0 0.0
        %5210 = vmatmul.mubr.f32.gmra.mxu0 %v4984
        %v5211 = vpop.f32.mrf.mxu0
        %v5212 = vadd.f32 0.0, %v5211
        %v5213 = vpop.f32.mrf.mxu0
        %5214 = vmatprep.mubr.f32.mxu0 0.0
        %5215 = vmatmul.mubr.f32.gmra.mxu0 %v4987
        %v5216 = vpop.f32.mrf.mxu0
        %v5217 = vadd.f32 0.0, %v5216
        %v5218 = vpop.f32.mrf.mxu0
        %5219 = vmatprep.mubr.f32.mxu0 0.0
        %5220 = vmatmul.mubr.f32.gmra.mxu0 %v4990
        %v5221 = vpop.f32.mrf.mxu0
        %v5222 = vadd.f32 0.0, %v5221
        %v5223 = vpop.f32.mrf.mxu0
        %5224 = vmatprep.mubr.f32.mxu0 0.0
        %5225 = vmatmul.mubr.f32.gmra.mxu0 %v4993
        %v5226 = vpop.f32.mrf.mxu0
        %v5227 = vadd.f32 0.0, %v5226
        %v5228 = vpop.f32.mrf.mxu0
        %5229 = vmatprep.mubr.f32.mxu0 0.0
        %5230 = vmatmul.mubr.f32.gmra.mxu0 %v4996
        %v5231 = vpop.f32.mrf.mxu0
        %v5232 = vadd.f32 0.0, %v5231
        %v5233 = vpop.f32.mrf.mxu0
        %5234 = vmatprep.mubr.f32.mxu0 0.0
        %5235 = vmatmul.mubr.f32.gmra.mxu0 %v4999
        %v5236 = vpop.f32.mrf.mxu0
        %v5237 = vadd.f32 0.0, %v5236
        %v5238 = vpop.f32.mrf.mxu0
        %5239 = vmatprep.mubr.f32.mxu0 0.0
        %5240 = vmatmul.mubr.f32.gmra.mxu0 %v5002
        %v5241 = vpop.f32.mrf.mxu0
        %v5242 = vadd.f32 0.0, %v5241
        %v5243 = vpop.f32.mrf.mxu0
        %5244 = vmatprep.mubr.f32.mxu0 0.0
        %5245 = vmatmul.mubr.f32.gmra.mxu0 %v5005
        %v5246 = vpop.f32.mrf.mxu0
        %v5247 = vadd.f32 0.0, %v5246
        %v5248 = vpop.f32.mrf.mxu0
        %5249 = vmatprep.mubr.f32.mxu0 0.0
        %5250 = vmatmul.mubr.f32.gmra.mxu0 %v5008
        %v5251 = vpop.f32.mrf.mxu0
        %v5252 = vadd.f32 0.0, %v5251
        %v5253 = vpop.f32.mrf.mxu0
        %5254 = vdwg.mxu0
        %v5256 = vsel %vm4784, %v4821, 0
        %v5259 = vsel %vm4784, %v4822, 0
        %v5262 = vsel %vm4784, %v4823, 0
        %v5265 = vsel %vm4784, %v4824, 0
        %v5268 = vsel %vm4784, %v4825, 0
        %v5271 = vsel %vm4784, %v4826, 0
        %v5274 = vsel %vm4784, %v4827, 0
        %v5277 = vsel %vm4784, %v4828, 0
        %v5280 = vsel %vm4784, %v4829, 0
        %v5283 = vsel %vm4784, %v4830, 0
        %v5286 = vsel %vm4784, %v4831, 0
        %v5289 = vsel %vm4784, %v4832, 0
        %v5292 = vsel %vm4784, %v4833, 0
        %v5295 = vsel %vm4784, %v4834, 0
        %v5298 = vsel %vm4784, %v4835, 0
        %v5301 = vsel %vm4784, %v4836, 0
        %v5304 = vsel %vm4784, %v4837, 0
        %v5307 = vsel %vm4784, %v4838, 0
        %v5310 = vsel %vm4784, %v4839, 0
        %v5313 = vsel %vm4784, %v4840, 0
        %v5316 = vsel %vm4784, %v4841, 0
        %v5319 = vsel %vm4784, %v4842, 0
        %v5322 = vsel %vm4784, %v4843, 0
        %v5325 = vsel %vm4784, %v4844, 0
        %v5328 = vsel %vm4784, %v4845, 0
        %v5331 = vsel %vm4784, %v4846, 0
        %v5334 = vsel %vm4784, %v4847, 0
        %v5337 = vsel %vm4784, %v4848, 0
        %v5340 = vsel %vm4784, %v4849, 0
        %v5343 = vsel %vm4784, %v4850, 0
        %v5346 = vsel %vm4784, %v4851, 0
        %v5349 = vsel %vm4784, %v4852, 0
        %v5352 = vsel %vm4784, %v4853, 0
        %v5355 = vsel %vm4784, %v4854, 0
        %v5358 = vsel %vm4784, %v4855, 0
        %v5361 = vsel %vm4784, %v4856, 0
        %5363 = vmatprep.subr.mxu0 0.0
        %5364 = vmatpush1.msra.mxu0 0.0
        %5365 = vmatprep.subr.mxu0 0.0
        %5366 = vmatpush1.msra.mxu0 0.0
        %5367 = vmatprep.subr.mxu0 0.0
        %5368 = vmatpush1.msra.mxu0 0.0
        %5369 = vmatprep.subr.mxu0 0.0
        %5370 = vmatpush1.msra.mxu0 0.0
        %5371 = vmatprep.subr.mxu0 0.0
        %5372 = vmatpush1.msra.mxu0 0.0
        %5373 = vmatprep.subr.mxu0 0.0
        %5374 = vmatpush1.msra.mxu0 0.0
        %5375 = vmatprep.subr.mxu0 0.0
        %5376 = vmatpush1.msra.mxu0 0.0
        %5377 = vmatprep.subr.mxu0 0.0
        %5378 = vmatpush1.msra.mxu0 0.0
        %5379 = vmatprep.subr.mxu0 0.0
        %5380 = vmatpush1.msra.mxu0 0.0
        %5381 = vmatprep.subr.mxu0 0.0
        %5382 = vmatpush1.msra.mxu0 0.0
        %5383 = vmatprep.subr.mxu0 0.0
        %5384 = vmatpush1.msra.mxu0 0.0
        %5385 = vmatprep.subr.mxu0 0.0
        %5386 = vmatpush1.msra.mxu0 0.0
        %5387 = vmatprep.subr.mxu0 0.0
        %5388 = vmatpush1.msra.mxu0 %v4860
        %5389 = vmatprep.subr.mxu0 0.0
        %5390 = vmatpush1.msra.mxu0 %v4859
        %5391 = vmatprep.subr.mxu0 0.0
        %5392 = vmatpush1.msra.mxu0 %v4858
        %5393 = vmatprep.subr.mxu0 0.0
        %5394 = vmatpush1.msra.mxu0 %v4857
        %5395 = vmatprep.subr.mxu0 0.0
        %5396 = vmatpush2.msra.mxu0 0.0
        %5397 = vmatprep.subr.mxu0 0.0
        %5398 = vmatpush2.msra.mxu0 0.0
        %5399 = vmatprep.subr.mxu0 0.0
        %5400 = vmatpush2.msra.mxu0 0.0
        %5401 = vmatprep.subr.mxu0 0.0
        %5402 = vmatpush2.msra.mxu0 0.0
        %5403 = vmatprep.subr.mxu0 0.0
        %5404 = vmatpush2.msra.mxu0 0.0
        %5405 = vmatprep.subr.mxu0 0.0
        %5406 = vmatpush2.msra.mxu0 0.0
        %5407 = vmatprep.subr.mxu0 0.0
        %5408 = vmatpush2.msra.mxu0 0.0
        %5409 = vmatprep.subr.mxu0 0.0
        %5410 = vmatpush2.msra.mxu0 0.0
        %5411 = vmatprep.subr.mxu0 0.0
        %5412 = vmatpush2.msra.mxu0 0.0
        %5413 = vmatprep.subr.mxu0 0.0
        %5414 = vmatpush2.msra.mxu0 0.0
        %5415 = vmatprep.subr.mxu0 0.0
        %5416 = vmatpush2.msra.mxu0 0.0
        %5417 = vmatprep.subr.mxu0 0.0
        %5418 = vmatpush2.msra.mxu0 0.0
        %5419 = vmatprep.subr.mxu0 0.0
        %5420 = vmatpush2.msra.mxu0 0.0
        %5421 = vmatprep.subr.mxu0 0.0
        %5422 = vmatpush2.msra.mxu0 0.0
        %5423 = vmatprep.subr.mxu0 0.0
        %5424 = vmatpush2.msra.mxu0 0.0
        %5425 = vmatprep.subr.mxu0 0.0
        %5426 = vmatpush2.msra.mxu0 0.0
        %5427 = vmatprep.mubr.f32.mxu0 0.0
        %5428 = vmatmul.mubr.f32.gmra.mxu0 %v5256
        %v5429 = vpop.f32.mrf.mxu0
        %v5430 = vadd.f32 %v5077, %v5429
        %v5431 = vpop.f32.mrf.mxu0
        %5432 = vmatprep.mubr.f32.mxu0 0.0
        %5433 = vmatmul.mubr.f32.gmra.mxu0 %v5259
        %v5434 = vpop.f32.mrf.mxu0
        %v5435 = vadd.f32 %v5082, %v5434
        %v5436 = vpop.f32.mrf.mxu0
        %5437 = vmatprep.mubr.f32.mxu0 0.0
        %5438 = vmatmul.mubr.f32.gmra.mxu0 %v5262
        %v5439 = vpop.f32.mrf.mxu0
        %v5440 = vadd.f32 %v5087, %v5439
        %v5441 = vpop.f32.mrf.mxu0
        %5442 = vmatprep.mubr.f32.mxu0 0.0
        %5443 = vmatmul.mubr.f32.gmra.mxu0 %v5265
        %v5444 = vpop.f32.mrf.mxu0
        %v5445 = vadd.f32 %v5092, %v5444
        %v5446 = vpop.f32.mrf.mxu0
        %5447 = vmatprep.mubr.f32.mxu0 0.0
        %5448 = vmatmul.mubr.f32.gmra.mxu0 %v5268
        %v5449 = vpop.f32.mrf.mxu0
        %v5450 = vadd.f32 %v5097, %v5449
        %v5451 = vpop.f32.mrf.mxu0
        %5452 = vmatprep.mubr.f32.mxu0 0.0
        %5453 = vmatmul.mubr.f32.gmra.mxu0 %v5271
        %v5454 = vpop.f32.mrf.mxu0
        %v5455 = vadd.f32 %v5102, %v5454
        %v5456 = vpop.f32.mrf.mxu0
        %5457 = vmatprep.mubr.f32.mxu0 0.0
        %5458 = vmatmul.mubr.f32.gmra.mxu0 %v5274
        %v5459 = vpop.f32.mrf.mxu0
        %v5460 = vadd.f32 %v5107, %v5459
        %v5461 = vpop.f32.mrf.mxu0
        %5462 = vmatprep.mubr.f32.mxu0 0.0
        %5463 = vmatmul.mubr.f32.gmra.mxu0 %v5277
        %v5464 = vpop.f32.mrf.mxu0
        %v5465 = vadd.f32 %v5112, %v5464
        %v5466 = vpop.f32.mrf.mxu0
        %5467 = vmatprep.mubr.f32.mxu0 0.0
        %5468 = vmatmul.mubr.f32.gmra.mxu0 %v5280
        %v5469 = vpop.f32.mrf.mxu0
        %v5470 = vadd.f32 %v5117, %v5469
        %v5471 = vpop.f32.mrf.mxu0
        %5472 = vmatprep.mubr.f32.mxu0 0.0
        %5473 = vmatmul.mubr.f32.gmra.mxu0 %v5283
        %v5474 = vpop.f32.mrf.mxu0
        %v5475 = vadd.f32 %v5122, %v5474
        %v5476 = vpop.f32.mrf.mxu0
        %5477 = vmatprep.mubr.f32.mxu0 0.0
        %5478 = vmatmul.mubr.f32.gmra.mxu0 %v5286
        %v5479 = vpop.f32.mrf.mxu0
        %v5480 = vadd.f32 %v5127, %v5479
        %v5481 = vpop.f32.mrf.mxu0
        %5482 = vmatprep.mubr.f32.mxu0 0.0
        %5483 = vmatmul.mubr.f32.gmra.mxu0 %v5289
        %v5484 = vpop.f32.mrf.mxu0
        %v5485 = vadd.f32 %v5132, %v5484
        %v5486 = vpop.f32.mrf.mxu0
        %5487 = vmatprep.mubr.f32.mxu0 0.0
        %5488 = vmatmul.mubr.f32.gmra.mxu0 %v5292
        %v5489 = vpop.f32.mrf.mxu0
        %v5490 = vadd.f32 %v5137, %v5489
        %v5491 = vpop.f32.mrf.mxu0
        %5492 = vmatprep.mubr.f32.mxu0 0.0
        %5493 = vmatmul.mubr.f32.gmra.mxu0 %v5295
        %v5494 = vpop.f32.mrf.mxu0
        %v5495 = vadd.f32 %v5142, %v5494
        %v5496 = vpop.f32.mrf.mxu0
        %5497 = vmatprep.mubr.f32.mxu0 0.0
        %5498 = vmatmul.mubr.f32.gmra.mxu0 %v5298
        %v5499 = vpop.f32.mrf.mxu0
        %v5500 = vadd.f32 %v5147, %v5499
        %v5501 = vpop.f32.mrf.mxu0
        %5502 = vmatprep.mubr.f32.mxu0 0.0
        %5503 = vmatmul.mubr.f32.gmra.mxu0 %v5301
        %v5504 = vpop.f32.mrf.mxu0
        %v5505 = vadd.f32 %v5152, %v5504
        %v5506 = vpop.f32.mrf.mxu0
        %5507 = vmatprep.mubr.f32.mxu0 0.0
        %5508 = vmatmul.mubr.f32.gmra.mxu0 %v5304
        %v5509 = vpop.f32.mrf.mxu0
        %v5510 = vadd.f32 %v5157, %v5509
        %v5511 = vpop.f32.mrf.mxu0
        %5512 = vmatprep.mubr.f32.mxu0 0.0
        %5513 = vmatmul.mubr.f32.gmra.mxu0 %v5307
        %v5514 = vpop.f32.mrf.mxu0
        %v5515 = vadd.f32 %v5162, %v5514
        %v5516 = vpop.f32.mrf.mxu0
        %5517 = vmatprep.mubr.f32.mxu0 0.0
        %5518 = vmatmul.mubr.f32.gmra.mxu0 %v5310
        %v5519 = vpop.f32.mrf.mxu0
        %v5520 = vadd.f32 %v5167, %v5519
        %v5521 = vpop.f32.mrf.mxu0
        %5522 = vmatprep.mubr.f32.mxu0 0.0
        %5523 = vmatmul.mubr.f32.gmra.mxu0 %v5313
        %v5524 = vpop.f32.mrf.mxu0
        %v5525 = vadd.f32 %v5172, %v5524
        %v5526 = vpop.f32.mrf.mxu0
        %5527 = vmatprep.mubr.f32.mxu0 0.0
        %5528 = vmatmul.mubr.f32.gmra.mxu0 %v5316
        %v5529 = vpop.f32.mrf.mxu0
        %v5530 = vadd.f32 %v5177, %v5529
        %v5531 = vpop.f32.mrf.mxu0
        %5532 = vmatprep.mubr.f32.mxu0 0.0
        %5533 = vmatmul.mubr.f32.gmra.mxu0 %v5319
        %v5534 = vpop.f32.mrf.mxu0
        %v5535 = vadd.f32 %v5182, %v5534
        %v5536 = vpop.f32.mrf.mxu0
        %5537 = vmatprep.mubr.f32.mxu0 0.0
        %5538 = vmatmul.mubr.f32.gmra.mxu0 %v5322
        %v5539 = vpop.f32.mrf.mxu0
        %v5540 = vadd.f32 %v5187, %v5539
        %v5541 = vpop.f32.mrf.mxu0
        %5542 = vmatprep.mubr.f32.mxu0 0.0
        %5543 = vmatmul.mubr.f32.gmra.mxu0 %v5325
        %v5544 = vpop.f32.mrf.mxu0
        %v5545 = vadd.f32 %v5192, %v5544
        %v5546 = vpop.f32.mrf.mxu0
        %5547 = vmatprep.mubr.f32.mxu0 0.0
        %5548 = vmatmul.mubr.f32.gmra.mxu0 %v5328
        %v5549 = vpop.f32.mrf.mxu0
        %v5550 = vadd.f32 %v5197, %v5549
        %v5551 = vpop.f32.mrf.mxu0
        %5552 = vmatprep.mubr.f32.mxu0 0.0
        %5553 = vmatmul.mubr.f32.gmra.mxu0 %v5331
        %v5554 = vpop.f32.mrf.mxu0
        %v5555 = vadd.f32 %v5202, %v5554
        %v5556 = vpop.f32.mrf.mxu0
        %5557 = vmatprep.mubr.f32.mxu0 0.0
        %5558 = vmatmul.mubr.f32.gmra.mxu0 %v5334
        %v5559 = vpop.f32.mrf.mxu0
        %v5560 = vadd.f32 %v5207, %v5559
        %v5561 = vpop.f32.mrf.mxu0
        %5562 = vmatprep.mubr.f32.mxu0 0.0
        %5563 = vmatmul.mubr.f32.gmra.mxu0 %v5337
        %v5564 = vpop.f32.mrf.mxu0
        %v5565 = vadd.f32 %v5212, %v5564
        %v5566 = vpop.f32.mrf.mxu0
        %5567 = vmatprep.mubr.f32.mxu0 0.0
        %5568 = vmatmul.mubr.f32.gmra.mxu0 %v5340
        %v5569 = vpop.f32.mrf.mxu0
        %v5570 = vadd.f32 %v5217, %v5569
        %v5571 = vpop.f32.mrf.mxu0
        %5572 = vmatprep.mubr.f32.mxu0 0.0
        %5573 = vmatmul.mubr.f32.gmra.mxu0 %v5343
        %v5574 = vpop.f32.mrf.mxu0
        %v5575 = vadd.f32 %v5222, %v5574
        %v5576 = vpop.f32.mrf.mxu0
        %5577 = vmatprep.mubr.f32.mxu0 0.0
        %5578 = vmatmul.mubr.f32.gmra.mxu0 %v5346
        %v5579 = vpop.f32.mrf.mxu0
        %v5580 = vadd.f32 %v5227, %v5579
        %v5581 = vpop.f32.mrf.mxu0
        %5582 = vmatprep.mubr.f32.mxu0 0.0
        %5583 = vmatmul.mubr.f32.gmra.mxu0 %v5349
        %v5584 = vpop.f32.mrf.mxu0
        %v5585 = vadd.f32 %v5232, %v5584
        %v5586 = vpop.f32.mrf.mxu0
        %5587 = vmatprep.mubr.f32.mxu0 0.0
        %5588 = vmatmul.mubr.f32.gmra.mxu0 %v5352
        %v5589 = vpop.f32.mrf.mxu0
        %v5590 = vadd.f32 %v5237, %v5589
        %v5591 = vpop.f32.mrf.mxu0
        %5592 = vmatprep.mubr.f32.mxu0 0.0
        %5593 = vmatmul.mubr.f32.gmra.mxu0 %v5355
        %v5594 = vpop.f32.mrf.mxu0
        %v5595 = vadd.f32 %v5242, %v5594
        %v5596 = vpop.f32.mrf.mxu0
        %5597 = vmatprep.mubr.f32.mxu0 0.0
        %5598 = vmatmul.mubr.f32.gmra.mxu0 %v5358
        %v5599 = vpop.f32.mrf.mxu0
        %v5600 = vadd.f32 %v5247, %v5599
        %v5601 = vpop.f32.mrf.mxu0
        %5602 = vmatprep.mubr.f32.mxu0 0.0
        %5603 = vmatmul.mubr.f32.gmra.mxu0 %v5361
        %v5604 = vpop.f32.mrf.mxu0
        %v5605 = vadd.f32 %v5252, %v5604
        %v5606 = vpop.f32.mrf.mxu0
        %5607 = vdwg.mxu0
        %v5608 = vld [vmem:[#allocation3 + $0x7] sm:$0xff]
        %v5609 = vld [vmem:[#allocation3 + $0xf] sm:$0xff]
        %v5610 = vld [vmem:[#allocation3 + $0x17] sm:$0xff]
        %v5611 = vld [vmem:[#allocation3 + $0x1f] sm:$0xff]
        %v5612 = vld [vmem:[#allocation3 + $0x27] sm:$0xff]
        %v5613 = vld [vmem:[#allocation3 + $0x2f] sm:$0xff]
        %v5614 = vld [vmem:[#allocation3 + $0x37] sm:$0xff]
        %v5615 = vld [vmem:[#allocation3 + $0x3f] sm:$0xff]
        %v5616 = vld [vmem:[#allocation3 + $0x47] sm:$0xff]
        %v5617 = vld [vmem:[#allocation3 + $0x4f] sm:$0xff]
        %v5618 = vld [vmem:[#allocation3 + $0x57] sm:$0xff]
        %v5619 = vld [vmem:[#allocation3 + $0x5f] sm:$0xff]
        %v5620 = vld [vmem:[#allocation3 + $0x67] sm:$0xff]
        %v5621 = vld [vmem:[#allocation3 + $0x6f] sm:$0xff]
        %v5622 = vld [vmem:[#allocation3 + $0x77] sm:$0xff]
        %v5623 = vld [vmem:[#allocation3 + $0x7f] sm:$0xff]
        %v5624 = vld [vmem:[#allocation3 + $0x87] sm:$0xff]
        %v5625 = vld [vmem:[#allocation3 + $0x8f] sm:$0xff]
        %v5626 = vld [vmem:[#allocation3 + $0x97] sm:$0xff]
        %v5627 = vld [vmem:[#allocation3 + $0x9f] sm:$0xff]
        %v5628 = vld [vmem:[#allocation3 + $0xa7] sm:$0xff]
        %v5629 = vld [vmem:[#allocation3 + $0xaf] sm:$0xff]
        %v5630 = vld [vmem:[#allocation3 + $0xb7] sm:$0xff]
        %v5631 = vld [vmem:[#allocation3 + $0xbf] sm:$0xff]
        %v5632 = vld [vmem:[#allocation3 + $0xc7] sm:$0xff]
        %v5633 = vld [vmem:[#allocation3 + $0xcf] sm:$0xff]
        %v5634 = vld [vmem:[#allocation3 + $0xd7] sm:$0xff]
        %v5635 = vld [vmem:[#allocation3 + $0xdf] sm:$0xff]
        %v5636 = vld [vmem:[#allocation3 + $0xe7] sm:$0xff]
        %v5637 = vld [vmem:[#allocation3 + $0xef] sm:$0xff]
        %v5638 = vld [vmem:[#allocation3 + $0xf7] sm:$0xff]
        %v5639 = vld [vmem:[#allocation3 + $0xff] sm:$0xff]
        %v5640 = vld [vmem:[#allocation3 + $0x107] sm:$0xff]
        %v5641 = vld [vmem:[#allocation3 + $0x10f] sm:$0xff]
        %v5642 = vld [vmem:[#allocation3 + $0x117] sm:$0xff]
        %v5643 = vld [vmem:[#allocation3 + $0x11f] sm:$0xff]
        %s5644 = scalar_lea.vmem %s4, 64
        %v5645 = vld [vmem:[%s5644] sm:$0xff]
        %v5646 = vld [vmem:[%s5644 + $0x8] sm:$0xff]
        %v5647 = vld [vmem:[%s5644 + $0x10] sm:$0xff]
        %v5648 = vld [vmem:[%s5644 + $0x18] sm:$0xff]
        %v5650 = vsel %vm4784, %v5608, 0
        %v5653 = vsel %vm4784, %v5609, 0
        %v5656 = vsel %vm4784, %v5610, 0
        %v5659 = vsel %vm4784, %v5611, 0
        %v5662 = vsel %vm4784, %v5612, 0
        %v5665 = vsel %vm4784, %v5613, 0
        %v5668 = vsel %vm4784, %v5614, 0
        %v5671 = vsel %vm4784, %v5615, 0
        %v5674 = vsel %vm4784, %v5616, 0
        %v5677 = vsel %vm4784, %v5617, 0
        %v5680 = vsel %vm4784, %v5618, 0
        %v5683 = vsel %vm4784, %v5619, 0
        %v5686 = vsel %vm4784, %v5620, 0
        %v5689 = vsel %vm4784, %v5621, 0
        %v5692 = vsel %vm4784, %v5622, 0
        %v5695 = vsel %vm4784, %v5623, 0
        %v5698 = vsel %vm4784, %v5624, 0
        %v5701 = vsel %vm4784, %v5625, 0
        %v5704 = vsel %vm4784, %v5626, 0
        %v5707 = vsel %vm4784, %v5627, 0
        %v5710 = vsel %vm4784, %v5628, 0
        %v5713 = vsel %vm4784, %v5629, 0
        %v5716 = vsel %vm4784, %v5630, 0
        %v5719 = vsel %vm4784, %v5631, 0
        %v5722 = vsel %vm4784, %v5632, 0
        %v5725 = vsel %vm4784, %v5633, 0
        %v5728 = vsel %vm4784, %v5634, 0
        %v5731 = vsel %vm4784, %v5635, 0
        %v5734 = vsel %vm4784, %v5636, 0
        %v5737 = vsel %vm4784, %v5637, 0
        %v5740 = vsel %vm4784, %v5638, 0
        %v5743 = vsel %vm4784, %v5639, 0
        %v5746 = vsel %vm4784, %v5640, 0
        %v5749 = vsel %vm4784, %v5641, 0
        %v5752 = vsel %vm4784, %v5642, 0
        %v5755 = vsel %vm4784, %v5643, 0
        %5757 = vmatprep.subr.mxu0 0.0
        %5758 = vmatpush1.msra.mxu0 0.0
        %5759 = vmatprep.subr.mxu0 0.0
        %5760 = vmatpush1.msra.mxu0 0.0
        %5761 = vmatprep.subr.mxu0 0.0
        %5762 = vmatpush1.msra.mxu0 0.0
        %5763 = vmatprep.subr.mxu0 0.0
        %5764 = vmatpush1.msra.mxu0 0.0
        %5765 = vmatprep.subr.mxu0 0.0
        %5766 = vmatpush1.msra.mxu0 0.0
        %5767 = vmatprep.subr.mxu0 0.0
        %5768 = vmatpush1.msra.mxu0 0.0
        %5769 = vmatprep.subr.mxu0 0.0
        %5770 = vmatpush1.msra.mxu0 0.0
        %5771 = vmatprep.subr.mxu0 0.0
        %5772 = vmatpush1.msra.mxu0 0.0
        %5773 = vmatprep.subr.mxu0 0.0
        %5774 = vmatpush1.msra.mxu0 0.0
        %5775 = vmatprep.subr.mxu0 0.0
        %5776 = vmatpush1.msra.mxu0 0.0
        %5777 = vmatprep.subr.mxu0 0.0
        %5778 = vmatpush1.msra.mxu0 0.0
        %5779 = vmatprep.subr.mxu0 0.0
        %5780 = vmatpush1.msra.mxu0 0.0
        %5781 = vmatprep.subr.mxu0 0.0
        %5782 = vmatpush1.msra.mxu0 %v5648
        %5783 = vmatprep.subr.mxu0 0.0
        %5784 = vmatpush1.msra.mxu0 %v5647
        %5785 = vmatprep.subr.mxu0 0.0
        %5786 = vmatpush1.msra.mxu0 %v5646
        %5787 = vmatprep.subr.mxu0 0.0
        %5788 = vmatpush1.msra.mxu0 %v5645
        %5789 = vmatprep.subr.mxu0 0.0
        %5790 = vmatpush2.msra.mxu0 0.0
        %5791 = vmatprep.subr.mxu0 0.0
        %5792 = vmatpush2.msra.mxu0 0.0
        %5793 = vmatprep.subr.mxu0 0.0
        %5794 = vmatpush2.msra.mxu0 0.0
        %5795 = vmatprep.subr.mxu0 0.0
        %5796 = vmatpush2.msra.mxu0 0.0
        %5797 = vmatprep.subr.mxu0 0.0
        %5798 = vmatpush2.msra.mxu0 0.0
        %5799 = vmatprep.subr.mxu0 0.0
        %5800 = vmatpush2.msra.mxu0 0.0
        %5801 = vmatprep.subr.mxu0 0.0
        %5802 = vmatpush2.msra.mxu0 0.0
        %5803 = vmatprep.subr.mxu0 0.0
        %5804 = vmatpush2.msra.mxu0 0.0
        %5805 = vmatprep.subr.mxu0 0.0
        %5806 = vmatpush2.msra.mxu0 0.0
        %5807 = vmatprep.subr.mxu0 0.0
        %5808 = vmatpush2.msra.mxu0 0.0
        %5809 = vmatprep.subr.mxu0 0.0
        %5810 = vmatpush2.msra.mxu0 0.0
        %5811 = vmatprep.subr.mxu0 0.0
        %5812 = vmatpush2.msra.mxu0 0.0
        %5813 = vmatprep.subr.mxu0 0.0
        %5814 = vmatpush2.msra.mxu0 0.0
        %5815 = vmatprep.subr.mxu0 0.0
        %5816 = vmatpush2.msra.mxu0 0.0
        %5817 = vmatprep.subr.mxu0 0.0
        %5818 = vmatpush2.msra.mxu0 0.0
        %5819 = vmatprep.subr.mxu0 0.0
        %5820 = vmatpush2.msra.mxu0 0.0
        %5821 = vmatprep.mubr.f32.mxu0 0.0
        %5822 = vmatmul.mubr.f32.gmra.mxu0 %v5650
        %v5823 = vpop.f32.mrf.mxu0
        %v5824 = vadd.f32 0.0, %v5823
        %v5825 = vpop.f32.mrf.mxu0
        %5826 = vmatprep.mubr.f32.mxu0 0.0
        %5827 = vmatmul.mubr.f32.gmra.mxu0 %v5653
        %v5828 = vpop.f32.mrf.mxu0
        %v5829 = vadd.f32 0.0, %v5828
        %v5830 = vpop.f32.mrf.mxu0
        %5831 = vmatprep.mubr.f32.mxu0 0.0
        %5832 = vmatmul.mubr.f32.gmra.mxu0 %v5656
        %v5833 = vpop.f32.mrf.mxu0
        %v5834 = vadd.f32 0.0, %v5833
        %v5835 = vpop.f32.mrf.mxu0
        %5836 = vmatprep.mubr.f32.mxu0 0.0
        %5837 = vmatmul.mubr.f32.gmra.mxu0 %v5659
        %v5838 = vpop.f32.mrf.mxu0
        %v5839 = vadd.f32 0.0, %v5838
        %v5840 = vpop.f32.mrf.mxu0
        %5841 = vmatprep.mubr.f32.mxu0 0.0
        %5842 = vmatmul.mubr.f32.gmra.mxu0 %v5662
        %v5843 = vpop.f32.mrf.mxu0
        %v5844 = vadd.f32 0.0, %v5843
        %v5845 = vpop.f32.mrf.mxu0
        %5846 = vmatprep.mubr.f32.mxu0 0.0
        %5847 = vmatmul.mubr.f32.gmra.mxu0 %v5665
        %v5848 = vpop.f32.mrf.mxu0
        %v5849 = vadd.f32 0.0, %v5848
        %v5850 = vpop.f32.mrf.mxu0
        %5851 = vmatprep.mubr.f32.mxu0 0.0
        %5852 = vmatmul.mubr.f32.gmra.mxu0 %v5668
        %v5853 = vpop.f32.mrf.mxu0
        %v5854 = vadd.f32 0.0, %v5853
        %v5855 = vpop.f32.mrf.mxu0
        %5856 = vmatprep.mubr.f32.mxu0 0.0
        %5857 = vmatmul.mubr.f32.gmra.mxu0 %v5671
        %v5858 = vpop.f32.mrf.mxu0
        %v5859 = vadd.f32 0.0, %v5858
        %v5860 = vpop.f32.mrf.mxu0
        %5861 = vmatprep.mubr.f32.mxu0 0.0
        %5862 = vmatmul.mubr.f32.gmra.mxu0 %v5674
        %v5863 = vpop.f32.mrf.mxu0
        %v5864 = vadd.f32 0.0, %v5863
        %v5865 = vpop.f32.mrf.mxu0
        %5866 = vmatprep.mubr.f32.mxu0 0.0
        %5867 = vmatmul.mubr.f32.gmra.mxu0 %v5677
        %v5868 = vpop.f32.mrf.mxu0
        %v5869 = vadd.f32 0.0, %v5868
        %v5870 = vpop.f32.mrf.mxu0
        %5871 = vmatprep.mubr.f32.mxu0 0.0
        %5872 = vmatmul.mubr.f32.gmra.mxu0 %v5680
        %v5873 = vpop.f32.mrf.mxu0
        %v5874 = vadd.f32 0.0, %v5873
        %v5875 = vpop.f32.mrf.mxu0
        %5876 = vmatprep.mubr.f32.mxu0 0.0
        %5877 = vmatmul.mubr.f32.gmra.mxu0 %v5683
        %v5878 = vpop.f32.mrf.mxu0
        %v5879 = vadd.f32 0.0, %v5878
        %v5880 = vpop.f32.mrf.mxu0
        %5881 = vmatprep.mubr.f32.mxu0 0.0
        %5882 = vmatmul.mubr.f32.gmra.mxu0 %v5686
        %v5883 = vpop.f32.mrf.mxu0
        %v5884 = vadd.f32 0.0, %v5883
        %v5885 = vpop.f32.mrf.mxu0
        %5886 = vmatprep.mubr.f32.mxu0 0.0
        %5887 = vmatmul.mubr.f32.gmra.mxu0 %v5689
        %v5888 = vpop.f32.mrf.mxu0
        %v5889 = vadd.f32 0.0, %v5888
        %v5890 = vpop.f32.mrf.mxu0
        %5891 = vmatprep.mubr.f32.mxu0 0.0
        %5892 = vmatmul.mubr.f32.gmra.mxu0 %v5692
        %v5893 = vpop.f32.mrf.mxu0
        %v5894 = vadd.f32 0.0, %v5893
        %v5895 = vpop.f32.mrf.mxu0
        %5896 = vmatprep.mubr.f32.mxu0 0.0
        %5897 = vmatmul.mubr.f32.gmra.mxu0 %v5695
        %v5898 = vpop.f32.mrf.mxu0
        %v5899 = vadd.f32 0.0, %v5898
        %v5900 = vpop.f32.mrf.mxu0
        %5901 = vmatprep.mubr.f32.mxu0 0.0
        %5902 = vmatmul.mubr.f32.gmra.mxu0 %v5698
        %v5903 = vpop.f32.mrf.mxu0
        %v5904 = vadd.f32 0.0, %v5903
        %v5905 = vpop.f32.mrf.mxu0
        %5906 = vmatprep.mubr.f32.mxu0 0.0
        %5907 = vmatmul.mubr.f32.gmra.mxu0 %v5701
        %v5908 = vpop.f32.mrf.mxu0
        %v5909 = vadd.f32 0.0, %v5908
        %v5910 = vpop.f32.mrf.mxu0
        %5911 = vmatprep.mubr.f32.mxu0 0.0
        %5912 = vmatmul.mubr.f32.gmra.mxu0 %v5704
        %v5913 = vpop.f32.mrf.mxu0
        %v5914 = vadd.f32 0.0, %v5913
        %v5915 = vpop.f32.mrf.mxu0
        %5916 = vmatprep.mubr.f32.mxu0 0.0
        %5917 = vmatmul.mubr.f32.gmra.mxu0 %v5707
        %v5918 = vpop.f32.mrf.mxu0
        %v5919 = vadd.f32 0.0, %v5918
        %v5920 = vpop.f32.mrf.mxu0
        %5921 = vmatprep.mubr.f32.mxu0 0.0
        %5922 = vmatmul.mubr.f32.gmra.mxu0 %v5710
        %v5923 = vpop.f32.mrf.mxu0
        %v5924 = vadd.f32 0.0, %v5923
        %v5925 = vpop.f32.mrf.mxu0
        %5926 = vmatprep.mubr.f32.mxu0 0.0
        %5927 = vmatmul.mubr.f32.gmra.mxu0 %v5713
        %v5928 = vpop.f32.mrf.mxu0
        %v5929 = vadd.f32 0.0, %v5928
        %v5930 = vpop.f32.mrf.mxu0
        %5931 = vmatprep.mubr.f32.mxu0 0.0
        %5932 = vmatmul.mubr.f32.gmra.mxu0 %v5716
        %v5933 = vpop.f32.mrf.mxu0
        %v5934 = vadd.f32 0.0, %v5933
        %v5935 = vpop.f32.mrf.mxu0
        %5936 = vmatprep.mubr.f32.mxu0 0.0
        %5937 = vmatmul.mubr.f32.gmra.mxu0 %v5719
        %v5938 = vpop.f32.mrf.mxu0
        %v5939 = vadd.f32 0.0, %v5938
        %v5940 = vpop.f32.mrf.mxu0
        %5941 = vmatprep.mubr.f32.mxu0 0.0
        %5942 = vmatmul.mubr.f32.gmra.mxu0 %v5722
        %v5943 = vpop.f32.mrf.mxu0
        %v5944 = vadd.f32 0.0, %v5943
        %v5945 = vpop.f32.mrf.mxu0
        %5946 = vmatprep.mubr.f32.mxu0 0.0
        %5947 = vmatmul.mubr.f32.gmra.mxu0 %v5725
        %v5948 = vpop.f32.mrf.mxu0
        %v5949 = vadd.f32 0.0, %v5948
        %v5950 = vpop.f32.mrf.mxu0
        %5951 = vmatprep.mubr.f32.mxu0 0.0
        %5952 = vmatmul.mubr.f32.gmra.mxu0 %v5728
        %v5953 = vpop.f32.mrf.mxu0
        %v5954 = vadd.f32 0.0, %v5953
        %v5955 = vpop.f32.mrf.mxu0
        %5956 = vmatprep.mubr.f32.mxu0 0.0
        %5957 = vmatmul.mubr.f32.gmra.mxu0 %v5731
        %v5958 = vpop.f32.mrf.mxu0
        %v5959 = vadd.f32 0.0, %v5958
        %v5960 = vpop.f32.mrf.mxu0
        %5961 = vmatprep.mubr.f32.mxu0 0.0
        %5962 = vmatmul.mubr.f32.gmra.mxu0 %v5734
        %v5963 = vpop.f32.mrf.mxu0
        %v5964 = vadd.f32 0.0, %v5963
        %v5965 = vpop.f32.mrf.mxu0
        %5966 = vmatprep.mubr.f32.mxu0 0.0
        %5967 = vmatmul.mubr.f32.gmra.mxu0 %v5737
        %v5968 = vpop.f32.mrf.mxu0
        %v5969 = vadd.f32 0.0, %v5968
        %v5970 = vpop.f32.mrf.mxu0
        %5971 = vmatprep.mubr.f32.mxu0 0.0
        %5972 = vmatmul.mubr.f32.gmra.mxu0 %v5740
        %v5973 = vpop.f32.mrf.mxu0
        %v5974 = vadd.f32 0.0, %v5973
        %v5975 = vpop.f32.mrf.mxu0
        %5976 = vmatprep.mubr.f32.mxu0 0.0
        %5977 = vmatmul.mubr.f32.gmra.mxu0 %v5743
        %v5978 = vpop.f32.mrf.mxu0
        %v5979 = vadd.f32 0.0, %v5978
        %v5980 = vpop.f32.mrf.mxu0
        %5981 = vmatprep.mubr.f32.mxu0 0.0
        %5982 = vmatmul.mubr.f32.gmra.mxu0 %v5746
        %v5983 = vpop.f32.mrf.mxu0
        %v5984 = vadd.f32 0.0, %v5983
        %v5985 = vpop.f32.mrf.mxu0
        %5986 = vmatprep.mubr.f32.mxu0 0.0
        %5987 = vmatmul.mubr.f32.gmra.mxu0 %v5749
        %v5988 = vpop.f32.mrf.mxu0
        %v5989 = vadd.f32 0.0, %v5988
        %v5990 = vpop.f32.mrf.mxu0
        %5991 = vmatprep.mubr.f32.mxu0 0.0
        %5992 = vmatmul.mubr.f32.gmra.mxu0 %v5752
        %v5993 = vpop.f32.mrf.mxu0
        %v5994 = vadd.f32 0.0, %v5993
        %v5995 = vpop.f32.mrf.mxu0
        %5996 = vmatprep.mubr.f32.mxu0 0.0
        %5997 = vmatmul.mubr.f32.gmra.mxu0 %v5755
        %v5998 = vpop.f32.mrf.mxu0
        %v5999 = vadd.f32 0.0, %v5998
        %v6000 = vpop.f32.mrf.mxu0
        %6001 = vdwg.mxu0
        %v6002 = vadd.f32 %v5430, %v5824
        %v6003 = vadd.f32 %v5435, %v5829
        %v6004 = vadd.f32 %v5440, %v5834
        %v6005 = vadd.f32 %v5445, %v5839
        %v6006 = vadd.f32 %v5450, %v5844
        %v6007 = vadd.f32 %v5455, %v5849
        %v6008 = vadd.f32 %v5460, %v5854
        %v6009 = vadd.f32 %v5465, %v5859
        %v6010 = vadd.f32 %v5470, %v5864
        %v6011 = vadd.f32 %v5475, %v5869
        %v6012 = vadd.f32 %v5480, %v5874
        %v6013 = vadd.f32 %v5485, %v5879
        %v6014 = vadd.f32 %v5490, %v5884
        %v6015 = vadd.f32 %v5495, %v5889
        %v6016 = vadd.f32 %v5500, %v5894
        %v6017 = vadd.f32 %v5505, %v5899
        %v6018 = vadd.f32 %v5510, %v5904
        %v6019 = vadd.f32 %v5515, %v5909
        %v6020 = vadd.f32 %v5520, %v5914
        %v6021 = vadd.f32 %v5525, %v5919
        %v6022 = vadd.f32 %v5530, %v5924
        %v6023 = vadd.f32 %v5535, %v5929
        %v6024 = vadd.f32 %v5540, %v5934
        %v6025 = vadd.f32 %v5545, %v5939
        %v6026 = vadd.f32 %v5550, %v5944
        %v6027 = vadd.f32 %v5555, %v5949
        %v6028 = vadd.f32 %v5560, %v5954
        %v6029 = vadd.f32 %v5565, %v5959
        %v6030 = vadd.f32 %v5570, %v5964
        %v6031 = vadd.f32 %v5575, %v5969
        %v6032 = vadd.f32 %v5580, %v5974
        %v6033 = vadd.f32 %v5585, %v5979
        %v6034 = vadd.f32 %v5590, %v5984
        %v6035 = vadd.f32 %v5595, %v5989
        %v6036 = vadd.f32 %v5600, %v5994
        %v6037 = vadd.f32 %v5605, %v5999
        %v6038 = vld [vmem:[#allocation3 + $0x17] sm:$0xff]
        %v6039 = vld [vmem:[#allocation3 + $0x1f] sm:$0xff]
        %v6040 = vld [vmem:[#allocation3 + $0x27] sm:$0xff]
        %v6041 = vld [vmem:[#allocation3 + $0x2f] sm:$0xff]
        %v6042 = vld [vmem:[#allocation3 + $0x37] sm:$0xff]
        %v6043 = vld [vmem:[#allocation3 + $0x3f] sm:$0xff]
        %v6044 = vld [vmem:[#allocation3 + $0x47] sm:$0xff]
        %v6045 = vld [vmem:[#allocation3 + $0x4f] sm:$0xff]
        %v6046 = vld [vmem:[#allocation3 + $0x57] sm:$0xff]
        %v6047 = vld [vmem:[#allocation3 + $0x5f] sm:$0xff]
        %v6048 = vld [vmem:[#allocation3 + $0x67] sm:$0xff]
        %v6049 = vld [vmem:[#allocation3 + $0x6f] sm:$0xff]
        %v6050 = vld [vmem:[#allocation3 + $0x77] sm:$0xff]
        %v6051 = vld [vmem:[#allocation3 + $0x7f] sm:$0xff]
        %v6052 = vld [vmem:[#allocation3 + $0x87] sm:$0xff]
        %v6053 = vld [vmem:[#allocation3 + $0x8f] sm:$0xff]
        %v6054 = vld [vmem:[#allocation3 + $0x97] sm:$0xff]
        %v6055 = vld [vmem:[#allocation3 + $0x9f] sm:$0xff]
        %v6056 = vld [vmem:[#allocation3 + $0xa7] sm:$0xff]
        %v6057 = vld [vmem:[#allocation3 + $0xaf] sm:$0xff]
        %v6058 = vld [vmem:[#allocation3 + $0xb7] sm:$0xff]
        %v6059 = vld [vmem:[#allocation3 + $0xbf] sm:$0xff]
        %v6060 = vld [vmem:[#allocation3 + $0xc7] sm:$0xff]
        %v6061 = vld [vmem:[#allocation3 + $0xcf] sm:$0xff]
        %v6062 = vld [vmem:[#allocation3 + $0xd7] sm:$0xff]
        %v6063 = vld [vmem:[#allocation3 + $0xdf] sm:$0xff]
        %v6064 = vld [vmem:[#allocation3 + $0xe7] sm:$0xff]
        %v6065 = vld [vmem:[#allocation3 + $0xef] sm:$0xff]
        %v6066 = vld [vmem:[#allocation3 + $0xf7] sm:$0xff]
        %v6067 = vld [vmem:[#allocation3 + $0xff] sm:$0xff]
        %v6068 = vld [vmem:[#allocation3 + $0x107] sm:$0xff]
        %v6069 = vld [vmem:[#allocation3 + $0x10f] sm:$0xff]
        %v6070 = vld [vmem:[#allocation3 + $0x117] sm:$0xff]
        %v6071 = vld [vmem:[#allocation3 + $0x11f] sm:$0xff]
        %v6072 = vld [vmem:[#allocation3 + $0x127] sm:$0xff]
        %v6073 = vld [vmem:[#allocation3 + $0x12f] sm:$0xff]
        %s6074 = scalar_lea.vmem %s4, 96
        %v6075 = vld [vmem:[%s6074] sm:$0xff]
        %v6076 = vld [vmem:[%s6074 + $0x8] sm:$0xff]
        %v6077 = vld [vmem:[%s6074 + $0x10] sm:$0xff]
        %v6078 = vld [vmem:[%s6074 + $0x18] sm:$0xff]
        %v6080 = vsel %vm4784, %v6038, 0
        %v6083 = vsel %vm4784, %v6039, 0
        %v6086 = vsel %vm4784, %v6040, 0
        %v6089 = vsel %vm4784, %v6041, 0
        %v6092 = vsel %vm4784, %v6042, 0
        %v6095 = vsel %vm4784, %v6043, 0
        %v6098 = vsel %vm4784, %v6044, 0
        %v6101 = vsel %vm4784, %v6045, 0
        %v6104 = vsel %vm4784, %v6046, 0
        %v6107 = vsel %vm4784, %v6047, 0
        %v6110 = vsel %vm4784, %v6048, 0
        %v6113 = vsel %vm4784, %v6049, 0
        %v6116 = vsel %vm4784, %v6050, 0
        %v6119 = vsel %vm4784, %v6051, 0
        %v6122 = vsel %vm4784, %v6052, 0
        %v6125 = vsel %vm4784, %v6053, 0
        %v6128 = vsel %vm4784, %v6054, 0
        %v6131 = vsel %vm4784, %v6055, 0
        %v6134 = vsel %vm4784, %v6056, 0
        %v6137 = vsel %vm4784, %v6057, 0
        %v6140 = vsel %vm4784, %v6058, 0
        %v6143 = vsel %vm4784, %v6059, 0
        %v6146 = vsel %vm4784, %v6060, 0
        %v6149 = vsel %vm4784, %v6061, 0
        %v6152 = vsel %vm4784, %v6062, 0
        %v6155 = vsel %vm4784, %v6063, 0
        %v6158 = vsel %vm4784, %v6064, 0
        %v6161 = vsel %vm4784, %v6065, 0
        %v6164 = vsel %vm4784, %v6066, 0
        %v6167 = vsel %vm4784, %v6067, 0
        %v6170 = vsel %vm4784, %v6068, 0
        %v6173 = vsel %vm4784, %v6069, 0
        %v6176 = vsel %vm4784, %v6070, 0
        %v6179 = vsel %vm4784, %v6071, 0
        %v6182 = vsel %vm4784, %v6072, 0
        %v6185 = vsel %vm4784, %v6073, 0
        %6187 = vmatprep.subr.mxu0 0.0
        %6188 = vmatpush1.msra.mxu0 0.0
        %6189 = vmatprep.subr.mxu0 0.0
        %6190 = vmatpush1.msra.mxu0 0.0
        %6191 = vmatprep.subr.mxu0 0.0
        %6192 = vmatpush1.msra.mxu0 0.0
        %6193 = vmatprep.subr.mxu0 0.0
        %6194 = vmatpush1.msra.mxu0 0.0
        %6195 = vmatprep.subr.mxu0 0.0
        %6196 = vmatpush1.msra.mxu0 0.0
        %6197 = vmatprep.subr.mxu0 0.0
        %6198 = vmatpush1.msra.mxu0 0.0
        %6199 = vmatprep.subr.mxu0 0.0
        %6200 = vmatpush1.msra.mxu0 0.0
        %6201 = vmatprep.subr.mxu0 0.0
        %6202 = vmatpush1.msra.mxu0 0.0
        %6203 = vmatprep.subr.mxu0 0.0
        %6204 = vmatpush1.msra.mxu0 0.0
        %6205 = vmatprep.subr.mxu0 0.0
        %6206 = vmatpush1.msra.mxu0 0.0
        %6207 = vmatprep.subr.mxu0 0.0
        %6208 = vmatpush1.msra.mxu0 0.0
        %6209 = vmatprep.subr.mxu0 0.0
        %6210 = vmatpush1.msra.mxu0 0.0
        %6211 = vmatprep.subr.mxu0 0.0
        %6212 = vmatpush1.msra.mxu0 %v6078
        %6213 = vmatprep.subr.mxu0 0.0
        %6214 = vmatpush1.msra.mxu0 %v6077
        %6215 = vmatprep.subr.mxu0 0.0
        %6216 = vmatpush1.msra.mxu0 %v6076
        %6217 = vmatprep.subr.mxu0 0.0
        %6218 = vmatpush1.msra.mxu0 %v6075
        %6219 = vmatprep.subr.mxu0 0.0
        %6220 = vmatpush2.msra.mxu0 0.0
        %6221 = vmatprep.subr.mxu0 0.0
        %6222 = vmatpush2.msra.mxu0 0.0
        %6223 = vmatprep.subr.mxu0 0.0
        %6224 = vmatpush2.msra.mxu0 0.0
        %6225 = vmatprep.subr.mxu0 0.0
        %6226 = vmatpush2.msra.mxu0 0.0
        %6227 = vmatprep.subr.mxu0 0.0
        %6228 = vmatpush2.msra.mxu0 0.0
        %6229 = vmatprep.subr.mxu0 0.0
        %6230 = vmatpush2.msra.mxu0 0.0
        %6231 = vmatprep.subr.mxu0 0.0
        %6232 = vmatpush2.msra.mxu0 0.0
        %6233 = vmatprep.subr.mxu0 0.0
        %6234 = vmatpush2.msra.mxu0 0.0
        %6235 = vmatprep.subr.mxu0 0.0
        %6236 = vmatpush2.msra.mxu0 0.0
        %6237 = vmatprep.subr.mxu0 0.0
        %6238 = vmatpush2.msra.mxu0 0.0
        %6239 = vmatprep.subr.mxu0 0.0
        %6240 = vmatpush2.msra.mxu0 0.0
        %6241 = vmatprep.subr.mxu0 0.0
        %6242 = vmatpush2.msra.mxu0 0.0
        %6243 = vmatprep.subr.mxu0 0.0
        %6244 = vmatpush2.msra.mxu0 0.0
        %6245 = vmatprep.subr.mxu0 0.0
        %6246 = vmatpush2.msra.mxu0 0.0
        %6247 = vmatprep.subr.mxu0 0.0
        %6248 = vmatpush2.msra.mxu0 0.0
        %6249 = vmatprep.subr.mxu0 0.0
        %6250 = vmatpush2.msra.mxu0 0.0
        %6251 = vmatprep.mubr.f32.mxu0 0.0
        %6252 = vmatmul.mubr.f32.gmra.mxu0 %v6080
        %v6253 = vpop.f32.mrf.mxu0
        %v6254 = vadd.f32 0.0, %v6253
        %v6255 = vpop.f32.mrf.mxu0
        %6256 = vmatprep.mubr.f32.mxu0 0.0
        %6257 = vmatmul.mubr.f32.gmra.mxu0 %v6083
        %v6258 = vpop.f32.mrf.mxu0
        %v6259 = vadd.f32 0.0, %v6258
        %v6260 = vpop.f32.mrf.mxu0
        %6261 = vmatprep.mubr.f32.mxu0 0.0
        %6262 = vmatmul.mubr.f32.gmra.mxu0 %v6086
        %v6263 = vpop.f32.mrf.mxu0
        %v6264 = vadd.f32 0.0, %v6263
        %v6265 = vpop.f32.mrf.mxu0
        %6266 = vmatprep.mubr.f32.mxu0 0.0
        %6267 = vmatmul.mubr.f32.gmra.mxu0 %v6089
        %v6268 = vpop.f32.mrf.mxu0
        %v6269 = vadd.f32 0.0, %v6268
        %v6270 = vpop.f32.mrf.mxu0
        %6271 = vmatprep.mubr.f32.mxu0 0.0
        %6272 = vmatmul.mubr.f32.gmra.mxu0 %v6092
        %v6273 = vpop.f32.mrf.mxu0
        %v6274 = vadd.f32 0.0, %v6273
        %v6275 = vpop.f32.mrf.mxu0
        %6276 = vmatprep.mubr.f32.mxu0 0.0
        %6277 = vmatmul.mubr.f32.gmra.mxu0 %v6095
        %v6278 = vpop.f32.mrf.mxu0
        %v6279 = vadd.f32 0.0, %v6278
        %v6280 = vpop.f32.mrf.mxu0
        %6281 = vmatprep.mubr.f32.mxu0 0.0
        %6282 = vmatmul.mubr.f32.gmra.mxu0 %v6098
        %v6283 = vpop.f32.mrf.mxu0
        %v6284 = vadd.f32 0.0, %v6283
        %v6285 = vpop.f32.mrf.mxu0
        %6286 = vmatprep.mubr.f32.mxu0 0.0
        %6287 = vmatmul.mubr.f32.gmra.mxu0 %v6101
        %v6288 = vpop.f32.mrf.mxu0
        %v6289 = vadd.f32 0.0, %v6288
        %v6290 = vpop.f32.mrf.mxu0
        %6291 = vmatprep.mubr.f32.mxu0 0.0
        %6292 = vmatmul.mubr.f32.gmra.mxu0 %v6104
        %v6293 = vpop.f32.mrf.mxu0
        %v6294 = vadd.f32 0.0, %v6293
        %v6295 = vpop.f32.mrf.mxu0
        %6296 = vmatprep.mubr.f32.mxu0 0.0
        %6297 = vmatmul.mubr.f32.gmra.mxu0 %v6107
        %v6298 = vpop.f32.mrf.mxu0
        %v6299 = vadd.f32 0.0, %v6298
        %v6300 = vpop.f32.mrf.mxu0
        %6301 = vmatprep.mubr.f32.mxu0 0.0
        %6302 = vmatmul.mubr.f32.gmra.mxu0 %v6110
        %v6303 = vpop.f32.mrf.mxu0
        %v6304 = vadd.f32 0.0, %v6303
        %v6305 = vpop.f32.mrf.mxu0
        %6306 = vmatprep.mubr.f32.mxu0 0.0
        %6307 = vmatmul.mubr.f32.gmra.mxu0 %v6113
        %v6308 = vpop.f32.mrf.mxu0
        %v6309 = vadd.f32 0.0, %v6308
        %v6310 = vpop.f32.mrf.mxu0
        %6311 = vmatprep.mubr.f32.mxu0 0.0
        %6312 = vmatmul.mubr.f32.gmra.mxu0 %v6116
        %v6313 = vpop.f32.mrf.mxu0
        %v6314 = vadd.f32 0.0, %v6313
        %v6315 = vpop.f32.mrf.mxu0
        %6316 = vmatprep.mubr.f32.mxu0 0.0
        %6317 = vmatmul.mubr.f32.gmra.mxu0 %v6119
        %v6318 = vpop.f32.mrf.mxu0
        %v6319 = vadd.f32 0.0, %v6318
        %v6320 = vpop.f32.mrf.mxu0
        %6321 = vmatprep.mubr.f32.mxu0 0.0
        %6322 = vmatmul.mubr.f32.gmra.mxu0 %v6122
        %v6323 = vpop.f32.mrf.mxu0
        %v6324 = vadd.f32 0.0, %v6323
        %v6325 = vpop.f32.mrf.mxu0
        %6326 = vmatprep.mubr.f32.mxu0 0.0
        %6327 = vmatmul.mubr.f32.gmra.mxu0 %v6125
        %v6328 = vpop.f32.mrf.mxu0
        %v6329 = vadd.f32 0.0, %v6328
        %v6330 = vpop.f32.mrf.mxu0
        %6331 = vmatprep.mubr.f32.mxu0 0.0
        %6332 = vmatmul.mubr.f32.gmra.mxu0 %v6128
        %v6333 = vpop.f32.mrf.mxu0
        %v6334 = vadd.f32 0.0, %v6333
        %v6335 = vpop.f32.mrf.mxu0
        %6336 = vmatprep.mubr.f32.mxu0 0.0
        %6337 = vmatmul.mubr.f32.gmra.mxu0 %v6131
        %v6338 = vpop.f32.mrf.mxu0
        %v6339 = vadd.f32 0.0, %v6338
        %v6340 = vpop.f32.mrf.mxu0
        %6341 = vmatprep.mubr.f32.mxu0 0.0
        %6342 = vmatmul.mubr.f32.gmra.mxu0 %v6134
        %v6343 = vpop.f32.mrf.mxu0
        %v6344 = vadd.f32 0.0, %v6343
        %v6345 = vpop.f32.mrf.mxu0
        %6346 = vmatprep.mubr.f32.mxu0 0.0
        %6347 = vmatmul.mubr.f32.gmra.mxu0 %v6137
        %v6348 = vpop.f32.mrf.mxu0
        %v6349 = vadd.f32 0.0, %v6348
        %v6350 = vpop.f32.mrf.mxu0
        %6351 = vmatprep.mubr.f32.mxu0 0.0
        %6352 = vmatmul.mubr.f32.gmra.mxu0 %v6140
        %v6353 = vpop.f32.mrf.mxu0
        %v6354 = vadd.f32 0.0, %v6353
        %v6355 = vpop.f32.mrf.mxu0
        %6356 = vmatprep.mubr.f32.mxu0 0.0
        %6357 = vmatmul.mubr.f32.gmra.mxu0 %v6143
        %v6358 = vpop.f32.mrf.mxu0
        %v6359 = vadd.f32 0.0, %v6358
        %v6360 = vpop.f32.mrf.mxu0
        %6361 = vmatprep.mubr.f32.mxu0 0.0
        %6362 = vmatmul.mubr.f32.gmra.mxu0 %v6146
        %v6363 = vpop.f32.mrf.mxu0
        %v6364 = vadd.f32 0.0, %v6363
        %v6365 = vpop.f32.mrf.mxu0
        %6366 = vmatprep.mubr.f32.mxu0 0.0
        %6367 = vmatmul.mubr.f32.gmra.mxu0 %v6149
        %v6368 = vpop.f32.mrf.mxu0
        %v6369 = vadd.f32 0.0, %v6368
        %v6370 = vpop.f32.mrf.mxu0
        %6371 = vmatprep.mubr.f32.mxu0 0.0
        %6372 = vmatmul.mubr.f32.gmra.mxu0 %v6152
        %v6373 = vpop.f32.mrf.mxu0
        %v6374 = vadd.f32 0.0, %v6373
        %v6375 = vpop.f32.mrf.mxu0
        %6376 = vmatprep.mubr.f32.mxu0 0.0
        %6377 = vmatmul.mubr.f32.gmra.mxu0 %v6155
        %v6378 = vpop.f32.mrf.mxu0
        %v6379 = vadd.f32 0.0, %v6378
        %v6380 = vpop.f32.mrf.mxu0
        %6381 = vmatprep.mubr.f32.mxu0 0.0
        %6382 = vmatmul.mubr.f32.gmra.mxu0 %v6158
        %v6383 = vpop.f32.mrf.mxu0
        %v6384 = vadd.f32 0.0, %v6383
        %v6385 = vpop.f32.mrf.mxu0
        %6386 = vmatprep.mubr.f32.mxu0 0.0
        %6387 = vmatmul.mubr.f32.gmra.mxu0 %v6161
        %v6388 = vpop.f32.mrf.mxu0
        %v6389 = vadd.f32 0.0, %v6388
        %v6390 = vpop.f32.mrf.mxu0
        %6391 = vmatprep.mubr.f32.mxu0 0.0
        %6392 = vmatmul.mubr.f32.gmra.mxu0 %v6164
        %v6393 = vpop.f32.mrf.mxu0
        %v6394 = vadd.f32 0.0, %v6393
        %v6395 = vpop.f32.mrf.mxu0
        %6396 = vmatprep.mubr.f32.mxu0 0.0
        %6397 = vmatmul.mubr.f32.gmra.mxu0 %v6167
        %v6398 = vpop.f32.mrf.mxu0
        %v6399 = vadd.f32 0.0, %v6398
        %v6400 = vpop.f32.mrf.mxu0
        %6401 = vmatprep.mubr.f32.mxu0 0.0
        %6402 = vmatmul.mubr.f32.gmra.mxu0 %v6170
        %v6403 = vpop.f32.mrf.mxu0
        %v6404 = vadd.f32 0.0, %v6403
        %v6405 = vpop.f32.mrf.mxu0
        %6406 = vmatprep.mubr.f32.mxu0 0.0
        %6407 = vmatmul.mubr.f32.gmra.mxu0 %v6173
        %v6408 = vpop.f32.mrf.mxu0
        %v6409 = vadd.f32 0.0, %v6408
        %v6410 = vpop.f32.mrf.mxu0
        %6411 = vmatprep.mubr.f32.mxu0 0.0
        %6412 = vmatmul.mubr.f32.gmra.mxu0 %v6176
        %v6413 = vpop.f32.mrf.mxu0
        %v6414 = vadd.f32 0.0, %v6413
        %v6415 = vpop.f32.mrf.mxu0
        %6416 = vmatprep.mubr.f32.mxu0 0.0
        %6417 = vmatmul.mubr.f32.gmra.mxu0 %v6179
        %v6418 = vpop.f32.mrf.mxu0
        %v6419 = vadd.f32 0.0, %v6418
        %v6420 = vpop.f32.mrf.mxu0
        %6421 = vmatprep.mubr.f32.mxu0 0.0
        %6422 = vmatmul.mubr.f32.gmra.mxu0 %v6182
        %v6423 = vpop.f32.mrf.mxu0
        %v6424 = vadd.f32 0.0, %v6423
        %v6425 = vpop.f32.mrf.mxu0
        %6426 = vmatprep.mubr.f32.mxu0 0.0
        %6427 = vmatmul.mubr.f32.gmra.mxu0 %v6185
        %v6428 = vpop.f32.mrf.mxu0
        %v6429 = vadd.f32 0.0, %v6428
        %v6430 = vpop.f32.mrf.mxu0
        %6431 = vdwg.mxu0
        %v6432 = vadd.f32 %v6002, %v6254
        %v6433 = vadd.f32 %v6003, %v6259
        %v6434 = vadd.f32 %v6004, %v6264
        %v6435 = vadd.f32 %v6005, %v6269
        %v6436 = vadd.f32 %v6006, %v6274
        %v6437 = vadd.f32 %v6007, %v6279
        %v6438 = vadd.f32 %v6008, %v6284
        %v6439 = vadd.f32 %v6009, %v6289
        %v6440 = vadd.f32 %v6010, %v6294
        %v6441 = vadd.f32 %v6011, %v6299
        %v6442 = vadd.f32 %v6012, %v6304
        %v6443 = vadd.f32 %v6013, %v6309
        %v6444 = vadd.f32 %v6014, %v6314
        %v6445 = vadd.f32 %v6015, %v6319
        %v6446 = vadd.f32 %v6016, %v6324
        %v6447 = vadd.f32 %v6017, %v6329
        %v6448 = vadd.f32 %v6018, %v6334
        %v6449 = vadd.f32 %v6019, %v6339
        %v6450 = vadd.f32 %v6020, %v6344
        %v6451 = vadd.f32 %v6021, %v6349
        %v6452 = vadd.f32 %v6022, %v6354
        %v6453 = vadd.f32 %v6023, %v6359
        %v6454 = vadd.f32 %v6024, %v6364
        %v6455 = vadd.f32 %v6025, %v6369
        %v6456 = vadd.f32 %v6026, %v6374
        %v6457 = vadd.f32 %v6027, %v6379
        %v6458 = vadd.f32 %v6028, %v6384
        %v6459 = vadd.f32 %v6029, %v6389
        %v6460 = vadd.f32 %v6030, %v6394
        %v6461 = vadd.f32 %v6031, %v6399
        %v6462 = vadd.f32 %v6032, %v6404
        %v6463 = vadd.f32 %v6033, %v6409
        %v6464 = vadd.f32 %v6034, %v6414
        %v6465 = vadd.f32 %v6035, %v6419
        %v6466 = vadd.f32 %v6036, %v6424
        %v6467 = vadd.f32 %v6037, %v6429
        %v6468 = vld [vmem:[#allocation3 + $0x18] sm:$0xff]
        %v6469 = vld [vmem:[#allocation3 + $0x20] sm:$0xff]
        %v6470 = vld [vmem:[#allocation3 + $0x28] sm:$0xff]
        %v6471 = vld [vmem:[#allocation3 + $0x30] sm:$0xff]
        %v6472 = vld [vmem:[#allocation3 + $0x38] sm:$0xff]
        %v6473 = vld [vmem:[#allocation3 + $0x40] sm:$0xff]
        %v6474 = vld [vmem:[#allocation3 + $0x48] sm:$0xff]
        %v6475 = vld [vmem:[#allocation3 + $0x50] sm:$0xff]
        %v6476 = vld [vmem:[#allocation3 + $0x58] sm:$0xff]
        %v6477 = vld [vmem:[#allocation3 + $0x60] sm:$0xff]
        %v6478 = vld [vmem:[#allocation3 + $0x68] sm:$0xff]
        %v6479 = vld [vmem:[#allocation3 + $0x70] sm:$0xff]
        %v6480 = vld [vmem:[#allocation3 + $0x78] sm:$0xff]
        %v6481 = vld [vmem:[#allocation3 + $0x80] sm:$0xff]
        %v6482 = vld [vmem:[#allocation3 + $0x88] sm:$0xff]
        %v6483 = vld [vmem:[#allocation3 + $0x90] sm:$0xff]
        %v6484 = vld [vmem:[#allocation3 + $0x98] sm:$0xff]
        %v6485 = vld [vmem:[#allocation3 + $0xa0] sm:$0xff]
        %v6486 = vld [vmem:[#allocation3 + $0xa8] sm:$0xff]
        %v6487 = vld [vmem:[#allocation3 + $0xb0] sm:$0xff]
        %v6488 = vld [vmem:[#allocation3 + $0xb8] sm:$0xff]
        %v6489 = vld [vmem:[#allocation3 + $0xc0] sm:$0xff]
        %v6490 = vld [vmem:[#allocation3 + $0xc8] sm:$0xff]
        %v6491 = vld [vmem:[#allocation3 + $0xd0] sm:$0xff]
        %v6492 = vld [vmem:[#allocation3 + $0xd8] sm:$0xff]
        %v6493 = vld [vmem:[#allocation3 + $0xe0] sm:$0xff]
        %v6494 = vld [vmem:[#allocation3 + $0xe8] sm:$0xff]
        %v6495 = vld [vmem:[#allocation3 + $0xf0] sm:$0xff]
        %v6496 = vld [vmem:[#allocation3 + $0xf8] sm:$0xff]
        %v6497 = vld [vmem:[#allocation3 + $0x100] sm:$0xff]
        %v6498 = vld [vmem:[#allocation3 + $0x108] sm:$0xff]
        %v6499 = vld [vmem:[#allocation3 + $0x110] sm:$0xff]
        %v6500 = vld [vmem:[#allocation3 + $0x118] sm:$0xff]
        %v6501 = vld [vmem:[#allocation3 + $0x120] sm:$0xff]
        %v6502 = vld [vmem:[#allocation3 + $0x128] sm:$0xff]
        %v6503 = vld [vmem:[#allocation3 + $0x130] sm:$0xff]
        %s6504 = scalar_lea.vmem %s4, 128
        %v6505 = vld [vmem:[%s6504] sm:$0xff]
        %v6506 = vld [vmem:[%s6504 + $0x8] sm:$0xff]
        %v6507 = vld [vmem:[%s6504 + $0x10] sm:$0xff]
        %v6508 = vld [vmem:[%s6504 + $0x18] sm:$0xff]
        %v6510 = vsel %vm4784, %v6468, 0
        %v6513 = vsel %vm4784, %v6469, 0
        %v6516 = vsel %vm4784, %v6470, 0
        %v6519 = vsel %vm4784, %v6471, 0
        %v6522 = vsel %vm4784, %v6472, 0
        %v6525 = vsel %vm4784, %v6473, 0
        %v6528 = vsel %vm4784, %v6474, 0
        %v6531 = vsel %vm4784, %v6475, 0
        %v6534 = vsel %vm4784, %v6476, 0
        %v6537 = vsel %vm4784, %v6477, 0
        %v6540 = vsel %vm4784, %v6478, 0
        %v6543 = vsel %vm4784, %v6479, 0
        %v6546 = vsel %vm4784, %v6480, 0
        %v6549 = vsel %vm4784, %v6481, 0
        %v6552 = vsel %vm4784, %v6482, 0
        %v6555 = vsel %vm4784, %v6483, 0
        %v6558 = vsel %vm4784, %v6484, 0
        %v6561 = vsel %vm4784, %v6485, 0
        %v6564 = vsel %vm4784, %v6486, 0
        %v6567 = vsel %vm4784, %v6487, 0
        %v6570 = vsel %vm4784, %v6488, 0
        %v6573 = vsel %vm4784, %v6489, 0
        %v6576 = vsel %vm4784, %v6490, 0
        %v6579 = vsel %vm4784, %v6491, 0
        %v6582 = vsel %vm4784, %v6492, 0
        %v6585 = vsel %vm4784, %v6493, 0
        %v6588 = vsel %vm4784, %v6494, 0
        %v6591 = vsel %vm4784, %v6495, 0
        %v6594 = vsel %vm4784, %v6496, 0
        %v6597 = vsel %vm4784, %v6497, 0
        %v6600 = vsel %vm4784, %v6498, 0
        %v6603 = vsel %vm4784, %v6499, 0
        %v6606 = vsel %vm4784, %v6500, 0
        %v6609 = vsel %vm4784, %v6501, 0
        %v6612 = vsel %vm4784, %v6502, 0
        %v6615 = vsel %vm4784, %v6503, 0
        %6617 = vmatprep.subr.mxu0 0.0
        %6618 = vmatpush1.msra.mxu0 0.0
        %6619 = vmatprep.subr.mxu0 0.0
        %6620 = vmatpush1.msra.mxu0 0.0
        %6621 = vmatprep.subr.mxu0 0.0
        %6622 = vmatpush1.msra.mxu0 0.0
        %6623 = vmatprep.subr.mxu0 0.0
        %6624 = vmatpush1.msra.mxu0 0.0
        %6625 = vmatprep.subr.mxu0 0.0
        %6626 = vmatpush1.msra.mxu0 0.0
        %6627 = vmatprep.subr.mxu0 0.0
        %6628 = vmatpush1.msra.mxu0 0.0
        %6629 = vmatprep.subr.mxu0 0.0
        %6630 = vmatpush1.msra.mxu0 0.0
        %6631 = vmatprep.subr.mxu0 0.0
        %6632 = vmatpush1.msra.mxu0 0.0
        %6633 = vmatprep.subr.mxu0 0.0
        %6634 = vmatpush1.msra.mxu0 0.0
        %6635 = vmatprep.subr.mxu0 0.0
        %6636 = vmatpush1.msra.mxu0 0.0
        %6637 = vmatprep.subr.mxu0 0.0
        %6638 = vmatpush1.msra.mxu0 0.0
        %6639 = vmatprep.subr.mxu0 0.0
        %6640 = vmatpush1.msra.mxu0 0.0
        %6641 = vmatprep.subr.mxu0 0.0
        %6642 = vmatpush1.msra.mxu0 %v6508
        %6643 = vmatprep.subr.mxu0 0.0
        %6644 = vmatpush1.msra.mxu0 %v6507
        %6645 = vmatprep.subr.mxu0 0.0
        %6646 = vmatpush1.msra.mxu0 %v6506
        %6647 = vmatprep.subr.mxu0 0.0
        %6648 = vmatpush1.msra.mxu0 %v6505
        %6649 = vmatprep.subr.mxu0 0.0
        %6650 = vmatpush2.msra.mxu0 0.0
        %6651 = vmatprep.subr.mxu0 0.0
        %6652 = vmatpush2.msra.mxu0 0.0
        %6653 = vmatprep.subr.mxu0 0.0
        %6654 = vmatpush2.msra.mxu0 0.0
        %6655 = vmatprep.subr.mxu0 0.0
        %6656 = vmatpush2.msra.mxu0 0.0
        %6657 = vmatprep.subr.mxu0 0.0
        %6658 = vmatpush2.msra.mxu0 0.0
        %6659 = vmatprep.subr.mxu0 0.0
        %6660 = vmatpush2.msra.mxu0 0.0
        %6661 = vmatprep.subr.mxu0 0.0
        %6662 = vmatpush2.msra.mxu0 0.0
        %6663 = vmatprep.subr.mxu0 0.0
        %6664 = vmatpush2.msra.mxu0 0.0
        %6665 = vmatprep.subr.mxu0 0.0
        %6666 = vmatpush2.msra.mxu0 0.0
        %6667 = vmatprep.subr.mxu0 0.0
        %6668 = vmatpush2.msra.mxu0 0.0
        %6669 = vmatprep.subr.mxu0 0.0
        %6670 = vmatpush2.msra.mxu0 0.0
        %6671 = vmatprep.subr.mxu0 0.0
        %6672 = vmatpush2.msra.mxu0 0.0
        %6673 = vmatprep.subr.mxu0 0.0
        %6674 = vmatpush2.msra.mxu0 0.0
        %6675 = vmatprep.subr.mxu0 0.0
        %6676 = vmatpush2.msra.mxu0 0.0
        %6677 = vmatprep.subr.mxu0 0.0
        %6678 = vmatpush2.msra.mxu0 0.0
        %6679 = vmatprep.subr.mxu0 0.0
        %6680 = vmatpush2.msra.mxu0 0.0
        %6681 = vmatprep.mubr.f32.mxu0 0.0
        %6682 = vmatmul.mubr.f32.gmra.mxu0 %v6510
        %v6683 = vpop.f32.mrf.mxu0
        %v6684 = vadd.f32 0.0, %v6683
        %v6685 = vpop.f32.mrf.mxu0
        %6686 = vmatprep.mubr.f32.mxu0 0.0
        %6687 = vmatmul.mubr.f32.gmra.mxu0 %v6513
        %v6688 = vpop.f32.mrf.mxu0
        %v6689 = vadd.f32 0.0, %v6688
        %v6690 = vpop.f32.mrf.mxu0
        %6691 = vmatprep.mubr.f32.mxu0 0.0
        %6692 = vmatmul.mubr.f32.gmra.mxu0 %v6516
        %v6693 = vpop.f32.mrf.mxu0
        %v6694 = vadd.f32 0.0, %v6693
        %v6695 = vpop.f32.mrf.mxu0
        %6696 = vmatprep.mubr.f32.mxu0 0.0
        %6697 = vmatmul.mubr.f32.gmra.mxu0 %v6519
        %v6698 = vpop.f32.mrf.mxu0
        %v6699 = vadd.f32 0.0, %v6698
        %v6700 = vpop.f32.mrf.mxu0
        %6701 = vmatprep.mubr.f32.mxu0 0.0
        %6702 = vmatmul.mubr.f32.gmra.mxu0 %v6522
        %v6703 = vpop.f32.mrf.mxu0
        %v6704 = vadd.f32 0.0, %v6703
        %v6705 = vpop.f32.mrf.mxu0
        %6706 = vmatprep.mubr.f32.mxu0 0.0
        %6707 = vmatmul.mubr.f32.gmra.mxu0 %v6525
        %v6708 = vpop.f32.mrf.mxu0
        %v6709 = vadd.f32 0.0, %v6708
        %v6710 = vpop.f32.mrf.mxu0
        %6711 = vmatprep.mubr.f32.mxu0 0.0
        %6712 = vmatmul.mubr.f32.gmra.mxu0 %v6528
        %v6713 = vpop.f32.mrf.mxu0
        %v6714 = vadd.f32 0.0, %v6713
        %v6715 = vpop.f32.mrf.mxu0
        %6716 = vmatprep.mubr.f32.mxu0 0.0
        %6717 = vmatmul.mubr.f32.gmra.mxu0 %v6531
        %v6718 = vpop.f32.mrf.mxu0
        %v6719 = vadd.f32 0.0, %v6718
        %v6720 = vpop.f32.mrf.mxu0
        %6721 = vmatprep.mubr.f32.mxu0 0.0
        %6722 = vmatmul.mubr.f32.gmra.mxu0 %v6534
        %v6723 = vpop.f32.mrf.mxu0
        %v6724 = vadd.f32 0.0, %v6723
        %v6725 = vpop.f32.mrf.mxu0
        %6726 = vmatprep.mubr.f32.mxu0 0.0
        %6727 = vmatmul.mubr.f32.gmra.mxu0 %v6537
        %v6728 = vpop.f32.mrf.mxu0
        %v6729 = vadd.f32 0.0, %v6728
        %v6730 = vpop.f32.mrf.mxu0
        %6731 = vmatprep.mubr.f32.mxu0 0.0
        %6732 = vmatmul.mubr.f32.gmra.mxu0 %v6540
        %v6733 = vpop.f32.mrf.mxu0
        %v6734 = vadd.f32 0.0, %v6733
        %v6735 = vpop.f32.mrf.mxu0
        %6736 = vmatprep.mubr.f32.mxu0 0.0
        %6737 = vmatmul.mubr.f32.gmra.mxu0 %v6543
        %v6738 = vpop.f32.mrf.mxu0
        %v6739 = vadd.f32 0.0, %v6738
        %v6740 = vpop.f32.mrf.mxu0
        %6741 = vmatprep.mubr.f32.mxu0 0.0
        %6742 = vmatmul.mubr.f32.gmra.mxu0 %v6546
        %v6743 = vpop.f32.mrf.mxu0
        %v6744 = vadd.f32 0.0, %v6743
        %v6745 = vpop.f32.mrf.mxu0
        %6746 = vmatprep.mubr.f32.mxu0 0.0
        %6747 = vmatmul.mubr.f32.gmra.mxu0 %v6549
        %v6748 = vpop.f32.mrf.mxu0
        %v6749 = vadd.f32 0.0, %v6748
        %v6750 = vpop.f32.mrf.mxu0
        %6751 = vmatprep.mubr.f32.mxu0 0.0
        %6752 = vmatmul.mubr.f32.gmra.mxu0 %v6552
        %v6753 = vpop.f32.mrf.mxu0
        %v6754 = vadd.f32 0.0, %v6753
        %v6755 = vpop.f32.mrf.mxu0
        %6756 = vmatprep.mubr.f32.mxu0 0.0
        %6757 = vmatmul.mubr.f32.gmra.mxu0 %v6555
        %v6758 = vpop.f32.mrf.mxu0
        %v6759 = vadd.f32 0.0, %v6758
        %v6760 = vpop.f32.mrf.mxu0
        %6761 = vmatprep.mubr.f32.mxu0 0.0
        %6762 = vmatmul.mubr.f32.gmra.mxu0 %v6558
        %v6763 = vpop.f32.mrf.mxu0
        %v6764 = vadd.f32 0.0, %v6763
        %v6765 = vpop.f32.mrf.mxu0
        %6766 = vmatprep.mubr.f32.mxu0 0.0
        %6767 = vmatmul.mubr.f32.gmra.mxu0 %v6561
        %v6768 = vpop.f32.mrf.mxu0
        %v6769 = vadd.f32 0.0, %v6768
        %v6770 = vpop.f32.mrf.mxu0
        %6771 = vmatprep.mubr.f32.mxu0 0.0
        %6772 = vmatmul.mubr.f32.gmra.mxu0 %v6564
        %v6773 = vpop.f32.mrf.mxu0
        %v6774 = vadd.f32 0.0, %v6773
        %v6775 = vpop.f32.mrf.mxu0
        %6776 = vmatprep.mubr.f32.mxu0 0.0
        %6777 = vmatmul.mubr.f32.gmra.mxu0 %v6567
        %v6778 = vpop.f32.mrf.mxu0
        %v6779 = vadd.f32 0.0, %v6778
        %v6780 = vpop.f32.mrf.mxu0
        %6781 = vmatprep.mubr.f32.mxu0 0.0
        %6782 = vmatmul.mubr.f32.gmra.mxu0 %v6570
        %v6783 = vpop.f32.mrf.mxu0
        %v6784 = vadd.f32 0.0, %v6783
        %v6785 = vpop.f32.mrf.mxu0
        %6786 = vmatprep.mubr.f32.mxu0 0.0
        %6787 = vmatmul.mubr.f32.gmra.mxu0 %v6573
        %v6788 = vpop.f32.mrf.mxu0
        %v6789 = vadd.f32 0.0, %v6788
        %v6790 = vpop.f32.mrf.mxu0
        %6791 = vmatprep.mubr.f32.mxu0 0.0
        %6792 = vmatmul.mubr.f32.gmra.mxu0 %v6576
        %v6793 = vpop.f32.mrf.mxu0
        %v6794 = vadd.f32 0.0, %v6793
        %v6795 = vpop.f32.mrf.mxu0
        %6796 = vmatprep.mubr.f32.mxu0 0.0
        %6797 = vmatmul.mubr.f32.gmra.mxu0 %v6579
        %v6798 = vpop.f32.mrf.mxu0
        %v6799 = vadd.f32 0.0, %v6798
        %v6800 = vpop.f32.mrf.mxu0
        %6801 = vmatprep.mubr.f32.mxu0 0.0
        %6802 = vmatmul.mubr.f32.gmra.mxu0 %v6582
        %v6803 = vpop.f32.mrf.mxu0
        %v6804 = vadd.f32 0.0, %v6803
        %v6805 = vpop.f32.mrf.mxu0
        %6806 = vmatprep.mubr.f32.mxu0 0.0
        %6807 = vmatmul.mubr.f32.gmra.mxu0 %v6585
        %v6808 = vpop.f32.mrf.mxu0
        %v6809 = vadd.f32 0.0, %v6808
        %v6810 = vpop.f32.mrf.mxu0
        %6811 = vmatprep.mubr.f32.mxu0 0.0
        %6812 = vmatmul.mubr.f32.gmra.mxu0 %v6588
        %v6813 = vpop.f32.mrf.mxu0
        %v6814 = vadd.f32 0.0, %v6813
        %v6815 = vpop.f32.mrf.mxu0
        %6816 = vmatprep.mubr.f32.mxu0 0.0
        %6817 = vmatmul.mubr.f32.gmra.mxu0 %v6591
        %v6818 = vpop.f32.mrf.mxu0
        %v6819 = vadd.f32 0.0, %v6818
        %v6820 = vpop.f32.mrf.mxu0
        %6821 = vmatprep.mubr.f32.mxu0 0.0
        %6822 = vmatmul.mubr.f32.gmra.mxu0 %v6594
        %v6823 = vpop.f32.mrf.mxu0
        %v6824 = vadd.f32 0.0, %v6823
        %v6825 = vpop.f32.mrf.mxu0
        %6826 = vmatprep.mubr.f32.mxu0 0.0
        %6827 = vmatmul.mubr.f32.gmra.mxu0 %v6597
        %v6828 = vpop.f32.mrf.mxu0
        %v6829 = vadd.f32 0.0, %v6828
        %v6830 = vpop.f32.mrf.mxu0
        %6831 = vmatprep.mubr.f32.mxu0 0.0
        %6832 = vmatmul.mubr.f32.gmra.mxu0 %v6600
        %v6833 = vpop.f32.mrf.mxu0
        %v6834 = vadd.f32 0.0, %v6833
        %v6835 = vpop.f32.mrf.mxu0
        %6836 = vmatprep.mubr.f32.mxu0 0.0
        %6837 = vmatmul.mubr.f32.gmra.mxu0 %v6603
        %v6838 = vpop.f32.mrf.mxu0
        %v6839 = vadd.f32 0.0, %v6838
        %v6840 = vpop.f32.mrf.mxu0
        %6841 = vmatprep.mubr.f32.mxu0 0.0
        %6842 = vmatmul.mubr.f32.gmra.mxu0 %v6606
        %v6843 = vpop.f32.mrf.mxu0
        %v6844 = vadd.f32 0.0, %v6843
        %v6845 = vpop.f32.mrf.mxu0
        %6846 = vmatprep.mubr.f32.mxu0 0.0
        %6847 = vmatmul.mubr.f32.gmra.mxu0 %v6609
        %v6848 = vpop.f32.mrf.mxu0
        %v6849 = vadd.f32 0.0, %v6848
        %v6850 = vpop.f32.mrf.mxu0
        %6851 = vmatprep.mubr.f32.mxu0 0.0
        %6852 = vmatmul.mubr.f32.gmra.mxu0 %v6612
        %v6853 = vpop.f32.mrf.mxu0
        %v6854 = vadd.f32 0.0, %v6853
        %v6855 = vpop.f32.mrf.mxu0
        %6856 = vmatprep.mubr.f32.mxu0 0.0
        %6857 = vmatmul.mubr.f32.gmra.mxu0 %v6615
        %v6858 = vpop.f32.mrf.mxu0
        %v6859 = vadd.f32 0.0, %v6858
        %v6860 = vpop.f32.mrf.mxu0
        %6861 = vdwg.mxu0
        %v6862 = vadd.f32 %v6432, %v6684
        %v6863 = vadd.f32 %v6433, %v6689
        %v6864 = vadd.f32 %v6434, %v6694
        %v6865 = vadd.f32 %v6435, %v6699
        %v6866 = vadd.f32 %v6436, %v6704
        %v6867 = vadd.f32 %v6437, %v6709
        %v6868 = vadd.f32 %v6438, %v6714
        %v6869 = vadd.f32 %v6439, %v6719
        %v6870 = vadd.f32 %v6440, %v6724
        %v6871 = vadd.f32 %v6441, %v6729
        %v6872 = vadd.f32 %v6442, %v6734
        %v6873 = vadd.f32 %v6443, %v6739
        %v6874 = vadd.f32 %v6444, %v6744
        %v6875 = vadd.f32 %v6445, %v6749
        %v6876 = vadd.f32 %v6446, %v6754
        %v6877 = vadd.f32 %v6447, %v6759
        %v6878 = vadd.f32 %v6448, %v6764
        %v6879 = vadd.f32 %v6449, %v6769
        %v6880 = vadd.f32 %v6450, %v6774
        %v6881 = vadd.f32 %v6451, %v6779
        %v6882 = vadd.f32 %v6452, %v6784
        %v6883 = vadd.f32 %v6453, %v6789
        %v6884 = vadd.f32 %v6454, %v6794
        %v6885 = vadd.f32 %v6455, %v6799
        %v6886 = vadd.f32 %v6456, %v6804
        %v6887 = vadd.f32 %v6457, %v6809
        %v6888 = vadd.f32 %v6458, %v6814
        %v6889 = vadd.f32 %v6459, %v6819
        %v6890 = vadd.f32 %v6460, %v6824
        %v6891 = vadd.f32 %v6461, %v6829
        %v6892 = vadd.f32 %v6462, %v6834
        %v6893 = vadd.f32 %v6463, %v6839
        %v6894 = vadd.f32 %v6464, %v6844
        %v6895 = vadd.f32 %v6465, %v6849
        %v6896 = vadd.f32 %v6466, %v6854
        %v6897 = vadd.f32 %v6467, %v6859
        %v6898 = vld [vmem:[#allocation3 + $0x19] sm:$0xff]
        %v6899 = vld [vmem:[#allocation3 + $0x21] sm:$0xff]
        %v6900 = vld [vmem:[#allocation3 + $0x29] sm:$0xff]
        %v6901 = vld [vmem:[#allocation3 + $0x31] sm:$0xff]
        %v6902 = vld [vmem:[#allocation3 + $0x39] sm:$0xff]
        %v6903 = vld [vmem:[#allocation3 + $0x41] sm:$0xff]
        %v6904 = vld [vmem:[#allocation3 + $0x49] sm:$0xff]
        %v6905 = vld [vmem:[#allocation3 + $0x51] sm:$0xff]
        %v6906 = vld [vmem:[#allocation3 + $0x59] sm:$0xff]
        %v6907 = vld [vmem:[#allocation3 + $0x61] sm:$0xff]
        %v6908 = vld [vmem:[#allocation3 + $0x69] sm:$0xff]
        %v6909 = vld [vmem:[#allocation3 + $0x71] sm:$0xff]
        %v6910 = vld [vmem:[#allocation3 + $0x79] sm:$0xff]
        %v6911 = vld [vmem:[#allocation3 + $0x81] sm:$0xff]
        %v6912 = vld [vmem:[#allocation3 + $0x89] sm:$0xff]
        %v6913 = vld [vmem:[#allocation3 + $0x91] sm:$0xff]
        %v6914 = vld [vmem:[#allocation3 + $0x99] sm:$0xff]
        %v6915 = vld [vmem:[#allocation3 + $0xa1] sm:$0xff]
        %v6916 = vld [vmem:[#allocation3 + $0xa9] sm:$0xff]
        %v6917 = vld [vmem:[#allocation3 + $0xb1] sm:$0xff]
        %v6918 = vld [vmem:[#allocation3 + $0xb9] sm:$0xff]
        %v6919 = vld [vmem:[#allocation3 + $0xc1] sm:$0xff]
        %v6920 = vld [vmem:[#allocation3 + $0xc9] sm:$0xff]
        %v6921 = vld [vmem:[#allocation3 + $0xd1] sm:$0xff]
        %v6922 = vld [vmem:[#allocation3 + $0xd9] sm:$0xff]
        %v6923 = vld [vmem:[#allocation3 + $0xe1] sm:$0xff]
        %v6924 = vld [vmem:[#allocation3 + $0xe9] sm:$0xff]
        %v6925 = vld [vmem:[#allocation3 + $0xf1] sm:$0xff]
        %v6926 = vld [vmem:[#allocation3 + $0xf9] sm:$0xff]
        %v6927 = vld [vmem:[#allocation3 + $0x101] sm:$0xff]
        %v6928 = vld [vmem:[#allocation3 + $0x109] sm:$0xff]
        %v6929 = vld [vmem:[#allocation3 + $0x111] sm:$0xff]
        %v6930 = vld [vmem:[#allocation3 + $0x119] sm:$0xff]
        %v6931 = vld [vmem:[#allocation3 + $0x121] sm:$0xff]
        %v6932 = vld [vmem:[#allocation3 + $0x129] sm:$0xff]
        %v6933 = vld [vmem:[#allocation3 + $0x131] sm:$0xff]
        %s6934 = scalar_lea.vmem %s4, 160
        %v6935 = vld [vmem:[%s6934] sm:$0xff]
        %v6936 = vld [vmem:[%s6934 + $0x8] sm:$0xff]
        %v6937 = vld [vmem:[%s6934 + $0x10] sm:$0xff]
        %v6938 = vld [vmem:[%s6934 + $0x18] sm:$0xff]
        %v6940 = vsel %vm4784, %v6898, 0
        %v6943 = vsel %vm4784, %v6899, 0
        %v6946 = vsel %vm4784, %v6900, 0
        %v6949 = vsel %vm4784, %v6901, 0
        %v6952 = vsel %vm4784, %v6902, 0
        %v6955 = vsel %vm4784, %v6903, 0
        %v6958 = vsel %vm4784, %v6904, 0
        %v6961 = vsel %vm4784, %v6905, 0
        %v6964 = vsel %vm4784, %v6906, 0
        %v6967 = vsel %vm4784, %v6907, 0
        %v6970 = vsel %vm4784, %v6908, 0
        %v6973 = vsel %vm4784, %v6909, 0
        %v6976 = vsel %vm4784, %v6910, 0
        %v6979 = vsel %vm4784, %v6911, 0
        %v6982 = vsel %vm4784, %v6912, 0
        %v6985 = vsel %vm4784, %v6913, 0
        %v6988 = vsel %vm4784, %v6914, 0
        %v6991 = vsel %vm4784, %v6915, 0
        %v6994 = vsel %vm4784, %v6916, 0
        %v6997 = vsel %vm4784, %v6917, 0
        %v7000 = vsel %vm4784, %v6918, 0
        %v7003 = vsel %vm4784, %v6919, 0
        %v7006 = vsel %vm4784, %v6920, 0
        %v7009 = vsel %vm4784, %v6921, 0
        %v7012 = vsel %vm4784, %v6922, 0
        %v7015 = vsel %vm4784, %v6923, 0
        %v7018 = vsel %vm4784, %v6924, 0
        %v7021 = vsel %vm4784, %v6925, 0
        %v7024 = vsel %vm4784, %v6926, 0
        %v7027 = vsel %vm4784, %v6927, 0
        %v7030 = vsel %vm4784, %v6928, 0
        %v7033 = vsel %vm4784, %v6929, 0
        %v7036 = vsel %vm4784, %v6930, 0
        %v7039 = vsel %vm4784, %v6931, 0
        %v7042 = vsel %vm4784, %v6932, 0
        %v7045 = vsel %vm4784, %v6933, 0
        %7047 = vmatprep.subr.mxu0 0.0
        %7048 = vmatpush1.msra.mxu0 0.0
        %7049 = vmatprep.subr.mxu0 0.0
        %7050 = vmatpush1.msra.mxu0 0.0
        %7051 = vmatprep.subr.mxu0 0.0
        %7052 = vmatpush1.msra.mxu0 0.0
        %7053 = vmatprep.subr.mxu0 0.0
        %7054 = vmatpush1.msra.mxu0 0.0
        %7055 = vmatprep.subr.mxu0 0.0
        %7056 = vmatpush1.msra.mxu0 0.0
        %7057 = vmatprep.subr.mxu0 0.0
        %7058 = vmatpush1.msra.mxu0 0.0
        %7059 = vmatprep.subr.mxu0 0.0
        %7060 = vmatpush1.msra.mxu0 0.0
        %7061 = vmatprep.subr.mxu0 0.0
        %7062 = vmatpush1.msra.mxu0 0.0
        %7063 = vmatprep.subr.mxu0 0.0
        %7064 = vmatpush1.msra.mxu0 0.0
        %7065 = vmatprep.subr.mxu0 0.0
        %7066 = vmatpush1.msra.mxu0 0.0
        %7067 = vmatprep.subr.mxu0 0.0
        %7068 = vmatpush1.msra.mxu0 0.0
        %7069 = vmatprep.subr.mxu0 0.0
        %7070 = vmatpush1.msra.mxu0 0.0
        %7071 = vmatprep.subr.mxu0 0.0
        %7072 = vmatpush1.msra.mxu0 %v6938
        %7073 = vmatprep.subr.mxu0 0.0
        %7074 = vmatpush1.msra.mxu0 %v6937
        %7075 = vmatprep.subr.mxu0 0.0
        %7076 = vmatpush1.msra.mxu0 %v6936
        %7077 = vmatprep.subr.mxu0 0.0
        %7078 = vmatpush1.msra.mxu0 %v6935
        %7079 = vmatprep.subr.mxu0 0.0
        %7080 = vmatpush2.msra.mxu0 0.0
        %7081 = vmatprep.subr.mxu0 0.0
        %7082 = vmatpush2.msra.mxu0 0.0
        %7083 = vmatprep.subr.mxu0 0.0
        %7084 = vmatpush2.msra.mxu0 0.0
        %7085 = vmatprep.subr.mxu0 0.0
        %7086 = vmatpush2.msra.mxu0 0.0
        %7087 = vmatprep.subr.mxu0 0.0
        %7088 = vmatpush2.msra.mxu0 0.0
        %7089 = vmatprep.subr.mxu0 0.0
        %7090 = vmatpush2.msra.mxu0 0.0
        %7091 = vmatprep.subr.mxu0 0.0
        %7092 = vmatpush2.msra.mxu0 0.0
        %7093 = vmatprep.subr.mxu0 0.0
        %7094 = vmatpush2.msra.mxu0 0.0
        %7095 = vmatprep.subr.mxu0 0.0
        %7096 = vmatpush2.msra.mxu0 0.0
        %7097 = vmatprep.subr.mxu0 0.0
        %7098 = vmatpush2.msra.mxu0 0.0
        %7099 = vmatprep.subr.mxu0 0.0
        %7100 = vmatpush2.msra.mxu0 0.0
        %7101 = vmatprep.subr.mxu0 0.0
        %7102 = vmatpush2.msra.mxu0 0.0
        %7103 = vmatprep.subr.mxu0 0.0
        %7104 = vmatpush2.msra.mxu0 0.0
        %7105 = vmatprep.subr.mxu0 0.0
        %7106 = vmatpush2.msra.mxu0 0.0
        %7107 = vmatprep.subr.mxu0 0.0
        %7108 = vmatpush2.msra.mxu0 0.0
        %7109 = vmatprep.subr.mxu0 0.0
        %7110 = vmatpush2.msra.mxu0 0.0
        %7111 = vmatprep.mubr.f32.mxu0 0.0
        %7112 = vmatmul.mubr.f32.gmra.mxu0 %v6940
        %v7113 = vpop.f32.mrf.mxu0
        %v7114 = vadd.f32 0.0, %v7113
        %v7115 = vpop.f32.mrf.mxu0
        %7116 = vmatprep.mubr.f32.mxu0 0.0
        %7117 = vmatmul.mubr.f32.gmra.mxu0 %v6943
        %v7118 = vpop.f32.mrf.mxu0
        %v7119 = vadd.f32 0.0, %v7118
        %v7120 = vpop.f32.mrf.mxu0
        %7121 = vmatprep.mubr.f32.mxu0 0.0
        %7122 = vmatmul.mubr.f32.gmra.mxu0 %v6946
        %v7123 = vpop.f32.mrf.mxu0
        %v7124 = vadd.f32 0.0, %v7123
        %v7125 = vpop.f32.mrf.mxu0
        %7126 = vmatprep.mubr.f32.mxu0 0.0
        %7127 = vmatmul.mubr.f32.gmra.mxu0 %v6949
        %v7128 = vpop.f32.mrf.mxu0
        %v7129 = vadd.f32 0.0, %v7128
        %v7130 = vpop.f32.mrf.mxu0
        %7131 = vmatprep.mubr.f32.mxu0 0.0
        %7132 = vmatmul.mubr.f32.gmra.mxu0 %v6952
        %v7133 = vpop.f32.mrf.mxu0
        %v7134 = vadd.f32 0.0, %v7133
        %v7135 = vpop.f32.mrf.mxu0
        %7136 = vmatprep.mubr.f32.mxu0 0.0
        %7137 = vmatmul.mubr.f32.gmra.mxu0 %v6955
        %v7138 = vpop.f32.mrf.mxu0
        %v7139 = vadd.f32 0.0, %v7138
        %v7140 = vpop.f32.mrf.mxu0
        %7141 = vmatprep.mubr.f32.mxu0 0.0
        %7142 = vmatmul.mubr.f32.gmra.mxu0 %v6958
        %v7143 = vpop.f32.mrf.mxu0
        %v7144 = vadd.f32 0.0, %v7143
        %v7145 = vpop.f32.mrf.mxu0
        %7146 = vmatprep.mubr.f32.mxu0 0.0
        %7147 = vmatmul.mubr.f32.gmra.mxu0 %v6961
        %v7148 = vpop.f32.mrf.mxu0
        %v7149 = vadd.f32 0.0, %v7148
        %v7150 = vpop.f32.mrf.mxu0
        %7151 = vmatprep.mubr.f32.mxu0 0.0
        %7152 = vmatmul.mubr.f32.gmra.mxu0 %v6964
        %v7153 = vpop.f32.mrf.mxu0
        %v7154 = vadd.f32 0.0, %v7153
        %v7155 = vpop.f32.mrf.mxu0
        %7156 = vmatprep.mubr.f32.mxu0 0.0
        %7157 = vmatmul.mubr.f32.gmra.mxu0 %v6967
        %v7158 = vpop.f32.mrf.mxu0
        %v7159 = vadd.f32 0.0, %v7158
        %v7160 = vpop.f32.mrf.mxu0
        %7161 = vmatprep.mubr.f32.mxu0 0.0
        %7162 = vmatmul.mubr.f32.gmra.mxu0 %v6970
        %v7163 = vpop.f32.mrf.mxu0
        %v7164 = vadd.f32 0.0, %v7163
        %v7165 = vpop.f32.mrf.mxu0
        %7166 = vmatprep.mubr.f32.mxu0 0.0
        %7167 = vmatmul.mubr.f32.gmra.mxu0 %v6973
        %v7168 = vpop.f32.mrf.mxu0
        %v7169 = vadd.f32 0.0, %v7168
        %v7170 = vpop.f32.mrf.mxu0
        %7171 = vmatprep.mubr.f32.mxu0 0.0
        %7172 = vmatmul.mubr.f32.gmra.mxu0 %v6976
        %v7173 = vpop.f32.mrf.mxu0
        %v7174 = vadd.f32 0.0, %v7173
        %v7175 = vpop.f32.mrf.mxu0
        %7176 = vmatprep.mubr.f32.mxu0 0.0
        %7177 = vmatmul.mubr.f32.gmra.mxu0 %v6979
        %v7178 = vpop.f32.mrf.mxu0
        %v7179 = vadd.f32 0.0, %v7178
        %v7180 = vpop.f32.mrf.mxu0
        %7181 = vmatprep.mubr.f32.mxu0 0.0
        %7182 = vmatmul.mubr.f32.gmra.mxu0 %v6982
        %v7183 = vpop.f32.mrf.mxu0
        %v7184 = vadd.f32 0.0, %v7183
        %v7185 = vpop.f32.mrf.mxu0
        %7186 = vmatprep.mubr.f32.mxu0 0.0
        %7187 = vmatmul.mubr.f32.gmra.mxu0 %v6985
        %v7188 = vpop.f32.mrf.mxu0
        %v7189 = vadd.f32 0.0, %v7188
        %v7190 = vpop.f32.mrf.mxu0
        %7191 = vmatprep.mubr.f32.mxu0 0.0
        %7192 = vmatmul.mubr.f32.gmra.mxu0 %v6988
        %v7193 = vpop.f32.mrf.mxu0
        %v7194 = vadd.f32 0.0, %v7193
        %v7195 = vpop.f32.mrf.mxu0
        %7196 = vmatprep.mubr.f32.mxu0 0.0
        %7197 = vmatmul.mubr.f32.gmra.mxu0 %v6991
        %v7198 = vpop.f32.mrf.mxu0
        %v7199 = vadd.f32 0.0, %v7198
        %v7200 = vpop.f32.mrf.mxu0
        %7201 = vmatprep.mubr.f32.mxu0 0.0
        %7202 = vmatmul.mubr.f32.gmra.mxu0 %v6994
        %v7203 = vpop.f32.mrf.mxu0
        %v7204 = vadd.f32 0.0, %v7203
        %v7205 = vpop.f32.mrf.mxu0
        %7206 = vmatprep.mubr.f32.mxu0 0.0
        %7207 = vmatmul.mubr.f32.gmra.mxu0 %v6997
        %v7208 = vpop.f32.mrf.mxu0
        %v7209 = vadd.f32 0.0, %v7208
        %v7210 = vpop.f32.mrf.mxu0
        %7211 = vmatprep.mubr.f32.mxu0 0.0
        %7212 = vmatmul.mubr.f32.gmra.mxu0 %v7000
        %v7213 = vpop.f32.mrf.mxu0
        %v7214 = vadd.f32 0.0, %v7213
        %v7215 = vpop.f32.mrf.mxu0
        %7216 = vmatprep.mubr.f32.mxu0 0.0
        %7217 = vmatmul.mubr.f32.gmra.mxu0 %v7003
        %v7218 = vpop.f32.mrf.mxu0
        %v7219 = vadd.f32 0.0, %v7218
        %v7220 = vpop.f32.mrf.mxu0
        %7221 = vmatprep.mubr.f32.mxu0 0.0
        %7222 = vmatmul.mubr.f32.gmra.mxu0 %v7006
        %v7223 = vpop.f32.mrf.mxu0
        %v7224 = vadd.f32 0.0, %v7223
        %v7225 = vpop.f32.mrf.mxu0
        %7226 = vmatprep.mubr.f32.mxu0 0.0
        %7227 = vmatmul.mubr.f32.gmra.mxu0 %v7009
        %v7228 = vpop.f32.mrf.mxu0
        %v7229 = vadd.f32 0.0, %v7228
        %v7230 = vpop.f32.mrf.mxu0
        %7231 = vmatprep.mubr.f32.mxu0 0.0
        %7232 = vmatmul.mubr.f32.gmra.mxu0 %v7012
        %v7233 = vpop.f32.mrf.mxu0
        %v7234 = vadd.f32 0.0, %v7233
        %v7235 = vpop.f32.mrf.mxu0
        %7236 = vmatprep.mubr.f32.mxu0 0.0
        %7237 = vmatmul.mubr.f32.gmra.mxu0 %v7015
        %v7238 = vpop.f32.mrf.mxu0
        %v7239 = vadd.f32 0.0, %v7238
        %v7240 = vpop.f32.mrf.mxu0
        %7241 = vmatprep.mubr.f32.mxu0 0.0
        %7242 = vmatmul.mubr.f32.gmra.mxu0 %v7018
        %v7243 = vpop.f32.mrf.mxu0
        %v7244 = vadd.f32 0.0, %v7243
        %v7245 = vpop.f32.mrf.mxu0
        %7246 = vmatprep.mubr.f32.mxu0 0.0
        %7247 = vmatmul.mubr.f32.gmra.mxu0 %v7021
        %v7248 = vpop.f32.mrf.mxu0
        %v7249 = vadd.f32 0.0, %v7248
        %v7250 = vpop.f32.mrf.mxu0
        %7251 = vmatprep.mubr.f32.mxu0 0.0
        %7252 = vmatmul.mubr.f32.gmra.mxu0 %v7024
        %v7253 = vpop.f32.mrf.mxu0
        %v7254 = vadd.f32 0.0, %v7253
        %v7255 = vpop.f32.mrf.mxu0
        %7256 = vmatprep.mubr.f32.mxu0 0.0
        %7257 = vmatmul.mubr.f32.gmra.mxu0 %v7027
        %v7258 = vpop.f32.mrf.mxu0
        %v7259 = vadd.f32 0.0, %v7258
        %v7260 = vpop.f32.mrf.mxu0
        %7261 = vmatprep.mubr.f32.mxu0 0.0
        %7262 = vmatmul.mubr.f32.gmra.mxu0 %v7030
        %v7263 = vpop.f32.mrf.mxu0
        %v7264 = vadd.f32 0.0, %v7263
        %v7265 = vpop.f32.mrf.mxu0
        %7266 = vmatprep.mubr.f32.mxu0 0.0
        %7267 = vmatmul.mubr.f32.gmra.mxu0 %v7033
        %v7268 = vpop.f32.mrf.mxu0
        %v7269 = vadd.f32 0.0, %v7268
        %v7270 = vpop.f32.mrf.mxu0
        %7271 = vmatprep.mubr.f32.mxu0 0.0
        %7272 = vmatmul.mubr.f32.gmra.mxu0 %v7036
        %v7273 = vpop.f32.mrf.mxu0
        %v7274 = vadd.f32 0.0, %v7273
        %v7275 = vpop.f32.mrf.mxu0
        %7276 = vmatprep.mubr.f32.mxu0 0.0
        %7277 = vmatmul.mubr.f32.gmra.mxu0 %v7039
        %v7278 = vpop.f32.mrf.mxu0
        %v7279 = vadd.f32 0.0, %v7278
        %v7280 = vpop.f32.mrf.mxu0
        %7281 = vmatprep.mubr.f32.mxu0 0.0
        %7282 = vmatmul.mubr.f32.gmra.mxu0 %v7042
        %v7283 = vpop.f32.mrf.mxu0
        %v7284 = vadd.f32 0.0, %v7283
        %v7285 = vpop.f32.mrf.mxu0
        %7286 = vmatprep.mubr.f32.mxu0 0.0
        %7287 = vmatmul.mubr.f32.gmra.mxu0 %v7045
        %v7288 = vpop.f32.mrf.mxu0
        %v7289 = vadd.f32 0.0, %v7288
        %v7290 = vpop.f32.mrf.mxu0
        %7291 = vdwg.mxu0
        %v7292 = vadd.f32 %v6862, %v7114
        %v7293 = vadd.f32 %v6863, %v7119
        %v7294 = vadd.f32 %v6864, %v7124
        %v7295 = vadd.f32 %v6865, %v7129
        %v7296 = vadd.f32 %v6866, %v7134
        %v7297 = vadd.f32 %v6867, %v7139
        %v7298 = vadd.f32 %v6868, %v7144
        %v7299 = vadd.f32 %v6869, %v7149
        %v7300 = vadd.f32 %v6870, %v7154
        %v7301 = vadd.f32 %v6871, %v7159
        %v7302 = vadd.f32 %v6872, %v7164
        %v7303 = vadd.f32 %v6873, %v7169
        %v7304 = vadd.f32 %v6874, %v7174
        %v7305 = vadd.f32 %v6875, %v7179
        %v7306 = vadd.f32 %v6876, %v7184
        %v7307 = vadd.f32 %v6877, %v7189
        %v7308 = vadd.f32 %v6878, %v7194
        %v7309 = vadd.f32 %v6879, %v7199
        %v7310 = vadd.f32 %v6880, %v7204
        %v7311 = vadd.f32 %v6881, %v7209
        %v7312 = vadd.f32 %v6882, %v7214
        %v7313 = vadd.f32 %v6883, %v7219
        %v7314 = vadd.f32 %v6884, %v7224
        %v7315 = vadd.f32 %v6885, %v7229
        %v7316 = vadd.f32 %v6886, %v7234
        %v7317 = vadd.f32 %v6887, %v7239
        %v7318 = vadd.f32 %v6888, %v7244
        %v7319 = vadd.f32 %v6889, %v7249
        %v7320 = vadd.f32 %v6890, %v7254
        %v7321 = vadd.f32 %v6891, %v7259
        %v7322 = vadd.f32 %v6892, %v7264
        %v7323 = vadd.f32 %v6893, %v7269
        %v7324 = vadd.f32 %v6894, %v7274
        %v7325 = vadd.f32 %v6895, %v7279
        %v7326 = vadd.f32 %v6896, %v7284
        %v7327 = vadd.f32 %v6897, %v7289
        %v7328 = vld [vmem:[#allocation3 + $0x29] sm:$0xff]
        %v7329 = vld [vmem:[#allocation3 + $0x31] sm:$0xff]
        %v7330 = vld [vmem:[#allocation3 + $0x39] sm:$0xff]
        %v7331 = vld [vmem:[#allocation3 + $0x41] sm:$0xff]
        %v7332 = vld [vmem:[#allocation3 + $0x49] sm:$0xff]
        %v7333 = vld [vmem:[#allocation3 + $0x51] sm:$0xff]
        %v7334 = vld [vmem:[#allocation3 + $0x59] sm:$0xff]
        %v7335 = vld [vmem:[#allocation3 + $0x61] sm:$0xff]
        %v7336 = vld [vmem:[#allocation3 + $0x69] sm:$0xff]
        %v7337 = vld [vmem:[#allocation3 + $0x71] sm:$0xff]
        %v7338 = vld [vmem:[#allocation3 + $0x79] sm:$0xff]
        %v7339 = vld [vmem:[#allocation3 + $0x81] sm:$0xff]
        %v7340 = vld [vmem:[#allocation3 + $0x89] sm:$0xff]
        %v7341 = vld [vmem:[#allocation3 + $0x91] sm:$0xff]
        %v7342 = vld [vmem:[#allocation3 + $0x99] sm:$0xff]
        %v7343 = vld [vmem:[#allocation3 + $0xa1] sm:$0xff]
        %v7344 = vld [vmem:[#allocation3 + $0xa9] sm:$0xff]
        %v7345 = vld [vmem:[#allocation3 + $0xb1] sm:$0xff]
        %v7346 = vld [vmem:[#allocation3 + $0xb9] sm:$0xff]
        %v7347 = vld [vmem:[#allocation3 + $0xc1] sm:$0xff]
        %v7348 = vld [vmem:[#allocation3 + $0xc9] sm:$0xff]
        %v7349 = vld [vmem:[#allocation3 + $0xd1] sm:$0xff]
        %v7350 = vld [vmem:[#allocation3 + $0xd9] sm:$0xff]
        %v7351 = vld [vmem:[#allocation3 + $0xe1] sm:$0xff]
        %v7352 = vld [vmem:[#allocation3 + $0xe9] sm:$0xff]
        %v7353 = vld [vmem:[#allocation3 + $0xf1] sm:$0xff]
        %v7354 = vld [vmem:[#allocation3 + $0xf9] sm:$0xff]
        %v7355 = vld [vmem:[#allocation3 + $0x101] sm:$0xff]
        %v7356 = vld [vmem:[#allocation3 + $0x109] sm:$0xff]
        %v7357 = vld [vmem:[#allocation3 + $0x111] sm:$0xff]
        %v7358 = vld [vmem:[#allocation3 + $0x119] sm:$0xff]
        %v7359 = vld [vmem:[#allocation3 + $0x121] sm:$0xff]
        %v7360 = vld [vmem:[#allocation3 + $0x129] sm:$0xff]
        %v7361 = vld [vmem:[#allocation3 + $0x131] sm:$0xff]
        %v7362 = vld [vmem:[#allocation3 + $0x139] sm:$0xff]
        %v7363 = vld [vmem:[#allocation3 + $0x141] sm:$0xff]
        %s7364 = scalar_lea.vmem %s4, 192
        %v7365 = vld [vmem:[%s7364] sm:$0xff]
        %v7366 = vld [vmem:[%s7364 + $0x8] sm:$0xff]
        %v7367 = vld [vmem:[%s7364 + $0x10] sm:$0xff]
        %v7368 = vld [vmem:[%s7364 + $0x18] sm:$0xff]
        %v7370 = vsel %vm4784, %v7328, 0
        %v7373 = vsel %vm4784, %v7329, 0
        %v7376 = vsel %vm4784, %v7330, 0
        %v7379 = vsel %vm4784, %v7331, 0
        %v7382 = vsel %vm4784, %v7332, 0
        %v7385 = vsel %vm4784, %v7333, 0
        %v7388 = vsel %vm4784, %v7334, 0
        %v7391 = vsel %vm4784, %v7335, 0
        %v7394 = vsel %vm4784, %v7336, 0
        %v7397 = vsel %vm4784, %v7337, 0
        %v7400 = vsel %vm4784, %v7338, 0
        %v7403 = vsel %vm4784, %v7339, 0
        %v7406 = vsel %vm4784, %v7340, 0
        %v7409 = vsel %vm4784, %v7341, 0
        %v7412 = vsel %vm4784, %v7342, 0
        %v7415 = vsel %vm4784, %v7343, 0
        %v7418 = vsel %vm4784, %v7344, 0
        %v7421 = vsel %vm4784, %v7345, 0
        %v7424 = vsel %vm4784, %v7346, 0
        %v7427 = vsel %vm4784, %v7347, 0
        %v7430 = vsel %vm4784, %v7348, 0
        %v7433 = vsel %vm4784, %v7349, 0
        %v7436 = vsel %vm4784, %v7350, 0
        %v7439 = vsel %vm4784, %v7351, 0
        %v7442 = vsel %vm4784, %v7352, 0
        %v7445 = vsel %vm4784, %v7353, 0
        %v7448 = vsel %vm4784, %v7354, 0
        %v7451 = vsel %vm4784, %v7355, 0
        %v7454 = vsel %vm4784, %v7356, 0
        %v7457 = vsel %vm4784, %v7357, 0
        %v7460 = vsel %vm4784, %v7358, 0
        %v7463 = vsel %vm4784, %v7359, 0
        %v7466 = vsel %vm4784, %v7360, 0
        %v7469 = vsel %vm4784, %v7361, 0
        %v7472 = vsel %vm4784, %v7362, 0
        %v7475 = vsel %vm4784, %v7363, 0
        %7477 = vmatprep.subr.mxu0 0.0
        %7478 = vmatpush1.msra.mxu0 0.0
        %7479 = vmatprep.subr.mxu0 0.0
        %7480 = vmatpush1.msra.mxu0 0.0
        %7481 = vmatprep.subr.mxu0 0.0
        %7482 = vmatpush1.msra.mxu0 0.0
        %7483 = vmatprep.subr.mxu0 0.0
        %7484 = vmatpush1.msra.mxu0 0.0
        %7485 = vmatprep.subr.mxu0 0.0
        %7486 = vmatpush1.msra.mxu0 0.0
        %7487 = vmatprep.subr.mxu0 0.0
        %7488 = vmatpush1.msra.mxu0 0.0
        %7489 = vmatprep.subr.mxu0 0.0
        %7490 = vmatpush1.msra.mxu0 0.0
        %7491 = vmatprep.subr.mxu0 0.0
        %7492 = vmatpush1.msra.mxu0 0.0
        %7493 = vmatprep.subr.mxu0 0.0
        %7494 = vmatpush1.msra.mxu0 0.0
        %7495 = vmatprep.subr.mxu0 0.0
        %7496 = vmatpush1.msra.mxu0 0.0
        %7497 = vmatprep.subr.mxu0 0.0
        %7498 = vmatpush1.msra.mxu0 0.0
        %7499 = vmatprep.subr.mxu0 0.0
        %7500 = vmatpush1.msra.mxu0 0.0
        %7501 = vmatprep.subr.mxu0 0.0
        %7502 = vmatpush1.msra.mxu0 %v7368
        %7503 = vmatprep.subr.mxu0 0.0
        %7504 = vmatpush1.msra.mxu0 %v7367
        %7505 = vmatprep.subr.mxu0 0.0
        %7506 = vmatpush1.msra.mxu0 %v7366
        %7507 = vmatprep.subr.mxu0 0.0
        %7508 = vmatpush1.msra.mxu0 %v7365
        %7509 = vmatprep.subr.mxu0 0.0
        %7510 = vmatpush2.msra.mxu0 0.0
        %7511 = vmatprep.subr.mxu0 0.0
        %7512 = vmatpush2.msra.mxu0 0.0
        %7513 = vmatprep.subr.mxu0 0.0
        %7514 = vmatpush2.msra.mxu0 0.0
        %7515 = vmatprep.subr.mxu0 0.0
        %7516 = vmatpush2.msra.mxu0 0.0
        %7517 = vmatprep.subr.mxu0 0.0
        %7518 = vmatpush2.msra.mxu0 0.0
        %7519 = vmatprep.subr.mxu0 0.0
        %7520 = vmatpush2.msra.mxu0 0.0
        %7521 = vmatprep.subr.mxu0 0.0
        %7522 = vmatpush2.msra.mxu0 0.0
        %7523 = vmatprep.subr.mxu0 0.0
        %7524 = vmatpush2.msra.mxu0 0.0
        %7525 = vmatprep.subr.mxu0 0.0
        %7526 = vmatpush2.msra.mxu0 0.0
        %7527 = vmatprep.subr.mxu0 0.0
        %7528 = vmatpush2.msra.mxu0 0.0
        %7529 = vmatprep.subr.mxu0 0.0
        %7530 = vmatpush2.msra.mxu0 0.0
        %7531 = vmatprep.subr.mxu0 0.0
        %7532 = vmatpush2.msra.mxu0 0.0
        %7533 = vmatprep.subr.mxu0 0.0
        %7534 = vmatpush2.msra.mxu0 0.0
        %7535 = vmatprep.subr.mxu0 0.0
        %7536 = vmatpush2.msra.mxu0 0.0
        %7537 = vmatprep.subr.mxu0 0.0
        %7538 = vmatpush2.msra.mxu0 0.0
        %7539 = vmatprep.subr.mxu0 0.0
        %7540 = vmatpush2.msra.mxu0 0.0
        %7541 = vmatprep.mubr.f32.mxu0 0.0
        %7542 = vmatmul.mubr.f32.gmra.mxu0 %v7370
        %v7543 = vpop.f32.mrf.mxu0
        %v7544 = vadd.f32 0.0, %v7543
        %v7545 = vpop.f32.mrf.mxu0
        %7546 = vmatprep.mubr.f32.mxu0 0.0
        %7547 = vmatmul.mubr.f32.gmra.mxu0 %v7373
        %v7548 = vpop.f32.mrf.mxu0
        %v7549 = vadd.f32 0.0, %v7548
        %v7550 = vpop.f32.mrf.mxu0
        %7551 = vmatprep.mubr.f32.mxu0 0.0
        %7552 = vmatmul.mubr.f32.gmra.mxu0 %v7376
        %v7553 = vpop.f32.mrf.mxu0
        %v7554 = vadd.f32 0.0, %v7553
        %v7555 = vpop.f32.mrf.mxu0
        %7556 = vmatprep.mubr.f32.mxu0 0.0
        %7557 = vmatmul.mubr.f32.gmra.mxu0 %v7379
        %v7558 = vpop.f32.mrf.mxu0
        %v7559 = vadd.f32 0.0, %v7558
        %v7560 = vpop.f32.mrf.mxu0
        %7561 = vmatprep.mubr.f32.mxu0 0.0
        %7562 = vmatmul.mubr.f32.gmra.mxu0 %v7382
        %v7563 = vpop.f32.mrf.mxu0
        %v7564 = vadd.f32 0.0, %v7563
        %v7565 = vpop.f32.mrf.mxu0
        %7566 = vmatprep.mubr.f32.mxu0 0.0
        %7567 = vmatmul.mubr.f32.gmra.mxu0 %v7385
        %v7568 = vpop.f32.mrf.mxu0
        %v7569 = vadd.f32 0.0, %v7568
        %v7570 = vpop.f32.mrf.mxu0
        %7571 = vmatprep.mubr.f32.mxu0 0.0
        %7572 = vmatmul.mubr.f32.gmra.mxu0 %v7388
        %v7573 = vpop.f32.mrf.mxu0
        %v7574 = vadd.f32 0.0, %v7573
        %v7575 = vpop.f32.mrf.mxu0
        %7576 = vmatprep.mubr.f32.mxu0 0.0
        %7577 = vmatmul.mubr.f32.gmra.mxu0 %v7391
        %v7578 = vpop.f32.mrf.mxu0
        %v7579 = vadd.f32 0.0, %v7578
        %v7580 = vpop.f32.mrf.mxu0
        %7581 = vmatprep.mubr.f32.mxu0 0.0
        %7582 = vmatmul.mubr.f32.gmra.mxu0 %v7394
        %v7583 = vpop.f32.mrf.mxu0
        %v7584 = vadd.f32 0.0, %v7583
        %v7585 = vpop.f32.mrf.mxu0
        %7586 = vmatprep.mubr.f32.mxu0 0.0
        %7587 = vmatmul.mubr.f32.gmra.mxu0 %v7397
        %v7588 = vpop.f32.mrf.mxu0
        %v7589 = vadd.f32 0.0, %v7588
        %v7590 = vpop.f32.mrf.mxu0
        %7591 = vmatprep.mubr.f32.mxu0 0.0
        %7592 = vmatmul.mubr.f32.gmra.mxu0 %v7400
        %v7593 = vpop.f32.mrf.mxu0
        %v7594 = vadd.f32 0.0, %v7593
        %v7595 = vpop.f32.mrf.mxu0
        %7596 = vmatprep.mubr.f32.mxu0 0.0
        %7597 = vmatmul.mubr.f32.gmra.mxu0 %v7403
        %v7598 = vpop.f32.mrf.mxu0
        %v7599 = vadd.f32 0.0, %v7598
        %v7600 = vpop.f32.mrf.mxu0
        %7601 = vmatprep.mubr.f32.mxu0 0.0
        %7602 = vmatmul.mubr.f32.gmra.mxu0 %v7406
        %v7603 = vpop.f32.mrf.mxu0
        %v7604 = vadd.f32 0.0, %v7603
        %v7605 = vpop.f32.mrf.mxu0
        %7606 = vmatprep.mubr.f32.mxu0 0.0
        %7607 = vmatmul.mubr.f32.gmra.mxu0 %v7409
        %v7608 = vpop.f32.mrf.mxu0
        %v7609 = vadd.f32 0.0, %v7608
        %v7610 = vpop.f32.mrf.mxu0
        %7611 = vmatprep.mubr.f32.mxu0 0.0
        %7612 = vmatmul.mubr.f32.gmra.mxu0 %v7412
        %v7613 = vpop.f32.mrf.mxu0
        %v7614 = vadd.f32 0.0, %v7613
        %v7615 = vpop.f32.mrf.mxu0
        %7616 = vmatprep.mubr.f32.mxu0 0.0
        %7617 = vmatmul.mubr.f32.gmra.mxu0 %v7415
        %v7618 = vpop.f32.mrf.mxu0
        %v7619 = vadd.f32 0.0, %v7618
        %v7620 = vpop.f32.mrf.mxu0
        %7621 = vmatprep.mubr.f32.mxu0 0.0
        %7622 = vmatmul.mubr.f32.gmra.mxu0 %v7418
        %v7623 = vpop.f32.mrf.mxu0
        %v7624 = vadd.f32 0.0, %v7623
        %v7625 = vpop.f32.mrf.mxu0
        %7626 = vmatprep.mubr.f32.mxu0 0.0
        %7627 = vmatmul.mubr.f32.gmra.mxu0 %v7421
        %v7628 = vpop.f32.mrf.mxu0
        %v7629 = vadd.f32 0.0, %v7628
        %v7630 = vpop.f32.mrf.mxu0
        %7631 = vmatprep.mubr.f32.mxu0 0.0
        %7632 = vmatmul.mubr.f32.gmra.mxu0 %v7424
        %v7633 = vpop.f32.mrf.mxu0
        %v7634 = vadd.f32 0.0, %v7633
        %v7635 = vpop.f32.mrf.mxu0
        %7636 = vmatprep.mubr.f32.mxu0 0.0
        %7637 = vmatmul.mubr.f32.gmra.mxu0 %v7427
        %v7638 = vpop.f32.mrf.mxu0
        %v7639 = vadd.f32 0.0, %v7638
        %v7640 = vpop.f32.mrf.mxu0
        %7641 = vmatprep.mubr.f32.mxu0 0.0
        %7642 = vmatmul.mubr.f32.gmra.mxu0 %v7430
        %v7643 = vpop.f32.mrf.mxu0
        %v7644 = vadd.f32 0.0, %v7643
        %v7645 = vpop.f32.mrf.mxu0
        %7646 = vmatprep.mubr.f32.mxu0 0.0
        %7647 = vmatmul.mubr.f32.gmra.mxu0 %v7433
        %v7648 = vpop.f32.mrf.mxu0
        %v7649 = vadd.f32 0.0, %v7648
        %v7650 = vpop.f32.mrf.mxu0
        %7651 = vmatprep.mubr.f32.mxu0 0.0
        %7652 = vmatmul.mubr.f32.gmra.mxu0 %v7436
        %v7653 = vpop.f32.mrf.mxu0
        %v7654 = vadd.f32 0.0, %v7653
        %v7655 = vpop.f32.mrf.mxu0
        %7656 = vmatprep.mubr.f32.mxu0 0.0
        %7657 = vmatmul.mubr.f32.gmra.mxu0 %v7439
        %v7658 = vpop.f32.mrf.mxu0
        %v7659 = vadd.f32 0.0, %v7658
        %v7660 = vpop.f32.mrf.mxu0
        %7661 = vmatprep.mubr.f32.mxu0 0.0
        %7662 = vmatmul.mubr.f32.gmra.mxu0 %v7442
        %v7663 = vpop.f32.mrf.mxu0
        %v7664 = vadd.f32 0.0, %v7663
        %v7665 = vpop.f32.mrf.mxu0
        %7666 = vmatprep.mubr.f32.mxu0 0.0
        %7667 = vmatmul.mubr.f32.gmra.mxu0 %v7445
        %v7668 = vpop.f32.mrf.mxu0
        %v7669 = vadd.f32 0.0, %v7668
        %v7670 = vpop.f32.mrf.mxu0
        %7671 = vmatprep.mubr.f32.mxu0 0.0
        %7672 = vmatmul.mubr.f32.gmra.mxu0 %v7448
        %v7673 = vpop.f32.mrf.mxu0
        %v7674 = vadd.f32 0.0, %v7673
        %v7675 = vpop.f32.mrf.mxu0
        %7676 = vmatprep.mubr.f32.mxu0 0.0
        %7677 = vmatmul.mubr.f32.gmra.mxu0 %v7451
        %v7678 = vpop.f32.mrf.mxu0
        %v7679 = vadd.f32 0.0, %v7678
        %v7680 = vpop.f32.mrf.mxu0
        %7681 = vmatprep.mubr.f32.mxu0 0.0
        %7682 = vmatmul.mubr.f32.gmra.mxu0 %v7454
        %v7683 = vpop.f32.mrf.mxu0
        %v7684 = vadd.f32 0.0, %v7683
        %v7685 = vpop.f32.mrf.mxu0
        %7686 = vmatprep.mubr.f32.mxu0 0.0
        %7687 = vmatmul.mubr.f32.gmra.mxu0 %v7457
        %v7688 = vpop.f32.mrf.mxu0
        %v7689 = vadd.f32 0.0, %v7688
        %v7690 = vpop.f32.mrf.mxu0
        %7691 = vmatprep.mubr.f32.mxu0 0.0
        %7692 = vmatmul.mubr.f32.gmra.mxu0 %v7460
        %v7693 = vpop.f32.mrf.mxu0
        %v7694 = vadd.f32 0.0, %v7693
        %v7695 = vpop.f32.mrf.mxu0
        %7696 = vmatprep.mubr.f32.mxu0 0.0
        %7697 = vmatmul.mubr.f32.gmra.mxu0 %v7463
        %v7698 = vpop.f32.mrf.mxu0
        %v7699 = vadd.f32 0.0, %v7698
        %v7700 = vpop.f32.mrf.mxu0
        %7701 = vmatprep.mubr.f32.mxu0 0.0
        %7702 = vmatmul.mubr.f32.gmra.mxu0 %v7466
        %v7703 = vpop.f32.mrf.mxu0
        %v7704 = vadd.f32 0.0, %v7703
        %v7705 = vpop.f32.mrf.mxu0
        %7706 = vmatprep.mubr.f32.mxu0 0.0
        %7707 = vmatmul.mubr.f32.gmra.mxu0 %v7469
        %v7708 = vpop.f32.mrf.mxu0
        %v7709 = vadd.f32 0.0, %v7708
        %v7710 = vpop.f32.mrf.mxu0
        %7711 = vmatprep.mubr.f32.mxu0 0.0
        %7712 = vmatmul.mubr.f32.gmra.mxu0 %v7472
        %v7713 = vpop.f32.mrf.mxu0
        %v7714 = vadd.f32 0.0, %v7713
        %v7715 = vpop.f32.mrf.mxu0
        %7716 = vmatprep.mubr.f32.mxu0 0.0
        %7717 = vmatmul.mubr.f32.gmra.mxu0 %v7475
        %v7718 = vpop.f32.mrf.mxu0
        %v7719 = vadd.f32 0.0, %v7718
        %v7720 = vpop.f32.mrf.mxu0
        %7721 = vdwg.mxu0
        %v7722 = vadd.f32 %v7292, %v7544
        %v7723 = vadd.f32 %v7293, %v7549
        %v7724 = vadd.f32 %v7294, %v7554
        %v7725 = vadd.f32 %v7295, %v7559
        %v7726 = vadd.f32 %v7296, %v7564
        %v7727 = vadd.f32 %v7297, %v7569
        %v7728 = vadd.f32 %v7298, %v7574
        %v7729 = vadd.f32 %v7299, %v7579
        %v7730 = vadd.f32 %v7300, %v7584
        %v7731 = vadd.f32 %v7301, %v7589
        %v7732 = vadd.f32 %v7302, %v7594
        %v7733 = vadd.f32 %v7303, %v7599
        %v7734 = vadd.f32 %v7304, %v7604
        %v7735 = vadd.f32 %v7305, %v7609
        %v7736 = vadd.f32 %v7306, %v7614
        %v7737 = vadd.f32 %v7307, %v7619
        %v7738 = vadd.f32 %v7308, %v7624
        %v7739 = vadd.f32 %v7309, %v7629
        %v7740 = vadd.f32 %v7310, %v7634
        %v7741 = vadd.f32 %v7311, %v7639
        %v7742 = vadd.f32 %v7312, %v7644
        %v7743 = vadd.f32 %v7313, %v7649
        %v7744 = vadd.f32 %v7314, %v7654
        %v7745 = vadd.f32 %v7315, %v7659
        %v7746 = vadd.f32 %v7316, %v7664
        %v7747 = vadd.f32 %v7317, %v7669
        %v7748 = vadd.f32 %v7318, %v7674
        %v7749 = vadd.f32 %v7319, %v7679
        %v7750 = vadd.f32 %v7320, %v7684
        %v7751 = vadd.f32 %v7321, %v7689
        %v7752 = vadd.f32 %v7322, %v7694
        %v7753 = vadd.f32 %v7323, %v7699
        %v7754 = vadd.f32 %v7324, %v7704
        %v7755 = vadd.f32 %v7325, %v7709
        %v7756 = vadd.f32 %v7326, %v7714
        %v7757 = vadd.f32 %v7327, %v7719
        %v7758 = vld [vmem:[#allocation3 + $0x2a] sm:$0xff]
        %v7759 = vld [vmem:[#allocation3 + $0x32] sm:$0xff]
        %v7760 = vld [vmem:[#allocation3 + $0x3a] sm:$0xff]
        %v7761 = vld [vmem:[#allocation3 + $0x42] sm:$0xff]
        %v7762 = vld [vmem:[#allocation3 + $0x4a] sm:$0xff]
        %v7763 = vld [vmem:[#allocation3 + $0x52] sm:$0xff]
        %v7764 = vld [vmem:[#allocation3 + $0x5a] sm:$0xff]
        %v7765 = vld [vmem:[#allocation3 + $0x62] sm:$0xff]
        %v7766 = vld [vmem:[#allocation3 + $0x6a] sm:$0xff]
        %v7767 = vld [vmem:[#allocation3 + $0x72] sm:$0xff]
        %v7768 = vld [vmem:[#allocation3 + $0x7a] sm:$0xff]
        %v7769 = vld [vmem:[#allocation3 + $0x82] sm:$0xff]
        %v7770 = vld [vmem:[#allocation3 + $0x8a] sm:$0xff]
        %v7771 = vld [vmem:[#allocation3 + $0x92] sm:$0xff]
        %v7772 = vld [vmem:[#allocation3 + $0x9a] sm:$0xff]
        %v7773 = vld [vmem:[#allocation3 + $0xa2] sm:$0xff]
        %v7774 = vld [vmem:[#allocation3 + $0xaa] sm:$0xff]
        %v7775 = vld [vmem:[#allocation3 + $0xb2] sm:$0xff]
        %v7776 = vld [vmem:[#allocation3 + $0xba] sm:$0xff]
        %v7777 = vld [vmem:[#allocation3 + $0xc2] sm:$0xff]
        %v7778 = vld [vmem:[#allocation3 + $0xca] sm:$0xff]
        %v7779 = vld [vmem:[#allocation3 + $0xd2] sm:$0xff]
        %v7780 = vld [vmem:[#allocation3 + $0xda] sm:$0xff]
        %v7781 = vld [vmem:[#allocation3 + $0xe2] sm:$0xff]
        %v7782 = vld [vmem:[#allocation3 + $0xea] sm:$0xff]
        %v7783 = vld [vmem:[#allocation3 + $0xf2] sm:$0xff]
        %v7784 = vld [vmem:[#allocation3 + $0xfa] sm:$0xff]
        %v7785 = vld [vmem:[#allocation3 + $0x102] sm:$0xff]
        %v7786 = vld [vmem:[#allocation3 + $0x10a] sm:$0xff]
        %v7787 = vld [vmem:[#allocation3 + $0x112] sm:$0xff]
        %v7788 = vld [vmem:[#allocation3 + $0x11a] sm:$0xff]
        %v7789 = vld [vmem:[#allocation3 + $0x122] sm:$0xff]
        %v7790 = vld [vmem:[#allocation3 + $0x12a] sm:$0xff]
        %v7791 = vld [vmem:[#allocation3 + $0x132] sm:$0xff]
        %v7792 = vld [vmem:[#allocation3 + $0x13a] sm:$0xff]
        %v7793 = vld [vmem:[#allocation3 + $0x142] sm:$0xff]
        %s7794 = scalar_lea.vmem %s4, 224
        %v7795 = vld [vmem:[%s7794] sm:$0xff]
        %v7796 = vld [vmem:[%s7794 + $0x8] sm:$0xff]
        %v7797 = vld [vmem:[%s7794 + $0x10] sm:$0xff]
        %v7798 = vld [vmem:[%s7794 + $0x18] sm:$0xff]
        %v7800 = vsel %vm4784, %v7758, 0
        %v7803 = vsel %vm4784, %v7759, 0
        %v7806 = vsel %vm4784, %v7760, 0
        %v7809 = vsel %vm4784, %v7761, 0
        %v7812 = vsel %vm4784, %v7762, 0
        %v7815 = vsel %vm4784, %v7763, 0
        %v7818 = vsel %vm4784, %v7764, 0
        %v7821 = vsel %vm4784, %v7765, 0
        %v7824 = vsel %vm4784, %v7766, 0
        %v7827 = vsel %vm4784, %v7767, 0
        %v7830 = vsel %vm4784, %v7768, 0
        %v7833 = vsel %vm4784, %v7769, 0
        %v7836 = vsel %vm4784, %v7770, 0
        %v7839 = vsel %vm4784, %v7771, 0
        %v7842 = vsel %vm4784, %v7772, 0
        %v7845 = vsel %vm4784, %v7773, 0
        %v7848 = vsel %vm4784, %v7774, 0
        %v7851 = vsel %vm4784, %v7775, 0
        %v7854 = vsel %vm4784, %v7776, 0
        %v7857 = vsel %vm4784, %v7777, 0
        %v7860 = vsel %vm4784, %v7778, 0
        %v7863 = vsel %vm4784, %v7779, 0
        %v7866 = vsel %vm4784, %v7780, 0
        %v7869 = vsel %vm4784, %v7781, 0
        %v7872 = vsel %vm4784, %v7782, 0
        %v7875 = vsel %vm4784, %v7783, 0
        %v7878 = vsel %vm4784, %v7784, 0
        %v7881 = vsel %vm4784, %v7785, 0
        %v7884 = vsel %vm4784, %v7786, 0
        %v7887 = vsel %vm4784, %v7787, 0
        %v7890 = vsel %vm4784, %v7788, 0
        %v7893 = vsel %vm4784, %v7789, 0
        %v7896 = vsel %vm4784, %v7790, 0
        %v7899 = vsel %vm4784, %v7791, 0
        %v7902 = vsel %vm4784, %v7792, 0
        %v7905 = vsel %vm4784, %v7793, 0
        %7907 = vmatprep.subr.mxu0 0.0
        %7908 = vmatpush1.msra.mxu0 0.0
        %7909 = vmatprep.subr.mxu0 0.0
        %7910 = vmatpush1.msra.mxu0 0.0
        %7911 = vmatprep.subr.mxu0 0.0
        %7912 = vmatpush1.msra.mxu0 0.0
        %7913 = vmatprep.subr.mxu0 0.0
        %7914 = vmatpush1.msra.mxu0 0.0
        %7915 = vmatprep.subr.mxu0 0.0
        %7916 = vmatpush1.msra.mxu0 0.0
        %7917 = vmatprep.subr.mxu0 0.0
        %7918 = vmatpush1.msra.mxu0 0.0
        %7919 = vmatprep.subr.mxu0 0.0
        %7920 = vmatpush1.msra.mxu0 0.0
        %7921 = vmatprep.subr.mxu0 0.0
        %7922 = vmatpush1.msra.mxu0 0.0
        %7923 = vmatprep.subr.mxu0 0.0
        %7924 = vmatpush1.msra.mxu0 0.0
        %7925 = vmatprep.subr.mxu0 0.0
        %7926 = vmatpush1.msra.mxu0 0.0
        %7927 = vmatprep.subr.mxu0 0.0
        %7928 = vmatpush1.msra.mxu0 0.0
        %7929 = vmatprep.subr.mxu0 0.0
        %7930 = vmatpush1.msra.mxu0 0.0
        %7931 = vmatprep.subr.mxu0 0.0
        %7932 = vmatpush1.msra.mxu0 %v7798
        %7933 = vmatprep.subr.mxu0 0.0
        %7934 = vmatpush1.msra.mxu0 %v7797
        %7935 = vmatprep.subr.mxu0 0.0
        %7936 = vmatpush1.msra.mxu0 %v7796
        %7937 = vmatprep.subr.mxu0 0.0
        %7938 = vmatpush1.msra.mxu0 %v7795
        %7939 = vmatprep.subr.mxu0 0.0
        %7940 = vmatpush2.msra.mxu0 0.0
        %7941 = vmatprep.subr.mxu0 0.0
        %7942 = vmatpush2.msra.mxu0 0.0
        %7943 = vmatprep.subr.mxu0 0.0
        %7944 = vmatpush2.msra.mxu0 0.0
        %7945 = vmatprep.subr.mxu0 0.0
        %7946 = vmatpush2.msra.mxu0 0.0
        %7947 = vmatprep.subr.mxu0 0.0
        %7948 = vmatpush2.msra.mxu0 0.0
        %7949 = vmatprep.subr.mxu0 0.0
        %7950 = vmatpush2.msra.mxu0 0.0
        %7951 = vmatprep.subr.mxu0 0.0
        %7952 = vmatpush2.msra.mxu0 0.0
        %7953 = vmatprep.subr.mxu0 0.0
        %7954 = vmatpush2.msra.mxu0 0.0
        %7955 = vmatprep.subr.mxu0 0.0
        %7956 = vmatpush2.msra.mxu0 0.0
        %7957 = vmatprep.subr.mxu0 0.0
        %7958 = vmatpush2.msra.mxu0 0.0
        %7959 = vmatprep.subr.mxu0 0.0
        %7960 = vmatpush2.msra.mxu0 0.0
        %7961 = vmatprep.subr.mxu0 0.0
        %7962 = vmatpush2.msra.mxu0 0.0
        %7963 = vmatprep.subr.mxu0 0.0
        %7964 = vmatpush2.msra.mxu0 0.0
        %7965 = vmatprep.subr.mxu0 0.0
        %7966 = vmatpush2.msra.mxu0 0.0
        %7967 = vmatprep.subr.mxu0 0.0
        %7968 = vmatpush2.msra.mxu0 0.0
        %7969 = vmatprep.subr.mxu0 0.0
        %7970 = vmatpush2.msra.mxu0 0.0
        %7971 = vmatprep.mubr.f32.mxu0 0.0
        %7972 = vmatmul.mubr.f32.gmra.mxu0 %v7800
        %v7973 = vpop.f32.mrf.mxu0
        %v7974 = vadd.f32 0.0, %v7973
        %v7975 = vpop.f32.mrf.mxu0
        %7976 = vmatprep.mubr.f32.mxu0 0.0
        %7977 = vmatmul.mubr.f32.gmra.mxu0 %v7803
        %v7978 = vpop.f32.mrf.mxu0
        %v7979 = vadd.f32 0.0, %v7978
        %v7980 = vpop.f32.mrf.mxu0
        %7981 = vmatprep.mubr.f32.mxu0 0.0
        %7982 = vmatmul.mubr.f32.gmra.mxu0 %v7806
        %v7983 = vpop.f32.mrf.mxu0
        %v7984 = vadd.f32 0.0, %v7983
        %v7985 = vpop.f32.mrf.mxu0
        %7986 = vmatprep.mubr.f32.mxu0 0.0
        %7987 = vmatmul.mubr.f32.gmra.mxu0 %v7809
        %v7988 = vpop.f32.mrf.mxu0
        %v7989 = vadd.f32 0.0, %v7988
        %v7990 = vpop.f32.mrf.mxu0
        %7991 = vmatprep.mubr.f32.mxu0 0.0
        %7992 = vmatmul.mubr.f32.gmra.mxu0 %v7812
        %v7993 = vpop.f32.mrf.mxu0
        %v7994 = vadd.f32 0.0, %v7993
        %v7995 = vpop.f32.mrf.mxu0
        %7996 = vmatprep.mubr.f32.mxu0 0.0
        %7997 = vmatmul.mubr.f32.gmra.mxu0 %v7815
        %v7998 = vpop.f32.mrf.mxu0
        %v7999 = vadd.f32 0.0, %v7998
        %v8000 = vpop.f32.mrf.mxu0
        %8001 = vmatprep.mubr.f32.mxu0 0.0
        %8002 = vmatmul.mubr.f32.gmra.mxu0 %v7818
        %v8003 = vpop.f32.mrf.mxu0
        %v8004 = vadd.f32 0.0, %v8003
        %v8005 = vpop.f32.mrf.mxu0
        %8006 = vmatprep.mubr.f32.mxu0 0.0
        %8007 = vmatmul.mubr.f32.gmra.mxu0 %v7821
        %v8008 = vpop.f32.mrf.mxu0
        %v8009 = vadd.f32 0.0, %v8008
        %v8010 = vpop.f32.mrf.mxu0
        %8011 = vmatprep.mubr.f32.mxu0 0.0
        %8012 = vmatmul.mubr.f32.gmra.mxu0 %v7824
        %v8013 = vpop.f32.mrf.mxu0
        %v8014 = vadd.f32 0.0, %v8013
        %v8015 = vpop.f32.mrf.mxu0
        %8016 = vmatprep.mubr.f32.mxu0 0.0
        %8017 = vmatmul.mubr.f32.gmra.mxu0 %v7827
        %v8018 = vpop.f32.mrf.mxu0
        %v8019 = vadd.f32 0.0, %v8018
        %v8020 = vpop.f32.mrf.mxu0
        %8021 = vmatprep.mubr.f32.mxu0 0.0
        %8022 = vmatmul.mubr.f32.gmra.mxu0 %v7830
        %v8023 = vpop.f32.mrf.mxu0
        %v8024 = vadd.f32 0.0, %v8023
        %v8025 = vpop.f32.mrf.mxu0
        %8026 = vmatprep.mubr.f32.mxu0 0.0
        %8027 = vmatmul.mubr.f32.gmra.mxu0 %v7833
        %v8028 = vpop.f32.mrf.mxu0
        %v8029 = vadd.f32 0.0, %v8028
        %v8030 = vpop.f32.mrf.mxu0
        %8031 = vmatprep.mubr.f32.mxu0 0.0
        %8032 = vmatmul.mubr.f32.gmra.mxu0 %v7836
        %v8033 = vpop.f32.mrf.mxu0
        %v8034 = vadd.f32 0.0, %v8033
        %v8035 = vpop.f32.mrf.mxu0
        %8036 = vmatprep.mubr.f32.mxu0 0.0
        %8037 = vmatmul.mubr.f32.gmra.mxu0 %v7839
        %v8038 = vpop.f32.mrf.mxu0
        %v8039 = vadd.f32 0.0, %v8038
        %v8040 = vpop.f32.mrf.mxu0
        %8041 = vmatprep.mubr.f32.mxu0 0.0
        %8042 = vmatmul.mubr.f32.gmra.mxu0 %v7842
        %v8043 = vpop.f32.mrf.mxu0
        %v8044 = vadd.f32 0.0, %v8043
        %v8045 = vpop.f32.mrf.mxu0
        %8046 = vmatprep.mubr.f32.mxu0 0.0
        %8047 = vmatmul.mubr.f32.gmra.mxu0 %v7845
        %v8048 = vpop.f32.mrf.mxu0
        %v8049 = vadd.f32 0.0, %v8048
        %v8050 = vpop.f32.mrf.mxu0
        %8051 = vmatprep.mubr.f32.mxu0 0.0
        %8052 = vmatmul.mubr.f32.gmra.mxu0 %v7848
        %v8053 = vpop.f32.mrf.mxu0
        %v8054 = vadd.f32 0.0, %v8053
        %v8055 = vpop.f32.mrf.mxu0
        %8056 = vmatprep.mubr.f32.mxu0 0.0
        %8057 = vmatmul.mubr.f32.gmra.mxu0 %v7851
        %v8058 = vpop.f32.mrf.mxu0
        %v8059 = vadd.f32 0.0, %v8058
        %v8060 = vpop.f32.mrf.mxu0
        %8061 = vmatprep.mubr.f32.mxu0 0.0
        %8062 = vmatmul.mubr.f32.gmra.mxu0 %v7854
        %v8063 = vpop.f32.mrf.mxu0
        %v8064 = vadd.f32 0.0, %v8063
        %v8065 = vpop.f32.mrf.mxu0
        %8066 = vmatprep.mubr.f32.mxu0 0.0
        %8067 = vmatmul.mubr.f32.gmra.mxu0 %v7857
        %v8068 = vpop.f32.mrf.mxu0
        %v8069 = vadd.f32 0.0, %v8068
        %v8070 = vpop.f32.mrf.mxu0
        %8071 = vmatprep.mubr.f32.mxu0 0.0
        %8072 = vmatmul.mubr.f32.gmra.mxu0 %v7860
        %v8073 = vpop.f32.mrf.mxu0
        %v8074 = vadd.f32 0.0, %v8073
        %v8075 = vpop.f32.mrf.mxu0
        %8076 = vmatprep.mubr.f32.mxu0 0.0
        %8077 = vmatmul.mubr.f32.gmra.mxu0 %v7863
        %v8078 = vpop.f32.mrf.mxu0
        %v8079 = vadd.f32 0.0, %v8078
        %v8080 = vpop.f32.mrf.mxu0
        %8081 = vmatprep.mubr.f32.mxu0 0.0
        %8082 = vmatmul.mubr.f32.gmra.mxu0 %v7866
        %v8083 = vpop.f32.mrf.mxu0
        %v8084 = vadd.f32 0.0, %v8083
        %v8085 = vpop.f32.mrf.mxu0
        %8086 = vmatprep.mubr.f32.mxu0 0.0
        %8087 = vmatmul.mubr.f32.gmra.mxu0 %v7869
        %v8088 = vpop.f32.mrf.mxu0
        %v8089 = vadd.f32 0.0, %v8088
        %v8090 = vpop.f32.mrf.mxu0
        %8091 = vmatprep.mubr.f32.mxu0 0.0
        %8092 = vmatmul.mubr.f32.gmra.mxu0 %v7872
        %v8093 = vpop.f32.mrf.mxu0
        %v8094 = vadd.f32 0.0, %v8093
        %v8095 = vpop.f32.mrf.mxu0
        %8096 = vmatprep.mubr.f32.mxu0 0.0
        %8097 = vmatmul.mubr.f32.gmra.mxu0 %v7875
        %v8098 = vpop.f32.mrf.mxu0
        %v8099 = vadd.f32 0.0, %v8098
        %v8100 = vpop.f32.mrf.mxu0
        %8101 = vmatprep.mubr.f32.mxu0 0.0
        %8102 = vmatmul.mubr.f32.gmra.mxu0 %v7878
        %v8103 = vpop.f32.mrf.mxu0
        %v8104 = vadd.f32 0.0, %v8103
        %v8105 = vpop.f32.mrf.mxu0
        %8106 = vmatprep.mubr.f32.mxu0 0.0
        %8107 = vmatmul.mubr.f32.gmra.mxu0 %v7881
        %v8108 = vpop.f32.mrf.mxu0
        %v8109 = vadd.f32 0.0, %v8108
        %v8110 = vpop.f32.mrf.mxu0
        %8111 = vmatprep.mubr.f32.mxu0 0.0
        %8112 = vmatmul.mubr.f32.gmra.mxu0 %v7884
        %v8113 = vpop.f32.mrf.mxu0
        %v8114 = vadd.f32 0.0, %v8113
        %v8115 = vpop.f32.mrf.mxu0
        %8116 = vmatprep.mubr.f32.mxu0 0.0
        %8117 = vmatmul.mubr.f32.gmra.mxu0 %v7887
        %v8118 = vpop.f32.mrf.mxu0
        %v8119 = vadd.f32 0.0, %v8118
        %v8120 = vpop.f32.mrf.mxu0
        %8121 = vmatprep.mubr.f32.mxu0 0.0
        %8122 = vmatmul.mubr.f32.gmra.mxu0 %v7890
        %v8123 = vpop.f32.mrf.mxu0
        %v8124 = vadd.f32 0.0, %v8123
        %v8125 = vpop.f32.mrf.mxu0
        %8126 = vmatprep.mubr.f32.mxu0 0.0
        %8127 = vmatmul.mubr.f32.gmra.mxu0 %v7893
        %v8128 = vpop.f32.mrf.mxu0
        %v8129 = vadd.f32 0.0, %v8128
        %v8130 = vpop.f32.mrf.mxu0
        %8131 = vmatprep.mubr.f32.mxu0 0.0
        %8132 = vmatmul.mubr.f32.gmra.mxu0 %v7896
        %v8133 = vpop.f32.mrf.mxu0
        %v8134 = vadd.f32 0.0, %v8133
        %v8135 = vpop.f32.mrf.mxu0
        %8136 = vmatprep.mubr.f32.mxu0 0.0
        %8137 = vmatmul.mubr.f32.gmra.mxu0 %v7899
        %v8138 = vpop.f32.mrf.mxu0
        %v8139 = vadd.f32 0.0, %v8138
        %v8140 = vpop.f32.mrf.mxu0
        %8141 = vmatprep.mubr.f32.mxu0 0.0
        %8142 = vmatmul.mubr.f32.gmra.mxu0 %v7902
        %v8143 = vpop.f32.mrf.mxu0
        %v8144 = vadd.f32 0.0, %v8143
        %v8145 = vpop.f32.mrf.mxu0
        %8146 = vmatprep.mubr.f32.mxu0 0.0
        %8147 = vmatmul.mubr.f32.gmra.mxu0 %v7905
        %v8148 = vpop.f32.mrf.mxu0
        %v8149 = vadd.f32 0.0, %v8148
        %v8150 = vpop.f32.mrf.mxu0
        %8151 = vdwg.mxu0
        %v8152 = vadd.f32 %v7722, %v7974
        %v8153 = vadd.f32 %v7723, %v7979
        %v8154 = vadd.f32 %v7724, %v7984
        %v8155 = vadd.f32 %v7725, %v7989
        %v8156 = vadd.f32 %v7726, %v7994
        %v8157 = vadd.f32 %v7727, %v7999
        %v8158 = vadd.f32 %v7728, %v8004
        %v8159 = vadd.f32 %v7729, %v8009
        %v8160 = vadd.f32 %v7730, %v8014
        %v8161 = vadd.f32 %v7731, %v8019
        %v8162 = vadd.f32 %v7732, %v8024
        %v8163 = vadd.f32 %v7733, %v8029
        %v8164 = vadd.f32 %v7734, %v8034
        %v8165 = vadd.f32 %v7735, %v8039
        %v8166 = vadd.f32 %v7736, %v8044
        %v8167 = vadd.f32 %v7737, %v8049
        %v8168 = vadd.f32 %v7738, %v8054
        %v8169 = vadd.f32 %v7739, %v8059
        %v8170 = vadd.f32 %v7740, %v8064
        %v8171 = vadd.f32 %v7741, %v8069
        %v8172 = vadd.f32 %v7742, %v8074
        %v8173 = vadd.f32 %v7743, %v8079
        %v8174 = vadd.f32 %v7744, %v8084
        %v8175 = vadd.f32 %v7745, %v8089
        %v8176 = vadd.f32 %v7746, %v8094
        %v8177 = vadd.f32 %v7747, %v8099
        %v8178 = vadd.f32 %v7748, %v8104
        %v8179 = vadd.f32 %v7749, %v8109
        %v8180 = vadd.f32 %v7750, %v8114
        %v8181 = vadd.f32 %v7751, %v8119
        %v8182 = vadd.f32 %v7752, %v8124
        %v8183 = vadd.f32 %v7753, %v8129
        %v8184 = vadd.f32 %v7754, %v8134
        %v8185 = vadd.f32 %v7755, %v8139
        %v8186 = vadd.f32 %v7756, %v8144
        %v8187 = vadd.f32 %v7757, %v8149
        %v8188 = vld [vmem:[#allocation3 + $0x2b] sm:$0xff]
        %v8189 = vld [vmem:[#allocation3 + $0x33] sm:$0xff]
        %v8190 = vld [vmem:[#allocation3 + $0x3b] sm:$0xff]
        %v8191 = vld [vmem:[#allocation3 + $0x43] sm:$0xff]
        %v8192 = vld [vmem:[#allocation3 + $0x4b] sm:$0xff]
        %v8193 = vld [vmem:[#allocation3 + $0x53] sm:$0xff]
        %v8194 = vld [vmem:[#allocation3 + $0x5b] sm:$0xff]
        %v8195 = vld [vmem:[#allocation3 + $0x63] sm:$0xff]
        %v8196 = vld [vmem:[#allocation3 + $0x6b] sm:$0xff]
        %v8197 = vld [vmem:[#allocation3 + $0x73] sm:$0xff]
        %v8198 = vld [vmem:[#allocation3 + $0x7b] sm:$0xff]
        %v8199 = vld [vmem:[#allocation3 + $0x83] sm:$0xff]
        %v8200 = vld [vmem:[#allocation3 + $0x8b] sm:$0xff]
        %v8201 = vld [vmem:[#allocation3 + $0x93] sm:$0xff]
        %v8202 = vld [vmem:[#allocation3 + $0x9b] sm:$0xff]
        %v8203 = vld [vmem:[#allocation3 + $0xa3] sm:$0xff]
        %v8204 = vld [vmem:[#allocation3 + $0xab] sm:$0xff]
        %v8205 = vld [vmem:[#allocation3 + $0xb3] sm:$0xff]
        %v8206 = vld [vmem:[#allocation3 + $0xbb] sm:$0xff]
        %v8207 = vld [vmem:[#allocation3 + $0xc3] sm:$0xff]
        %v8208 = vld [vmem:[#allocation3 + $0xcb] sm:$0xff]
        %v8209 = vld [vmem:[#allocation3 + $0xd3] sm:$0xff]
        %v8210 = vld [vmem:[#allocation3 + $0xdb] sm:$0xff]
        %v8211 = vld [vmem:[#allocation3 + $0xe3] sm:$0xff]
        %v8212 = vld [vmem:[#allocation3 + $0xeb] sm:$0xff]
        %v8213 = vld [vmem:[#allocation3 + $0xf3] sm:$0xff]
        %v8214 = vld [vmem:[#allocation3 + $0xfb] sm:$0xff]
        %v8215 = vld [vmem:[#allocation3 + $0x103] sm:$0xff]
        %v8216 = vld [vmem:[#allocation3 + $0x10b] sm:$0xff]
        %v8217 = vld [vmem:[#allocation3 + $0x113] sm:$0xff]
        %v8218 = vld [vmem:[#allocation3 + $0x11b] sm:$0xff]
        %v8219 = vld [vmem:[#allocation3 + $0x123] sm:$0xff]
        %v8220 = vld [vmem:[#allocation3 + $0x12b] sm:$0xff]
        %v8221 = vld [vmem:[#allocation3 + $0x133] sm:$0xff]
        %v8222 = vld [vmem:[#allocation3 + $0x13b] sm:$0xff]
        %v8223 = vld [vmem:[#allocation3 + $0x143] sm:$0xff]
        %s8224 = scalar_lea.vmem %s4, 256
        %v8225 = vld [vmem:[%s8224] sm:$0xff]
        %v8226 = vld [vmem:[%s8224 + $0x8] sm:$0xff]
        %v8227 = vld [vmem:[%s8224 + $0x10] sm:$0xff]
        %v8228 = vld [vmem:[%s8224 + $0x18] sm:$0xff]
        %v8230 = vsel %vm4784, %v8188, 0
        %v8233 = vsel %vm4784, %v8189, 0
        %v8236 = vsel %vm4784, %v8190, 0
        %v8239 = vsel %vm4784, %v8191, 0
        %v8242 = vsel %vm4784, %v8192, 0
        %v8245 = vsel %vm4784, %v8193, 0
        %v8248 = vsel %vm4784, %v8194, 0
        %v8251 = vsel %vm4784, %v8195, 0
        %v8254 = vsel %vm4784, %v8196, 0
        %v8257 = vsel %vm4784, %v8197, 0
        %v8260 = vsel %vm4784, %v8198, 0
        %v8263 = vsel %vm4784, %v8199, 0
        %v8266 = vsel %vm4784, %v8200, 0
        %v8269 = vsel %vm4784, %v8201, 0
        %v8272 = vsel %vm4784, %v8202, 0
        %v8275 = vsel %vm4784, %v8203, 0
        %v8278 = vsel %vm4784, %v8204, 0
        %v8281 = vsel %vm4784, %v8205, 0
        %v8284 = vsel %vm4784, %v8206, 0
        %v8287 = vsel %vm4784, %v8207, 0
        %v8290 = vsel %vm4784, %v8208, 0
        %v8293 = vsel %vm4784, %v8209, 0
        %v8296 = vsel %vm4784, %v8210, 0
        %v8299 = vsel %vm4784, %v8211, 0
        %v8302 = vsel %vm4784, %v8212, 0
        %v8305 = vsel %vm4784, %v8213, 0
        %v8308 = vsel %vm4784, %v8214, 0
        %v8311 = vsel %vm4784, %v8215, 0
        %v8314 = vsel %vm4784, %v8216, 0
        %v8317 = vsel %vm4784, %v8217, 0
        %v8320 = vsel %vm4784, %v8218, 0
        %v8323 = vsel %vm4784, %v8219, 0
        %v8326 = vsel %vm4784, %v8220, 0
        %v8329 = vsel %vm4784, %v8221, 0
        %v8332 = vsel %vm4784, %v8222, 0
        %v8335 = vsel %vm4784, %v8223, 0
        %8337 = vmatprep.subr.mxu0 0.0
        %8338 = vmatpush1.msra.mxu0 0.0
        %8339 = vmatprep.subr.mxu0 0.0
        %8340 = vmatpush1.msra.mxu0 0.0
        %8341 = vmatprep.subr.mxu0 0.0
        %8342 = vmatpush1.msra.mxu0 0.0
        %8343 = vmatprep.subr.mxu0 0.0
        %8344 = vmatpush1.msra.mxu0 0.0
        %8345 = vmatprep.subr.mxu0 0.0
        %8346 = vmatpush1.msra.mxu0 0.0
        %8347 = vmatprep.subr.mxu0 0.0
        %8348 = vmatpush1.msra.mxu0 0.0
        %8349 = vmatprep.subr.mxu0 0.0
        %8350 = vmatpush1.msra.mxu0 0.0
        %8351 = vmatprep.subr.mxu0 0.0
        %8352 = vmatpush1.msra.mxu0 0.0
        %8353 = vmatprep.subr.mxu0 0.0
        %8354 = vmatpush1.msra.mxu0 0.0
        %8355 = vmatprep.subr.mxu0 0.0
        %8356 = vmatpush1.msra.mxu0 0.0
        %8357 = vmatprep.subr.mxu0 0.0
        %8358 = vmatpush1.msra.mxu0 0.0
        %8359 = vmatprep.subr.mxu0 0.0
        %8360 = vmatpush1.msra.mxu0 0.0
        %8361 = vmatprep.subr.mxu0 0.0
        %8362 = vmatpush1.msra.mxu0 %v8228
        %8363 = vmatprep.subr.mxu0 0.0
        %8364 = vmatpush1.msra.mxu0 %v8227
        %8365 = vmatprep.subr.mxu0 0.0
        %8366 = vmatpush1.msra.mxu0 %v8226
        %8367 = vmatprep.subr.mxu0 0.0
        %8368 = vmatpush1.msra.mxu0 %v8225
        %8369 = vmatprep.subr.mxu0 0.0
        %8370 = vmatpush2.msra.mxu0 0.0
        %8371 = vmatprep.subr.mxu0 0.0
        %8372 = vmatpush2.msra.mxu0 0.0
        %8373 = vmatprep.subr.mxu0 0.0
        %8374 = vmatpush2.msra.mxu0 0.0
        %8375 = vmatprep.subr.mxu0 0.0
        %8376 = vmatpush2.msra.mxu0 0.0
        %8377 = vmatprep.subr.mxu0 0.0
        %8378 = vmatpush2.msra.mxu0 0.0
        %8379 = vmatprep.subr.mxu0 0.0
        %8380 = vmatpush2.msra.mxu0 0.0
        %8381 = vmatprep.subr.mxu0 0.0
        %8382 = vmatpush2.msra.mxu0 0.0
        %8383 = vmatprep.subr.mxu0 0.0
        %8384 = vmatpush2.msra.mxu0 0.0
        %8385 = vmatprep.subr.mxu0 0.0
        %8386 = vmatpush2.msra.mxu0 0.0
        %8387 = vmatprep.subr.mxu0 0.0
        %8388 = vmatpush2.msra.mxu0 0.0
        %8389 = vmatprep.subr.mxu0 0.0
        %8390 = vmatpush2.msra.mxu0 0.0
        %8391 = vmatprep.subr.mxu0 0.0
        %8392 = vmatpush2.msra.mxu0 0.0
        %8393 = vmatprep.subr.mxu0 0.0
        %8394 = vmatpush2.msra.mxu0 0.0
        %8395 = vmatprep.subr.mxu0 0.0
        %8396 = vmatpush2.msra.mxu0 0.0
        %8397 = vmatprep.subr.mxu0 0.0
        %8398 = vmatpush2.msra.mxu0 0.0
        %8399 = vmatprep.subr.mxu0 0.0
        %8400 = vmatpush2.msra.mxu0 0.0
        %8401 = vmatprep.mubr.f32.mxu0 0.0
        %8402 = vmatmul.mubr.f32.gmra.mxu0 %v8230
        %v8403 = vpop.f32.mrf.mxu0
        %v8404 = vadd.f32 0.0, %v8403
        %v8405 = vpop.f32.mrf.mxu0
        %8406 = vmatprep.mubr.f32.mxu0 0.0
        %8407 = vmatmul.mubr.f32.gmra.mxu0 %v8233
        %v8408 = vpop.f32.mrf.mxu0
        %v8409 = vadd.f32 0.0, %v8408
        %v8410 = vpop.f32.mrf.mxu0
        %8411 = vmatprep.mubr.f32.mxu0 0.0
        %8412 = vmatmul.mubr.f32.gmra.mxu0 %v8236
        %v8413 = vpop.f32.mrf.mxu0
        %v8414 = vadd.f32 0.0, %v8413
        %v8415 = vpop.f32.mrf.mxu0
        %8416 = vmatprep.mubr.f32.mxu0 0.0
        %8417 = vmatmul.mubr.f32.gmra.mxu0 %v8239
        %v8418 = vpop.f32.mrf.mxu0
        %v8419 = vadd.f32 0.0, %v8418
        %v8420 = vpop.f32.mrf.mxu0
        %8421 = vmatprep.mubr.f32.mxu0 0.0
        %8422 = vmatmul.mubr.f32.gmra.mxu0 %v8242
        %v8423 = vpop.f32.mrf.mxu0
        %v8424 = vadd.f32 0.0, %v8423
        %v8425 = vpop.f32.mrf.mxu0
        %8426 = vmatprep.mubr.f32.mxu0 0.0
        %8427 = vmatmul.mubr.f32.gmra.mxu0 %v8245
        %v8428 = vpop.f32.mrf.mxu0
        %v8429 = vadd.f32 0.0, %v8428
        %v8430 = vpop.f32.mrf.mxu0
        %8431 = vmatprep.mubr.f32.mxu0 0.0
        %8432 = vmatmul.mubr.f32.gmra.mxu0 %v8248
        %v8433 = vpop.f32.mrf.mxu0
        %v8434 = vadd.f32 0.0, %v8433
        %v8435 = vpop.f32.mrf.mxu0
        %8436 = vmatprep.mubr.f32.mxu0 0.0
        %8437 = vmatmul.mubr.f32.gmra.mxu0 %v8251
        %v8438 = vpop.f32.mrf.mxu0
        %v8439 = vadd.f32 0.0, %v8438
        %v8440 = vpop.f32.mrf.mxu0
        %8441 = vmatprep.mubr.f32.mxu0 0.0
        %8442 = vmatmul.mubr.f32.gmra.mxu0 %v8254
        %v8443 = vpop.f32.mrf.mxu0
        %v8444 = vadd.f32 0.0, %v8443
        %v8445 = vpop.f32.mrf.mxu0
        %8446 = vmatprep.mubr.f32.mxu0 0.0
        %8447 = vmatmul.mubr.f32.gmra.mxu0 %v8257
        %v8448 = vpop.f32.mrf.mxu0
        %v8449 = vadd.f32 0.0, %v8448
        %v8450 = vpop.f32.mrf.mxu0
        %8451 = vmatprep.mubr.f32.mxu0 0.0
        %8452 = vmatmul.mubr.f32.gmra.mxu0 %v8260
        %v8453 = vpop.f32.mrf.mxu0
        %v8454 = vadd.f32 0.0, %v8453
        %v8455 = vpop.f32.mrf.mxu0
        %8456 = vmatprep.mubr.f32.mxu0 0.0
        %8457 = vmatmul.mubr.f32.gmra.mxu0 %v8263
        %v8458 = vpop.f32.mrf.mxu0
        %v8459 = vadd.f32 0.0, %v8458
        %v8460 = vpop.f32.mrf.mxu0
        %8461 = vmatprep.mubr.f32.mxu0 0.0
        %8462 = vmatmul.mubr.f32.gmra.mxu0 %v8266
        %v8463 = vpop.f32.mrf.mxu0
        %v8464 = vadd.f32 0.0, %v8463
        %v8465 = vpop.f32.mrf.mxu0
        %8466 = vmatprep.mubr.f32.mxu0 0.0
        %8467 = vmatmul.mubr.f32.gmra.mxu0 %v8269
        %v8468 = vpop.f32.mrf.mxu0
        %v8469 = vadd.f32 0.0, %v8468
        %v8470 = vpop.f32.mrf.mxu0
        %8471 = vmatprep.mubr.f32.mxu0 0.0
        %8472 = vmatmul.mubr.f32.gmra.mxu0 %v8272
        %v8473 = vpop.f32.mrf.mxu0
        %v8474 = vadd.f32 0.0, %v8473
        %v8475 = vpop.f32.mrf.mxu0
        %8476 = vmatprep.mubr.f32.mxu0 0.0
        %8477 = vmatmul.mubr.f32.gmra.mxu0 %v8275
        %v8478 = vpop.f32.mrf.mxu0
        %v8479 = vadd.f32 0.0, %v8478
        %v8480 = vpop.f32.mrf.mxu0
        %8481 = vmatprep.mubr.f32.mxu0 0.0
        %8482 = vmatmul.mubr.f32.gmra.mxu0 %v8278
        %v8483 = vpop.f32.mrf.mxu0
        %v8484 = vadd.f32 0.0, %v8483
        %v8485 = vpop.f32.mrf.mxu0
        %8486 = vmatprep.mubr.f32.mxu0 0.0
        %8487 = vmatmul.mubr.f32.gmra.mxu0 %v8281
        %v8488 = vpop.f32.mrf.mxu0
        %v8489 = vadd.f32 0.0, %v8488
        %v8490 = vpop.f32.mrf.mxu0
        %8491 = vmatprep.mubr.f32.mxu0 0.0
        %8492 = vmatmul.mubr.f32.gmra.mxu0 %v8284
        %v8493 = vpop.f32.mrf.mxu0
        %v8494 = vadd.f32 0.0, %v8493
        %v8495 = vpop.f32.mrf.mxu0
        %8496 = vmatprep.mubr.f32.mxu0 0.0
        %8497 = vmatmul.mubr.f32.gmra.mxu0 %v8287
        %v8498 = vpop.f32.mrf.mxu0
        %v8499 = vadd.f32 0.0, %v8498
        %v8500 = vpop.f32.mrf.mxu0
        %8501 = vmatprep.mubr.f32.mxu0 0.0
        %8502 = vmatmul.mubr.f32.gmra.mxu0 %v8290
        %v8503 = vpop.f32.mrf.mxu0
        %v8504 = vadd.f32 0.0, %v8503
        %v8505 = vpop.f32.mrf.mxu0
        %8506 = vmatprep.mubr.f32.mxu0 0.0
        %8507 = vmatmul.mubr.f32.gmra.mxu0 %v8293
        %v8508 = vpop.f32.mrf.mxu0
        %v8509 = vadd.f32 0.0, %v8508
        %v8510 = vpop.f32.mrf.mxu0
        %8511 = vmatprep.mubr.f32.mxu0 0.0
        %8512 = vmatmul.mubr.f32.gmra.mxu0 %v8296
        %v8513 = vpop.f32.mrf.mxu0
        %v8514 = vadd.f32 0.0, %v8513
        %v8515 = vpop.f32.mrf.mxu0
        %8516 = vmatprep.mubr.f32.mxu0 0.0
        %8517 = vmatmul.mubr.f32.gmra.mxu0 %v8299
        %v8518 = vpop.f32.mrf.mxu0
        %v8519 = vadd.f32 0.0, %v8518
        %v8520 = vpop.f32.mrf.mxu0
        %8521 = vmatprep.mubr.f32.mxu0 0.0
        %8522 = vmatmul.mubr.f32.gmra.mxu0 %v8302
        %v8523 = vpop.f32.mrf.mxu0
        %v8524 = vadd.f32 0.0, %v8523
        %v8525 = vpop.f32.mrf.mxu0
        %8526 = vmatprep.mubr.f32.mxu0 0.0
        %8527 = vmatmul.mubr.f32.gmra.mxu0 %v8305
        %v8528 = vpop.f32.mrf.mxu0
        %v8529 = vadd.f32 0.0, %v8528
        %v8530 = vpop.f32.mrf.mxu0
        %8531 = vmatprep.mubr.f32.mxu0 0.0
        %8532 = vmatmul.mubr.f32.gmra.mxu0 %v8308
        %v8533 = vpop.f32.mrf.mxu0
        %v8534 = vadd.f32 0.0, %v8533
        %v8535 = vpop.f32.mrf.mxu0
        %8536 = vmatprep.mubr.f32.mxu0 0.0
        %8537 = vmatmul.mubr.f32.gmra.mxu0 %v8311
        %v8538 = vpop.f32.mrf.mxu0
        %v8539 = vadd.f32 0.0, %v8538
        %v8540 = vpop.f32.mrf.mxu0
        %8541 = vmatprep.mubr.f32.mxu0 0.0
        %8542 = vmatmul.mubr.f32.gmra.mxu0 %v8314
        %v8543 = vpop.f32.mrf.mxu0
        %v8544 = vadd.f32 0.0, %v8543
        %v8545 = vpop.f32.mrf.mxu0
        %8546 = vmatprep.mubr.f32.mxu0 0.0
        %8547 = vmatmul.mubr.f32.gmra.mxu0 %v8317
        %v8548 = vpop.f32.mrf.mxu0
        %v8549 = vadd.f32 0.0, %v8548
        %v8550 = vpop.f32.mrf.mxu0
        %8551 = vmatprep.mubr.f32.mxu0 0.0
        %8552 = vmatmul.mubr.f32.gmra.mxu0 %v8320
        %v8553 = vpop.f32.mrf.mxu0
        %v8554 = vadd.f32 0.0, %v8553
        %v8555 = vpop.f32.mrf.mxu0
        %8556 = vmatprep.mubr.f32.mxu0 0.0
        %8557 = vmatmul.mubr.f32.gmra.mxu0 %v8323
        %v8558 = vpop.f32.mrf.mxu0
        %v8559 = vadd.f32 0.0, %v8558
        %v8560 = vpop.f32.mrf.mxu0
        %8561 = vmatprep.mubr.f32.mxu0 0.0
        %8562 = vmatmul.mubr.f32.gmra.mxu0 %v8326
        %v8563 = vpop.f32.mrf.mxu0
        %v8564 = vadd.f32 0.0, %v8563
        %v8565 = vpop.f32.mrf.mxu0
        %8566 = vmatprep.mubr.f32.mxu0 0.0
        %8567 = vmatmul.mubr.f32.gmra.mxu0 %v8329
        %v8568 = vpop.f32.mrf.mxu0
        %v8569 = vadd.f32 0.0, %v8568
        %v8570 = vpop.f32.mrf.mxu0
        %8571 = vmatprep.mubr.f32.mxu0 0.0
        %8572 = vmatmul.mubr.f32.gmra.mxu0 %v8332
        %v8573 = vpop.f32.mrf.mxu0
        %v8574 = vadd.f32 0.0, %v8573
        %v8575 = vpop.f32.mrf.mxu0
        %8576 = vmatprep.mubr.f32.mxu0 0.0
        %8577 = vmatmul.mubr.f32.gmra.mxu0 %v8335
        %v8578 = vpop.f32.mrf.mxu0
        %v8579 = vadd.f32 0.0, %v8578
        %v8580 = vpop.f32.mrf.mxu0
        %8581 = vdwg.mxu0
        %v8582 = vadd.f32 %v8152, %v8404
        %v8583 = vadd.f32 %v8153, %v8409
        %v8584 = vadd.f32 %v8154, %v8414
        %v8585 = vadd.f32 %v8155, %v8419
        %v8586 = vadd.f32 %v8156, %v8424
        %v8587 = vadd.f32 %v8157, %v8429
        %v8588 = vadd.f32 %v8158, %v8434
        %v8589 = vadd.f32 %v8159, %v8439
        %v8590 = vadd.f32 %v8160, %v8444
        %v8591 = vadd.f32 %v8161, %v8449
        %v8592 = vadd.f32 %v8162, %v8454
        %v8593 = vadd.f32 %v8163, %v8459
        %v8594 = vadd.f32 %v8164, %v8464
        %v8595 = vadd.f32 %v8165, %v8469
        %v8596 = vadd.f32 %v8166, %v8474
        %v8597 = vadd.f32 %v8167, %v8479
        %v8598 = vadd.f32 %v8168, %v8484
        %v8599 = vadd.f32 %v8169, %v8489
        %v8600 = vadd.f32 %v8170, %v8494
        %v8601 = vadd.f32 %v8171, %v8499
        %v8602 = vadd.f32 %v8172, %v8504
        %v8603 = vadd.f32 %v8173, %v8509
        %v8604 = vadd.f32 %v8174, %v8514
        %v8605 = vadd.f32 %v8175, %v8519
        %v8606 = vadd.f32 %v8176, %v8524
        %v8607 = vadd.f32 %v8177, %v8529
        %v8608 = vadd.f32 %v8178, %v8534
        %v8609 = vadd.f32 %v8179, %v8539
        %v8610 = vadd.f32 %v8180, %v8544
        %v8611 = vadd.f32 %v8181, %v8549
        %v8612 = vadd.f32 %v8182, %v8554
        %v8613 = vadd.f32 %v8183, %v8559
        %v8614 = vadd.f32 %v8184, %v8564
        %v8615 = vadd.f32 %v8185, %v8569
        %v8616 = vadd.f32 %v8186, %v8574
        %v8617 = vadd.f32 %v8187, %v8579
        %v8618 = vld [vmem:[%s5] sm:$0x1]
        %v8620 = vlaneseq
        %v8621 = vshrl.u32 %v8620, 7
        %v8622 = vsub.s32 0, %v8621
        %v8623 = vrot.slane %v8618, %v8622
        %v8625 = vadd.f32 %v8582, %v8623
        %v8626 = vadd.f32 %v8583, %v8623
        %v8627 = vadd.f32 %v8584, %v8623
        %v8628 = vadd.f32 %v8585, %v8623
        %v8629 = vadd.f32 %v8586, %v8623
        %v8630 = vadd.f32 %v8587, %v8623
        %v8631 = vadd.f32 %v8588, %v8623
        %v8632 = vadd.f32 %v8589, %v8623
        %v8633 = vadd.f32 %v8590, %v8623
        %v8634 = vadd.f32 %v8591, %v8623
        %v8635 = vadd.f32 %v8592, %v8623
        %v8636 = vadd.f32 %v8593, %v8623
        %v8637 = vadd.f32 %v8594, %v8623
        %v8638 = vadd.f32 %v8595, %v8623
        %v8639 = vadd.f32 %v8596, %v8623
        %v8640 = vadd.f32 %v8597, %v8623
        %v8641 = vadd.f32 %v8598, %v8623
        %v8642 = vadd.f32 %v8599, %v8623
        %v8643 = vadd.f32 %v8600, %v8623
        %v8644 = vadd.f32 %v8601, %v8623
        %v8645 = vadd.f32 %v8602, %v8623
        %v8646 = vadd.f32 %v8603, %v8623
        %v8647 = vadd.f32 %v8604, %v8623
        %v8648 = vadd.f32 %v8605, %v8623
        %v8649 = vadd.f32 %v8606, %v8623
        %v8650 = vadd.f32 %v8607, %v8623
        %v8651 = vadd.f32 %v8608, %v8623
        %v8652 = vadd.f32 %v8609, %v8623
        %v8653 = vadd.f32 %v8610, %v8623
        %v8654 = vadd.f32 %v8611, %v8623
        %v8655 = vadd.f32 %v8612, %v8623
        %v8656 = vadd.f32 %v8613, %v8623
        %v8657 = vadd.f32 %v8614, %v8623
        %v8658 = vadd.f32 %v8615, %v8623
        %v8659 = vadd.f32 %v8616, %v8623
        %v8660 = vadd.f32 %v8617, %v8623
        %s8661 = smul.u32 %s24, 128
        %s8662 = sld [smem:[#allocation4 + %s8661]]
        %s8663 = sadd.s32 %s8661, 1
        %s8664 = sld [smem:[#allocation4 + %s8663]]
        %v8665 = vld [vmem:[#allocation2 + $0x18] sm:$0xff]
        %v8666 = vld [vmem:[#allocation2 + $0x20] sm:$0xff]
        %v8667 = vld [vmem:[#allocation2 + $0x28] sm:$0xff]
        %v8668 = vld [vmem:[#allocation2 + $0x30] sm:$0xff]
        %v8669 = vld [vmem:[#allocation2 + $0x38] sm:$0xff]
        %v8670 = vld [vmem:[#allocation2 + $0x40] sm:$0xff]
        %v8671 = vld [vmem:[#allocation2 + $0x48] sm:$0xff]
        %v8672 = vld [vmem:[#allocation2 + $0x50] sm:$0xff]
        %v8673 = vld [vmem:[#allocation2 + $0x58] sm:$0xff]
        %v8674 = vld [vmem:[#allocation2 + $0x60] sm:$0xff]
        %v8675 = vld [vmem:[#allocation2 + $0x68] sm:$0xff]
        %v8676 = vld [vmem:[#allocation2 + $0x70] sm:$0xff]
        %v8677 = vld [vmem:[#allocation2 + $0x78] sm:$0xff]
        %v8678 = vld [vmem:[#allocation2 + $0x80] sm:$0xff]
        %v8679 = vld [vmem:[#allocation2 + $0x88] sm:$0xff]
        %v8680 = vld [vmem:[#allocation2 + $0x90] sm:$0xff]
        %v8681 = vld [vmem:[#allocation2 + $0x98] sm:$0xff]
        %v8682 = vld [vmem:[#allocation2 + $0xa0] sm:$0xff]
        %v8683 = vld [vmem:[#allocation2 + $0xa8] sm:$0xff]
        %v8684 = vld [vmem:[#allocation2 + $0xb0] sm:$0xff]
        %v8685 = vld [vmem:[#allocation2 + $0xb8] sm:$0xff]
        %v8686 = vld [vmem:[#allocation2 + $0xc0] sm:$0xff]
        %v8687 = vld [vmem:[#allocation2 + $0xc8] sm:$0xff]
        %v8688 = vld [vmem:[#allocation2 + $0xd0] sm:$0xff]
        %v8689 = vld [vmem:[#allocation2 + $0xd8] sm:$0xff]
        %v8690 = vld [vmem:[#allocation2 + $0xe0] sm:$0xff]
        %v8691 = vld [vmem:[#allocation2 + $0xe8] sm:$0xff]
        %v8692 = vld [vmem:[#allocation2 + $0xf0] sm:$0xff]
        %v8693 = vld [vmem:[#allocation2 + $0xf8] sm:$0xff]
        %v8694 = vld [vmem:[#allocation2 + $0x100] sm:$0xff]
        %v8695 = vld [vmem:[#allocation2 + $0x108] sm:$0xff]
        %v8696 = vld [vmem:[#allocation2 + $0x110] sm:$0xff]
        %v8697 = vld [vmem:[#allocation2 + $0x118] sm:$0xff]
        %v8698 = vld [vmem:[#allocation2 + $0x120] sm:$0xff]
        %v8699 = vld [vmem:[#allocation2 + $0x128] sm:$0xff]
        %v8700 = vld [vmem:[#allocation2 + $0x130] sm:$0xff]
        %v8701 = vstv %s8662
        %v8702 = vmul.f32 %v8701, %v8665
        %v8703 = vmul.f32 %v8701, %v8666
        %v8704 = vmul.f32 %v8701, %v8667
        %v8705 = vmul.f32 %v8701, %v8668
        %v8706 = vmul.f32 %v8701, %v8669
        %v8707 = vmul.f32 %v8701, %v8670
        %v8708 = vmul.f32 %v8701, %v8671
        %v8709 = vmul.f32 %v8701, %v8672
        %v8710 = vmul.f32 %v8701, %v8673
        %v8711 = vmul.f32 %v8701, %v8674
        %v8712 = vmul.f32 %v8701, %v8675
        %v8713 = vmul.f32 %v8701, %v8676
        %v8714 = vmul.f32 %v8701, %v8677
        %v8715 = vmul.f32 %v8701, %v8678
        %v8716 = vmul.f32 %v8701, %v8679
        %v8717 = vmul.f32 %v8701, %v8680
        %v8718 = vmul.f32 %v8701, %v8681
        %v8719 = vmul.f32 %v8701, %v8682
        %v8720 = vmul.f32 %v8701, %v8683
        %v8721 = vmul.f32 %v8701, %v8684
        %v8722 = vmul.f32 %v8701, %v8685
        %v8723 = vmul.f32 %v8701, %v8686
        %v8724 = vmul.f32 %v8701, %v8687
        %v8725 = vmul.f32 %v8701, %v8688
        %v8726 = vmul.f32 %v8701, %v8689
        %v8727 = vmul.f32 %v8701, %v8690
        %v8728 = vmul.f32 %v8701, %v8691
        %v8729 = vmul.f32 %v8701, %v8692
        %v8730 = vmul.f32 %v8701, %v8693
        %v8731 = vmul.f32 %v8701, %v8694
        %v8732 = vmul.f32 %v8701, %v8695
        %v8733 = vmul.f32 %v8701, %v8696
        %v8734 = vmul.f32 %v8701, %v8697
        %v8735 = vmul.f32 %v8701, %v8698
        %v8736 = vmul.f32 %v8701, %v8699
        %v8737 = vmul.f32 %v8701, %v8700
        %v8738 = vstv %s8664
        %v8739 = vmul.f32 %v8738, %v8625
        %v8740 = vmul.f32 %v8738, %v8626
        %v8741 = vmul.f32 %v8738, %v8627
        %v8742 = vmul.f32 %v8738, %v8628
        %v8743 = vmul.f32 %v8738, %v8629
        %v8744 = vmul.f32 %v8738, %v8630
        %v8745 = vmul.f32 %v8738, %v8631
        %v8746 = vmul.f32 %v8738, %v8632
        %v8747 = vmul.f32 %v8738, %v8633
        %v8748 = vmul.f32 %v8738, %v8634
        %v8749 = vmul.f32 %v8738, %v8635
        %v8750 = vmul.f32 %v8738, %v8636
        %v8751 = vmul.f32 %v8738, %v8637
        %v8752 = vmul.f32 %v8738, %v8638
        %v8753 = vmul.f32 %v8738, %v8639
        %v8754 = vmul.f32 %v8738, %v8640
        %v8755 = vmul.f32 %v8738, %v8641
        %v8756 = vmul.f32 %v8738, %v8642
        %v8757 = vmul.f32 %v8738, %v8643
        %v8758 = vmul.f32 %v8738, %v8644
        %v8759 = vmul.f32 %v8738, %v8645
        %v8760 = vmul.f32 %v8738, %v8646
        %v8761 = vmul.f32 %v8738, %v8647
        %v8762 = vmul.f32 %v8738, %v8648
        %v8763 = vmul.f32 %v8738, %v8649
        %v8764 = vmul.f32 %v8738, %v8650
        %v8765 = vmul.f32 %v8738, %v8651
        %v8766 = vmul.f32 %v8738, %v8652
        %v8767 = vmul.f32 %v8738, %v8653
        %v8768 = vmul.f32 %v8738, %v8654
        %v8769 = vmul.f32 %v8738, %v8655
        %v8770 = vmul.f32 %v8738, %v8656
        %v8771 = vmul.f32 %v8738, %v8657
        %v8772 = vmul.f32 %v8738, %v8658
        %v8773 = vmul.f32 %v8738, %v8659
        %v8774 = vmul.f32 %v8738, %v8660
        %v8775 = vadd.f32 %v8702, %v8739
        %v8776 = vadd.f32 %v8703, %v8740
        %v8777 = vadd.f32 %v8704, %v8741
        %v8778 = vadd.f32 %v8705, %v8742
        %v8779 = vadd.f32 %v8706, %v8743
        %v8780 = vadd.f32 %v8707, %v8744
        %v8781 = vadd.f32 %v8708, %v8745
        %v8782 = vadd.f32 %v8709, %v8746
        %v8783 = vadd.f32 %v8710, %v8747
        %v8784 = vadd.f32 %v8711, %v8748
        %v8785 = vadd.f32 %v8712, %v8749
        %v8786 = vadd.f32 %v8713, %v8750
        %v8787 = vadd.f32 %v8714, %v8751
        %v8788 = vadd.f32 %v8715, %v8752
        %v8789 = vadd.f32 %v8716, %v8753
        %v8790 = vadd.f32 %v8717, %v8754
        %v8791 = vadd.f32 %v8718, %v8755
        %v8792 = vadd.f32 %v8719, %v8756
        %v8793 = vadd.f32 %v8720, %v8757
        %v8794 = vadd.f32 %v8721, %v8758
        %v8795 = vadd.f32 %v8722, %v8759
        %v8796 = vadd.f32 %v8723, %v8760
        %v8797 = vadd.f32 %v8724, %v8761
        %v8798 = vadd.f32 %v8725, %v8762
        %v8799 = vadd.f32 %v8726, %v8763
        %v8800 = vadd.f32 %v8727, %v8764
        %v8801 = vadd.f32 %v8728, %v8765
        %v8802 = vadd.f32 %v8729, %v8766
        %v8803 = vadd.f32 %v8730, %v8767
        %v8804 = vadd.f32 %v8731, %v8768
        %v8805 = vadd.f32 %v8732, %v8769
        %v8806 = vadd.f32 %v8733, %v8770
        %v8807 = vadd.f32 %v8734, %v8771
        %v8808 = vadd.f32 %v8735, %v8772
        %v8809 = vadd.f32 %v8736, %v8773
        %v8810 = vadd.f32 %v8737, %v8774
        %v8811 = vmul.f32 %v8775, %v4571
        %v8812 = vmul.f32 %v8776, %v4576
        %v8813 = vmul.f32 %v8777, %v4581
        %v8814 = vmul.f32 %v8778, %v4586
        %v8815 = vmul.f32 %v8779, %v4591
        %v8816 = vmul.f32 %v8780, %v4596
        %v8817 = vmul.f32 %v8781, %v4601
        %v8818 = vmul.f32 %v8782, %v4606
        %v8819 = vmul.f32 %v8783, %v4611
        %v8820 = vmul.f32 %v8784, %v4616
        %v8821 = vmul.f32 %v8785, %v4621
        %v8822 = vmul.f32 %v8786, %v4626
        %v8823 = vmul.f32 %v8787, %v4631
        %v8824 = vmul.f32 %v8788, %v4636
        %v8825 = vmul.f32 %v8789, %v4641
        %v8826 = vmul.f32 %v8790, %v4646
        %v8827 = vmul.f32 %v8791, %v4651
        %v8828 = vmul.f32 %v8792, %v4656
        %v8829 = vmul.f32 %v8793, %v4661
        %v8830 = vmul.f32 %v8794, %v4666
        %v8831 = vmul.f32 %v8795, %v4671
        %v8832 = vmul.f32 %v8796, %v4676
        %v8833 = vmul.f32 %v8797, %v4681
        %v8834 = vmul.f32 %v8798, %v4686
        %v8835 = vmul.f32 %v8799, %v4691
        %v8836 = vmul.f32 %v8800, %v4696
        %v8837 = vmul.f32 %v8801, %v4701
        %v8838 = vmul.f32 %v8802, %v4706
        %v8839 = vmul.f32 %v8803, %v4711
        %v8840 = vmul.f32 %v8804, %v4716
        %v8841 = vmul.f32 %v8805, %v4721
        %v8842 = vmul.f32 %v8806, %v4726
        %v8843 = vmul.f32 %v8807, %v4731
        %v8844 = vmul.f32 %v8808, %v4736
        %v8845 = vmul.f32 %v8809, %v4741
        %v8846 = vmul.f32 %v8810, %v4746
        %8847 = vst.msk [vmem:[#allocation2 + $0x18] sm:$0xff] %vm550, %v8811
        %8848 = vst.msk [vmem:[#allocation2 + $0x20] sm:$0xff] %vm550, %v8812
        %8849 = vst.msk [vmem:[#allocation2 + $0x28] sm:$0xff] %vm550, %v8813
        %8850 = vst.msk [vmem:[#allocation2 + $0x30] sm:$0xff] %vm550, %v8814
        %8851 = vst.msk [vmem:[#allocation2 + $0x38] sm:$0xff] %vm550, %v8815
        %8852 = vst.msk [vmem:[#allocation2 + $0x40] sm:$0xff] %vm550, %v8816
        %8853 = vst.msk [vmem:[#allocation2 + $0x48] sm:$0xff] %vm550, %v8817
        %8854 = vst.msk [vmem:[#allocation2 + $0x50] sm:$0xff] %vm550, %v8818
        %8855 = vst.msk [vmem:[#allocation2 + $0x58] sm:$0xff] %vm550, %v8819
        %8856 = vst.msk [vmem:[#allocation2 + $0x60] sm:$0xff] %vm550, %v8820
        %8857 = vst.msk [vmem:[#allocation2 + $0x68] sm:$0xff] %vm550, %v8821
        %8858 = vst.msk [vmem:[#allocation2 + $0x70] sm:$0xff] %vm550, %v8822
        %8859 = vst.msk [vmem:[#allocation2 + $0x78] sm:$0xff] %vm550, %v8823
        %8860 = vst.msk [vmem:[#allocation2 + $0x80] sm:$0xff] %vm550, %v8824
        %8861 = vst.msk [vmem:[#allocation2 + $0x88] sm:$0xff] %vm550, %v8825
        %8862 = vst.msk [vmem:[#allocation2 + $0x90] sm:$0xff] %vm550, %v8826
        %8863 = vst.msk [vmem:[#allocation2 + $0x98] sm:$0xff] %vm550, %v8827
        %8864 = vst.msk [vmem:[#allocation2 + $0xa0] sm:$0xff] %vm550, %v8828
        %8865 = vst.msk [vmem:[#allocation2 + $0xa8] sm:$0xff] %vm550, %v8829
        %8866 = vst.msk [vmem:[#allocation2 + $0xb0] sm:$0xff] %vm550, %v8830
        %8867 = vst.msk [vmem:[#allocation2 + $0xb8] sm:$0xff] %vm550, %v8831
        %8868 = vst.msk [vmem:[#allocation2 + $0xc0] sm:$0xff] %vm550, %v8832
        %8869 = vst.msk [vmem:[#allocation2 + $0xc8] sm:$0xff] %vm550, %v8833
        %8870 = vst.msk [vmem:[#allocation2 + $0xd0] sm:$0xff] %vm550, %v8834
        %8871 = vst.msk [vmem:[#allocation2 + $0xd8] sm:$0xff] %vm550, %v8835
        %8872 = vst.msk [vmem:[#allocation2 + $0xe0] sm:$0xff] %vm550, %v8836
        %8873 = vst.msk [vmem:[#allocation2 + $0xe8] sm:$0xff] %vm550, %v8837
        %8874 = vst.msk [vmem:[#allocation2 + $0xf0] sm:$0xff] %vm550, %v8838
        %8875 = vst.msk [vmem:[#allocation2 + $0xf8] sm:$0xff] %vm550, %v8839
        %8876 = vst.msk [vmem:[#allocation2 + $0x100] sm:$0xff] %vm550, %v8840
        %8877 = vst.msk [vmem:[#allocation2 + $0x108] sm:$0xff] %vm550, %v8841
        %8878 = vst.msk [vmem:[#allocation2 + $0x110] sm:$0xff] %vm550, %v8842
        %8879 = vst.msk [vmem:[#allocation2 + $0x118] sm:$0xff] %vm550, %v8843
        %8880 = vst.msk [vmem:[#allocation2 + $0x120] sm:$0xff] %vm550, %v8844
        %8881 = vst.msk [vmem:[#allocation2 + $0x128] sm:$0xff] %vm550, %v8845
        %8882 = vst.msk [vmem:[#allocation2 + $0x130] sm:$0xff] %vm550, %v8846
        %p8883 = scmp.eq.s32.totalorder %s24, 9
        // Predicated region
        $region57: #{_lambda_.3} parent=47 // pred_check
          %p8884 = pneg %p8883
        $region58: #{_lambda_.3} parent=47 // pred_check_branch
          %8886 = sbr.rel (%p8884) target = $region60
        $region59: #{_lambda_.3} parent=47 // pred_region
          %v8887 = vld [vmem:[#allocation2] sm:$0xff]
          %v8888 = vld [vmem:[#allocation2 + $0x8] sm:$0xff]
          %v8889 = vld [vmem:[#allocation2 + $0x10] sm:$0xff]
          %v8890 = vld [vmem:[#allocation2 + $0x18] sm:$0xff]
          %v8891 = vld [vmem:[#allocation2 + $0x20] sm:$0xff]
          %v8892 = vld [vmem:[#allocation2 + $0x28] sm:$0xff]
          %v8893 = vld [vmem:[#allocation2 + $0x30] sm:$0xff]
          %v8894 = vld [vmem:[#allocation2 + $0x38] sm:$0xff]
          %v8895 = vld [vmem:[#allocation2 + $0x40] sm:$0xff]
          %v8896 = vld [vmem:[#allocation2 + $0x48] sm:$0xff]
          %v8897 = vld [vmem:[#allocation2 + $0x50] sm:$0xff]
          %v8898 = vld [vmem:[#allocation2 + $0x58] sm:$0xff]
          %v8899 = vld [vmem:[#allocation2 + $0x60] sm:$0xff]
          %v8900 = vld [vmem:[#allocation2 + $0x68] sm:$0xff]
          %v8901 = vld [vmem:[#allocation2 + $0x70] sm:$0xff]
          %v8902 = vld [vmem:[#allocation2 + $0x78] sm:$0xff]
          %v8903 = vld [vmem:[#allocation2 + $0x80] sm:$0xff]
          %v8904 = vld [vmem:[#allocation2 + $0x88] sm:$0xff]
          %v8905 = vld [vmem:[#allocation2 + $0x90] sm:$0xff]
          %v8906 = vld [vmem:[#allocation2 + $0x98] sm:$0xff]
          %v8907 = vld [vmem:[#allocation2 + $0xa0] sm:$0xff]
          %v8908 = vld [vmem:[#allocation2 + $0xa8] sm:$0xff]
          %v8909 = vld [vmem:[#allocation2 + $0xb0] sm:$0xff]
          %v8910 = vld [vmem:[#allocation2 + $0xb8] sm:$0xff]
          %v8911 = vld [vmem:[#allocation2 + $0xc0] sm:$0xff]
          %v8912 = vld [vmem:[#allocation2 + $0xc8] sm:$0xff]
          %v8913 = vld [vmem:[#allocation2 + $0xd0] sm:$0xff]
          %v8914 = vld [vmem:[#allocation2 + $0xd8] sm:$0xff]
          %v8915 = vld [vmem:[#allocation2 + $0xe0] sm:$0xff]
          %v8916 = vld [vmem:[#allocation2 + $0xe8] sm:$0xff]
          %v8917 = vld [vmem:[#allocation2 + $0xf0] sm:$0xff]
          %v8918 = vld [vmem:[#allocation2 + $0xf8] sm:$0xff]
          %v8919 = vld [vmem:[#allocation2 + $0x100] sm:$0xff]
          %v8920 = vld [vmem:[#allocation2 + $0x108] sm:$0xff]
          %v8921 = vld [vmem:[#allocation2 + $0x110] sm:$0xff]
          %v8922 = vld [vmem:[#allocation2 + $0x118] sm:$0xff]
          %v8923 = vld [vmem:[#allocation2 + $0x120] sm:$0xff]
          %v8924 = vld [vmem:[#allocation2 + $0x128] sm:$0xff]
          %v8925 = vld [vmem:[#allocation2 + $0x130] sm:$0xff]
          %v8926 = vld [vmem:[#allocation2 + $0x138] sm:$0xff]
          %v8927 = vld [vmem:[#allocation2 + $0x140] sm:$0xff]
          %v8928 = vld [vmem:[#allocation2 + $0x148] sm:$0xff]
          %v8929 = vmax.f32 %v8887, -1.0
          %v8930 = vmax.f32 %v8888, -1.0
          %v8931 = vmax.f32 %v8889, -1.0
          %v8932 = vmax.f32 %v8890, -1.0
          %v8933 = vmax.f32 %v8891, -1.0
          %v8934 = vmax.f32 %v8892, -1.0
          %v8935 = vmax.f32 %v8893, -1.0
          %v8936 = vmax.f32 %v8894, -1.0
          %v8937 = vmax.f32 %v8895, -1.0
          %v8938 = vmax.f32 %v8896, -1.0
          %v8939 = vmax.f32 %v8897, -1.0
          %v8940 = vmax.f32 %v8898, -1.0
          %v8941 = vmax.f32 %v8899, -1.0
          %v8942 = vmax.f32 %v8900, -1.0
          %v8943 = vmax.f32 %v8901, -1.0
          %v8944 = vmax.f32 %v8902, -1.0
          %v8945 = vmax.f32 %v8903, -1.0
          %v8946 = vmax.f32 %v8904, -1.0
          %v8947 = vmax.f32 %v8905, -1.0
          %v8948 = vmax.f32 %v8906, -1.0
          %v8949 = vmax.f32 %v8907, -1.0
          %v8950 = vmax.f32 %v8908, -1.0
          %v8951 = vmax.f32 %v8909, -1.0
          %v8952 = vmax.f32 %v8910, -1.0
          %v8953 = vmax.f32 %v8911, -1.0
          %v8954 = vmax.f32 %v8912, -1.0
          %v8955 = vmax.f32 %v8913, -1.0
          %v8956 = vmax.f32 %v8914, -1.0
          %v8957 = vmax.f32 %v8915, -1.0
          %v8958 = vmax.f32 %v8916, -1.0
          %v8959 = vmax.f32 %v8917, -1.0
          %v8960 = vmax.f32 %v8918, -1.0
          %v8961 = vmax.f32 %v8919, -1.0
          %v8962 = vmax.f32 %v8920, -1.0
          %v8963 = vmax.f32 %v8921, -1.0
          %v8964 = vmax.f32 %v8922, -1.0
          %v8965 = vmax.f32 %v8923, -1.0
          %v8966 = vmax.f32 %v8924, -1.0
          %v8967 = vmax.f32 %v8925, -1.0
          %v8968 = vmax.f32 %v8926, -1.0
          %v8969 = vmax.f32 %v8927, -1.0
          %v8970 = vmax.f32 %v8928, -1.0
          %v8971 = vmin.f32 %v8929, 1.0
          %v8972 = vmin.f32 %v8930, 1.0
          %v8973 = vmin.f32 %v8931, 1.0
          %v8974 = vmin.f32 %v8932, 1.0
          %v8975 = vmin.f32 %v8933, 1.0
          %v8976 = vmin.f32 %v8934, 1.0
          %v8977 = vmin.f32 %v8935, 1.0
          %v8978 = vmin.f32 %v8936, 1.0
          %v8979 = vmin.f32 %v8937, 1.0
          %v8980 = vmin.f32 %v8938, 1.0
          %v8981 = vmin.f32 %v8939, 1.0
          %v8982 = vmin.f32 %v8940, 1.0
          %v8983 = vmin.f32 %v8941, 1.0
          %v8984 = vmin.f32 %v8942, 1.0
          %v8985 = vmin.f32 %v8943, 1.0
          %v8986 = vmin.f32 %v8944, 1.0
          %v8987 = vmin.f32 %v8945, 1.0
          %v8988 = vmin.f32 %v8946, 1.0
          %v8989 = vmin.f32 %v8947, 1.0
          %v8990 = vmin.f32 %v8948, 1.0
          %v8991 = vmin.f32 %v8949, 1.0
          %v8992 = vmin.f32 %v8950, 1.0
          %v8993 = vmin.f32 %v8951, 1.0
          %v8994 = vmin.f32 %v8952, 1.0
          %v8995 = vmin.f32 %v8953, 1.0
          %v8996 = vmin.f32 %v8954, 1.0
          %v8997 = vmin.f32 %v8955, 1.0
          %v8998 = vmin.f32 %v8956, 1.0
          %v8999 = vmin.f32 %v8957, 1.0
          %v9000 = vmin.f32 %v8958, 1.0
          %v9001 = vmin.f32 %v8959, 1.0
          %v9002 = vmin.f32 %v8960, 1.0
          %v9003 = vmin.f32 %v8961, 1.0
          %v9004 = vmin.f32 %v8962, 1.0
          %v9005 = vmin.f32 %v8963, 1.0
          %v9006 = vmin.f32 %v8964, 1.0
          %v9007 = vmin.f32 %v8965, 1.0
          %v9008 = vmin.f32 %v8966, 1.0
          %v9009 = vmin.f32 %v8967, 1.0
          %v9010 = vmin.f32 %v8968, 1.0
          %v9011 = vmin.f32 %v8969, 1.0
          %v9012 = vmin.f32 %v8970, 1.0
          %9013 = vst.msk [vmem:[%s306] sm:$0xff] %vm550, %v8971
          %9014 = vst.msk [vmem:[%s306 + $0x8] sm:$0xff] %vm550, %v8972
          %9015 = vst.msk [vmem:[%s306 + $0x10] sm:$0xff] %vm550, %v8973
          %9016 = vst.msk [vmem:[%s306 + $0x18] sm:$0xff] %vm550, %v8974
          %9017 = vst.msk [vmem:[%s306 + $0x20] sm:$0xff] %vm550, %v8975
          %9018 = vst.msk [vmem:[%s306 + $0x28] sm:$0xff] %vm550, %v8976
          %9019 = vst.msk [vmem:[%s306 + $0x30] sm:$0xff] %vm550, %v8977
          %9020 = vst.msk [vmem:[%s306 + $0x38] sm:$0xff] %vm550, %v8978
          %9021 = vst.msk [vmem:[%s306 + $0x40] sm:$0xff] %vm550, %v8979
          %9022 = vst.msk [vmem:[%s306 + $0x48] sm:$0xff] %vm550, %v8980
          %9023 = vst.msk [vmem:[%s306 + $0x50] sm:$0xff] %vm550, %v8981
          %9024 = vst.msk [vmem:[%s306 + $0x58] sm:$0xff] %vm550, %v8982
          %9025 = vst.msk [vmem:[%s306 + $0x60] sm:$0xff] %vm550, %v8983
          %9026 = vst.msk [vmem:[%s306 + $0x68] sm:$0xff] %vm550, %v8984
          %9027 = vst.msk [vmem:[%s306 + $0x70] sm:$0xff] %vm550, %v8985
          %9028 = vst.msk [vmem:[%s306 + $0x78] sm:$0xff] %vm550, %v8986
          %9029 = vst.msk [vmem:[%s306 + $0x80] sm:$0xff] %vm550, %v8987
          %9030 = vst.msk [vmem:[%s306 + $0x88] sm:$0xff] %vm550, %v8988
          %9031 = vst.msk [vmem:[%s306 + $0x90] sm:$0xff] %vm550, %v8989
          %9032 = vst.msk [vmem:[%s306 + $0x98] sm:$0xff] %vm550, %v8990
          %9033 = vst.msk [vmem:[%s306 + $0xa0] sm:$0xff] %vm550, %v8991
          %9034 = vst.msk [vmem:[%s306 + $0xa8] sm:$0xff] %vm550, %v8992
          %9035 = vst.msk [vmem:[%s306 + $0xb0] sm:$0xff] %vm550, %v8993
          %9036 = vst.msk [vmem:[%s306 + $0xb8] sm:$0xff] %vm550, %v8994
          %9037 = vst.msk [vmem:[%s306 + $0xc0] sm:$0xff] %vm550, %v8995
          %9038 = vst.msk [vmem:[%s306 + $0xc8] sm:$0xff] %vm550, %v8996
          %9039 = vst.msk [vmem:[%s306 + $0xd0] sm:$0xff] %vm550, %v8997
          %9040 = vst.msk [vmem:[%s306 + $0xd8] sm:$0xff] %vm550, %v8998
          %9041 = vst.msk [vmem:[%s306 + $0xe0] sm:$0xff] %vm550, %v8999
          %9042 = vst.msk [vmem:[%s306 + $0xe8] sm:$0xff] %vm550, %v9000
          %9043 = vst.msk [vmem:[%s306 + $0xf0] sm:$0xff] %vm550, %v9001
          %9044 = vst.msk [vmem:[%s306 + $0xf8] sm:$0xff] %vm550, %v9002
          %9045 = vst.msk [vmem:[%s306 + $0x100] sm:$0xff] %vm550, %v9003
          %9046 = vst.msk [vmem:[%s306 + $0x108] sm:$0xff] %vm550, %v9004
          %9047 = vst.msk [vmem:[%s306 + $0x110] sm:$0xff] %vm550, %v9005
          %9048 = vst.msk [vmem:[%s306 + $0x118] sm:$0xff] %vm550, %v9006
          %9049 = vst.msk [vmem:[%s306 + $0x120] sm:$0xff] %vm550, %v9007
          %9050 = vst.msk [vmem:[%s306 + $0x128] sm:$0xff] %vm550, %v9008
          %9051 = vst.msk [vmem:[%s306 + $0x130] sm:$0xff] %vm550, %v9009
          %9052 = vst.msk [vmem:[%s306 + $0x138] sm:$0xff] %vm550, %v9010
          %9053 = vst.msk [vmem:[%s306 + $0x140] sm:$0xff] %vm550, %v9011
          %9054 = vst.msk [vmem:[%s306 + $0x148] sm:$0xff] %vm550, %v9012
        $region60: #{_lambda_.3} parent=47 // pred_fallthru
          _
        %p9055 = scmp.lt.s32.totalorder %s23, 1
        %s9056 = scalar_select %p9055, %s23, 1
        %s9057 = smul.addr %s9056, 42
        %s9058 = smul.addr %s9057, 8
        %s9059 = scalar_lea.vmem %s7, %s9058
        // Predicated region
        $region61: #{_lambda_.3} parent=47 // pred_check
          %p9060 = pneg %p201
        $region62: #{_lambda_.3} parent=47 // pred_check_branch
          %9062 = sbr.rel (%p9060) target = $region64
        $region63: #{_lambda_.3} parent=47 // pred_region
          _
        $region64: #{_lambda_.3} parent=47 // pred_fallthru
          _
      $region48: #{_lambda_.3} parent=5 // pred_fallthru
        _
      %p9063 = scmp.le.s32.totalorder 2, %s14
      // Predicated region
      $region65: #{_lambda_.3} parent=5 // pred_check
        %p9064 = pneg %p9063
      $region66: #{_lambda_.3} parent=5 // pred_check_branch
        %9066 = sbr.rel (%p9064) target = $region68
      $region67: #{_lambda_.3} parent=5 // pred_region
        %s9067 = ssub.s32 %s14, 2
        // Predicated region
        $region69: #{_lambda_.3} parent=67 // pred_check
          %p9068 = pneg %p207
        $region70: #{_lambda_.3} parent=67 // pred_check_branch
          %9070 = sbr.rel (%p9068) target = $region72
        $region71: #{_lambda_.3} parent=67 // pred_region
          %p9071 = scmp.lt.s32.totalorder %s25, 1
          %s9072 = scalar_select %p9071, %s25, 1
          %s9073 = smul.addr %s9072, 42
          %s9074 = smul.addr %s9073, 8
          %s9075 = scalar_lea.vmem %s7, %s9074
        $region72: #{_lambda_.3} parent=67 // pred_fallthru
          _
      $region68: #{_lambda_.3} parent=5 // pred_fallthru
        _
    $region6: #{_lambda_.3} parent=1 // loop_footer
      %s18 = sadd.s32 1, %s14
    $region7: #{_lambda_.3} parent=1 // loop_footer_branch
      %13 = sbr.rel target = $region3
    $region8: #{_lambda_.3} parent=1 // loop_exit
      _
    %9076 = vsyncpa [#allocation5], 1
    %s9077 = scalar_lea.sflag [#allocation5], 1
    %9078 = vsyncpa %s9077, 1

</llo_original>
